<compile_context>
chip_gen: v7x
topology: tpu7x:2x2x1
jax: 0.10.0
libtpu: 0.0.40
codegen_flags: <defaults>
</compile_context>

<pallas_src>
import functools

import jax
import jax.numpy as jnp
import numpy as np
from jax import lax
from jax.experimental import pallas as pl
from jax.experimental.pallas import tpu as pltpu

NEG_BIG = -99999.0
LEAKY_SLOPE = 0.01  # torch.nn.LeakyReLU() default


def _pick_row_tile(n, requested=None, cap=128):
    """Pick a row-tile Nb with n % Nb == 0 and (Nb == n or Nb % 8 == 0).

    `cap` bounds the per-block VMEM working set; on v7x (64 MiB physical / 32 MiB scoped
    default) keep cap small enough that double-buffered (Nb, T, E)+(Nb, T, 2H) tiles fit.
    """
    if requested is not None and n % requested == 0 and (requested == n or requested % 8 == 0):
        return requested
    if n <= cap:
        return n
    for cand in range(cap - (cap % 8), 0, -8):  # multiples of 8, descending
        if n % cand == 0:
            return cand
    return n  # fallback: single block


# ----------------------------------------------------------------------------
# Pallas kernel 1: fused (bi)directional masked GRU (packed-sequence equivalent)
# ----------------------------------------------------------------------------
def _gru_kernel(x_ref, lens_ref, wi_ref, bi_ref, wh_ref, bh_ref, y_ref,
                *, T, H, bidirectional):
    """One block of Nb independent rows.

    x_ref    : (Nb, T, E)        input features
    lens_ref : (Nb, 1) int32     valid lengths per row
    wi_ref   : (E, ndir*3H)      fused input weights   [dir][r|z|n]
    bi_ref   : (1, ndir*3H)
    wh_ref   : (ndir, H, 3H)     fused hidden weights per direction  [r|z|n]
    bh_ref   : (ndir, 1, 3H)
    y_ref    : (Nb, T, ndir*H)   outputs; exact zeros at padded steps
    """
    ndir = 2 if bidirectional else 1
    Nb = x_ref.shape[0]
    E = x_ref.shape[2]

    x = x_ref[...].astype(jnp.float32)                     # (Nb, T, E)
    lens = lens_ref[...]                                   # (Nb, 1) int32
    valid = [(t < lens).astype(jnp.float32) for t in range(T)]   # hoisted masks

    # Hoisted input projection: one MXU matmul covers all timesteps, gates and directions.
    xp = jnp.dot(x.reshape(Nb * T, E), wi_ref[...],
                 preferred_element_type=jnp.float32) + bi_ref[...]   # (Nb*T, ndir*3H)
    xp = xp.reshape(Nb, T, ndir * 3 * H)

    def run_direction(d):
        wh = wh_ref[d]                                     # (H, 3H)
        bh = bh_ref[d]                                     # (1, 3H)
        off = d * 3 * H
        reverse = (d == 1)
        order = range(T - 1, -1, -1) if reverse else range(T)
        h = jnp.zeros((Nb, H), jnp.float32)
        ys = [None] * T
        for t in order:                                    # static unroll: T is compile-time
            xpt = xp[:, t, off:off + 3 * H]                # (Nb, 3H)
            g = jnp.dot(h, wh, preferred_element_type=jnp.float32) + bh   # (Nb, 3H)
            r = jax.nn.sigmoid(xpt[:, :H] + g[:, :H])
            z = jax.nn.sigmoid(xpt[:, H:2 * H] + g[:, H:2 * H])
            n = jnp.tanh(xpt[:, 2 * H:] + r * g[:, 2 * H:])
            h_new = (1.0 - z) * n + z * h
            v = valid[t]
            y_t = v * h_new                                # zeros at padded positions
            ys[t] = y_t
            h = y_t + (1.0 - v) * h                        # hold state across padding
        return ys

    ys_dirs = [run_direction(d) for d in range(ndir)]
    for t in range(T):
        if ndir == 2:
            row = jnp.concatenate([ys_dirs[0][t], ys_dirs[1][t]], axis=-1)   # (Nb, 2H)
        else:
            row = ys_dirs[0][t]                                              # (Nb, H)
        y_ref[:, t:t + 1, :] = row[:, None, :]


def gru_layer(x, lens, p, *, hidden, bidirectional, row_tile=None):
    """x: (N, T, E) f32, lens: (N,) i32 -> (N, T, ndir*hidden) f32 (zeros at padded steps)."""
    N, T, E = x.shape
    ndir = 2 if bidirectional else 1
    Nb = _pick_row_tile(N, row_tile)
    lens_col = lens.reshape(N, 1).astype(jnp.int32)
    return pl.pallas_call(
        functools.partial(_gru_kernel, T=T, H=hidden, bidirectional=bidirectional),
        grid=(N // Nb,),
        in_specs=[
            pl.BlockSpec((Nb, T, E), lambda n: (n, 0, 0)),
            pl.BlockSpec((Nb, 1), lambda n: (n, 0)),
            pl.BlockSpec(tuple(p["wi"].shape), lambda n: (0, 0)),
            pl.BlockSpec(tuple(p["bi"].shape), lambda n: (0, 0)),
            pl.BlockSpec(tuple(p["wh"].shape), lambda n: (0, 0, 0)),
            pl.BlockSpec(tuple(p["bh"].shape), lambda n: (0, 0, 0)),
        ],
        out_specs=pl.BlockSpec((Nb, T, ndir * hidden), lambda n: (n, 0, 0)),
        out_shape=jax.ShapeDtypeStruct((N, T, ndir * hidden), jnp.float32),
        compiler_params=pltpu.CompilerParams(dimension_semantics=("parallel",)),
    )(x.astype(jnp.float32), lens_col, p["wi"], p["bi"], p["wh"], p["bh"])


# ----------------------------------------------------------------------------
# Pallas kernel 2: scorer MLP + masked softmax + attention pooling (row-batched)
#   scorer = Linear(D->K, bias) -> LeakyReLU -> Linear(K->1, no bias)
# ----------------------------------------------------------------------------
def _attn_pool_kernel(x_ref, lens_ref, w1_ref, b1_ref, w2_ref,
                      pooled_ref, probs_ref, *, inv_temperature):
    x = x_ref[...]                                         # (Nb, L, D)
    Nb, L, D = x.shape
    lens = lens_ref[...]                                   # (Nb, 1) int32

    # Scorer MLP over all Nb*L positions as two MXU matmuls.
    h = jnp.dot(x.reshape(Nb * L, D), w1_ref[...],
                preferred_element_type=jnp.float32) + b1_ref[...]          # (Nb*L, K)
    h = jnp.where(h >= 0.0, h, LEAKY_SLOPE * h)            # LeakyReLU
    s = jnp.dot(h, w2_ref[...], preferred_element_type=jnp.float32)        # (Nb*L, 1)
    s = s.reshape(Nb, L) * inv_temperature                 # lane-dense scores

    mask = lax.broadcasted_iota(jnp.int32, (Nb, L), 1) < lens               # (Nb, L)
    s = jnp.where(mask, s, NEG_BIG)                        # exact torch masking value
    s = s - jnp.max(s, axis=-1, keepdims=True)
    e = jnp.exp(s)
    p = e / jnp.sum(e, axis=-1, keepdims=True)             # (Nb, L) per-row softmax
    probs_ref[...] = p                                     # lane-dense (L on lanes)
    pooled_ref[...] = jnp.sum(p[:, :, None] * x, axis=1)   # (Nb, D)


def attn_pool(x, lens, p, *, temperature, row_tile=None):
    """x: (N, L, D) f32, lens: (N,) i32 -> pooled (N, D), probs (N, L)."""
    N, L, D = x.shape
    K = p["w1"].shape[1]
    Nb = _pick_row_tile(N, row_tile)
    lens_col = lens.reshape(N, 1).astype(jnp.int32)
    pooled, probs = pl.pallas_call(
        functools.partial(_attn_pool_kernel, inv_temperature=1.0 / float(temperature)),
        grid=(N // Nb,),
        in_specs=[
            pl.BlockSpec((Nb, L, D), lambda n: (n, 0, 0)),
            pl.BlockSpec((Nb, 1), lambda n: (n, 0)),
            pl.BlockSpec((D, K), lambda n: (0, 0)),
            pl.BlockSpec((1, K), lambda n: (0, 0)),
            pl.BlockSpec((K, 1), lambda n: (0, 0)),
        ],
        out_specs=[
            pl.BlockSpec((Nb, D), lambda n: (n, 0)),
            pl.BlockSpec((Nb, L), lambda n: (n, 0)),
        ],
        out_shape=(jax.ShapeDtypeStruct((N, D), jnp.float32),
                   jax.ShapeDtypeStruct((N, L), jnp.float32)),
        compiler_params=pltpu.CompilerParams(dimension_semantics=("parallel",)),
    )(x.astype(jnp.float32), lens_col, p["w1"], p["b1"], p["w2"])
    return pooled, probs


# ----------------------------------------------------------------------------
# Full forward pass (wrapper glue in plain JAX; hot paths in the two kernels)
# ----------------------------------------------------------------------------
def hierarchical_attention_encoder_forward(params, token_features, token_lens, dlg_lens,
                                           dlg_pos_features=None, temperature=1.0,
                                           tok_row_tile=None, attn_row_tile=None):
    B, U, T, E = token_features.shape
    H = params["tok_gru"]["wh"].shape[1]
    N = B * U

    # --- per-utterance bidirectional token GRU (packed-sequence equivalent) ---
    # TODO(synk): single-layer GRU only (enc_num_layers=1, dropout=0 -- the cfg default path).
    x_tok = token_features.reshape(N, T, E).astype(jnp.float32)            # no transpose
    tok_lens_flat = token_lens.reshape(N).astype(jnp.int32)
    ctx_nld = gru_layer(x_tok, tok_lens_flat, params["tok_gru"],
                        hidden=H, bidirectional=True, row_tile=tok_row_tile)   # (N, T, 2H)
    ctx_token_features = ctx_nld.reshape(B, U, T, 2 * H)

    # --- token-level attention pooling ---
    utt_flat, tok_probs_flat = attn_pool(ctx_nld, tok_lens_flat, params["token_scorer"],
                                         temperature=temperature, row_tile=attn_row_tile)
    utt_features = utt_flat.reshape(B, U, 2 * H)
    token_probs = tok_probs_flat.reshape(B, U, T)

    if dlg_pos_features is None:
        tfeats = utt_features
    else:  # TODO(synk): dlg GRU params assume no utterance-position embeddings (cfg default).
        tfeats = jnp.concatenate([utt_features, dlg_pos_features], axis=-1)

    # --- per-dialog unidirectional GRU over utterances ---
    dlg_lens_i32 = dlg_lens.astype(jnp.int32)
    ctx_utt_features = gru_layer(tfeats, dlg_lens_i32, params["dlg_gru"],
                                 hidden=2 * H, bidirectional=False)            # (B, U, 2H)

    # --- utterance-level attention pooling ---
    agg_dlg_features, uttr_probs = attn_pool(ctx_utt_features, dlg_lens_i32,
                                             params["uttr_scorer"], temperature=temperature)

    return (ctx_token_features, utt_features, ctx_utt_features, agg_dlg_features,
            token_probs, uttr_probs)


# ----------------------------------------------------------------------------
# Deterministic parameter init (PyTorch-style uniform bounds), fused gate layout
# ----------------------------------------------------------------------------
def init_params(key, emb_size, enc_hid_size):
    H = enc_hid_size

    def u(k, shape, bound):
        return jax.random.uniform(k, shape, jnp.float32, -bound, bound)

    def gru_params(k, in_size, hid, ndir):
        k1, k2, k3, k4 = jax.random.split(k, 4)
        b = 1.0 / np.sqrt(hid)
        return {"wi": u(k1, (in_size, ndir * 3 * hid), b),   # [dir][r|z|n] fused on lanes
                "bi": u(k2, (1, ndir * 3 * hid), b),
                "wh": u(k3, (ndir, hid, 3 * hid), b),
                "bh": u(k4, (ndir, 1, 3 * hid), b)}

    def scorer_params(k, in_size, hid):
        k1, k2, k3 = jax.random.split(k, 3)
        b1 = 1.0 / np.sqrt(in_size)
        b2 = 1.0 / np.sqrt(hid)
        return {"w1": u(k1, (in_size, hid), b1), "b1": u(k2, (1, hid), b1),
                "w2": u(k3, (hid, 1), b2)}     # second linear (hid -> 1, no bias)

    ks = jax.random.split(key, 4)
    return {
        "tok_gru": gru_params(ks[0], emb_size, H, 2),
        "dlg_gru": gru_params(ks[1], 2 * H, 2 * H, 1),
        "token_scorer": scorer_params(ks[2], 2 * H, H),
        "uttr_scorer": scorer_params(ks[3], 2 * H, H),
    }


# ----------------------------------------------------------------------------
# Pure-JAX reference (same math, no Pallas) for a correctness check
# ----------------------------------------------------------------------------
def _gru_ref(x, lens, p, hid, bidirectional):
    N, T, _ = x.shape
    ndir = 2 if bidirectional else 1
    lens_col = lens.reshape(N, 1).astype(jnp.int32)
    outs = []
    for d in range(ndir):
        wi = p["wi"][:, d * 3 * hid:(d + 1) * 3 * hid]
        bi = p["bi"][:, d * 3 * hid:(d + 1) * 3 * hid]
        wh = p["wh"][d]
        bh = p["bh"][d]

        def cell(h, t, wi=wi, bi=bi, wh=wh, bh=bh):
            xt = x[:, t, :]
            a = xt @ wi + bi
            g = h @ wh + bh
            r = jax.nn.sigmoid(a[:, :hid] + g[:, :hid])
            z = jax.nn.sigmoid(a[:, hid:2 * hid] + g[:, hid:2 * hid])
            n = jnp.tanh(a[:, 2 * hid:] + r * g[:, 2 * hid:])
            h_new = (1.0 - z) * n + z * h
            v = (t < lens_col).astype(jnp.float32)
            return v * h_new + (1.0 - v) * h, v * h_new

        ts = jnp.arange(T - 1, -1, -1) if d == 1 else jnp.arange(T)
        _, ys = lax.scan(cell, jnp.zeros((N, hid), jnp.float32), ts)
        if d == 1:
            ys = ys[::-1]
        outs.append(jnp.transpose(ys, (1, 0, 2)))
    return jnp.concatenate(outs, axis=-1) if ndir == 2 else outs[0]


def _attn_ref(x, lens, p, temperature):
    N, L, D = x.shape
    h = x @ p["w1"] + p["b1"]
    h = jnp.where(h >= 0.0, h, LEAKY_SLOPE * h)
    s = jnp.squeeze(h @ p["w2"], -1) * (1.0 / temperature)
    mask = jnp.arange(L)[None, :] < lens[:, None]
    s = jnp.where(mask, s, NEG_BIG)
    probs = jax.nn.softmax(s, axis=-1)
    pooled = jnp.einsum("nl,nld->nd", probs, x)
    return pooled, probs


def reference_forward(params, token_features, token_lens, dlg_lens, temperature=1.0):
    B, U, T, E = token_features.shape
    H = params["tok_gru"]["wh"].shape[1]
    N = B * U
    x_tok = token_features.reshape(N, T, E).astype(jnp.float32)
    lens_flat = token_lens.reshape(N).astype(jnp.int32)
    ctx_nld = _gru_ref(x_tok, lens_flat, params["tok_gru"], H, True)
    ctx_token_features = ctx_nld.reshape(B, U, T, 2 * H)
    utt_flat, tok_probs = _attn_ref(ctx_nld, lens_flat, params["token_scorer"], temperature)
    utt_features = utt_flat.reshape(B, U, 2 * H)
    dlg_lens_i32 = dlg_lens.astype(jnp.int32)
    ctx_utt_features = _gru_ref(utt_features, dlg_lens_i32, params["dlg_gru"], 2 * H, False)
    agg, uttr_probs = _attn_ref(ctx_utt_features, dlg_lens_i32, params["uttr_scorer"], temperature)
    return (ctx_token_features, utt_features, ctx_utt_features, agg,
            tok_probs.reshape(B, U, T), uttr_probs)


if __name__ == "__main__":
    key = jax.random.PRNGKey(0)
    B, U, T = 2, 8, 8
    emb_size, enc_hid_size = 16, 16

    kp, kx = jax.random.split(key)
    params = init_params(kp, emb_size, enc_hid_size)
    token_features = jax.random.normal(kx, (B, U, T, emb_size), jnp.float32)
    # max(token_lens) == T and max(dlg_lens) == U so padded output shapes match torch exactly.
    token_lens = jnp.array([[8, 3, 5, 1, 2, 7, 4, 6],
                            [2, 8, 4, 6, 1, 3, 5, 7]], jnp.int32)
    dlg_lens = jnp.array([8, 5], jnp.int32)

    # row tiles of 8 exercise a >1 grid with "parallel" semantics at these toy shapes.
    fwd = jax.jit(functools.partial(hierarchical_attention_encoder_forward,
                                    temperature=1.0, tok_row_tile=8, attn_row_tile=8))
    outs = jax.block_until_ready(fwd(params, token_features, token_lens, dlg_lens))

    refs = reference_forward(params, token_features, token_lens, dlg_lens)
    for o, r in zip(outs, refs):
        np.testing.assert_allclose(np.asarray(o), np.asarray(r), rtol=1e-4, atol=1e-4)

    print("KERNEL_OK")
</pallas_src>

<mosaic_0001>
module attributes {stable_mosaic.version = 11 : i64} {
  func.func @_gru_kernel(%arg0: i32, %arg1: memref<8x8x16xf32, #tpu.memory_space<vmem>>, %arg2: memref<8x1xi32, #tpu.memory_space<vmem>>, %arg3: memref<16x96xf32, #tpu.memory_space<vmem>>, %arg4: memref<1x96xf32, #tpu.memory_space<vmem>>, %arg5: memref<2x16x48xf32, #tpu.memory_space<vmem>>, %arg6: memref<2x1x48xf32, #tpu.memory_space<vmem>>, %arg7: memref<8x8x32xf32, #tpu.memory_space<vmem>>) attributes {dimension_semantics = [#tpu.dimension_semantics<parallel>], iteration_bounds = array<i64: 2>, scalar_prefetch = 0 : i64, scratch_operands = 0 : i64, tpu.core_type = #tpu.core_type<tc>, window_params = [{transform_indices = @transform_0, window_bounds = array<i64: 8, 8, 16>}, {transform_indices = @transform_1, window_bounds = array<i64: 8, 1>}, {pipeline_mode = #tpu.pipeline_mode<synchronous>, transform_indices = @transform_2, window_bounds = array<i64: 16, 96>}, {pipeline_mode = #tpu.pipeline_mode<synchronous>, transform_indices = @transform_3, window_bounds = array<i64: 1, 96>}, {pipeline_mode = #tpu.pipeline_mode<synchronous>, transform_indices = @transform_4, window_bounds = array<i64: 2, 16, 48>}, {pipeline_mode = #tpu.pipeline_mode<synchronous>, transform_indices = @transform_5, window_bounds = array<i64: 2, 1, 48>}, {transform_indices = @transform_6, window_bounds = array<i64: 8, 8, 32>}]} {
    %c0 = arith.constant 0 : index
    %c0_0 = arith.constant 0 : index
    %c0_1 = arith.constant 0 : index
    %0 = vector.load %arg1[%c0, %c0_0, %c0_1] : memref<8x8x16xf32, #tpu.memory_space<vmem>>, vector<8x8x16xf32>
    %c0_2 = arith.constant 0 : index
    %c0_3 = arith.constant 0 : index
    %1 = vector.load %arg2[%c0_2, %c0_3] : memref<8x1xi32, #tpu.memory_space<vmem>>, vector<8x1xi32>
    %c0_i32 = arith.constant 0 : i32
    %2 = vector.broadcast %c0_i32 : i32 to vector<8x1xi32>
    %3 = arith.cmpi sgt, %1, %2 : vector<8x1xi32>
    %4 = arith.extui %3 : vector<8x1xi1> to vector<8x1xi32>
    %5 = arith.sitofp %4 : vector<8x1xi32> to vector<8x1xf32>
    %c1_i32 = arith.constant 1 : i32
    %6 = vector.broadcast %c1_i32 : i32 to vector<8x1xi32>
    %7 = arith.cmpi sgt, %1, %6 : vector<8x1xi32>
    %8 = arith.extui %7 : vector<8x1xi1> to vector<8x1xi32>
    %9 = arith.sitofp %8 : vector<8x1xi32> to vector<8x1xf32>
    %c2_i32 = arith.constant 2 : i32
    %10 = vector.broadcast %c2_i32 : i32 to vector<8x1xi32>
    %11 = arith.cmpi sgt, %1, %10 : vector<8x1xi32>
    %12 = arith.extui %11 : vector<8x1xi1> to vector<8x1xi32>
    %13 = arith.sitofp %12 : vector<8x1xi32> to vector<8x1xf32>
    %c3_i32 = arith.constant 3 : i32
    %14 = vector.broadcast %c3_i32 : i32 to vector<8x1xi32>
    %15 = arith.cmpi sgt, %1, %14 : vector<8x1xi32>
    %16 = arith.extui %15 : vector<8x1xi1> to vector<8x1xi32>
    %17 = arith.sitofp %16 : vector<8x1xi32> to vector<8x1xf32>
    %c4_i32 = arith.constant 4 : i32
    %18 = vector.broadcast %c4_i32 : i32 to vector<8x1xi32>
    %19 = arith.cmpi sgt, %1, %18 : vector<8x1xi32>
    %20 = arith.extui %19 : vector<8x1xi1> to vector<8x1xi32>
    %21 = arith.sitofp %20 : vector<8x1xi32> to vector<8x1xf32>
    %c5_i32 = arith.constant 5 : i32
    %22 = vector.broadcast %c5_i32 : i32 to vector<8x1xi32>
    %23 = arith.cmpi sgt, %1, %22 : vector<8x1xi32>
    %24 = arith.extui %23 : vector<8x1xi1> to vector<8x1xi32>
    %25 = arith.sitofp %24 : vector<8x1xi32> to vector<8x1xf32>
    %c6_i32 = arith.constant 6 : i32
    %26 = vector.broadcast %c6_i32 : i32 to vector<8x1xi32>
    %27 = arith.cmpi sgt, %1, %26 : vector<8x1xi32>
    %28 = arith.extui %27 : vector<8x1xi1> to vector<8x1xi32>
    %29 = arith.sitofp %28 : vector<8x1xi32> to vector<8x1xf32>
    %c7_i32 = arith.constant 7 : i32
    %30 = vector.broadcast %c7_i32 : i32 to vector<8x1xi32>
    %31 = arith.cmpi sgt, %1, %30 : vector<8x1xi32>
    %32 = arith.extui %31 : vector<8x1xi1> to vector<8x1xi32>
    %33 = arith.sitofp %32 : vector<8x1xi32> to vector<8x1xf32>
    %34 = vector.shape_cast %0 : vector<8x8x16xf32> to vector<64x16xf32>
    %c0_4 = arith.constant 0 : index
    %c0_5 = arith.constant 0 : index
    %35 = vector.load %arg3[%c0_4, %c0_5] : memref<16x96xf32, #tpu.memory_space<vmem>>, vector<16x96xf32>
    %cst = arith.constant dense<0.000000e+00> : vector<64x96xf32>
    %36 = tpu.matmul %34, %35, %cst {dimension_numbers = #tpu.dot_dimension_numbers<[1], [0], [0], [1], [0, 0, 1, 1], [], []>} : vector<64x16xf32>, vector<16x96xf32>, vector<64x96xf32> -> vector<64x96xf32>
    %c0_6 = arith.constant 0 : index
    %c0_7 = arith.constant 0 : index
    %37 = vector.load %arg4[%c0_6, %c0_7] : memref<1x96xf32, #tpu.memory_space<vmem>>, vector<1x96xf32>
    %38 = vector.broadcast %37 : vector<1x96xf32> to vector<64x96xf32>
    %39 = arith.addf %36, %38 : vector<64x96xf32>
    %40 = vector.shape_cast %39 : vector<64x96xf32> to vector<8x8x96xf32>
    %c0_8 = arith.constant 0 : index
    %c0_9 = arith.constant 0 : index
    %c0_10 = arith.constant 0 : index
    %41 = vector.load %arg5[%c0_8, %c0_9, %c0_10] : memref<2x16x48xf32, #tpu.memory_space<vmem>>, vector<1x16x48xf32>
    %42 = vector.shape_cast %41 : vector<1x16x48xf32> to vector<16x48xf32>
    %c0_11 = arith.constant 0 : index
    %c0_12 = arith.constant 0 : index
    %c0_13 = arith.constant 0 : index
    %43 = vector.load %arg6[%c0_11, %c0_12, %c0_13] : memref<2x1x48xf32, #tpu.memory_space<vmem>>, vector<1x1x48xf32>
    %44 = vector.shape_cast %43 : vector<1x1x48xf32> to vector<1x48xf32>
    %cst_14 = arith.constant 0.000000e+00 : f32
    %45 = vector.broadcast %cst_14 : f32 to vector<8x16xf32>
    %46 = vector.extract_strided_slice %40 {offsets = [0, 0, 0], sizes = [8, 1, 48], strides = [1, 1, 1]} : vector<8x8x96xf32> to vector<8x1x48xf32>
    %47 = vector.shape_cast %46 : vector<8x1x48xf32> to vector<8x48xf32>
    %cst_15 = arith.constant dense<0.000000e+00> : vector<8x48xf32>
    %48 = tpu.matmul %45, %42, %cst_15 {dimension_numbers = #tpu.dot_dimension_numbers<[1], [0], [0], [1], [0, 0, 1, 1], [], []>} : vector<8x16xf32>, vector<16x48xf32>, vector<8x48xf32> -> vector<8x48xf32>
    %49 = vector.broadcast %44 : vector<1x48xf32> to vector<8x48xf32>
    %50 = arith.addf %48, %49 : vector<8x48xf32>
    %51 = vector.extract_strided_slice %47 {offsets = [0, 0], sizes = [8, 16], strides = [1, 1]} : vector<8x48xf32> to vector<8x16xf32>
    %52 = vector.extract_strided_slice %50 {offsets = [0, 0], sizes = [8, 16], strides = [1, 1]} : vector<8x48xf32> to vector<8x16xf32>
    %53 = arith.addf %51, %52 : vector<8x16xf32>
    %54 = arith.negf %53 : vector<8x16xf32>
    %55 = math.exp %54 : vector<8x16xf32>
    %cst_16 = arith.constant 1.000000e+00 : f32
    %56 = vector.broadcast %cst_16 : f32 to vector<8x16xf32>
    %57 = arith.addf %56, %55 : vector<8x16xf32>
    %58 = arith.divf %56, %57 : vector<8x16xf32>
    %59 = vector.extract_strided_slice %47 {offsets = [0, 16], sizes = [8, 16], strides = [1, 1]} : vector<8x48xf32> to vector<8x16xf32>
    %60 = vector.extract_strided_slice %50 {offsets = [0, 16], sizes = [8, 16], strides = [1, 1]} : vector<8x48xf32> to vector<8x16xf32>
    %61 = arith.addf %59, %60 : vector<8x16xf32>
    %62 = arith.negf %61 : vector<8x16xf32>
    %63 = math.exp %62 : vector<8x16xf32>
    %cst_17 = arith.constant 1.000000e+00 : f32
    %64 = vector.broadcast %cst_17 : f32 to vector<8x16xf32>
    %65 = arith.addf %64, %63 : vector<8x16xf32>
    %66 = arith.divf %64, %65 : vector<8x16xf32>
    %67 = vector.extract_strided_slice %47 {offsets = [0, 32], sizes = [8, 16], strides = [1, 1]} : vector<8x48xf32> to vector<8x16xf32>
    %68 = vector.extract_strided_slice %50 {offsets = [0, 32], sizes = [8, 16], strides = [1, 1]} : vector<8x48xf32> to vector<8x16xf32>
    %69 = arith.mulf %58, %68 : vector<8x16xf32>
    %70 = arith.addf %67, %69 : vector<8x16xf32>
    %71 = math.tanh %70 : vector<8x16xf32>
    %cst_18 = arith.constant 1.000000e+00 : f32
    %72 = vector.broadcast %cst_18 : f32 to vector<8x16xf32>
    %73 = arith.subf %72, %66 : vector<8x16xf32>
    %74 = arith.mulf %73, %71 : vector<8x16xf32>
    %75 = arith.mulf %66, %45 : vector<8x16xf32>
    %76 = arith.addf %74, %75 : vector<8x16xf32>
    %77 = vector.broadcast %5 : vector<8x1xf32> to vector<8x16xf32>
    %78 = arith.mulf %77, %76 : vector<8x16xf32>
    %cst_19 = arith.constant 1.000000e+00 : f32
    %79 = vector.broadcast %cst_19 : f32 to vector<8x1xf32>
    %80 = arith.subf %79, %5 : vector<8x1xf32>
    %81 = vector.broadcast %80 : vector<8x1xf32> to vector<8x16xf32>
    %82 = arith.mulf %81, %45 : vector<8x16xf32>
    %83 = arith.addf %78, %82 : vector<8x16xf32>
    %84 = vector.extract_strided_slice %40 {offsets = [0, 1, 0], sizes = [8, 1, 48], strides = [1, 1, 1]} : vector<8x8x96xf32> to vector<8x1x48xf32>
    %85 = vector.shape_cast %84 : vector<8x1x48xf32> to vector<8x48xf32>
    %cst_20 = arith.constant dense<0.000000e+00> : vector<8x48xf32>
    %86 = tpu.matmul %83, %42, %cst_20 {dimension_numbers = #tpu.dot_dimension_numbers<[1], [0], [0], [1], [0, 0, 1, 1], [], []>} : vector<8x16xf32>, vector<16x48xf32>, vector<8x48xf32> -> vector<8x48xf32>
    %87 = vector.broadcast %44 : vector<1x48xf32> to vector<8x48xf32>
    %88 = arith.addf %86, %87 : vector<8x48xf32>
    %89 = vector.extract_strided_slice %85 {offsets = [0, 0], sizes = [8, 16], strides = [1, 1]} : vector<8x48xf32> to vector<8x16xf32>
    %90 = vector.extract_strided_slice %88 {offsets = [0, 0], sizes = [8, 16], strides = [1, 1]} : vector<8x48xf32> to vector<8x16xf32>
    %91 = arith.addf %89, %90 : vector<8x16xf32>
    %92 = arith.negf %91 : vector<8x16xf32>
    %93 = math.exp %92 : vector<8x16xf32>
    %cst_21 = arith.constant 1.000000e+00 : f32
    %94 = vector.broadcast %cst_21 : f32 to vector<8x16xf32>
    %95 = arith.addf %94, %93 : vector<8x16xf32>
    %96 = arith.divf %94, %95 : vector<8x16xf32>
    %97 = vector.extract_strided_slice %85 {offsets = [0, 16], sizes = [8, 16], strides = [1, 1]} : vector<8x48xf32> to vector<8x16xf32>
    %98 = vector.extract_strided_slice %88 {offsets = [0, 16], sizes = [8, 16], strides = [1, 1]} : vector<8x48xf32> to vector<8x16xf32>
    %99 = arith.addf %97, %98 : vector<8x16xf32>
    %100 = arith.negf %99 : vector<8x16xf32>
    %101 = math.exp %100 : vector<8x16xf32>
    %cst_22 = arith.constant 1.000000e+00 : f32
    %102 = vector.broadcast %cst_22 : f32 to vector<8x16xf32>
    %103 = arith.addf %102, %101 : vector<8x16xf32>
    %104 = arith.divf %102, %103 : vector<8x16xf32>
    %105 = vector.extract_strided_slice %85 {offsets = [0, 32], sizes = [8, 16], strides = [1, 1]} : vector<8x48xf32> to vector<8x16xf32>
    %106 = vector.extract_strided_slice %88 {offsets = [0, 32], sizes = [8, 16], strides = [1, 1]} : vector<8x48xf32> to vector<8x16xf32>
    %107 = arith.mulf %96, %106 : vector<8x16xf32>
    %108 = arith.addf %105, %107 : vector<8x16xf32>
    %109 = math.tanh %108 : vector<8x16xf32>
    %cst_23 = arith.constant 1.000000e+00 : f32
    %110 = vector.broadcast %cst_23 : f32 to vector<8x16xf32>
    %111 = arith.subf %110, %104 : vector<8x16xf32>
    %112 = arith.mulf %111, %109 : vector<8x16xf32>
    %113 = arith.mulf %104, %83 : vector<8x16xf32>
    %114 = arith.addf %112, %113 : vector<8x16xf32>
    %115 = vector.broadcast %9 : vector<8x1xf32> to vector<8x16xf32>
    %116 = arith.mulf %115, %114 : vector<8x16xf32>
    %cst_24 = arith.constant 1.000000e+00 : f32
    %117 = vector.broadcast %cst_24 : f32 to vector<8x1xf32>
    %118 = arith.subf %117, %9 : vector<8x1xf32>
    %119 = vector.broadcast %118 : vector<8x1xf32> to vector<8x16xf32>
    %120 = arith.mulf %119, %83 : vector<8x16xf32>
    %121 = arith.addf %116, %120 : vector<8x16xf32>
    %122 = vector.extract_strided_slice %40 {offsets = [0, 2, 0], sizes = [8, 1, 48], strides = [1, 1, 1]} : vector<8x8x96xf32> to vector<8x1x48xf32>
    %123 = vector.shape_cast %122 : vector<8x1x48xf32> to vector<8x48xf32>
    %cst_25 = arith.constant dense<0.000000e+00> : vector<8x48xf32>
    %124 = tpu.matmul %121, %42, %cst_25 {dimension_numbers = #tpu.dot_dimension_numbers<[1], [0], [0], [1], [0, 0, 1, 1], [], []>} : vector<8x16xf32>, vector<16x48xf32>, vector<8x48xf32> -> vector<8x48xf32>
    %125 = vector.broadcast %44 : vector<1x48xf32> to vector<8x48xf32>
    %126 = arith.addf %124, %125 : vector<8x48xf32>
    %127 = vector.extract_strided_slice %123 {offsets = [0, 0], sizes = [8, 16], strides = [1, 1]} : vector<8x48xf32> to vector<8x16xf32>
    %128 = vector.extract_strided_slice %126 {offsets = [0, 0], sizes = [8, 16], strides = [1, 1]} : vector<8x48xf32> to vector<8x16xf32>
    %129 = arith.addf %127, %128 : vector<8x16xf32>
    %130 = arith.negf %129 : vector<8x16xf32>
    %131 = math.exp %130 : vector<8x16xf32>
    %cst_26 = arith.constant 1.000000e+00 : f32
    %132 = vector.broadcast %cst_26 : f32 to vector<8x16xf32>
    %133 = arith.addf %132, %131 : vector<8x16xf32>
    %134 = arith.divf %132, %133 : vector<8x16xf32>
    %135 = vector.extract_strided_slice %123 {offsets = [0, 16], sizes = [8, 16], strides = [1, 1]} : vector<8x48xf32> to vector<8x16xf32>
    %136 = vector.extract_strided_slice %126 {offsets = [0, 16], sizes = [8, 16], strides = [1, 1]} : vector<8x48xf32> to vector<8x16xf32>
    %137 = arith.addf %135, %136 : vector<8x16xf32>
    %138 = arith.negf %137 : vector<8x16xf32>
    %139 = math.exp %138 : vector<8x16xf32>
    %cst_27 = arith.constant 1.000000e+00 : f32
    %140 = vector.broadcast %cst_27 : f32 to vector<8x16xf32>
    %141 = arith.addf %140, %139 : vector<8x16xf32>
    %142 = arith.divf %140, %141 : vector<8x16xf32>
    %143 = vector.extract_strided_slice %123 {offsets = [0, 32], sizes = [8, 16], strides = [1, 1]} : vector<8x48xf32> to vector<8x16xf32>
    %144 = vector.extract_strided_slice %126 {offsets = [0, 32], sizes = [8, 16], strides = [1, 1]} : vector<8x48xf32> to vector<8x16xf32>
    %145 = arith.mulf %134, %144 : vector<8x16xf32>
    %146 = arith.addf %143, %145 : vector<8x16xf32>
    %147 = math.tanh %146 : vector<8x16xf32>
    %cst_28 = arith.constant 1.000000e+00 : f32
    %148 = vector.broadcast %cst_28 : f32 to vector<8x16xf32>
    %149 = arith.subf %148, %142 : vector<8x16xf32>
    %150 = arith.mulf %149, %147 : vector<8x16xf32>
    %151 = arith.mulf %142, %121 : vector<8x16xf32>
    %152 = arith.addf %150, %151 : vector<8x16xf32>
    %153 = vector.broadcast %13 : vector<8x1xf32> to vector<8x16xf32>
    %154 = arith.mulf %153, %152 : vector<8x16xf32>
    %cst_29 = arith.constant 1.000000e+00 : f32
    %155 = vector.broadcast %cst_29 : f32 to vector<8x1xf32>
    %156 = arith.subf %155, %13 : vector<8x1xf32>
    %157 = vector.broadcast %156 : vector<8x1xf32> to vector<8x16xf32>
    %158 = arith.mulf %157, %121 : vector<8x16xf32>
    %159 = arith.addf %154, %158 : vector<8x16xf32>
    %160 = vector.extract_strided_slice %40 {offsets = [0, 3, 0], sizes = [8, 1, 48], strides = [1, 1, 1]} : vector<8x8x96xf32> to vector<8x1x48xf32>
    %161 = vector.shape_cast %160 : vector<8x1x48xf32> to vector<8x48xf32>
    %cst_30 = arith.constant dense<0.000000e+00> : vector<8x48xf32>
    %162 = tpu.matmul %159, %42, %cst_30 {dimension_numbers = #tpu.dot_dimension_numbers<[1], [0], [0], [1], [0, 0, 1, 1], [], []>} : vector<8x16xf32>, vector<16x48xf32>, vector<8x48xf32> -> vector<8x48xf32>
    %163 = vector.broadcast %44 : vector<1x48xf32> to vector<8x48xf32>
    %164 = arith.addf %162, %163 : vector<8x48xf32>
    %165 = vector.extract_strided_slice %161 {offsets = [0, 0], sizes = [8, 16], strides = [1, 1]} : vector<8x48xf32> to vector<8x16xf32>
    %166 = vector.extract_strided_slice %164 {offsets = [0, 0], sizes = [8, 16], strides = [1, 1]} : vector<8x48xf32> to vector<8x16xf32>
    %167 = arith.addf %165, %166 : vector<8x16xf32>
    %168 = arith.negf %167 : vector<8x16xf32>
    %169 = math.exp %168 : vector<8x16xf32>
    %cst_31 = arith.constant 1.000000e+00 : f32
    %170 = vector.broadcast %cst_31 : f32 to vector<8x16xf32>
    %171 = arith.addf %170, %169 : vector<8x16xf32>
    %172 = arith.divf %170, %171 : vector<8x16xf32>
    %173 = vector.extract_strided_slice %161 {offsets = [0, 16], sizes = [8, 16], strides = [1, 1]} : vector<8x48xf32> to vector<8x16xf32>
    %174 = vector.extract_strided_slice %164 {offsets = [0, 16], sizes = [8, 16], strides = [1, 1]} : vector<8x48xf32> to vector<8x16xf32>
    %175 = arith.addf %173, %174 : vector<8x16xf32>
    %176 = arith.negf %175 : vector<8x16xf32>
    %177 = math.exp %176 : vector<8x16xf32>
    %cst_32 = arith.constant 1.000000e+00 : f32
    %178 = vector.broadcast %cst_32 : f32 to vector<8x16xf32>
    %179 = arith.addf %178, %177 : vector<8x16xf32>
    %180 = arith.divf %178, %179 : vector<8x16xf32>
    %181 = vector.extract_strided_slice %161 {offsets = [0, 32], sizes = [8, 16], strides = [1, 1]} : vector<8x48xf32> to vector<8x16xf32>
    %182 = vector.extract_strided_slice %164 {offsets = [0, 32], sizes = [8, 16], strides = [1, 1]} : vector<8x48xf32> to vector<8x16xf32>
    %183 = arith.mulf %172, %182 : vector<8x16xf32>
    %184 = arith.addf %181, %183 : vector<8x16xf32>
    %185 = math.tanh %184 : vector<8x16xf32>
    %cst_33 = arith.constant 1.000000e+00 : f32
    %186 = vector.broadcast %cst_33 : f32 to vector<8x16xf32>
    %187 = arith.subf %186, %180 : vector<8x16xf32>
    %188 = arith.mulf %187, %185 : vector<8x16xf32>
    %189 = arith.mulf %180, %159 : vector<8x16xf32>
    %190 = arith.addf %188, %189 : vector<8x16xf32>
    %191 = vector.broadcast %17 : vector<8x1xf32> to vector<8x16xf32>
    %192 = arith.mulf %191, %190 : vector<8x16xf32>
    %cst_34 = arith.constant 1.000000e+00 : f32
    %193 = vector.broadcast %cst_34 : f32 to vector<8x1xf32>
    %194 = arith.subf %193, %17 : vector<8x1xf32>
    %195 = vector.broadcast %194 : vector<8x1xf32> to vector<8x16xf32>
    %196 = arith.mulf %195, %159 : vector<8x16xf32>
    %197 = arith.addf %192, %196 : vector<8x16xf32>
    %198 = vector.extract_strided_slice %40 {offsets = [0, 4, 0], sizes = [8, 1, 48], strides = [1, 1, 1]} : vector<8x8x96xf32> to vector<8x1x48xf32>
    %199 = vector.shape_cast %198 : vector<8x1x48xf32> to vector<8x48xf32>
    %cst_35 = arith.constant dense<0.000000e+00> : vector<8x48xf32>
    %200 = tpu.matmul %197, %42, %cst_35 {dimension_numbers = #tpu.dot_dimension_numbers<[1], [0], [0], [1], [0, 0, 1, 1], [], []>} : vector<8x16xf32>, vector<16x48xf32>, vector<8x48xf32> -> vector<8x48xf32>
    %201 = vector.broadcast %44 : vector<1x48xf32> to vector<8x48xf32>
    %202 = arith.addf %200, %201 : vector<8x48xf32>
    %203 = vector.extract_strided_slice %199 {offsets = [0, 0], sizes = [8, 16], strides = [1, 1]} : vector<8x48xf32> to vector<8x16xf32>
    %204 = vector.extract_strided_slice %202 {offsets = [0, 0], sizes = [8, 16], strides = [1, 1]} : vector<8x48xf32> to vector<8x16xf32>
    %205 = arith.addf %203, %204 : vector<8x16xf32>
    %206 = arith.negf %205 : vector<8x16xf32>
    %207 = math.exp %206 : vector<8x16xf32>
    %cst_36 = arith.constant 1.000000e+00 : f32
    %208 = vector.broadcast %cst_36 : f32 to vector<8x16xf32>
    %209 = arith.addf %208, %207 : vector<8x16xf32>
    %210 = arith.divf %208, %209 : vector<8x16xf32>
    %211 = vector.extract_strided_slice %199 {offsets = [0, 16], sizes = [8, 16], strides = [1, 1]} : vector<8x48xf32> to vector<8x16xf32>
    %212 = vector.extract_strided_slice %202 {offsets = [0, 16], sizes = [8, 16], strides = [1, 1]} : vector<8x48xf32> to vector<8x16xf32>
    %213 = arith.addf %211, %212 : vector<8x16xf32>
    %214 = arith.negf %213 : vector<8x16xf32>
    %215 = math.exp %214 : vector<8x16xf32>
    %cst_37 = arith.constant 1.000000e+00 : f32
    %216 = vector.broadcast %cst_37 : f32 to vector<8x16xf32>
    %217 = arith.addf %216, %215 : vector<8x16xf32>
    %218 = arith.divf %216, %217 : vector<8x16xf32>
    %219 = vector.extract_strided_slice %199 {offsets = [0, 32], sizes = [8, 16], strides = [1, 1]} : vector<8x48xf32> to vector<8x16xf32>
    %220 = vector.extract_strided_slice %202 {offsets = [0, 32], sizes = [8, 16], strides = [1, 1]} : vector<8x48xf32> to vector<8x16xf32>
    %221 = arith.mulf %210, %220 : vector<8x16xf32>
    %222 = arith.addf %219, %221 : vector<8x16xf32>
    %223 = math.tanh %222 : vector<8x16xf32>
    %cst_38 = arith.constant 1.000000e+00 : f32
    %224 = vector.broadcast %cst_38 : f32 to vector<8x16xf32>
    %225 = arith.subf %224, %218 : vector<8x16xf32>
    %226 = arith.mulf %225, %223 : vector<8x16xf32>
    %227 = arith.mulf %218, %197 : vector<8x16xf32>
    %228 = arith.addf %226, %227 : vector<8x16xf32>
    %229 = vector.broadcast %21 : vector<8x1xf32> to vector<8x16xf32>
    %230 = arith.mulf %229, %228 : vector<8x16xf32>
    %cst_39 = arith.constant 1.000000e+00 : f32
    %231 = vector.broadcast %cst_39 : f32 to vector<8x1xf32>
    %232 = arith.subf %231, %21 : vector<8x1xf32>
    %233 = vector.broadcast %232 : vector<8x1xf32> to vector<8x16xf32>
    %234 = arith.mulf %233, %197 : vector<8x16xf32>
    %235 = arith.addf %230, %234 : vector<8x16xf32>
    %236 = vector.extract_strided_slice %40 {offsets = [0, 5, 0], sizes = [8, 1, 48], strides = [1, 1, 1]} : vector<8x8x96xf32> to vector<8x1x48xf32>
    %237 = vector.shape_cast %236 : vector<8x1x48xf32> to vector<8x48xf32>
    %cst_40 = arith.constant dense<0.000000e+00> : vector<8x48xf32>
    %238 = tpu.matmul %235, %42, %cst_40 {dimension_numbers = #tpu.dot_dimension_numbers<[1], [0], [0], [1], [0, 0, 1, 1], [], []>} : vector<8x16xf32>, vector<16x48xf32>, vector<8x48xf32> -> vector<8x48xf32>
    %239 = vector.broadcast %44 : vector<1x48xf32> to vector<8x48xf32>
    %240 = arith.addf %238, %239 : vector<8x48xf32>
    %241 = vector.extract_strided_slice %237 {offsets = [0, 0], sizes = [8, 16], strides = [1, 1]} : vector<8x48xf32> to vector<8x16xf32>
    %242 = vector.extract_strided_slice %240 {offsets = [0, 0], sizes = [8, 16], strides = [1, 1]} : vector<8x48xf32> to vector<8x16xf32>
    %243 = arith.addf %241, %242 : vector<8x16xf32>
    %244 = arith.negf %243 : vector<8x16xf32>
    %245 = math.exp %244 : vector<8x16xf32>
    %cst_41 = arith.constant 1.000000e+00 : f32
    %246 = vector.broadcast %cst_41 : f32 to vector<8x16xf32>
    %247 = arith.addf %246, %245 : vector<8x16xf32>
    %248 = arith.divf %246, %247 : vector<8x16xf32>
    %249 = vector.extract_strided_slice %237 {offsets = [0, 16], sizes = [8, 16], strides = [1, 1]} : vector<8x48xf32> to vector<8x16xf32>
    %250 = vector.extract_strided_slice %240 {offsets = [0, 16], sizes = [8, 16], strides = [1, 1]} : vector<8x48xf32> to vector<8x16xf32>
    %251 = arith.addf %249, %250 : vector<8x16xf32>
    %252 = arith.negf %251 : vector<8x16xf32>
    %253 = math.exp %252 : vector<8x16xf32>
    %cst_42 = arith.constant 1.000000e+00 : f32
    %254 = vector.broadcast %cst_42 : f32 to vector<8x16xf32>
    %255 = arith.addf %254, %253 : vector<8x16xf32>
    %256 = arith.divf %254, %255 : vector<8x16xf32>
    %257 = vector.extract_strided_slice %237 {offsets = [0, 32], sizes = [8, 16], strides = [1, 1]} : vector<8x48xf32> to vector<8x16xf32>
    %258 = vector.extract_strided_slice %240 {offsets = [0, 32], sizes = [8, 16], strides = [1, 1]} : vector<8x48xf32> to vector<8x16xf32>
    %259 = arith.mulf %248, %258 : vector<8x16xf32>
    %260 = arith.addf %257, %259 : vector<8x16xf32>
    %261 = math.tanh %260 : vector<8x16xf32>
    %cst_43 = arith.constant 1.000000e+00 : f32
    %262 = vector.broadcast %cst_43 : f32 to vector<8x16xf32>
    %263 = arith.subf %262, %256 : vector<8x16xf32>
    %264 = arith.mulf %263, %261 : vector<8x16xf32>
    %265 = arith.mulf %256, %235 : vector<8x16xf32>
    %266 = arith.addf %264, %265 : vector<8x16xf32>
    %267 = vector.broadcast %25 : vector<8x1xf32> to vector<8x16xf32>
    %268 = arith.mulf %267, %266 : vector<8x16xf32>
    %cst_44 = arith.constant 1.000000e+00 : f32
    %269 = vector.broadcast %cst_44 : f32 to vector<8x1xf32>
    %270 = arith.subf %269, %25 : vector<8x1xf32>
    %271 = vector.broadcast %270 : vector<8x1xf32> to vector<8x16xf32>
    %272 = arith.mulf %271, %235 : vector<8x16xf32>
    %273 = arith.addf %268, %272 : vector<8x16xf32>
    %274 = vector.extract_strided_slice %40 {offsets = [0, 6, 0], sizes = [8, 1, 48], strides = [1, 1, 1]} : vector<8x8x96xf32> to vector<8x1x48xf32>
    %275 = vector.shape_cast %274 : vector<8x1x48xf32> to vector<8x48xf32>
    %cst_45 = arith.constant dense<0.000000e+00> : vector<8x48xf32>
    %276 = tpu.matmul %273, %42, %cst_45 {dimension_numbers = #tpu.dot_dimension_numbers<[1], [0], [0], [1], [0, 0, 1, 1], [], []>} : vector<8x16xf32>, vector<16x48xf32>, vector<8x48xf32> -> vector<8x48xf32>
    %277 = vector.broadcast %44 : vector<1x48xf32> to vector<8x48xf32>
    %278 = arith.addf %276, %277 : vector<8x48xf32>
    %279 = vector.extract_strided_slice %275 {offsets = [0, 0], sizes = [8, 16], strides = [1, 1]} : vector<8x48xf32> to vector<8x16xf32>
    %280 = vector.extract_strided_slice %278 {offsets = [0, 0], sizes = [8, 16], strides = [1, 1]} : vector<8x48xf32> to vector<8x16xf32>
    %281 = arith.addf %279, %280 : vector<8x16xf32>
    %282 = arith.negf %281 : vector<8x16xf32>
    %283 = math.exp %282 : vector<8x16xf32>
    %cst_46 = arith.constant 1.000000e+00 : f32
    %284 = vector.broadcast %cst_46 : f32 to vector<8x16xf32>
    %285 = arith.addf %284, %283 : vector<8x16xf32>
    %286 = arith.divf %284, %285 : vector<8x16xf32>
    %287 = vector.extract_strided_slice %275 {offsets = [0, 16], sizes = [8, 16], strides = [1, 1]} : vector<8x48xf32> to vector<8x16xf32>
    %288 = vector.extract_strided_slice %278 {offsets = [0, 16], sizes = [8, 16], strides = [1, 1]} : vector<8x48xf32> to vector<8x16xf32>
    %289 = arith.addf %287, %288 : vector<8x16xf32>
    %290 = arith.negf %289 : vector<8x16xf32>
    %291 = math.exp %290 : vector<8x16xf32>
    %cst_47 = arith.constant 1.000000e+00 : f32
    %292 = vector.broadcast %cst_47 : f32 to vector<8x16xf32>
    %293 = arith.addf %292, %291 : vector<8x16xf32>
    %294 = arith.divf %292, %293 : vector<8x16xf32>
    %295 = vector.extract_strided_slice %275 {offsets = [0, 32], sizes = [8, 16], strides = [1, 1]} : vector<8x48xf32> to vector<8x16xf32>
    %296 = vector.extract_strided_slice %278 {offsets = [0, 32], sizes = [8, 16], strides = [1, 1]} : vector<8x48xf32> to vector<8x16xf32>
    %297 = arith.mulf %286, %296 : vector<8x16xf32>
    %298 = arith.addf %295, %297 : vector<8x16xf32>
    %299 = math.tanh %298 : vector<8x16xf32>
    %cst_48 = arith.constant 1.000000e+00 : f32
    %300 = vector.broadcast %cst_48 : f32 to vector<8x16xf32>
    %301 = arith.subf %300, %294 : vector<8x16xf32>
    %302 = arith.mulf %301, %299 : vector<8x16xf32>
    %303 = arith.mulf %294, %273 : vector<8x16xf32>
    %304 = arith.addf %302, %303 : vector<8x16xf32>
    %305 = vector.broadcast %29 : vector<8x1xf32> to vector<8x16xf32>
    %306 = arith.mulf %305, %304 : vector<8x16xf32>
    %cst_49 = arith.constant 1.000000e+00 : f32
    %307 = vector.broadcast %cst_49 : f32 to vector<8x1xf32>
    %308 = arith.subf %307, %29 : vector<8x1xf32>
    %309 = vector.broadcast %308 : vector<8x1xf32> to vector<8x16xf32>
    %310 = arith.mulf %309, %273 : vector<8x16xf32>
    %311 = arith.addf %306, %310 : vector<8x16xf32>
    %312 = vector.extract_strided_slice %40 {offsets = [0, 7, 0], sizes = [8, 1, 48], strides = [1, 1, 1]} : vector<8x8x96xf32> to vector<8x1x48xf32>
    %313 = vector.shape_cast %312 : vector<8x1x48xf32> to vector<8x48xf32>
    %cst_50 = arith.constant dense<0.000000e+00> : vector<8x48xf32>
    %314 = tpu.matmul %311, %42, %cst_50 {dimension_numbers = #tpu.dot_dimension_numbers<[1], [0], [0], [1], [0, 0, 1, 1], [], []>} : vector<8x16xf32>, vector<16x48xf32>, vector<8x48xf32> -> vector<8x48xf32>
    %315 = vector.broadcast %44 : vector<1x48xf32> to vector<8x48xf32>
    %316 = arith.addf %314, %315 : vector<8x48xf32>
    %317 = vector.extract_strided_slice %313 {offsets = [0, 0], sizes = [8, 16], strides = [1, 1]} : vector<8x48xf32> to vector<8x16xf32>
    %318 = vector.extract_strided_slice %316 {offsets = [0, 0], sizes = [8, 16], strides = [1, 1]} : vector<8x48xf32> to vector<8x16xf32>
    %319 = arith.addf %317, %318 : vector<8x16xf32>
    %320 = arith.negf %319 : vector<8x16xf32>
    %321 = math.exp %320 : vector<8x16xf32>
    %cst_51 = arith.constant 1.000000e+00 : f32
    %322 = vector.broadcast %cst_51 : f32 to vector<8x16xf32>
    %323 = arith.addf %322, %321 : vector<8x16xf32>
    %324 = arith.divf %322, %323 : vector<8x16xf32>
    %325 = vector.extract_strided_slice %313 {offsets = [0, 16], sizes = [8, 16], strides = [1, 1]} : vector<8x48xf32> to vector<8x16xf32>
    %326 = vector.extract_strided_slice %316 {offsets = [0, 16], sizes = [8, 16], strides = [1, 1]} : vector<8x48xf32> to vector<8x16xf32>
    %327 = arith.addf %325, %326 : vector<8x16xf32>
    %328 = arith.negf %327 : vector<8x16xf32>
    %329 = math.exp %328 : vector<8x16xf32>
    %cst_52 = arith.constant 1.000000e+00 : f32
    %330 = vector.broadcast %cst_52 : f32 to vector<8x16xf32>
    %331 = arith.addf %330, %329 : vector<8x16xf32>
    %332 = arith.divf %330, %331 : vector<8x16xf32>
    %333 = vector.extract_strided_slice %313 {offsets = [0, 32], sizes = [8, 16], strides = [1, 1]} : vector<8x48xf32> to vector<8x16xf32>
    %334 = vector.extract_strided_slice %316 {offsets = [0, 32], sizes = [8, 16], strides = [1, 1]} : vector<8x48xf32> to vector<8x16xf32>
    %335 = arith.mulf %324, %334 : vector<8x16xf32>
    %336 = arith.addf %333, %335 : vector<8x16xf32>
    %337 = math.tanh %336 : vector<8x16xf32>
    %cst_53 = arith.constant 1.000000e+00 : f32
    %338 = vector.broadcast %cst_53 : f32 to vector<8x16xf32>
    %339 = arith.subf %338, %332 : vector<8x16xf32>
    %340 = arith.mulf %339, %337 : vector<8x16xf32>
    %341 = arith.mulf %332, %311 : vector<8x16xf32>
    %342 = arith.addf %340, %341 : vector<8x16xf32>
    %343 = vector.broadcast %33 : vector<8x1xf32> to vector<8x16xf32>
    %344 = arith.mulf %343, %342 : vector<8x16xf32>
    %c1 = arith.constant 1 : index
    %c0_54 = arith.constant 0 : index
    %c0_55 = arith.constant 0 : index
    %345 = vector.load %arg5[%c1, %c0_54, %c0_55] : memref<2x16x48xf32, #tpu.memory_space<vmem>>, vector<1x16x48xf32>
    %346 = vector.shape_cast %345 : vector<1x16x48xf32> to vector<16x48xf32>
    %c1_56 = arith.constant 1 : index
    %c0_57 = arith.constant 0 : index
    %c0_58 = arith.constant 0 : index
    %347 = vector.load %arg6[%c1_56, %c0_57, %c0_58] : memref<2x1x48xf32, #tpu.memory_space<vmem>>, vector<1x1x48xf32>
    %348 = vector.shape_cast %347 : vector<1x1x48xf32> to vector<1x48xf32>
    %cst_59 = arith.constant 0.000000e+00 : f32
    %349 = vector.broadcast %cst_59 : f32 to vector<8x16xf32>
    %350 = vector.extract_strided_slice %40 {offsets = [0, 7, 48], sizes = [8, 1, 48], strides = [1, 1, 1]} : vector<8x8x96xf32> to vector<8x1x48xf32>
    %351 = vector.shape_cast %350 : vector<8x1x48xf32> to vector<8x48xf32>
    %cst_60 = arith.constant dense<0.000000e+00> : vector<8x48xf32>
    %352 = tpu.matmul %349, %346, %cst_60 {dimension_numbers = #tpu.dot_dimension_numbers<[1], [0], [0], [1], [0, 0, 1, 1], [], []>} : vector<8x16xf32>, vector<16x48xf32>, vector<8x48xf32> -> vector<8x48xf32>
    %353 = vector.broadcast %348 : vector<1x48xf32> to vector<8x48xf32>
    %354 = arith.addf %352, %353 : vector<8x48xf32>
    %355 = vector.extract_strided_slice %351 {offsets = [0, 0], sizes = [8, 16], strides = [1, 1]} : vector<8x48xf32> to vector<8x16xf32>
    %356 = vector.extract_strided_slice %354 {offsets = [0, 0], sizes = [8, 16], strides = [1, 1]} : vector<8x48xf32> to vector<8x16xf32>
    %357 = arith.addf %355, %356 : vector<8x16xf32>
    %358 = arith.negf %357 : vector<8x16xf32>
    %359 = math.exp %358 : vector<8x16xf32>
    %cst_61 = arith.constant 1.000000e+00 : f32
    %360 = vector.broadcast %cst_61 : f32 to vector<8x16xf32>
    %361 = arith.addf %360, %359 : vector<8x16xf32>
    %362 = arith.divf %360, %361 : vector<8x16xf32>
    %363 = vector.extract_strided_slice %351 {offsets = [0, 16], sizes = [8, 16], strides = [1, 1]} : vector<8x48xf32> to vector<8x16xf32>
    %364 = vector.extract_strided_slice %354 {offsets = [0, 16], sizes = [8, 16], strides = [1, 1]} : vector<8x48xf32> to vector<8x16xf32>
    %365 = arith.addf %363, %364 : vector<8x16xf32>
    %366 = arith.negf %365 : vector<8x16xf32>
    %367 = math.exp %366 : vector<8x16xf32>
    %cst_62 = arith.constant 1.000000e+00 : f32
    %368 = vector.broadcast %cst_62 : f32 to vector<8x16xf32>
    %369 = arith.addf %368, %367 : vector<8x16xf32>
    %370 = arith.divf %368, %369 : vector<8x16xf32>
    %371 = vector.extract_strided_slice %351 {offsets = [0, 32], sizes = [8, 16], strides = [1, 1]} : vector<8x48xf32> to vector<8x16xf32>
    %372 = vector.extract_strided_slice %354 {offsets = [0, 32], sizes = [8, 16], strides = [1, 1]} : vector<8x48xf32> to vector<8x16xf32>
    %373 = arith.mulf %362, %372 : vector<8x16xf32>
    %374 = arith.addf %371, %373 : vector<8x16xf32>
    %375 = math.tanh %374 : vector<8x16xf32>
    %cst_63 = arith.constant 1.000000e+00 : f32
    %376 = vector.broadcast %cst_63 : f32 to vector<8x16xf32>
    %377 = arith.subf %376, %370 : vector<8x16xf32>
    %378 = arith.mulf %377, %375 : vector<8x16xf32>
    %379 = arith.mulf %370, %349 : vector<8x16xf32>
    %380 = arith.addf %378, %379 : vector<8x16xf32>
    %381 = vector.broadcast %33 : vector<8x1xf32> to vector<8x16xf32>
    %382 = arith.mulf %381, %380 : vector<8x16xf32>
    %cst_64 = arith.constant 1.000000e+00 : f32
    %383 = vector.broadcast %cst_64 : f32 to vector<8x1xf32>
    %384 = arith.subf %383, %33 : vector<8x1xf32>
    %385 = vector.broadcast %384 : vector<8x1xf32> to vector<8x16xf32>
    %386 = arith.mulf %385, %349 : vector<8x16xf32>
    %387 = arith.addf %382, %386 : vector<8x16xf32>
    %388 = vector.extract_strided_slice %40 {offsets = [0, 6, 48], sizes = [8, 1, 48], strides = [1, 1, 1]} : vector<8x8x96xf32> to vector<8x1x48xf32>
    %389 = vector.shape_cast %388 : vector<8x1x48xf32> to vector<8x48xf32>
    %cst_65 = arith.constant dense<0.000000e+00> : vector<8x48xf32>
    %390 = tpu.matmul %387, %346, %cst_65 {dimension_numbers = #tpu.dot_dimension_numbers<[1], [0], [0], [1], [0, 0, 1, 1], [], []>} : vector<8x16xf32>, vector<16x48xf32>, vector<8x48xf32> -> vector<8x48xf32>
    %391 = vector.broadcast %348 : vector<1x48xf32> to vector<8x48xf32>
    %392 = arith.addf %390, %391 : vector<8x48xf32>
    %393 = vector.extract_strided_slice %389 {offsets = [0, 0], sizes = [8, 16], strides = [1, 1]} : vector<8x48xf32> to vector<8x16xf32>
    %394 = vector.extract_strided_slice %392 {offsets = [0, 0], sizes = [8, 16], strides = [1, 1]} : vector<8x48xf32> to vector<8x16xf32>
    %395 = arith.addf %393, %394 : vector<8x16xf32>
    %396 = arith.negf %395 : vector<8x16xf32>
    %397 = math.exp %396 : vector<8x16xf32>
    %cst_66 = arith.constant 1.000000e+00 : f32
    %398 = vector.broadcast %cst_66 : f32 to vector<8x16xf32>
    %399 = arith.addf %398, %397 : vector<8x16xf32>
    %400 = arith.divf %398, %399 : vector<8x16xf32>
    %401 = vector.extract_strided_slice %389 {offsets = [0, 16], sizes = [8, 16], strides = [1, 1]} : vector<8x48xf32> to vector<8x16xf32>
    %402 = vector.extract_strided_slice %392 {offsets = [0, 16], sizes = [8, 16], strides = [1, 1]} : vector<8x48xf32> to vector<8x16xf32>
    %403 = arith.addf %401, %402 : vector<8x16xf32>
    %404 = arith.negf %403 : vector<8x16xf32>
    %405 = math.exp %404 : vector<8x16xf32>
    %cst_67 = arith.constant 1.000000e+00 : f32
    %406 = vector.broadcast %cst_67 : f32 to vector<8x16xf32>
    %407 = arith.addf %406, %405 : vector<8x16xf32>
    %408 = arith.divf %406, %407 : vector<8x16xf32>
    %409 = vector.extract_strided_slice %389 {offsets = [0, 32], sizes = [8, 16], strides = [1, 1]} : vector<8x48xf32> to vector<8x16xf32>
    %410 = vector.extract_strided_slice %392 {offsets = [0, 32], sizes = [8, 16], strides = [1, 1]} : vector<8x48xf32> to vector<8x16xf32>
    %411 = arith.mulf %400, %410 : vector<8x16xf32>
    %412 = arith.addf %409, %411 : vector<8x16xf32>
    %413 = math.tanh %412 : vector<8x16xf32>
    %cst_68 = arith.constant 1.000000e+00 : f32
    %414 = vector.broadcast %cst_68 : f32 to vector<8x16xf32>
    %415 = arith.subf %414, %408 : vector<8x16xf32>
    %416 = arith.mulf %415, %413 : vector<8x16xf32>
    %417 = arith.mulf %408, %387 : vector<8x16xf32>
    %418 = arith.addf %416, %417 : vector<8x16xf32>
    %419 = vector.broadcast %29 : vector<8x1xf32> to vector<8x16xf32>
    %420 = arith.mulf %419, %418 : vector<8x16xf32>
    %cst_69 = arith.constant 1.000000e+00 : f32
    %421 = vector.broadcast %cst_69 : f32 to vector<8x1xf32>
    %422 = arith.subf %421, %29 : vector<8x1xf32>
    %423 = vector.broadcast %422 : vector<8x1xf32> to vector<8x16xf32>
    %424 = arith.mulf %423, %387 : vector<8x16xf32>
    %425 = arith.addf %420, %424 : vector<8x16xf32>
    %426 = vector.extract_strided_slice %40 {offsets = [0, 5, 48], sizes = [8, 1, 48], strides = [1, 1, 1]} : vector<8x8x96xf32> to vector<8x1x48xf32>
    %427 = vector.shape_cast %426 : vector<8x1x48xf32> to vector<8x48xf32>
    %cst_70 = arith.constant dense<0.000000e+00> : vector<8x48xf32>
    %428 = tpu.matmul %425, %346, %cst_70 {dimension_numbers = #tpu.dot_dimension_numbers<[1], [0], [0], [1], [0, 0, 1, 1], [], []>} : vector<8x16xf32>, vector<16x48xf32>, vector<8x48xf32> -> vector<8x48xf32>
    %429 = vector.broadcast %348 : vector<1x48xf32> to vector<8x48xf32>
    %430 = arith.addf %428, %429 : vector<8x48xf32>
    %431 = vector.extract_strided_slice %427 {offsets = [0, 0], sizes = [8, 16], strides = [1, 1]} : vector<8x48xf32> to vector<8x16xf32>
    %432 = vector.extract_strided_slice %430 {offsets = [0, 0], sizes = [8, 16], strides = [1, 1]} : vector<8x48xf32> to vector<8x16xf32>
    %433 = arith.addf %431, %432 : vector<8x16xf32>
    %434 = arith.negf %433 : vector<8x16xf32>
    %435 = math.exp %434 : vector<8x16xf32>
    %cst_71 = arith.constant 1.000000e+00 : f32
    %436 = vector.broadcast %cst_71 : f32 to vector<8x16xf32>
    %437 = arith.addf %436, %435 : vector<8x16xf32>
    %438 = arith.divf %436, %437 : vector<8x16xf32>
    %439 = vector.extract_strided_slice %427 {offsets = [0, 16], sizes = [8, 16], strides = [1, 1]} : vector<8x48xf32> to vector<8x16xf32>
    %440 = vector.extract_strided_slice %430 {offsets = [0, 16], sizes = [8, 16], strides = [1, 1]} : vector<8x48xf32> to vector<8x16xf32>
    %441 = arith.addf %439, %440 : vector<8x16xf32>
    %442 = arith.negf %441 : vector<8x16xf32>
    %443 = math.exp %442 : vector<8x16xf32>
    %cst_72 = arith.constant 1.000000e+00 : f32
    %444 = vector.broadcast %cst_72 : f32 to vector<8x16xf32>
    %445 = arith.addf %444, %443 : vector<8x16xf32>
    %446 = arith.divf %444, %445 : vector<8x16xf32>
    %447 = vector.extract_strided_slice %427 {offsets = [0, 32], sizes = [8, 16], strides = [1, 1]} : vector<8x48xf32> to vector<8x16xf32>
    %448 = vector.extract_strided_slice %430 {offsets = [0, 32], sizes = [8, 16], strides = [1, 1]} : vector<8x48xf32> to vector<8x16xf32>
    %449 = arith.mulf %438, %448 : vector<8x16xf32>
    %450 = arith.addf %447, %449 : vector<8x16xf32>
    %451 = math.tanh %450 : vector<8x16xf32>
    %cst_73 = arith.constant 1.000000e+00 : f32
    %452 = vector.broadcast %cst_73 : f32 to vector<8x16xf32>
    %453 = arith.subf %452, %446 : vector<8x16xf32>
    %454 = arith.mulf %453, %451 : vector<8x16xf32>
    %455 = arith.mulf %446, %425 : vector<8x16xf32>
    %456 = arith.addf %454, %455 : vector<8x16xf32>
    %457 = vector.broadcast %25 : vector<8x1xf32> to vector<8x16xf32>
    %458 = arith.mulf %457, %456 : vector<8x16xf32>
    %cst_74 = arith.constant 1.000000e+00 : f32
    %459 = vector.broadcast %cst_74 : f32 to vector<8x1xf32>
    %460 = arith.subf %459, %25 : vector<8x1xf32>
    %461 = vector.broadcast %460 : vector<8x1xf32> to vector<8x16xf32>
    %462 = arith.mulf %461, %425 : vector<8x16xf32>
    %463 = arith.addf %458, %462 : vector<8x16xf32>
    %464 = vector.extract_strided_slice %40 {offsets = [0, 4, 48], sizes = [8, 1, 48], strides = [1, 1, 1]} : vector<8x8x96xf32> to vector<8x1x48xf32>
    %465 = vector.shape_cast %464 : vector<8x1x48xf32> to vector<8x48xf32>
    %cst_75 = arith.constant dense<0.000000e+00> : vector<8x48xf32>
    %466 = tpu.matmul %463, %346, %cst_75 {dimension_numbers = #tpu.dot_dimension_numbers<[1], [0], [0], [1], [0, 0, 1, 1], [], []>} : vector<8x16xf32>, vector<16x48xf32>, vector<8x48xf32> -> vector<8x48xf32>
    %467 = vector.broadcast %348 : vector<1x48xf32> to vector<8x48xf32>
    %468 = arith.addf %466, %467 : vector<8x48xf32>
    %469 = vector.extract_strided_slice %465 {offsets = [0, 0], sizes = [8, 16], strides = [1, 1]} : vector<8x48xf32> to vector<8x16xf32>
    %470 = vector.extract_strided_slice %468 {offsets = [0, 0], sizes = [8, 16], strides = [1, 1]} : vector<8x48xf32> to vector<8x16xf32>
    %471 = arith.addf %469, %470 : vector<8x16xf32>
    %472 = arith.negf %471 : vector<8x16xf32>
    %473 = math.exp %472 : vector<8x16xf32>
    %cst_76 = arith.constant 1.000000e+00 : f32
    %474 = vector.broadcast %cst_76 : f32 to vector<8x16xf32>
    %475 = arith.addf %474, %473 : vector<8x16xf32>
    %476 = arith.divf %474, %475 : vector<8x16xf32>
    %477 = vector.extract_strided_slice %465 {offsets = [0, 16], sizes = [8, 16], strides = [1, 1]} : vector<8x48xf32> to vector<8x16xf32>
    %478 = vector.extract_strided_slice %468 {offsets = [0, 16], sizes = [8, 16], strides = [1, 1]} : vector<8x48xf32> to vector<8x16xf32>
    %479 = arith.addf %477, %478 : vector<8x16xf32>
    %480 = arith.negf %479 : vector<8x16xf32>
    %481 = math.exp %480 : vector<8x16xf32>
    %cst_77 = arith.constant 1.000000e+00 : f32
    %482 = vector.broadcast %cst_77 : f32 to vector<8x16xf32>
    %483 = arith.addf %482, %481 : vector<8x16xf32>
    %484 = arith.divf %482, %483 : vector<8x16xf32>
    %485 = vector.extract_strided_slice %465 {offsets = [0, 32], sizes = [8, 16], strides = [1, 1]} : vector<8x48xf32> to vector<8x16xf32>
    %486 = vector.extract_strided_slice %468 {offsets = [0, 32], sizes = [8, 16], strides = [1, 1]} : vector<8x48xf32> to vector<8x16xf32>
    %487 = arith.mulf %476, %486 : vector<8x16xf32>
    %488 = arith.addf %485, %487 : vector<8x16xf32>
    %489 = math.tanh %488 : vector<8x16xf32>
    %cst_78 = arith.constant 1.000000e+00 : f32
    %490 = vector.broadcast %cst_78 : f32 to vector<8x16xf32>
    %491 = arith.subf %490, %484 : vector<8x16xf32>
    %492 = arith.mulf %491, %489 : vector<8x16xf32>
    %493 = arith.mulf %484, %463 : vector<8x16xf32>
    %494 = arith.addf %492, %493 : vector<8x16xf32>
    %495 = vector.broadcast %21 : vector<8x1xf32> to vector<8x16xf32>
    %496 = arith.mulf %495, %494 : vector<8x16xf32>
    %cst_79 = arith.constant 1.000000e+00 : f32
    %497 = vector.broadcast %cst_79 : f32 to vector<8x1xf32>
    %498 = arith.subf %497, %21 : vector<8x1xf32>
    %499 = vector.broadcast %498 : vector<8x1xf32> to vector<8x16xf32>
    %500 = arith.mulf %499, %463 : vector<8x16xf32>
    %501 = arith.addf %496, %500 : vector<8x16xf32>
    %502 = vector.extract_strided_slice %40 {offsets = [0, 3, 48], sizes = [8, 1, 48], strides = [1, 1, 1]} : vector<8x8x96xf32> to vector<8x1x48xf32>
    %503 = vector.shape_cast %502 : vector<8x1x48xf32> to vector<8x48xf32>
    %cst_80 = arith.constant dense<0.000000e+00> : vector<8x48xf32>
    %504 = tpu.matmul %501, %346, %cst_80 {dimension_numbers = #tpu.dot_dimension_numbers<[1], [0], [0], [1], [0, 0, 1, 1], [], []>} : vector<8x16xf32>, vector<16x48xf32>, vector<8x48xf32> -> vector<8x48xf32>
    %505 = vector.broadcast %348 : vector<1x48xf32> to vector<8x48xf32>
    %506 = arith.addf %504, %505 : vector<8x48xf32>
    %507 = vector.extract_strided_slice %503 {offsets = [0, 0], sizes = [8, 16], strides = [1, 1]} : vector<8x48xf32> to vector<8x16xf32>
    %508 = vector.extract_strided_slice %506 {offsets = [0, 0], sizes = [8, 16], strides = [1, 1]} : vector<8x48xf32> to vector<8x16xf32>
    %509 = arith.addf %507, %508 : vector<8x16xf32>
    %510 = arith.negf %509 : vector<8x16xf32>
    %511 = math.exp %510 : vector<8x16xf32>
    %cst_81 = arith.constant 1.000000e+00 : f32
    %512 = vector.broadcast %cst_81 : f32 to vector<8x16xf32>
    %513 = arith.addf %512, %511 : vector<8x16xf32>
    %514 = arith.divf %512, %513 : vector<8x16xf32>
    %515 = vector.extract_strided_slice %503 {offsets = [0, 16], sizes = [8, 16], strides = [1, 1]} : vector<8x48xf32> to vector<8x16xf32>
    %516 = vector.extract_strided_slice %506 {offsets = [0, 16], sizes = [8, 16], strides = [1, 1]} : vector<8x48xf32> to vector<8x16xf32>
    %517 = arith.addf %515, %516 : vector<8x16xf32>
    %518 = arith.negf %517 : vector<8x16xf32>
    %519 = math.exp %518 : vector<8x16xf32>
    %cst_82 = arith.constant 1.000000e+00 : f32
    %520 = vector.broadcast %cst_82 : f32 to vector<8x16xf32>
    %521 = arith.addf %520, %519 : vector<8x16xf32>
    %522 = arith.divf %520, %521 : vector<8x16xf32>
    %523 = vector.extract_strided_slice %503 {offsets = [0, 32], sizes = [8, 16], strides = [1, 1]} : vector<8x48xf32> to vector<8x16xf32>
    %524 = vector.extract_strided_slice %506 {offsets = [0, 32], sizes = [8, 16], strides = [1, 1]} : vector<8x48xf32> to vector<8x16xf32>
    %525 = arith.mulf %514, %524 : vector<8x16xf32>
    %526 = arith.addf %523, %525 : vector<8x16xf32>
    %527 = math.tanh %526 : vector<8x16xf32>
    %cst_83 = arith.constant 1.000000e+00 : f32
    %528 = vector.broadcast %cst_83 : f32 to vector<8x16xf32>
    %529 = arith.subf %528, %522 : vector<8x16xf32>
    %530 = arith.mulf %529, %527 : vector<8x16xf32>
    %531 = arith.mulf %522, %501 : vector<8x16xf32>
    %532 = arith.addf %530, %531 : vector<8x16xf32>
    %533 = vector.broadcast %17 : vector<8x1xf32> to vector<8x16xf32>
    %534 = arith.mulf %533, %532 : vector<8x16xf32>
    %cst_84 = arith.constant 1.000000e+00 : f32
    %535 = vector.broadcast %cst_84 : f32 to vector<8x1xf32>
    %536 = arith.subf %535, %17 : vector<8x1xf32>
    %537 = vector.broadcast %536 : vector<8x1xf32> to vector<8x16xf32>
    %538 = arith.mulf %537, %501 : vector<8x16xf32>
    %539 = arith.addf %534, %538 : vector<8x16xf32>
    %540 = vector.extract_strided_slice %40 {offsets = [0, 2, 48], sizes = [8, 1, 48], strides = [1, 1, 1]} : vector<8x8x96xf32> to vector<8x1x48xf32>
    %541 = vector.shape_cast %540 : vector<8x1x48xf32> to vector<8x48xf32>
    %cst_85 = arith.constant dense<0.000000e+00> : vector<8x48xf32>
    %542 = tpu.matmul %539, %346, %cst_85 {dimension_numbers = #tpu.dot_dimension_numbers<[1], [0], [0], [1], [0, 0, 1, 1], [], []>} : vector<8x16xf32>, vector<16x48xf32>, vector<8x48xf32> -> vector<8x48xf32>
    %543 = vector.broadcast %348 : vector<1x48xf32> to vector<8x48xf32>
    %544 = arith.addf %542, %543 : vector<8x48xf32>
    %545 = vector.extract_strided_slice %541 {offsets = [0, 0], sizes = [8, 16], strides = [1, 1]} : vector<8x48xf32> to vector<8x16xf32>
    %546 = vector.extract_strided_slice %544 {offsets = [0, 0], sizes = [8, 16], strides = [1, 1]} : vector<8x48xf32> to vector<8x16xf32>
    %547 = arith.addf %545, %546 : vector<8x16xf32>
    %548 = arith.negf %547 : vector<8x16xf32>
    %549 = math.exp %548 : vector<8x16xf32>
    %cst_86 = arith.constant 1.000000e+00 : f32
    %550 = vector.broadcast %cst_86 : f32 to vector<8x16xf32>
    %551 = arith.addf %550, %549 : vector<8x16xf32>
    %552 = arith.divf %550, %551 : vector<8x16xf32>
    %553 = vector.extract_strided_slice %541 {offsets = [0, 16], sizes = [8, 16], strides = [1, 1]} : vector<8x48xf32> to vector<8x16xf32>
    %554 = vector.extract_strided_slice %544 {offsets = [0, 16], sizes = [8, 16], strides = [1, 1]} : vector<8x48xf32> to vector<8x16xf32>
    %555 = arith.addf %553, %554 : vector<8x16xf32>
    %556 = arith.negf %555 : vector<8x16xf32>
    %557 = math.exp %556 : vector<8x16xf32>
    %cst_87 = arith.constant 1.000000e+00 : f32
    %558 = vector.broadcast %cst_87 : f32 to vector<8x16xf32>
    %559 = arith.addf %558, %557 : vector<8x16xf32>
    %560 = arith.divf %558, %559 : vector<8x16xf32>
    %561 = vector.extract_strided_slice %541 {offsets = [0, 32], sizes = [8, 16], strides = [1, 1]} : vector<8x48xf32> to vector<8x16xf32>
    %562 = vector.extract_strided_slice %544 {offsets = [0, 32], sizes = [8, 16], strides = [1, 1]} : vector<8x48xf32> to vector<8x16xf32>
    %563 = arith.mulf %552, %562 : vector<8x16xf32>
    %564 = arith.addf %561, %563 : vector<8x16xf32>
    %565 = math.tanh %564 : vector<8x16xf32>
    %cst_88 = arith.constant 1.000000e+00 : f32
    %566 = vector.broadcast %cst_88 : f32 to vector<8x16xf32>
    %567 = arith.subf %566, %560 : vector<8x16xf32>
    %568 = arith.mulf %567, %565 : vector<8x16xf32>
    %569 = arith.mulf %560, %539 : vector<8x16xf32>
    %570 = arith.addf %568, %569 : vector<8x16xf32>
    %571 = vector.broadcast %13 : vector<8x1xf32> to vector<8x16xf32>
    %572 = arith.mulf %571, %570 : vector<8x16xf32>
    %cst_89 = arith.constant 1.000000e+00 : f32
    %573 = vector.broadcast %cst_89 : f32 to vector<8x1xf32>
    %574 = arith.subf %573, %13 : vector<8x1xf32>
    %575 = vector.broadcast %574 : vector<8x1xf32> to vector<8x16xf32>
    %576 = arith.mulf %575, %539 : vector<8x16xf32>
    %577 = arith.addf %572, %576 : vector<8x16xf32>
    %578 = vector.extract_strided_slice %40 {offsets = [0, 1, 48], sizes = [8, 1, 48], strides = [1, 1, 1]} : vector<8x8x96xf32> to vector<8x1x48xf32>
    %579 = vector.shape_cast %578 : vector<8x1x48xf32> to vector<8x48xf32>
    %cst_90 = arith.constant dense<0.000000e+00> : vector<8x48xf32>
    %580 = tpu.matmul %577, %346, %cst_90 {dimension_numbers = #tpu.dot_dimension_numbers<[1], [0], [0], [1], [0, 0, 1, 1], [], []>} : vector<8x16xf32>, vector<16x48xf32>, vector<8x48xf32> -> vector<8x48xf32>
    %581 = vector.broadcast %348 : vector<1x48xf32> to vector<8x48xf32>
    %582 = arith.addf %580, %581 : vector<8x48xf32>
    %583 = vector.extract_strided_slice %579 {offsets = [0, 0], sizes = [8, 16], strides = [1, 1]} : vector<8x48xf32> to vector<8x16xf32>
    %584 = vector.extract_strided_slice %582 {offsets = [0, 0], sizes = [8, 16], strides = [1, 1]} : vector<8x48xf32> to vector<8x16xf32>
    %585 = arith.addf %583, %584 : vector<8x16xf32>
    %586 = arith.negf %585 : vector<8x16xf32>
    %587 = math.exp %586 : vector<8x16xf32>
    %cst_91 = arith.constant 1.000000e+00 : f32
    %588 = vector.broadcast %cst_91 : f32 to vector<8x16xf32>
    %589 = arith.addf %588, %587 : vector<8x16xf32>
    %590 = arith.divf %588, %589 : vector<8x16xf32>
    %591 = vector.extract_strided_slice %579 {offsets = [0, 16], sizes = [8, 16], strides = [1, 1]} : vector<8x48xf32> to vector<8x16xf32>
    %592 = vector.extract_strided_slice %582 {offsets = [0, 16], sizes = [8, 16], strides = [1, 1]} : vector<8x48xf32> to vector<8x16xf32>
    %593 = arith.addf %591, %592 : vector<8x16xf32>
    %594 = arith.negf %593 : vector<8x16xf32>
    %595 = math.exp %594 : vector<8x16xf32>
    %cst_92 = arith.constant 1.000000e+00 : f32
    %596 = vector.broadcast %cst_92 : f32 to vector<8x16xf32>
    %597 = arith.addf %596, %595 : vector<8x16xf32>
    %598 = arith.divf %596, %597 : vector<8x16xf32>
    %599 = vector.extract_strided_slice %579 {offsets = [0, 32], sizes = [8, 16], strides = [1, 1]} : vector<8x48xf32> to vector<8x16xf32>
    %600 = vector.extract_strided_slice %582 {offsets = [0, 32], sizes = [8, 16], strides = [1, 1]} : vector<8x48xf32> to vector<8x16xf32>
    %601 = arith.mulf %590, %600 : vector<8x16xf32>
    %602 = arith.addf %599, %601 : vector<8x16xf32>
    %603 = math.tanh %602 : vector<8x16xf32>
    %cst_93 = arith.constant 1.000000e+00 : f32
    %604 = vector.broadcast %cst_93 : f32 to vector<8x16xf32>
    %605 = arith.subf %604, %598 : vector<8x16xf32>
    %606 = arith.mulf %605, %603 : vector<8x16xf32>
    %607 = arith.mulf %598, %577 : vector<8x16xf32>
    %608 = arith.addf %606, %607 : vector<8x16xf32>
    %609 = vector.broadcast %9 : vector<8x1xf32> to vector<8x16xf32>
    %610 = arith.mulf %609, %608 : vector<8x16xf32>
    %cst_94 = arith.constant 1.000000e+00 : f32
    %611 = vector.broadcast %cst_94 : f32 to vector<8x1xf32>
    %612 = arith.subf %611, %9 : vector<8x1xf32>
    %613 = vector.broadcast %612 : vector<8x1xf32> to vector<8x16xf32>
    %614 = arith.mulf %613, %577 : vector<8x16xf32>
    %615 = arith.addf %610, %614 : vector<8x16xf32>
    %616 = vector.extract_strided_slice %40 {offsets = [0, 0, 48], sizes = [8, 1, 48], strides = [1, 1, 1]} : vector<8x8x96xf32> to vector<8x1x48xf32>
    %617 = vector.shape_cast %616 : vector<8x1x48xf32> to vector<8x48xf32>
    %cst_95 = arith.constant dense<0.000000e+00> : vector<8x48xf32>
    %618 = tpu.matmul %615, %346, %cst_95 {dimension_numbers = #tpu.dot_dimension_numbers<[1], [0], [0], [1], [0, 0, 1, 1], [], []>} : vector<8x16xf32>, vector<16x48xf32>, vector<8x48xf32> -> vector<8x48xf32>
    %619 = vector.broadcast %348 : vector<1x48xf32> to vector<8x48xf32>
    %620 = arith.addf %618, %619 : vector<8x48xf32>
    %621 = vector.extract_strided_slice %617 {offsets = [0, 0], sizes = [8, 16], strides = [1, 1]} : vector<8x48xf32> to vector<8x16xf32>
    %622 = vector.extract_strided_slice %620 {offsets = [0, 0], sizes = [8, 16], strides = [1, 1]} : vector<8x48xf32> to vector<8x16xf32>
    %623 = arith.addf %621, %622 : vector<8x16xf32>
    %624 = arith.negf %623 : vector<8x16xf32>
    %625 = math.exp %624 : vector<8x16xf32>
    %cst_96 = arith.constant 1.000000e+00 : f32
    %626 = vector.broadcast %cst_96 : f32 to vector<8x16xf32>
    %627 = arith.addf %626, %625 : vector<8x16xf32>
    %628 = arith.divf %626, %627 : vector<8x16xf32>
    %629 = vector.extract_strided_slice %617 {offsets = [0, 16], sizes = [8, 16], strides = [1, 1]} : vector<8x48xf32> to vector<8x16xf32>
    %630 = vector.extract_strided_slice %620 {offsets = [0, 16], sizes = [8, 16], strides = [1, 1]} : vector<8x48xf32> to vector<8x16xf32>
    %631 = arith.addf %629, %630 : vector<8x16xf32>
    %632 = arith.negf %631 : vector<8x16xf32>
    %633 = math.exp %632 : vector<8x16xf32>
    %cst_97 = arith.constant 1.000000e+00 : f32
    %634 = vector.broadcast %cst_97 : f32 to vector<8x16xf32>
    %635 = arith.addf %634, %633 : vector<8x16xf32>
    %636 = arith.divf %634, %635 : vector<8x16xf32>
    %637 = vector.extract_strided_slice %617 {offsets = [0, 32], sizes = [8, 16], strides = [1, 1]} : vector<8x48xf32> to vector<8x16xf32>
    %638 = vector.extract_strided_slice %620 {offsets = [0, 32], sizes = [8, 16], strides = [1, 1]} : vector<8x48xf32> to vector<8x16xf32>
    %639 = arith.mulf %628, %638 : vector<8x16xf32>
    %640 = arith.addf %637, %639 : vector<8x16xf32>
    %641 = math.tanh %640 : vector<8x16xf32>
    %cst_98 = arith.constant 1.000000e+00 : f32
    %642 = vector.broadcast %cst_98 : f32 to vector<8x16xf32>
    %643 = arith.subf %642, %636 : vector<8x16xf32>
    %644 = arith.mulf %643, %641 : vector<8x16xf32>
    %645 = arith.mulf %636, %615 : vector<8x16xf32>
    %646 = arith.addf %644, %645 : vector<8x16xf32>
    %647 = vector.broadcast %5 : vector<8x1xf32> to vector<8x16xf32>
    %648 = arith.mulf %647, %646 : vector<8x16xf32>
    %649 = tpu.concatenate %78, %648 in 1 : vector<8x16xf32>, vector<8x16xf32> -> vector<8x32xf32>
    %650 = vector.shape_cast %649 : vector<8x32xf32> to vector<8x1x32xf32>
    %c0_99 = arith.constant 0 : index
    %c0_100 = arith.constant 0 : index
    %c0_101 = arith.constant 0 : index
    %651 = vector.load %arg7[%c0_99, %c0_100, %c0_101] : memref<8x8x32xf32, #tpu.memory_space<vmem>>, vector<8x1x32xf32>
    tpu.vector_store %arg7[%c0_99, %c0_100, %c0_101], %650 {strides = array<i32>} : memref<8x8x32xf32, #tpu.memory_space<vmem>>, vector<8x1x32xf32>,
    %652 = tpu.concatenate %116, %610 in 1 : vector<8x16xf32>, vector<8x16xf32> -> vector<8x32xf32>
    %653 = vector.shape_cast %652 : vector<8x32xf32> to vector<8x1x32xf32>
    %c0_102 = arith.constant 0 : index
    %c1_103 = arith.constant 1 : index
    %c0_104 = arith.constant 0 : index
    %654 = vector.load %arg7[%c0_102, %c1_103, %c0_104] : memref<8x8x32xf32, #tpu.memory_space<vmem>>, vector<8x1x32xf32>
    tpu.vector_store %arg7[%c0_102, %c1_103, %c0_104], %653 {strides = array<i32>} : memref<8x8x32xf32, #tpu.memory_space<vmem>>, vector<8x1x32xf32>,
    %655 = tpu.concatenate %154, %572 in 1 : vector<8x16xf32>, vector<8x16xf32> -> vector<8x32xf32>
    %656 = vector.shape_cast %655 : vector<8x32xf32> to vector<8x1x32xf32>
    %c0_105 = arith.constant 0 : index
    %c2 = arith.constant 2 : index
    %c0_106 = arith.constant 0 : index
    %657 = vector.load %arg7[%c0_105, %c2, %c0_106] : memref<8x8x32xf32, #tpu.memory_space<vmem>>, vector<8x1x32xf32>
    tpu.vector_store %arg7[%c0_105, %c2, %c0_106], %656 {strides = array<i32>} : memref<8x8x32xf32, #tpu.memory_space<vmem>>, vector<8x1x32xf32>,
    %658 = tpu.concatenate %192, %534 in 1 : vector<8x16xf32>, vector<8x16xf32> -> vector<8x32xf32>
    %659 = vector.shape_cast %658 : vector<8x32xf32> to vector<8x1x32xf32>
    %c0_107 = arith.constant 0 : index
    %c3 = arith.constant 3 : index
    %c0_108 = arith.constant 0 : index
    %660 = vector.load %arg7[%c0_107, %c3, %c0_108] : memref<8x8x32xf32, #tpu.memory_space<vmem>>, vector<8x1x32xf32>
    tpu.vector_store %arg7[%c0_107, %c3, %c0_108], %659 {strides = array<i32>} : memref<8x8x32xf32, #tpu.memory_space<vmem>>, vector<8x1x32xf32>,
    %661 = tpu.concatenate %230, %496 in 1 : vector<8x16xf32>, vector<8x16xf32> -> vector<8x32xf32>
    %662 = vector.shape_cast %661 : vector<8x32xf32> to vector<8x1x32xf32>
    %c0_109 = arith.constant 0 : index
    %c4 = arith.constant 4 : index
    %c0_110 = arith.constant 0 : index
    %663 = vector.load %arg7[%c0_109, %c4, %c0_110] : memref<8x8x32xf32, #tpu.memory_space<vmem>>, vector<8x1x32xf32>
    tpu.vector_store %arg7[%c0_109, %c4, %c0_110], %662 {strides = array<i32>} : memref<8x8x32xf32, #tpu.memory_space<vmem>>, vector<8x1x32xf32>,
    %664 = tpu.concatenate %268, %458 in 1 : vector<8x16xf32>, vector<8x16xf32> -> vector<8x32xf32>
    %665 = vector.shape_cast %664 : vector<8x32xf32> to vector<8x1x32xf32>
    %c0_111 = arith.constant 0 : index
    %c5 = arith.constant 5 : index
    %c0_112 = arith.constant 0 : index
    %666 = vector.load %arg7[%c0_111, %c5, %c0_112] : memref<8x8x32xf32, #tpu.memory_space<vmem>>, vector<8x1x32xf32>
    tpu.vector_store %arg7[%c0_111, %c5, %c0_112], %665 {strides = array<i32>} : memref<8x8x32xf32, #tpu.memory_space<vmem>>, vector<8x1x32xf32>,
    %667 = tpu.concatenate %306, %420 in 1 : vector<8x16xf32>, vector<8x16xf32> -> vector<8x32xf32>
    %668 = vector.shape_cast %667 : vector<8x32xf32> to vector<8x1x32xf32>
    %c0_113 = arith.constant 0 : index
    %c6 = arith.constant 6 : index
    %c0_114 = arith.constant 0 : index
    %669 = vector.load %arg7[%c0_113, %c6, %c0_114] : memref<8x8x32xf32, #tpu.memory_space<vmem>>, vector<8x1x32xf32>
    tpu.vector_store %arg7[%c0_113, %c6, %c0_114], %668 {strides = array<i32>} : memref<8x8x32xf32, #tpu.memory_space<vmem>>, vector<8x1x32xf32>,
    %670 = tpu.concatenate %344, %382 in 1 : vector<8x16xf32>, vector<8x16xf32> -> vector<8x32xf32>
    %671 = vector.shape_cast %670 : vector<8x32xf32> to vector<8x1x32xf32>
    %c0_115 = arith.constant 0 : index
    %c7 = arith.constant 7 : index
    %c0_116 = arith.constant 0 : index
    %672 = vector.load %arg7[%c0_115, %c7, %c0_116] : memref<8x8x32xf32, #tpu.memory_space<vmem>>, vector<8x1x32xf32>
    tpu.vector_store %arg7[%c0_115, %c7, %c0_116], %671 {strides = array<i32>} : memref<8x8x32xf32, #tpu.memory_space<vmem>>, vector<8x1x32xf32>,
    return
  }
  func.func @transform_0(%arg0: i32) -> (i32, i32, i32) {
    %c0_i32 = arith.constant 0 : i32
    %c0_i32_0 = arith.constant 0 : i32
    %c0_i32_1 = arith.constant 0 : i32
    return %arg0, %c0_i32, %c0_i32_0 : i32, i32, i32
  }
  func.func @transform_1(%arg0: i32) -> (i32, i32) {
    %c0_i32 = arith.constant 0 : i32
    %c0_i32_0 = arith.constant 0 : i32
    return %arg0, %c0_i32 : i32, i32
  }
  func.func @transform_2(%arg0: i32) -> (i32, i32) {
    %c0_i32 = arith.constant 0 : i32
    %c0_i32_0 = arith.constant 0 : i32
    %c0_i32_1 = arith.constant 0 : i32
    return %c0_i32, %c0_i32_0 : i32, i32
  }
  func.func @transform_3(%arg0: i32) -> (i32, i32) {
    %c0_i32 = arith.constant 0 : i32
    %c0_i32_0 = arith.constant 0 : i32
    %c0_i32_1 = arith.constant 0 : i32
    return %c0_i32, %c0_i32_0 : i32, i32
  }
  func.func @transform_4(%arg0: i32) -> (i32, i32, i32) {
    %c0_i32 = arith.constant 0 : i32
    %c0_i32_0 = arith.constant 0 : i32
    %c0_i32_1 = arith.constant 0 : i32
    %c0_i32_2 = arith.constant 0 : i32
    return %c0_i32, %c0_i32_0, %c0_i32_1 : i32, i32, i32
  }
  func.func @transform_5(%arg0: i32) -> (i32, i32, i32) {
    %c0_i32 = arith.constant 0 : i32
    %c0_i32_0 = arith.constant 0 : i32
    %c0_i32_1 = arith.constant 0 : i32
    %c0_i32_2 = arith.constant 0 : i32
    return %c0_i32, %c0_i32_0, %c0_i32_1 : i32, i32, i32
  }
  func.func @transform_6(%arg0: i32) -> (i32, i32, i32) {
    %c0_i32 = arith.constant 0 : i32
    %c0_i32_0 = arith.constant 0 : i32
    %c0_i32_1 = arith.constant 0 : i32
    return %arg0, %c0_i32, %c0_i32_0 : i32, i32, i32
  }
}

module attributes {stable_mosaic.version = 11 : i64} {
  func.func @_attn_pool_kernel(%arg0: i32, %arg1: memref<8x8x32xf32, #tpu.memory_space<vmem>>, %arg2: memref<8x1xi32, #tpu.memory_space<vmem>>, %arg3: memref<32x16xf32, #tpu.memory_space<vmem>>, %arg4: memref<1x16xf32, #tpu.memory_space<vmem>>, %arg5: memref<16x1xf32, #tpu.memory_space<vmem>>, %arg6: memref<8x32xf32, #tpu.memory_space<vmem>>, %arg7: memref<8x8xf32, #tpu.memory_space<vmem>>) attributes {dimension_semantics = [#tpu.dimension_semantics<parallel>], iteration_bounds = array<i64: 2>, scalar_prefetch = 0 : i64, scratch_operands = 0 : i64, tpu.core_type = #tpu.core_type<tc>, window_params = [{transform_indices = @transform_0, window_bounds = array<i64: 8, 8, 32>}, {transform_indices = @transform_1, window_bounds = array<i64: 8, 1>}, {pipeline_mode = #tpu.pipeline_mode<synchronous>, transform_indices = @transform_2, window_bounds = array<i64: 32, 16>}, {pipeline_mode = #tpu.pipeline_mode<synchronous>, transform_indices = @transform_3, window_bounds = array<i64: 1, 16>}, {pipeline_mode = #tpu.pipeline_mode<synchronous>, transform_indices = @transform_4, window_bounds = array<i64: 16, 1>}, {transform_indices = @transform_5, window_bounds = array<i64: 8, 32>}, {transform_indices = @transform_6, window_bounds = array<i64: 8, 8>}]} {
    %c0 = arith.constant 0 : index
    %c0_0 = arith.constant 0 : index
    %c0_1 = arith.constant 0 : index
    %0 = vector.load %arg1[%c0, %c0_0, %c0_1] : memref<8x8x32xf32, #tpu.memory_space<vmem>>, vector<8x8x32xf32>
    %c0_2 = arith.constant 0 : index
    %c0_3 = arith.constant 0 : index
    %1 = vector.load %arg2[%c0_2, %c0_3] : memref<8x1xi32, #tpu.memory_space<vmem>>, vector<8x1xi32>
    %2 = vector.shape_cast %0 : vector<8x8x32xf32> to vector<64x32xf32>
    %c0_4 = arith.constant 0 : index
    %c0_5 = arith.constant 0 : index
    %3 = vector.load %arg3[%c0_4, %c0_5] : memref<32x16xf32, #tpu.memory_space<vmem>>, vector<32x16xf32>
    %cst = arith.constant dense<0.000000e+00> : vector<64x16xf32>
    %4 = tpu.matmul %2, %3, %cst {dimension_numbers = #tpu.dot_dimension_numbers<[1], [0], [0], [1], [0, 0, 1, 1], [], []>} : vector<64x32xf32>, vector<32x16xf32>, vector<64x16xf32> -> vector<64x16xf32>
    %c0_6 = arith.constant 0 : index
    %c0_7 = arith.constant 0 : index
    %5 = vector.load %arg4[%c0_6, %c0_7] : memref<1x16xf32, #tpu.memory_space<vmem>>, vector<1x16xf32>
    %6 = vector.broadcast %5 : vector<1x16xf32> to vector<64x16xf32>
    %7 = arith.addf %4, %6 : vector<64x16xf32>
    %cst_8 = arith.constant 0.000000e+00 : f32
    %8 = vector.broadcast %cst_8 : f32 to vector<64x16xf32>
    %9 = arith.cmpf oge, %7, %8 : vector<64x16xf32>
    %cst_9 = arith.constant 0.00999999977 : f32
    %10 = vector.broadcast %cst_9 : f32 to vector<64x16xf32>
    %11 = arith.mulf %10, %7 : vector<64x16xf32>
    %12 = arith.select %9, %7, %11 : vector<64x16xi1>, vector<64x16xf32>
    %c0_10 = arith.constant 0 : index
    %c0_11 = arith.constant 0 : index
    %13 = vector.load %arg5[%c0_10, %c0_11] : memref<16x1xf32, #tpu.memory_space<vmem>>, vector<16x1xf32>
    %cst_12 = arith.constant dense<0.000000e+00> : vector<64x1xf32>
    %14 = tpu.matmul %12, %13, %cst_12 {dimension_numbers = #tpu.dot_dimension_numbers<[1], [0], [0], [1], [0, 0, 1, 1], [], []>} : vector<64x16xf32>, vector<16x1xf32>, vector<64x1xf32> -> vector<64x1xf32>
    %15 = vector.shape_cast %14 : vector<64x1xf32> to vector<8x8xf32>
    %cst_13 = arith.constant 1.000000e+00 : f32
    %16 = vector.broadcast %cst_13 : f32 to vector<8x8xf32>
    %17 = arith.mulf %15, %16 : vector<8x8xf32>
    %18 = tpu.iota {dimensions = array<i32: 1>} : vector<8x8xi32>
    %19 = vector.broadcast %1 : vector<8x1xi32> to vector<8x8xi32>
    %20 = arith.cmpi slt, %18, %19 : vector<8x8xi32>
    %cst_14 = arith.constant -9.999900e+04 : f32
    %21 = vector.broadcast %cst_14 : f32 to vector<8x8xf32>
    %22 = arith.select %20, %17, %21 : vector<8x8xi1>, vector<8x8xf32>
    %cst_15 = arith.constant dense<0xFF800000> : vector<8xf32>
    %23 = vector.multi_reduction <maximumf>, %22, %cst_15 [1] : vector<8x8xf32> to vector<8xf32>
    %24 = vector.shape_cast %23 : vector<8xf32> to vector<8x1xf32>
    %25 = vector.broadcast %24 : vector<8x1xf32> to vector<8x8xf32>
    %26 = arith.subf %22, %25 : vector<8x8xf32>
    %27 = math.exp %26 : vector<8x8xf32>
    %cst_16 = arith.constant dense<0.000000e+00> : vector<8xf32>
    %28 = vector.multi_reduction <add>, %27, %cst_16 [1] : vector<8x8xf32> to vector<8xf32>
    %29 = vector.shape_cast %28 : vector<8xf32> to vector<8x1xf32>
    %30 = vector.broadcast %29 : vector<8x1xf32> to vector<8x8xf32>
    %31 = arith.divf %27, %30 : vector<8x8xf32>
    %c0_17 = arith.constant 0 : index
    %c0_18 = arith.constant 0 : index
    %32 = vector.load %arg7[%c0_17, %c0_18] : memref<8x8xf32, #tpu.memory_space<vmem>>, vector<8x8xf32>
    tpu.vector_store %arg7[%c0_17, %c0_18], %31 {strides = array<i32>} : memref<8x8xf32, #tpu.memory_space<vmem>>, vector<8x8xf32>,
    %33 = vector.shape_cast %31 : vector<8x8xf32> to vector<8x8x1xf32>
    %34 = vector.broadcast %33 : vector<8x8x1xf32> to vector<8x8x32xf32>
    %35 = arith.mulf %34, %0 : vector<8x8x32xf32>
    %cst_19 = arith.constant dense<0.000000e+00> : vector<8x32xf32>
    %36 = vector.multi_reduction <add>, %35, %cst_19 [1] : vector<8x8x32xf32> to vector<8x32xf32>
    %c0_20 = arith.constant 0 : index
    %c0_21 = arith.constant 0 : index
    %37 = vector.load %arg6[%c0_20, %c0_21] : memref<8x32xf32, #tpu.memory_space<vmem>>, vector<8x32xf32>
    tpu.vector_store %arg6[%c0_20, %c0_21], %36 {strides = array<i32>} : memref<8x32xf32, #tpu.memory_space<vmem>>, vector<8x32xf32>,
    return
  }
  func.func @transform_0(%arg0: i32) -> (i32, i32, i32) {
    %c0_i32 = arith.constant 0 : i32
    %c0_i32_0 = arith.constant 0 : i32
    %c0_i32_1 = arith.constant 0 : i32
    return %arg0, %c0_i32, %c0_i32_0 : i32, i32, i32
  }
  func.func @transform_1(%arg0: i32) -> (i32, i32) {
    %c0_i32 = arith.constant 0 : i32
    %c0_i32_0 = arith.constant 0 : i32
    return %arg0, %c0_i32 : i32, i32
  }
  func.func @transform_2(%arg0: i32) -> (i32, i32) {
    %c0_i32 = arith.constant 0 : i32
    %c0_i32_0 = arith.constant 0 : i32
    %c0_i32_1 = arith.constant 0 : i32
    return %c0_i32, %c0_i32_0 : i32, i32
  }
  func.func @transform_3(%arg0: i32) -> (i32, i32) {
    %c0_i32 = arith.constant 0 : i32
    %c0_i32_0 = arith.constant 0 : i32
    %c0_i32_1 = arith.constant 0 : i32
    return %c0_i32, %c0_i32_0 : i32, i32
  }
  func.func @transform_4(%arg0: i32) -> (i32, i32) {
    %c0_i32 = arith.constant 0 : i32
    %c0_i32_0 = arith.constant 0 : i32
    %c0_i32_1 = arith.constant 0 : i32
    return %c0_i32, %c0_i32_0 : i32, i32
  }
  func.func @transform_5(%arg0: i32) -> (i32, i32) {
    %c0_i32 = arith.constant 0 : i32
    %c0_i32_0 = arith.constant 0 : i32
    return %arg0, %c0_i32 : i32, i32
  }
  func.func @transform_6(%arg0: i32) -> (i32, i32) {
    %c0_i32 = arith.constant 0 : i32
    %c0_i32_0 = arith.constant 0 : i32
    return %arg0, %c0_i32 : i32, i32
  }
}

module attributes {stable_mosaic.version = 11 : i64} {
  func.func @_gru_kernel(%arg0: i32, %arg1: memref<2x8x32xf32, #tpu.memory_space<vmem>>, %arg2: memref<2x1xi32, #tpu.memory_space<vmem>>, %arg3: memref<32x96xf32, #tpu.memory_space<vmem>>, %arg4: memref<1x96xf32, #tpu.memory_space<vmem>>, %arg5: memref<1x32x96xf32, #tpu.memory_space<vmem>>, %arg6: memref<1x1x96xf32, #tpu.memory_space<vmem>>, %arg7: memref<2x8x32xf32, #tpu.memory_space<vmem>>) attributes {dimension_semantics = [#tpu.dimension_semantics<parallel>], iteration_bounds = array<i64: 1>, scalar_prefetch = 0 : i64, scratch_operands = 0 : i64, tpu.core_type = #tpu.core_type<tc>, window_params = [{transform_indices = @transform_0, window_bounds = array<i64: 2, 8, 32>}, {transform_indices = @transform_1, window_bounds = array<i64: 2, 1>}, {pipeline_mode = #tpu.pipeline_mode<synchronous>, transform_indices = @transform_2, window_bounds = array<i64: 32, 96>}, {pipeline_mode = #tpu.pipeline_mode<synchronous>, transform_indices = @transform_3, window_bounds = array<i64: 1, 96>}, {pipeline_mode = #tpu.pipeline_mode<synchronous>, transform_indices = @transform_4, window_bounds = array<i64: 1, 32, 96>}, {pipeline_mode = #tpu.pipeline_mode<synchronous>, transform_indices = @transform_5, window_bounds = array<i64: 1, 1, 96>}, {transform_indices = @transform_6, window_bounds = array<i64: 2, 8, 32>}]} {
    %c0 = arith.constant 0 : index
    %c0_0 = arith.constant 0 : index
    %c0_1 = arith.constant 0 : index
    %0 = vector.load %arg1[%c0, %c0_0, %c0_1] : memref<2x8x32xf32, #tpu.memory_space<vmem>>, vector<2x8x32xf32>
    %c0_2 = arith.constant 0 : index
    %c0_3 = arith.constant 0 : index
    %1 = vector.load %arg2[%c0_2, %c0_3] : memref<2x1xi32, #tpu.memory_space<vmem>>, vector<2x1xi32>
    %c0_i32 = arith.constant 0 : i32
    %2 = vector.broadcast %c0_i32 : i32 to vector<2x1xi32>
    %3 = arith.cmpi sgt, %1, %2 : vector<2x1xi32>
    %4 = arith.extui %3 : vector<2x1xi1> to vector<2x1xi32>
    %5 = arith.sitofp %4 : vector<2x1xi32> to vector<2x1xf32>
    %c1_i32 = arith.constant 1 : i32
    %6 = vector.broadcast %c1_i32 : i32 to vector<2x1xi32>
    %7 = arith.cmpi sgt, %1, %6 : vector<2x1xi32>
    %8 = arith.extui %7 : vector<2x1xi1> to vector<2x1xi32>
    %9 = arith.sitofp %8 : vector<2x1xi32> to vector<2x1xf32>
    %c2_i32 = arith.constant 2 : i32
    %10 = vector.broadcast %c2_i32 : i32 to vector<2x1xi32>
    %11 = arith.cmpi sgt, %1, %10 : vector<2x1xi32>
    %12 = arith.extui %11 : vector<2x1xi1> to vector<2x1xi32>
    %13 = arith.sitofp %12 : vector<2x1xi32> to vector<2x1xf32>
    %c3_i32 = arith.constant 3 : i32
    %14 = vector.broadcast %c3_i32 : i32 to vector<2x1xi32>
    %15 = arith.cmpi sgt, %1, %14 : vector<2x1xi32>
    %16 = arith.extui %15 : vector<2x1xi1> to vector<2x1xi32>
    %17 = arith.sitofp %16 : vector<2x1xi32> to vector<2x1xf32>
    %c4_i32 = arith.constant 4 : i32
    %18 = vector.broadcast %c4_i32 : i32 to vector<2x1xi32>
    %19 = arith.cmpi sgt, %1, %18 : vector<2x1xi32>
    %20 = arith.extui %19 : vector<2x1xi1> to vector<2x1xi32>
    %21 = arith.sitofp %20 : vector<2x1xi32> to vector<2x1xf32>
    %c5_i32 = arith.constant 5 : i32
    %22 = vector.broadcast %c5_i32 : i32 to vector<2x1xi32>
    %23 = arith.cmpi sgt, %1, %22 : vector<2x1xi32>
    %24 = arith.extui %23 : vector<2x1xi1> to vector<2x1xi32>
    %25 = arith.sitofp %24 : vector<2x1xi32> to vector<2x1xf32>
    %c6_i32 = arith.constant 6 : i32
    %26 = vector.broadcast %c6_i32 : i32 to vector<2x1xi32>
    %27 = arith.cmpi sgt, %1, %26 : vector<2x1xi32>
    %28 = arith.extui %27 : vector<2x1xi1> to vector<2x1xi32>
    %29 = arith.sitofp %28 : vector<2x1xi32> to vector<2x1xf32>
    %c7_i32 = arith.constant 7 : i32
    %30 = vector.broadcast %c7_i32 : i32 to vector<2x1xi32>
    %31 = arith.cmpi sgt, %1, %30 : vector<2x1xi32>
    %32 = arith.extui %31 : vector<2x1xi1> to vector<2x1xi32>
    %33 = arith.sitofp %32 : vector<2x1xi32> to vector<2x1xf32>
    %34 = vector.shape_cast %0 : vector<2x8x32xf32> to vector<16x32xf32>
    %c0_4 = arith.constant 0 : index
    %c0_5 = arith.constant 0 : index
    %35 = vector.load %arg3[%c0_4, %c0_5] : memref<32x96xf32, #tpu.memory_space<vmem>>, vector<32x96xf32>
    %cst = arith.constant dense<0.000000e+00> : vector<16x96xf32>
    %36 = tpu.matmul %34, %35, %cst {dimension_numbers = #tpu.dot_dimension_numbers<[1], [0], [0], [1], [0, 0, 1, 1], [], []>} : vector<16x32xf32>, vector<32x96xf32>, vector<16x96xf32> -> vector<16x96xf32>
    %c0_6 = arith.constant 0 : index
    %c0_7 = arith.constant 0 : index
    %37 = vector.load %arg4[%c0_6, %c0_7] : memref<1x96xf32, #tpu.memory_space<vmem>>, vector<1x96xf32>
    %38 = vector.broadcast %37 : vector<1x96xf32> to vector<16x96xf32>
    %39 = arith.addf %36, %38 : vector<16x96xf32>
    %40 = vector.shape_cast %39 : vector<16x96xf32> to vector<2x8x96xf32>
    %c0_8 = arith.constant 0 : index
    %c0_9 = arith.constant 0 : index
    %c0_10 = arith.constant 0 : index
    %41 = vector.load %arg5[%c0_8, %c0_9, %c0_10] : memref<1x32x96xf32, #tpu.memory_space<vmem>>, vector<1x32x96xf32>
    %42 = vector.shape_cast %41 : vector<1x32x96xf32> to vector<32x96xf32>
    %c0_11 = arith.constant 0 : index
    %c0_12 = arith.constant 0 : index
    %c0_13 = arith.constant 0 : index
    %43 = vector.load %arg6[%c0_11, %c0_12, %c0_13] : memref<1x1x96xf32, #tpu.memory_space<vmem>>, vector<1x1x96xf32>
    %44 = vector.shape_cast %43 : vector<1x1x96xf32> to vector<1x96xf32>
    %cst_14 = arith.constant 0.000000e+00 : f32
    %45 = vector.broadcast %cst_14 : f32 to vector<2x32xf32>
    %46 = vector.extract_strided_slice %40 {offsets = [0, 0, 0], sizes = [2, 1, 96], strides = [1, 1, 1]} : vector<2x8x96xf32> to vector<2x1x96xf32>
    %47 = vector.shape_cast %46 : vector<2x1x96xf32> to vector<2x96xf32>
    %cst_15 = arith.constant dense<0.000000e+00> : vector<2x96xf32>
    %48 = tpu.matmul %45, %42, %cst_15 {dimension_numbers = #tpu.dot_dimension_numbers<[1], [0], [0], [1], [0, 0, 1, 1], [], []>} : vector<2x32xf32>, vector<32x96xf32>, vector<2x96xf32> -> vector<2x96xf32>
    %49 = vector.broadcast %44 : vector<1x96xf32> to vector<2x96xf32>
    %50 = arith.addf %48, %49 : vector<2x96xf32>
    %51 = vector.extract_strided_slice %47 {offsets = [0, 0], sizes = [2, 32], strides = [1, 1]} : vector<2x96xf32> to vector<2x32xf32>
    %52 = vector.extract_strided_slice %50 {offsets = [0, 0], sizes = [2, 32], strides = [1, 1]} : vector<2x96xf32> to vector<2x32xf32>
    %53 = arith.addf %51, %52 : vector<2x32xf32>
    %54 = arith.negf %53 : vector<2x32xf32>
    %55 = math.exp %54 : vector<2x32xf32>
    %cst_16 = arith.constant 1.000000e+00 : f32
    %56 = vector.broadcast %cst_16 : f32 to vector<2x32xf32>
    %57 = arith.addf %56, %55 : vector<2x32xf32>
    %58 = arith.divf %56, %57 : vector<2x32xf32>
    %59 = vector.extract_strided_slice %47 {offsets = [0, 32], sizes = [2, 32], strides = [1, 1]} : vector<2x96xf32> to vector<2x32xf32>
    %60 = vector.extract_strided_slice %50 {offsets = [0, 32], sizes = [2, 32], strides = [1, 1]} : vector<2x96xf32> to vector<2x32xf32>
    %61 = arith.addf %59, %60 : vector<2x32xf32>
    %62 = arith.negf %61 : vector<2x32xf32>
    %63 = math.exp %62 : vector<2x32xf32>
    %cst_17 = arith.constant 1.000000e+00 : f32
    %64 = vector.broadcast %cst_17 : f32 to vector<2x32xf32>
    %65 = arith.addf %64, %63 : vector<2x32xf32>
    %66 = arith.divf %64, %65 : vector<2x32xf32>
    %67 = vector.extract_strided_slice %47 {offsets = [0, 64], sizes = [2, 32], strides = [1, 1]} : vector<2x96xf32> to vector<2x32xf32>
    %68 = vector.extract_strided_slice %50 {offsets = [0, 64], sizes = [2, 32], strides = [1, 1]} : vector<2x96xf32> to vector<2x32xf32>
    %69 = arith.mulf %58, %68 : vector<2x32xf32>
    %70 = arith.addf %67, %69 : vector<2x32xf32>
    %71 = math.tanh %70 : vector<2x32xf32>
    %cst_18 = arith.constant 1.000000e+00 : f32
    %72 = vector.broadcast %cst_18 : f32 to vector<2x32xf32>
    %73 = arith.subf %72, %66 : vector<2x32xf32>
    %74 = arith.mulf %73, %71 : vector<2x32xf32>
    %75 = arith.mulf %66, %45 : vector<2x32xf32>
    %76 = arith.addf %74, %75 : vector<2x32xf32>
    %77 = vector.broadcast %5 : vector<2x1xf32> to vector<2x32xf32>
    %78 = arith.mulf %77, %76 : vector<2x32xf32>
    %cst_19 = arith.constant 1.000000e+00 : f32
    %79 = vector.broadcast %cst_19 : f32 to vector<2x1xf32>
    %80 = arith.subf %79, %5 : vector<2x1xf32>
    %81 = vector.broadcast %80 : vector<2x1xf32> to vector<2x32xf32>
    %82 = arith.mulf %81, %45 : vector<2x32xf32>
    %83 = arith.addf %78, %82 : vector<2x32xf32>
    %84 = vector.extract_strided_slice %40 {offsets = [0, 1, 0], sizes = [2, 1, 96], strides = [1, 1, 1]} : vector<2x8x96xf32> to vector<2x1x96xf32>
    %85 = vector.shape_cast %84 : vector<2x1x96xf32> to vector<2x96xf32>
    %cst_20 = arith.constant dense<0.000000e+00> : vector<2x96xf32>
    %86 = tpu.matmul %83, %42, %cst_20 {dimension_numbers = #tpu.dot_dimension_numbers<[1], [0], [0], [1], [0, 0, 1, 1], [], []>} : vector<2x32xf32>, vector<32x96xf32>, vector<2x96xf32> -> vector<2x96xf32>
    %87 = vector.broadcast %44 : vector<1x96xf32> to vector<2x96xf32>
    %88 = arith.addf %86, %87 : vector<2x96xf32>
    %89 = vector.extract_strided_slice %85 {offsets = [0, 0], sizes = [2, 32], strides = [1, 1]} : vector<2x96xf32> to vector<2x32xf32>
    %90 = vector.extract_strided_slice %88 {offsets = [0, 0], sizes = [2, 32], strides = [1, 1]} : vector<2x96xf32> to vector<2x32xf32>
    %91 = arith.addf %89, %90 : vector<2x32xf32>
    %92 = arith.negf %91 : vector<2x32xf32>
    %93 = math.exp %92 : vector<2x32xf32>
    %cst_21 = arith.constant 1.000000e+00 : f32
    %94 = vector.broadcast %cst_21 : f32 to vector<2x32xf32>
    %95 = arith.addf %94, %93 : vector<2x32xf32>
    %96 = arith.divf %94, %95 : vector<2x32xf32>
    %97 = vector.extract_strided_slice %85 {offsets = [0, 32], sizes = [2, 32], strides = [1, 1]} : vector<2x96xf32> to vector<2x32xf32>
    %98 = vector.extract_strided_slice %88 {offsets = [0, 32], sizes = [2, 32], strides = [1, 1]} : vector<2x96xf32> to vector<2x32xf32>
    %99 = arith.addf %97, %98 : vector<2x32xf32>
    %100 = arith.negf %99 : vector<2x32xf32>
    %101 = math.exp %100 : vector<2x32xf32>
    %cst_22 = arith.constant 1.000000e+00 : f32
    %102 = vector.broadcast %cst_22 : f32 to vector<2x32xf32>
    %103 = arith.addf %102, %101 : vector<2x32xf32>
    %104 = arith.divf %102, %103 : vector<2x32xf32>
    %105 = vector.extract_strided_slice %85 {offsets = [0, 64], sizes = [2, 32], strides = [1, 1]} : vector<2x96xf32> to vector<2x32xf32>
    %106 = vector.extract_strided_slice %88 {offsets = [0, 64], sizes = [2, 32], strides = [1, 1]} : vector<2x96xf32> to vector<2x32xf32>
    %107 = arith.mulf %96, %106 : vector<2x32xf32>
    %108 = arith.addf %105, %107 : vector<2x32xf32>
    %109 = math.tanh %108 : vector<2x32xf32>
    %cst_23 = arith.constant 1.000000e+00 : f32
    %110 = vector.broadcast %cst_23 : f32 to vector<2x32xf32>
    %111 = arith.subf %110, %104 : vector<2x32xf32>
    %112 = arith.mulf %111, %109 : vector<2x32xf32>
    %113 = arith.mulf %104, %83 : vector<2x32xf32>
    %114 = arith.addf %112, %113 : vector<2x32xf32>
    %115 = vector.broadcast %9 : vector<2x1xf32> to vector<2x32xf32>
    %116 = arith.mulf %115, %114 : vector<2x32xf32>
    %cst_24 = arith.constant 1.000000e+00 : f32
    %117 = vector.broadcast %cst_24 : f32 to vector<2x1xf32>
    %118 = arith.subf %117, %9 : vector<2x1xf32>
    %119 = vector.broadcast %118 : vector<2x1xf32> to vector<2x32xf32>
    %120 = arith.mulf %119, %83 : vector<2x32xf32>
    %121 = arith.addf %116, %120 : vector<2x32xf32>
    %122 = vector.extract_strided_slice %40 {offsets = [0, 2, 0], sizes = [2, 1, 96], strides = [1, 1, 1]} : vector<2x8x96xf32> to vector<2x1x96xf32>
    %123 = vector.shape_cast %122 : vector<2x1x96xf32> to vector<2x96xf32>
    %cst_25 = arith.constant dense<0.000000e+00> : vector<2x96xf32>
    %124 = tpu.matmul %121, %42, %cst_25 {dimension_numbers = #tpu.dot_dimension_numbers<[1], [0], [0], [1], [0, 0, 1, 1], [], []>} : vector<2x32xf32>, vector<32x96xf32>, vector<2x96xf32> -> vector<2x96xf32>
    %125 = vector.broadcast %44 : vector<1x96xf32> to vector<2x96xf32>
    %126 = arith.addf %124, %125 : vector<2x96xf32>
    %127 = vector.extract_strided_slice %123 {offsets = [0, 0], sizes = [2, 32], strides = [1, 1]} : vector<2x96xf32> to vector<2x32xf32>
    %128 = vector.extract_strided_slice %126 {offsets = [0, 0], sizes = [2, 32], strides = [1, 1]} : vector<2x96xf32> to vector<2x32xf32>
    %129 = arith.addf %127, %128 : vector<2x32xf32>
    %130 = arith.negf %129 : vector<2x32xf32>
    %131 = math.exp %130 : vector<2x32xf32>
    %cst_26 = arith.constant 1.000000e+00 : f32
    %132 = vector.broadcast %cst_26 : f32 to vector<2x32xf32>
    %133 = arith.addf %132, %131 : vector<2x32xf32>
    %134 = arith.divf %132, %133 : vector<2x32xf32>
    %135 = vector.extract_strided_slice %123 {offsets = [0, 32], sizes = [2, 32], strides = [1, 1]} : vector<2x96xf32> to vector<2x32xf32>
    %136 = vector.extract_strided_slice %126 {offsets = [0, 32], sizes = [2, 32], strides = [1, 1]} : vector<2x96xf32> to vector<2x32xf32>
    %137 = arith.addf %135, %136 : vector<2x32xf32>
    %138 = arith.negf %137 : vector<2x32xf32>
    %139 = math.exp %138 : vector<2x32xf32>
    %cst_27 = arith.constant 1.000000e+00 : f32
    %140 = vector.broadcast %cst_27 : f32 to vector<2x32xf32>
    %141 = arith.addf %140, %139 : vector<2x32xf32>
    %142 = arith.divf %140, %141 : vector<2x32xf32>
    %143 = vector.extract_strided_slice %123 {offsets = [0, 64], sizes = [2, 32], strides = [1, 1]} : vector<2x96xf32> to vector<2x32xf32>
    %144 = vector.extract_strided_slice %126 {offsets = [0, 64], sizes = [2, 32], strides = [1, 1]} : vector<2x96xf32> to vector<2x32xf32>
    %145 = arith.mulf %134, %144 : vector<2x32xf32>
    %146 = arith.addf %143, %145 : vector<2x32xf32>
    %147 = math.tanh %146 : vector<2x32xf32>
    %cst_28 = arith.constant 1.000000e+00 : f32
    %148 = vector.broadcast %cst_28 : f32 to vector<2x32xf32>
    %149 = arith.subf %148, %142 : vector<2x32xf32>
    %150 = arith.mulf %149, %147 : vector<2x32xf32>
    %151 = arith.mulf %142, %121 : vector<2x32xf32>
    %152 = arith.addf %150, %151 : vector<2x32xf32>
    %153 = vector.broadcast %13 : vector<2x1xf32> to vector<2x32xf32>
    %154 = arith.mulf %153, %152 : vector<2x32xf32>
    %cst_29 = arith.constant 1.000000e+00 : f32
    %155 = vector.broadcast %cst_29 : f32 to vector<2x1xf32>
    %156 = arith.subf %155, %13 : vector<2x1xf32>
    %157 = vector.broadcast %156 : vector<2x1xf32> to vector<2x32xf32>
    %158 = arith.mulf %157, %121 : vector<2x32xf32>
    %159 = arith.addf %154, %158 : vector<2x32xf32>
    %160 = vector.extract_strided_slice %40 {offsets = [0, 3, 0], sizes = [2, 1, 96], strides = [1, 1, 1]} : vector<2x8x96xf32> to vector<2x1x96xf32>
    %161 = vector.shape_cast %160 : vector<2x1x96xf32> to vector<2x96xf32>
    %cst_30 = arith.constant dense<0.000000e+00> : vector<2x96xf32>
    %162 = tpu.matmul %159, %42, %cst_30 {dimension_numbers = #tpu.dot_dimension_numbers<[1], [0], [0], [1], [0, 0, 1, 1], [], []>} : vector<2x32xf32>, vector<32x96xf32>, vector<2x96xf32> -> vector<2x96xf32>
    %163 = vector.broadcast %44 : vector<1x96xf32> to vector<2x96xf32>
    %164 = arith.addf %162, %163 : vector<2x96xf32>
    %165 = vector.extract_strided_slice %161 {offsets = [0, 0], sizes = [2, 32], strides = [1, 1]} : vector<2x96xf32> to vector<2x32xf32>
    %166 = vector.extract_strided_slice %164 {offsets = [0, 0], sizes = [2, 32], strides = [1, 1]} : vector<2x96xf32> to vector<2x32xf32>
    %167 = arith.addf %165, %166 : vector<2x32xf32>
    %168 = arith.negf %167 : vector<2x32xf32>
    %169 = math.exp %168 : vector<2x32xf32>
    %cst_31 = arith.constant 1.000000e+00 : f32
    %170 = vector.broadcast %cst_31 : f32 to vector<2x32xf32>
    %171 = arith.addf %170, %169 : vector<2x32xf32>
    %172 = arith.divf %170, %171 : vector<2x32xf32>
    %173 = vector.extract_strided_slice %161 {offsets = [0, 32], sizes = [2, 32], strides = [1, 1]} : vector<2x96xf32> to vector<2x32xf32>
    %174 = vector.extract_strided_slice %164 {offsets = [0, 32], sizes = [2, 32], strides = [1, 1]} : vector<2x96xf32> to vector<2x32xf32>
    %175 = arith.addf %173, %174 : vector<2x32xf32>
    %176 = arith.negf %175 : vector<2x32xf32>
    %177 = math.exp %176 : vector<2x32xf32>
    %cst_32 = arith.constant 1.000000e+00 : f32
    %178 = vector.broadcast %cst_32 : f32 to vector<2x32xf32>
    %179 = arith.addf %178, %177 : vector<2x32xf32>
    %180 = arith.divf %178, %179 : vector<2x32xf32>
    %181 = vector.extract_strided_slice %161 {offsets = [0, 64], sizes = [2, 32], strides = [1, 1]} : vector<2x96xf32> to vector<2x32xf32>
    %182 = vector.extract_strided_slice %164 {offsets = [0, 64], sizes = [2, 32], strides = [1, 1]} : vector<2x96xf32> to vector<2x32xf32>
    %183 = arith.mulf %172, %182 : vector<2x32xf32>
    %184 = arith.addf %181, %183 : vector<2x32xf32>
    %185 = math.tanh %184 : vector<2x32xf32>
    %cst_33 = arith.constant 1.000000e+00 : f32
    %186 = vector.broadcast %cst_33 : f32 to vector<2x32xf32>
    %187 = arith.subf %186, %180 : vector<2x32xf32>
    %188 = arith.mulf %187, %185 : vector<2x32xf32>
    %189 = arith.mulf %180, %159 : vector<2x32xf32>
    %190 = arith.addf %188, %189 : vector<2x32xf32>
    %191 = vector.broadcast %17 : vector<2x1xf32> to vector<2x32xf32>
    %192 = arith.mulf %191, %190 : vector<2x32xf32>
    %cst_34 = arith.constant 1.000000e+00 : f32
    %193 = vector.broadcast %cst_34 : f32 to vector<2x1xf32>
    %194 = arith.subf %193, %17 : vector<2x1xf32>
    %195 = vector.broadcast %194 : vector<2x1xf32> to vector<2x32xf32>
    %196 = arith.mulf %195, %159 : vector<2x32xf32>
    %197 = arith.addf %192, %196 : vector<2x32xf32>
    %198 = vector.extract_strided_slice %40 {offsets = [0, 4, 0], sizes = [2, 1, 96], strides = [1, 1, 1]} : vector<2x8x96xf32> to vector<2x1x96xf32>
    %199 = vector.shape_cast %198 : vector<2x1x96xf32> to vector<2x96xf32>
    %cst_35 = arith.constant dense<0.000000e+00> : vector<2x96xf32>
    %200 = tpu.matmul %197, %42, %cst_35 {dimension_numbers = #tpu.dot_dimension_numbers<[1], [0], [0], [1], [0, 0, 1, 1], [], []>} : vector<2x32xf32>, vector<32x96xf32>, vector<2x96xf32> -> vector<2x96xf32>
    %201 = vector.broadcast %44 : vector<1x96xf32> to vector<2x96xf32>
    %202 = arith.addf %200, %201 : vector<2x96xf32>
    %203 = vector.extract_strided_slice %199 {offsets = [0, 0], sizes = [2, 32], strides = [1, 1]} : vector<2x96xf32> to vector<2x32xf32>
    %204 = vector.extract_strided_slice %202 {offsets = [0, 0], sizes = [2, 32], strides = [1, 1]} : vector<2x96xf32> to vector<2x32xf32>
    %205 = arith.addf %203, %204 : vector<2x32xf32>
    %206 = arith.negf %205 : vector<2x32xf32>
    %207 = math.exp %206 : vector<2x32xf32>
    %cst_36 = arith.constant 1.000000e+00 : f32
    %208 = vector.broadcast %cst_36 : f32 to vector<2x32xf32>
    %209 = arith.addf %208, %207 : vector<2x32xf32>
    %210 = arith.divf %208, %209 : vector<2x32xf32>
    %211 = vector.extract_strided_slice %199 {offsets = [0, 32], sizes = [2, 32], strides = [1, 1]} : vector<2x96xf32> to vector<2x32xf32>
    %212 = vector.extract_strided_slice %202 {offsets = [0, 32], sizes = [2, 32], strides = [1, 1]} : vector<2x96xf32> to vector<2x32xf32>
    %213 = arith.addf %211, %212 : vector<2x32xf32>
    %214 = arith.negf %213 : vector<2x32xf32>
    %215 = math.exp %214 : vector<2x32xf32>
    %cst_37 = arith.constant 1.000000e+00 : f32
    %216 = vector.broadcast %cst_37 : f32 to vector<2x32xf32>
    %217 = arith.addf %216, %215 : vector<2x32xf32>
    %218 = arith.divf %216, %217 : vector<2x32xf32>
    %219 = vector.extract_strided_slice %199 {offsets = [0, 64], sizes = [2, 32], strides = [1, 1]} : vector<2x96xf32> to vector<2x32xf32>
    %220 = vector.extract_strided_slice %202 {offsets = [0, 64], sizes = [2, 32], strides = [1, 1]} : vector<2x96xf32> to vector<2x32xf32>
    %221 = arith.mulf %210, %220 : vector<2x32xf32>
    %222 = arith.addf %219, %221 : vector<2x32xf32>
    %223 = math.tanh %222 : vector<2x32xf32>
    %cst_38 = arith.constant 1.000000e+00 : f32
    %224 = vector.broadcast %cst_38 : f32 to vector<2x32xf32>
    %225 = arith.subf %224, %218 : vector<2x32xf32>
    %226 = arith.mulf %225, %223 : vector<2x32xf32>
    %227 = arith.mulf %218, %197 : vector<2x32xf32>
    %228 = arith.addf %226, %227 : vector<2x32xf32>
    %229 = vector.broadcast %21 : vector<2x1xf32> to vector<2x32xf32>
    %230 = arith.mulf %229, %228 : vector<2x32xf32>
    %cst_39 = arith.constant 1.000000e+00 : f32
    %231 = vector.broadcast %cst_39 : f32 to vector<2x1xf32>
    %232 = arith.subf %231, %21 : vector<2x1xf32>
    %233 = vector.broadcast %232 : vector<2x1xf32> to vector<2x32xf32>
    %234 = arith.mulf %233, %197 : vector<2x32xf32>
    %235 = arith.addf %230, %234 : vector<2x32xf32>
    %236 = vector.extract_strided_slice %40 {offsets = [0, 5, 0], sizes = [2, 1, 96], strides = [1, 1, 1]} : vector<2x8x96xf32> to vector<2x1x96xf32>
    %237 = vector.shape_cast %236 : vector<2x1x96xf32> to vector<2x96xf32>
    %cst_40 = arith.constant dense<0.000000e+00> : vector<2x96xf32>
    %238 = tpu.matmul %235, %42, %cst_40 {dimension_numbers = #tpu.dot_dimension_numbers<[1], [0], [0], [1], [0, 0, 1, 1], [], []>} : vector<2x32xf32>, vector<32x96xf32>, vector<2x96xf32> -> vector<2x96xf32>
    %239 = vector.broadcast %44 : vector<1x96xf32> to vector<2x96xf32>
    %240 = arith.addf %238, %239 : vector<2x96xf32>
    %241 = vector.extract_strided_slice %237 {offsets = [0, 0], sizes = [2, 32], strides = [1, 1]} : vector<2x96xf32> to vector<2x32xf32>
    %242 = vector.extract_strided_slice %240 {offsets = [0, 0], sizes = [2, 32], strides = [1, 1]} : vector<2x96xf32> to vector<2x32xf32>
    %243 = arith.addf %241, %242 : vector<2x32xf32>
    %244 = arith.negf %243 : vector<2x32xf32>
    %245 = math.exp %244 : vector<2x32xf32>
    %cst_41 = arith.constant 1.000000e+00 : f32
    %246 = vector.broadcast %cst_41 : f32 to vector<2x32xf32>
    %247 = arith.addf %246, %245 : vector<2x32xf32>
    %248 = arith.divf %246, %247 : vector<2x32xf32>
    %249 = vector.extract_strided_slice %237 {offsets = [0, 32], sizes = [2, 32], strides = [1, 1]} : vector<2x96xf32> to vector<2x32xf32>
    %250 = vector.extract_strided_slice %240 {offsets = [0, 32], sizes = [2, 32], strides = [1, 1]} : vector<2x96xf32> to vector<2x32xf32>
    %251 = arith.addf %249, %250 : vector<2x32xf32>
    %252 = arith.negf %251 : vector<2x32xf32>
    %253 = math.exp %252 : vector<2x32xf32>
    %cst_42 = arith.constant 1.000000e+00 : f32
    %254 = vector.broadcast %cst_42 : f32 to vector<2x32xf32>
    %255 = arith.addf %254, %253 : vector<2x32xf32>
    %256 = arith.divf %254, %255 : vector<2x32xf32>
    %257 = vector.extract_strided_slice %237 {offsets = [0, 64], sizes = [2, 32], strides = [1, 1]} : vector<2x96xf32> to vector<2x32xf32>
    %258 = vector.extract_strided_slice %240 {offsets = [0, 64], sizes = [2, 32], strides = [1, 1]} : vector<2x96xf32> to vector<2x32xf32>
    %259 = arith.mulf %248, %258 : vector<2x32xf32>
    %260 = arith.addf %257, %259 : vector<2x32xf32>
    %261 = math.tanh %260 : vector<2x32xf32>
    %cst_43 = arith.constant 1.000000e+00 : f32
    %262 = vector.broadcast %cst_43 : f32 to vector<2x32xf32>
    %263 = arith.subf %262, %256 : vector<2x32xf32>
    %264 = arith.mulf %263, %261 : vector<2x32xf32>
    %265 = arith.mulf %256, %235 : vector<2x32xf32>
    %266 = arith.addf %264, %265 : vector<2x32xf32>
    %267 = vector.broadcast %25 : vector<2x1xf32> to vector<2x32xf32>
    %268 = arith.mulf %267, %266 : vector<2x32xf32>
    %cst_44 = arith.constant 1.000000e+00 : f32
    %269 = vector.broadcast %cst_44 : f32 to vector<2x1xf32>
    %270 = arith.subf %269, %25 : vector<2x1xf32>
    %271 = vector.broadcast %270 : vector<2x1xf32> to vector<2x32xf32>
    %272 = arith.mulf %271, %235 : vector<2x32xf32>
    %273 = arith.addf %268, %272 : vector<2x32xf32>
    %274 = vector.extract_strided_slice %40 {offsets = [0, 6, 0], sizes = [2, 1, 96], strides = [1, 1, 1]} : vector<2x8x96xf32> to vector<2x1x96xf32>
    %275 = vector.shape_cast %274 : vector<2x1x96xf32> to vector<2x96xf32>
    %cst_45 = arith.constant dense<0.000000e+00> : vector<2x96xf32>
    %276 = tpu.matmul %273, %42, %cst_45 {dimension_numbers = #tpu.dot_dimension_numbers<[1], [0], [0], [1], [0, 0, 1, 1], [], []>} : vector<2x32xf32>, vector<32x96xf32>, vector<2x96xf32> -> vector<2x96xf32>
    %277 = vector.broadcast %44 : vector<1x96xf32> to vector<2x96xf32>
    %278 = arith.addf %276, %277 : vector<2x96xf32>
    %279 = vector.extract_strided_slice %275 {offsets = [0, 0], sizes = [2, 32], strides = [1, 1]} : vector<2x96xf32> to vector<2x32xf32>
    %280 = vector.extract_strided_slice %278 {offsets = [0, 0], sizes = [2, 32], strides = [1, 1]} : vector<2x96xf32> to vector<2x32xf32>
    %281 = arith.addf %279, %280 : vector<2x32xf32>
    %282 = arith.negf %281 : vector<2x32xf32>
    %283 = math.exp %282 : vector<2x32xf32>
    %cst_46 = arith.constant 1.000000e+00 : f32
    %284 = vector.broadcast %cst_46 : f32 to vector<2x32xf32>
    %285 = arith.addf %284, %283 : vector<2x32xf32>
    %286 = arith.divf %284, %285 : vector<2x32xf32>
    %287 = vector.extract_strided_slice %275 {offsets = [0, 32], sizes = [2, 32], strides = [1, 1]} : vector<2x96xf32> to vector<2x32xf32>
    %288 = vector.extract_strided_slice %278 {offsets = [0, 32], sizes = [2, 32], strides = [1, 1]} : vector<2x96xf32> to vector<2x32xf32>
    %289 = arith.addf %287, %288 : vector<2x32xf32>
    %290 = arith.negf %289 : vector<2x32xf32>
    %291 = math.exp %290 : vector<2x32xf32>
    %cst_47 = arith.constant 1.000000e+00 : f32
    %292 = vector.broadcast %cst_47 : f32 to vector<2x32xf32>
    %293 = arith.addf %292, %291 : vector<2x32xf32>
    %294 = arith.divf %292, %293 : vector<2x32xf32>
    %295 = vector.extract_strided_slice %275 {offsets = [0, 64], sizes = [2, 32], strides = [1, 1]} : vector<2x96xf32> to vector<2x32xf32>
    %296 = vector.extract_strided_slice %278 {offsets = [0, 64], sizes = [2, 32], strides = [1, 1]} : vector<2x96xf32> to vector<2x32xf32>
    %297 = arith.mulf %286, %296 : vector<2x32xf32>
    %298 = arith.addf %295, %297 : vector<2x32xf32>
    %299 = math.tanh %298 : vector<2x32xf32>
    %cst_48 = arith.constant 1.000000e+00 : f32
    %300 = vector.broadcast %cst_48 : f32 to vector<2x32xf32>
    %301 = arith.subf %300, %294 : vector<2x32xf32>
    %302 = arith.mulf %301, %299 : vector<2x32xf32>
    %303 = arith.mulf %294, %273 : vector<2x32xf32>
    %304 = arith.addf %302, %303 : vector<2x32xf32>
    %305 = vector.broadcast %29 : vector<2x1xf32> to vector<2x32xf32>
    %306 = arith.mulf %305, %304 : vector<2x32xf32>
    %cst_49 = arith.constant 1.000000e+00 : f32
    %307 = vector.broadcast %cst_49 : f32 to vector<2x1xf32>
    %308 = arith.subf %307, %29 : vector<2x1xf32>
    %309 = vector.broadcast %308 : vector<2x1xf32> to vector<2x32xf32>
    %310 = arith.mulf %309, %273 : vector<2x32xf32>
    %311 = arith.addf %306, %310 : vector<2x32xf32>
    %312 = vector.extract_strided_slice %40 {offsets = [0, 7, 0], sizes = [2, 1, 96], strides = [1, 1, 1]} : vector<2x8x96xf32> to vector<2x1x96xf32>
    %313 = vector.shape_cast %312 : vector<2x1x96xf32> to vector<2x96xf32>
    %cst_50 = arith.constant dense<0.000000e+00> : vector<2x96xf32>
    %314 = tpu.matmul %311, %42, %cst_50 {dimension_numbers = #tpu.dot_dimension_numbers<[1], [0], [0], [1], [0, 0, 1, 1], [], []>} : vector<2x32xf32>, vector<32x96xf32>, vector<2x96xf32> -> vector<2x96xf32>
    %315 = vector.broadcast %44 : vector<1x96xf32> to vector<2x96xf32>
    %316 = arith.addf %314, %315 : vector<2x96xf32>
    %317 = vector.extract_strided_slice %313 {offsets = [0, 0], sizes = [2, 32], strides = [1, 1]} : vector<2x96xf32> to vector<2x32xf32>
    %318 = vector.extract_strided_slice %316 {offsets = [0, 0], sizes = [2, 32], strides = [1, 1]} : vector<2x96xf32> to vector<2x32xf32>
    %319 = arith.addf %317, %318 : vector<2x32xf32>
    %320 = arith.negf %319 : vector<2x32xf32>
    %321 = math.exp %320 : vector<2x32xf32>
    %cst_51 = arith.constant 1.000000e+00 : f32
    %322 = vector.broadcast %cst_51 : f32 to vector<2x32xf32>
    %323 = arith.addf %322, %321 : vector<2x32xf32>
    %324 = arith.divf %322, %323 : vector<2x32xf32>
    %325 = vector.extract_strided_slice %313 {offsets = [0, 32], sizes = [2, 32], strides = [1, 1]} : vector<2x96xf32> to vector<2x32xf32>
    %326 = vector.extract_strided_slice %316 {offsets = [0, 32], sizes = [2, 32], strides = [1, 1]} : vector<2x96xf32> to vector<2x32xf32>
    %327 = arith.addf %325, %326 : vector<2x32xf32>
    %328 = arith.negf %327 : vector<2x32xf32>
    %329 = math.exp %328 : vector<2x32xf32>
    %cst_52 = arith.constant 1.000000e+00 : f32
    %330 = vector.broadcast %cst_52 : f32 to vector<2x32xf32>
    %331 = arith.addf %330, %329 : vector<2x32xf32>
    %332 = arith.divf %330, %331 : vector<2x32xf32>
    %333 = vector.extract_strided_slice %313 {offsets = [0, 64], sizes = [2, 32], strides = [1, 1]} : vector<2x96xf32> to vector<2x32xf32>
    %334 = vector.extract_strided_slice %316 {offsets = [0, 64], sizes = [2, 32], strides = [1, 1]} : vector<2x96xf32> to vector<2x32xf32>
    %335 = arith.mulf %324, %334 : vector<2x32xf32>
    %336 = arith.addf %333, %335 : vector<2x32xf32>
    %337 = math.tanh %336 : vector<2x32xf32>
    %cst_53 = arith.constant 1.000000e+00 : f32
    %338 = vector.broadcast %cst_53 : f32 to vector<2x32xf32>
    %339 = arith.subf %338, %332 : vector<2x32xf32>
    %340 = arith.mulf %339, %337 : vector<2x32xf32>
    %341 = arith.mulf %332, %311 : vector<2x32xf32>
    %342 = arith.addf %340, %341 : vector<2x32xf32>
    %343 = vector.broadcast %33 : vector<2x1xf32> to vector<2x32xf32>
    %344 = arith.mulf %343, %342 : vector<2x32xf32>
    %345 = vector.shape_cast %78 : vector<2x32xf32> to vector<2x1x32xf32>
    %c0_54 = arith.constant 0 : index
    %c0_55 = arith.constant 0 : index
    %c0_56 = arith.constant 0 : index
    %346 = vector.load %arg7[%c0_54, %c0_55, %c0_56] : memref<2x8x32xf32, #tpu.memory_space<vmem>>, vector<2x1x32xf32>
    tpu.vector_store %arg7[%c0_54, %c0_55, %c0_56], %345 {strides = array<i32>} : memref<2x8x32xf32, #tpu.memory_space<vmem>>, vector<2x1x32xf32>,
    %347 = vector.shape_cast %116 : vector<2x32xf32> to vector<2x1x32xf32>
    %c0_57 = arith.constant 0 : index
    %c1 = arith.constant 1 : index
    %c0_58 = arith.constant 0 : index
    %348 = vector.load %arg7[%c0_57, %c1, %c0_58] : memref<2x8x32xf32, #tpu.memory_space<vmem>>, vector<2x1x32xf32>
    tpu.vector_store %arg7[%c0_57, %c1, %c0_58], %347 {strides = array<i32>} : memref<2x8x32xf32, #tpu.memory_space<vmem>>, vector<2x1x32xf32>,
    %349 = vector.shape_cast %154 : vector<2x32xf32> to vector<2x1x32xf32>
    %c0_59 = arith.constant 0 : index
    %c2 = arith.constant 2 : index
    %c0_60 = arith.constant 0 : index
    %350 = vector.load %arg7[%c0_59, %c2, %c0_60] : memref<2x8x32xf32, #tpu.memory_space<vmem>>, vector<2x1x32xf32>
    tpu.vector_store %arg7[%c0_59, %c2, %c0_60], %349 {strides = array<i32>} : memref<2x8x32xf32, #tpu.memory_space<vmem>>, vector<2x1x32xf32>,
    %351 = vector.shape_cast %192 : vector<2x32xf32> to vector<2x1x32xf32>
    %c0_61 = arith.constant 0 : index
    %c3 = arith.constant 3 : index
    %c0_62 = arith.constant 0 : index
    %352 = vector.load %arg7[%c0_61, %c3, %c0_62] : memref<2x8x32xf32, #tpu.memory_space<vmem>>, vector<2x1x32xf32>
    tpu.vector_store %arg7[%c0_61, %c3, %c0_62], %351 {strides = array<i32>} : memref<2x8x32xf32, #tpu.memory_space<vmem>>, vector<2x1x32xf32>,
    %353 = vector.shape_cast %230 : vector<2x32xf32> to vector<2x1x32xf32>
    %c0_63 = arith.constant 0 : index
    %c4 = arith.constant 4 : index
    %c0_64 = arith.constant 0 : index
    %354 = vector.load %arg7[%c0_63, %c4, %c0_64] : memref<2x8x32xf32, #tpu.memory_space<vmem>>, vector<2x1x32xf32>
    tpu.vector_store %arg7[%c0_63, %c4, %c0_64], %353 {strides = array<i32>} : memref<2x8x32xf32, #tpu.memory_space<vmem>>, vector<2x1x32xf32>,
    %355 = vector.shape_cast %268 : vector<2x32xf32> to vector<2x1x32xf32>
    %c0_65 = arith.constant 0 : index
    %c5 = arith.constant 5 : index
    %c0_66 = arith.constant 0 : index
    %356 = vector.load %arg7[%c0_65, %c5, %c0_66] : memref<2x8x32xf32, #tpu.memory_space<vmem>>, vector<2x1x32xf32>
    tpu.vector_store %arg7[%c0_65, %c5, %c0_66], %355 {strides = array<i32>} : memref<2x8x32xf32, #tpu.memory_space<vmem>>, vector<2x1x32xf32>,
    %357 = vector.shape_cast %306 : vector<2x32xf32> to vector<2x1x32xf32>
    %c0_67 = arith.constant 0 : index
    %c6 = arith.constant 6 : index
    %c0_68 = arith.constant 0 : index
    %358 = vector.load %arg7[%c0_67, %c6, %c0_68] : memref<2x8x32xf32, #tpu.memory_space<vmem>>, vector<2x1x32xf32>
    tpu.vector_store %arg7[%c0_67, %c6, %c0_68], %357 {strides = array<i32>} : memref<2x8x32xf32, #tpu.memory_space<vmem>>, vector<2x1x32xf32>,
    %359 = vector.shape_cast %344 : vector<2x32xf32> to vector<2x1x32xf32>
    %c0_69 = arith.constant 0 : index
    %c7 = arith.constant 7 : index
    %c0_70 = arith.constant 0 : index
    %360 = vector.load %arg7[%c0_69, %c7, %c0_70] : memref<2x8x32xf32, #tpu.memory_space<vmem>>, vector<2x1x32xf32>
    tpu.vector_store %arg7[%c0_69, %c7, %c0_70], %359 {strides = array<i32>} : memref<2x8x32xf32, #tpu.memory_space<vmem>>, vector<2x1x32xf32>,
    return
  }
  func.func @transform_0(%arg0: i32) -> (i32, i32, i32) {
    %c0_i32 = arith.constant 0 : i32
    %c0_i32_0 = arith.constant 0 : i32
    %c0_i32_1 = arith.constant 0 : i32
    return %arg0, %c0_i32, %c0_i32_0 : i32, i32, i32
  }
  func.func @transform_1(%arg0: i32) -> (i32, i32) {
    %c0_i32 = arith.constant 0 : i32
    %c0_i32_0 = arith.constant 0 : i32
    return %arg0, %c0_i32 : i32, i32
  }
  func.func @transform_2(%arg0: i32) -> (i32, i32) {
    %c0_i32 = arith.constant 0 : i32
    %c0_i32_0 = arith.constant 0 : i32
    %c0_i32_1 = arith.constant 0 : i32
    return %c0_i32, %c0_i32_0 : i32, i32
  }
  func.func @transform_3(%arg0: i32) -> (i32, i32) {
    %c0_i32 = arith.constant 0 : i32
    %c0_i32_0 = arith.constant 0 : i32
    %c0_i32_1 = arith.constant 0 : i32
    return %c0_i32, %c0_i32_0 : i32, i32
  }
  func.func @transform_4(%arg0: i32) -> (i32, i32, i32) {
    %c0_i32 = arith.constant 0 : i32
    %c0_i32_0 = arith.constant 0 : i32
    %c0_i32_1 = arith.constant 0 : i32
    %c0_i32_2 = arith.constant 0 : i32
    return %c0_i32, %c0_i32_0, %c0_i32_1 : i32, i32, i32
  }
  func.func @transform_5(%arg0: i32) -> (i32, i32, i32) {
    %c0_i32 = arith.constant 0 : i32
    %c0_i32_0 = arith.constant 0 : i32
    %c0_i32_1 = arith.constant 0 : i32
    %c0_i32_2 = arith.constant 0 : i32
    return %c0_i32, %c0_i32_0, %c0_i32_1 : i32, i32, i32
  }
  func.func @transform_6(%arg0: i32) -> (i32, i32, i32) {
    %c0_i32 = arith.constant 0 : i32
    %c0_i32_0 = arith.constant 0 : i32
    %c0_i32_1 = arith.constant 0 : i32
    return %arg0, %c0_i32, %c0_i32_0 : i32, i32, i32
  }
}

module attributes {stable_mosaic.version = 11 : i64} {
  func.func @_attn_pool_kernel(%arg0: i32, %arg1: memref<2x8x32xf32, #tpu.memory_space<vmem>>, %arg2: memref<2x1xi32, #tpu.memory_space<vmem>>, %arg3: memref<32x16xf32, #tpu.memory_space<vmem>>, %arg4: memref<1x16xf32, #tpu.memory_space<vmem>>, %arg5: memref<16x1xf32, #tpu.memory_space<vmem>>, %arg6: memref<2x32xf32, #tpu.memory_space<vmem>>, %arg7: memref<2x8xf32, #tpu.memory_space<vmem>>) attributes {dimension_semantics = [#tpu.dimension_semantics<parallel>], iteration_bounds = array<i64: 1>, scalar_prefetch = 0 : i64, scratch_operands = 0 : i64, tpu.core_type = #tpu.core_type<tc>, window_params = [{transform_indices = @transform_0, window_bounds = array<i64: 2, 8, 32>}, {transform_indices = @transform_1, window_bounds = array<i64: 2, 1>}, {pipeline_mode = #tpu.pipeline_mode<synchronous>, transform_indices = @transform_2, window_bounds = array<i64: 32, 16>}, {pipeline_mode = #tpu.pipeline_mode<synchronous>, transform_indices = @transform_3, window_bounds = array<i64: 1, 16>}, {pipeline_mode = #tpu.pipeline_mode<synchronous>, transform_indices = @transform_4, window_bounds = array<i64: 16, 1>}, {transform_indices = @transform_5, window_bounds = array<i64: 2, 32>}, {transform_indices = @transform_6, window_bounds = array<i64: 2, 8>}]} {
    %c0 = arith.constant 0 : index
    %c0_0 = arith.constant 0 : index
    %c0_1 = arith.constant 0 : index
    %0 = vector.load %arg1[%c0, %c0_0, %c0_1] : memref<2x8x32xf32, #tpu.memory_space<vmem>>, vector<2x8x32xf32>
    %c0_2 = arith.constant 0 : index
    %c0_3 = arith.constant 0 : index
    %1 = vector.load %arg2[%c0_2, %c0_3] : memref<2x1xi32, #tpu.memory_space<vmem>>, vector<2x1xi32>
    %2 = vector.shape_cast %0 : vector<2x8x32xf32> to vector<16x32xf32>
    %c0_4 = arith.constant 0 : index
    %c0_5 = arith.constant 0 : index
    %3 = vector.load %arg3[%c0_4, %c0_5] : memref<32x16xf32, #tpu.memory_space<vmem>>, vector<32x16xf32>
    %cst = arith.constant dense<0.000000e+00> : vector<16x16xf32>
    %4 = tpu.matmul %2, %3, %cst {dimension_numbers = #tpu.dot_dimension_numbers<[1], [0], [0], [1], [0, 0, 1, 1], [], []>} : vector<16x32xf32>, vector<32x16xf32>, vector<16x16xf32> -> vector<16x16xf32>
    %c0_6 = arith.constant 0 : index
    %c0_7 = arith.constant 0 : index
    %5 = vector.load %arg4[%c0_6, %c0_7] : memref<1x16xf32, #tpu.memory_space<vmem>>, vector<1x16xf32>
    %6 = vector.broadcast %5 : vector<1x16xf32> to vector<16x16xf32>
    %7 = arith.addf %4, %6 : vector<16x16xf32>
    %cst_8 = arith.constant 0.000000e+00 : f32
    %8 = vector.broadcast %cst_8 : f32 to vector<16x16xf32>
    %9 = arith.cmpf oge, %7, %8 : vector<16x16xf32>
    %cst_9 = arith.constant 0.00999999977 : f32
    %10 = vector.broadcast %cst_9 : f32 to vector<16x16xf32>
    %11 = arith.mulf %10, %7 : vector<16x16xf32>
    %12 = arith.select %9, %7, %11 : vector<16x16xi1>, vector<16x16xf32>
    %c0_10 = arith.constant 0 : index
    %c0_11 = arith.constant 0 : index
    %13 = vector.load %arg5[%c0_10, %c0_11] : memref<16x1xf32, #tpu.memory_space<vmem>>, vector<16x1xf32>
    %cst_12 = arith.constant dense<0.000000e+00> : vector<16x1xf32>
    %14 = tpu.matmul %12, %13, %cst_12 {dimension_numbers = #tpu.dot_dimension_numbers<[1], [0], [0], [1], [0, 0, 1, 1], [], []>} : vector<16x16xf32>, vector<16x1xf32>, vector<16x1xf32> -> vector<16x1xf32>
    %15 = vector.shape_cast %14 : vector<16x1xf32> to vector<2x8xf32>
    %cst_13 = arith.constant 1.000000e+00 : f32
    %16 = vector.broadcast %cst_13 : f32 to vector<2x8xf32>
    %17 = arith.mulf %15, %16 : vector<2x8xf32>
    %18 = tpu.iota {dimensions = array<i32: 1>} : vector<2x8xi32>
    %19 = vector.broadcast %1 : vector<2x1xi32> to vector<2x8xi32>
    %20 = arith.cmpi slt, %18, %19 : vector<2x8xi32>
    %cst_14 = arith.constant -9.999900e+04 : f32
    %21 = vector.broadcast %cst_14 : f32 to vector<2x8xf32>
    %22 = arith.select %20, %17, %21 : vector<2x8xi1>, vector<2x8xf32>
    %cst_15 = arith.constant dense<0xFF800000> : vector<2xf32>
    %23 = vector.multi_reduction <maximumf>, %22, %cst_15 [1] : vector<2x8xf32> to vector<2xf32>
    %24 = vector.shape_cast %23 : vector<2xf32> to vector<2x1xf32>
    %25 = vector.broadcast %24 : vector<2x1xf32> to vector<2x8xf32>
    %26 = arith.subf %22, %25 : vector<2x8xf32>
    %27 = math.exp %26 : vector<2x8xf32>
    %cst_16 = arith.constant dense<0.000000e+00> : vector<2xf32>
    %28 = vector.multi_reduction <add>, %27, %cst_16 [1] : vector<2x8xf32> to vector<2xf32>
    %29 = vector.shape_cast %28 : vector<2xf32> to vector<2x1xf32>
    %30 = vector.broadcast %29 : vector<2x1xf32> to vector<2x8xf32>
    %31 = arith.divf %27, %30 : vector<2x8xf32>
    %c0_17 = arith.constant 0 : index
    %c0_18 = arith.constant 0 : index
    %32 = vector.load %arg7[%c0_17, %c0_18] : memref<2x8xf32, #tpu.memory_space<vmem>>, vector<2x8xf32>
    tpu.vector_store %arg7[%c0_17, %c0_18], %31 {strides = array<i32>} : memref<2x8xf32, #tpu.memory_space<vmem>>, vector<2x8xf32>,
    %33 = vector.shape_cast %31 : vector<2x8xf32> to vector<2x8x1xf32>
    %34 = vector.broadcast %33 : vector<2x8x1xf32> to vector<2x8x32xf32>
    %35 = arith.mulf %34, %0 : vector<2x8x32xf32>
    %cst_19 = arith.constant dense<0.000000e+00> : vector<2x32xf32>
    %36 = vector.multi_reduction <add>, %35, %cst_19 [1] : vector<2x8x32xf32> to vector<2x32xf32>
    %c0_20 = arith.constant 0 : index
    %c0_21 = arith.constant 0 : index
    %37 = vector.load %arg6[%c0_20, %c0_21] : memref<2x32xf32, #tpu.memory_space<vmem>>, vector<2x32xf32>
    tpu.vector_store %arg6[%c0_20, %c0_21], %36 {strides = array<i32>} : memref<2x32xf32, #tpu.memory_space<vmem>>, vector<2x32xf32>,
    return
  }
  func.func @transform_0(%arg0: i32) -> (i32, i32, i32) {
    %c0_i32 = arith.constant 0 : i32
    %c0_i32_0 = arith.constant 0 : i32
    %c0_i32_1 = arith.constant 0 : i32
    return %arg0, %c0_i32, %c0_i32_0 : i32, i32, i32
  }
  func.func @transform_1(%arg0: i32) -> (i32, i32) {
    %c0_i32 = arith.constant 0 : i32
    %c0_i32_0 = arith.constant 0 : i32
    return %arg0, %c0_i32 : i32, i32
  }
  func.func @transform_2(%arg0: i32) -> (i32, i32) {
    %c0_i32 = arith.constant 0 : i32
    %c0_i32_0 = arith.constant 0 : i32
    %c0_i32_1 = arith.constant 0 : i32
    return %c0_i32, %c0_i32_0 : i32, i32
  }
  func.func @transform_3(%arg0: i32) -> (i32, i32) {
    %c0_i32 = arith.constant 0 : i32
    %c0_i32_0 = arith.constant 0 : i32
    %c0_i32_1 = arith.constant 0 : i32
    return %c0_i32, %c0_i32_0 : i32, i32
  }
  func.func @transform_4(%arg0: i32) -> (i32, i32) {
    %c0_i32 = arith.constant 0 : i32
    %c0_i32_0 = arith.constant 0 : i32
    %c0_i32_1 = arith.constant 0 : i32
    return %c0_i32, %c0_i32_0 : i32, i32
  }
  func.func @transform_5(%arg0: i32) -> (i32, i32) {
    %c0_i32 = arith.constant 0 : i32
    %c0_i32_0 = arith.constant 0 : i32
    return %arg0, %c0_i32 : i32, i32
  }
  func.func @transform_6(%arg0: i32) -> (i32, i32) {
    %c0_i32 = arith.constant 0 : i32
    %c0_i32_0 = arith.constant 0 : i32
    return %arg0, %c0_i32 : i32, i32
  }
}

</mosaic_0001>

<llo_original>
// kernel: hierarchical_attention_encoder_forward.7
$region0: #{hierarchical_attention_encoder_forward.7}
  #allocation0 [shape = 'u32[]', space=smem, size = 0x4, offset = 0x4, fixed_abs, tag = 'smem constant byte address 0x4 - core index']
  #allocation1 [shape = 'u32[144,128]{1,0:T(1,128)}', space=vmem, size = 0x12000, scoped, tag = 'internal scratch']
  %s0 = inlined_call_operand.vmem [shape: f32[2,8,32], index: 0, kind: input, shape index: {}]
  %s1 = inlined_call_operand.vmem [shape: s32[2,1], index: 1, kind: input, shape index: {}]
  %s2 = inlined_call_operand.vmem [shape: f32[32,16], index: 2, kind: input, shape index: {}]
  %s3 = inlined_call_operand.vmem [shape: f32[1,16], index: 3, kind: input, shape index: {}]
  %s4 = inlined_call_operand.vmem [shape: f32[16,1], index: 4, kind: input, shape index: {}]
  %s5 = inlined_call_operand.hbm [shape: f32[2,32], index: 5, kind: output, shape index: {0}]
  %s6 = inlined_call_operand.hbm [shape: f32[2,8], index: 6, kind: output, shape index: {1}]
  %7 = xla_tuple %s5, %s6
  %s8 = sld [smem:[#allocation0]]
  $region38: #{hierarchical_attention_encoder_forward.7} parent=0
    _
  %s10 = ssub.s32 1, %s8
  %s11 = scalar_select 0, %s10, %s8
  $region1: #{hierarchical_attention_encoder_forward.7} parent=0
    #allocation2 [shape = 'u8[1024]{0}', space=vmem, size = 0x400, scoped, tag = 'output window, operand 0, single buffered']
    #allocation3 [shape = 's32[1]{0}', space=sflag, size = 0x4, scoped, tag = 'scoped memory for hierarchical_attention_encoder_forward.7']
    #allocation4 [shape = 'u8[1024]{0}', space=vmem, size = 0x400, scoped, tag = 'output window, operand 1, single buffered']
    #allocation5 [shape = 's32[1]{0}', space=sflag, size = 0x4, scoped, tag = 'scoped memory for hierarchical_attention_encoder_forward.7']
    %12 = vsyncpa [#allocation3], 0
    %13 = vsyncpa [#allocation5], 0
    // Predicated region
    $region2: #{hierarchical_attention_encoder_forward.7} parent=1 // pred_check
      _
    $region3: #{hierarchical_attention_encoder_forward.7} parent=1 // pred_check_branch
      %15 = sbr.rel (0) target = $region5
    $region4: #{hierarchical_attention_encoder_forward.7} parent=1 // pred_region
      _
    $region5: #{hierarchical_attention_encoder_forward.7} parent=1 // pred_fallthru
      _
    // Predicated region
    $region6: #{hierarchical_attention_encoder_forward.7} parent=1 // pred_check
      _
    $region7: #{hierarchical_attention_encoder_forward.7} parent=1 // pred_check_branch
      %17 = sbr.rel (0) target = $region9
    $region8: #{hierarchical_attention_encoder_forward.7} parent=1 // pred_region
      _
    $region9: #{hierarchical_attention_encoder_forward.7} parent=1 // pred_fallthru
      _
    // Predicated region
    $region10: #{hierarchical_attention_encoder_forward.7} parent=1 // pred_check
      _
    $region11: #{hierarchical_attention_encoder_forward.7} parent=1 // pred_check_branch
      %19 = sbr.rel (0) target = $region13
    $region12: #{hierarchical_attention_encoder_forward.7} parent=1 // pred_region
      _
    $region13: #{hierarchical_attention_encoder_forward.7} parent=1 // pred_fallthru
      _
    // Predicated region
    $region14: #{hierarchical_attention_encoder_forward.7} parent=1 // pred_check
      _
    $region15: #{hierarchical_attention_encoder_forward.7} parent=1 // pred_check_branch
      %21 = sbr.rel (0) target = $region17
    $region16: #{hierarchical_attention_encoder_forward.7} parent=1 // pred_region
      _
    $region17: #{hierarchical_attention_encoder_forward.7} parent=1 // pred_fallthru
      _
    // Predicated region
    $region18: #{hierarchical_attention_encoder_forward.7} parent=1 // pred_check
      _
    $region19: #{hierarchical_attention_encoder_forward.7} parent=1 // pred_check_branch
      %23 = sbr.rel (0) target = $region21
    $region20: #{hierarchical_attention_encoder_forward.7} parent=1 // pred_region
      _
    $region21: #{hierarchical_attention_encoder_forward.7} parent=1 // pred_fallthru
      _
    %v24 = vld [vmem:[%s0] sm:$0xff]
    %v25 = vld [vmem:[%s0 + $0x8] sm:$0xff]
    %v26 = vld [vmem:[%s1] sm:$0x3]
    %v27 = vld [vmem:[%s2] sm:$0xff]
    %v28 = vld [vmem:[%s2 + $0x8] sm:$0xff]
    %v29 = vld [vmem:[%s2 + $0x10] sm:$0xff]
    %v30 = vld [vmem:[%s2 + $0x18] sm:$0xff]
    %v31 = vld [vmem:[%s3] sm:$0x1]
    %v33 = vlaneseq
    %v34 = vshrl.u32 %v33, 7
    %v35 = vsub.s32 0, %v34
    %v36 = vrot.slane %v31, %v35
    %vm38 = vcmask 261120
    %v40 = vsel %vm38, %v24, 0
    %v43 = vsel %vm38, %v25, 0
    %45 = vmatprep.subr.mxu0 0.0
    %46 = vmatpush1.msra.mxu0 %v27
    %47 = vmatprep.subr.mxu0 0.0
    %48 = vmatpush1.msra.mxu0 %v28
    %49 = vmatprep.subr.mxu0 0.0
    %50 = vmatpush1.msra.mxu0 %v29
    %51 = vmatprep.subr.mxu0 0.0
    %52 = vmatpush1.msra.mxu0 %v30
    %53 = vmatprep.subr.mxu0 0.0
    %54 = vmatpush1.msra.mxu0 0.0
    %55 = vmatprep.subr.mxu0 0.0
    %56 = vmatpush1.msra.mxu0 0.0
    %57 = vmatprep.subr.mxu0 0.0
    %58 = vmatpush1.msra.mxu0 0.0
    %59 = vmatprep.subr.mxu0 0.0
    %60 = vmatpush1.msra.mxu0 0.0
    %61 = vmatprep.subr.mxu0 0.0
    %62 = vmatpush1.msra.mxu0 0.0
    %63 = vmatprep.subr.mxu0 0.0
    %64 = vmatpush1.msra.mxu0 0.0
    %65 = vmatprep.subr.mxu0 0.0
    %66 = vmatpush1.msra.mxu0 0.0
    %67 = vmatprep.subr.mxu0 0.0
    %68 = vmatpush1.msra.mxu0 0.0
    %69 = vmatprep.subr.mxu0 0.0
    %70 = vmatpush1.msra.mxu0 0.0
    %71 = vmatprep.subr.mxu0 0.0
    %72 = vmatpush1.msra.mxu0 0.0
    %73 = vmatprep.subr.mxu0 0.0
    %74 = vmatpush1.msra.mxu0 0.0
    %75 = vmatprep.subr.mxu0 0.0
    %76 = vmatpush1.msra.mxu0 0.0
    %77 = vmatprep.subr.mxu0 0.0
    %78 = vmatpush1.msra.mxu0 0.0
    %79 = vmatprep.subr.mxu0 0.0
    %80 = vmatpush1.msra.mxu0 0.0
    %81 = vmatprep.subr.mxu0 0.0
    %82 = vmatpush1.msra.mxu0 0.0
    %83 = vmatprep.subr.mxu0 0.0
    %84 = vmatpush1.msra.mxu0 0.0
    %85 = vmatprep.subr.mxu0 0.0
    %86 = vmatpush1.msra.mxu0 0.0
    %87 = vmatprep.subr.mxu0 0.0
    %88 = vmatpush1.msra.mxu0 0.0
    %89 = vmatprep.subr.mxu0 0.0
    %90 = vmatpush1.msra.mxu0 0.0
    %91 = vmatprep.subr.mxu0 0.0
    %92 = vmatpush1.msra.mxu0 0.0
    %93 = vmatprep.subr.mxu0 0.0
    %94 = vmatpush1.msra.mxu0 0.0
    %95 = vmatprep.subr.mxu0 0.0
    %96 = vmatpush1.msra.mxu0 0.0
    %97 = vmatprep.subr.mxu0 0.0
    %98 = vmatpush1.msra.mxu0 0.0
    %99 = vmatprep.subr.mxu0 0.0
    %100 = vmatpush1.msra.mxu0 0.0
    %101 = vmatprep.subr.mxu0 0.0
    %102 = vmatpush1.msra.mxu0 0.0
    %103 = vmatprep.subr.mxu0 0.0
    %104 = vmatpush1.msra.mxu0 0.0
    %105 = vmatprep.subr.mxu0 0.0
    %106 = vmatpush1.msra.mxu0 0.0
    %107 = vmatprep.subr.mxu0 0.0
    %108 = vmatpush1.msra.mxu0 0.0
    %109 = vmatprep.mubr.f32.mxu0 0.0
    %110 = vmatmul.mubr.f32.gmra.mrb[0].mxu0 %v40
    %v111 = vpop.f32.mrb[0].mxu0
    %v112 = vadd.f32 %v36, %v111
    %v113 = vpop.f32.mrb[0].mxu0
    %114 = vmatprep.mubr.f32.mxu0 0.0
    %115 = vmatmul.mubr.f32.gmra.mrb[0].mxu0 %v43
    %v116 = vpop.f32.mrb[0].mxu0
    %v117 = vadd.f32 %v36, %v116
    %v118 = vpop.f32.mrb[0].mxu0
    %119 = vdwg.mxu0
    %vm120 = vcmp.ge.f32.partialorder %v112, 0.0
    %vm121 = vcmp.ge.f32.partialorder %v117, 0.0
    %v122 = vmul.f32 %v112, 0.01
    %v123 = vmul.f32 %v117, 0.01
    %v124 = vsel %vm120, %v112, %v122
    %v125 = vsel %vm121, %v117, %v123
    %v126 = vld [vmem:[%s4] sm:$0xff]
    %v127 = vld [vmem:[%s4 + $0x8] sm:$0xff]
    %vm128 = vcmask 130048
    %v130 = vsel %vm128, %v124, 0
    %v133 = vsel %vm128, %v125, 0
    %135 = vmatprep.subr.mxu0 0.0
    %136 = vmatpush1.msra.mxu0 %v126
    %137 = vmatprep.subr.mxu0 0.0
    %138 = vmatpush1.msra.mxu0 %v127
    %139 = vmatprep.subr.mxu0 0.0
    %140 = vmatpush1.msra.mxu0 0.0
    %141 = vmatprep.subr.mxu0 0.0
    %142 = vmatpush1.msra.mxu0 0.0
    %143 = vmatprep.subr.mxu0 0.0
    %144 = vmatpush1.msra.mxu0 0.0
    %145 = vmatprep.subr.mxu0 0.0
    %146 = vmatpush1.msra.mxu0 0.0
    %147 = vmatprep.subr.mxu0 0.0
    %148 = vmatpush1.msra.mxu0 0.0
    %149 = vmatprep.subr.mxu0 0.0
    %150 = vmatpush1.msra.mxu0 0.0
    %151 = vmatprep.subr.mxu0 0.0
    %152 = vmatpush1.msra.mxu0 0.0
    %153 = vmatprep.subr.mxu0 0.0
    %154 = vmatpush1.msra.mxu0 0.0
    %155 = vmatprep.subr.mxu0 0.0
    %156 = vmatpush1.msra.mxu0 0.0
    %157 = vmatprep.subr.mxu0 0.0
    %158 = vmatpush1.msra.mxu0 0.0
    %159 = vmatprep.subr.mxu0 0.0
    %160 = vmatpush1.msra.mxu0 0.0
    %161 = vmatprep.subr.mxu0 0.0
    %162 = vmatpush1.msra.mxu0 0.0
    %163 = vmatprep.subr.mxu0 0.0
    %164 = vmatpush1.msra.mxu0 0.0
    %165 = vmatprep.subr.mxu0 0.0
    %166 = vmatpush1.msra.mxu0 0.0
    %167 = vmatprep.subr.mxu0 0.0
    %168 = vmatpush1.msra.mxu0 0.0
    %169 = vmatprep.subr.mxu0 0.0
    %170 = vmatpush1.msra.mxu0 0.0
    %171 = vmatprep.subr.mxu0 0.0
    %172 = vmatpush1.msra.mxu0 0.0
    %173 = vmatprep.subr.mxu0 0.0
    %174 = vmatpush1.msra.mxu0 0.0
    %175 = vmatprep.subr.mxu0 0.0
    %176 = vmatpush1.msra.mxu0 0.0
    %177 = vmatprep.subr.mxu0 0.0
    %178 = vmatpush1.msra.mxu0 0.0
    %179 = vmatprep.subr.mxu0 0.0
    %180 = vmatpush1.msra.mxu0 0.0
    %181 = vmatprep.subr.mxu0 0.0
    %182 = vmatpush1.msra.mxu0 0.0
    %183 = vmatprep.subr.mxu0 0.0
    %184 = vmatpush1.msra.mxu0 0.0
    %185 = vmatprep.subr.mxu0 0.0
    %186 = vmatpush1.msra.mxu0 0.0
    %187 = vmatprep.subr.mxu0 0.0
    %188 = vmatpush1.msra.mxu0 0.0
    %189 = vmatprep.subr.mxu0 0.0
    %190 = vmatpush1.msra.mxu0 0.0
    %191 = vmatprep.subr.mxu0 0.0
    %192 = vmatpush1.msra.mxu0 0.0
    %193 = vmatprep.subr.mxu0 0.0
    %194 = vmatpush1.msra.mxu0 0.0
    %195 = vmatprep.subr.mxu0 0.0
    %196 = vmatpush1.msra.mxu0 0.0
    %197 = vmatprep.subr.mxu0 0.0
    %198 = vmatpush1.msra.mxu0 0.0
    %199 = vmatprep.mubr.f32.mxu0 0.0
    %200 = vmatmul.mubr.f32.gmra.mrb[0].mxu0 %v130
    %v201 = vpop.f32.mrb[0].mxu0
    %v202 = vadd.f32 0.0, %v201
    %v203 = vpop.f32.mrb[0].mxu0
    %204 = vmatprep.mubr.f32.mxu0 0.0
    %205 = vmatmul.mubr.f32.gmra.mrb[0].mxu0 %v133
    %v206 = vpop.f32.mrb[0].mxu0
    %v207 = vadd.f32 0.0, %v206
    %v208 = vpop.f32.mrb[0].mxu0
    %209 = vdwg.mxu0
    %v210 = vlaneseq
    %v211 = vand.u32 %v210, 127
    %212 = vset.pattern.permute.xlu0 0
    %213 = vperm.xlu0 %212, %v26
    %v214 = vpop.permute.xlu0 %213
    %vm215 = vcmp.lt.s32.totalorder %v211, %v214
    %218 = vset.pattern.permute.xlu0 0
    %219 = vperm.xlu0 %218, %v202
    %v220 = vpop.permute.xlu0 %219
    %221 = vset.pattern.permute.xlu0 0
    %222 = vperm.xlu0 %221, %v207
    %v223 = vpop.permute.xlu0 %222
    %v224 = vlaneseq
    %v225 = vshrl.u32 %v224, 7
    %v226 = vsub.s32 %v211, %v225
    %v227 = vrot.slane %v220, %v226
    %v228 = vlaneseq
    %v229 = vshrl.u32 %v228, 7
    %v230 = vsub.s32 %v211, %v229
    %v231 = vrot.slane %v223, %v230
    %vm232 = vcmask 1041409
    %v233 = vsel %vm232, %v231, %v227
    %v235 = vsel %vm215, %v233, -99999.0
    %vm236 = vcmask 58368
    %v237 = vsel %vm236, %v235, -inf
    %238 = vmax.xlane.f32.xlu0 %v237
    %v239 = vpop.xlane.xlu0 %238
    %v240 = vsub.f32 %v235, %v239
    %v241 = vmul.f32 %v240, 1.442695
    %v242 = vpow.pop %v241
    %v243 = vsel %vm236, %v242, 0.0
    %244 = vadd.xlane.f32.xlu0 %v243
    %v245 = vpop.xlane.xlu0 %244
    %v246 = vrcp.pop %v245
    %v247 = vmul.f32 %v242, %v246
    %248 = vst.msk [vmem:[#allocation4] sm:$0x3] %vm236, %v247
    %v249 = vlaneseq
    %v250 = vshrl.u32 %v249, 7
    %v251 = vsub.s32 0, %v250
    %v252 = vrot.slane %v247, %v251
    %254 = vbcast.lane.b32.xlu0 %v252, 256
    %v255 = vpop.permute.xlu0 %254
    %v256 = vlaneseq
    %v257 = vshrl.u32 %v256, 7
    %v258 = vsub.s32 1, %v257
    %v259 = vrot.slane %v247, %v258
    %261 = vbcast.lane.b32.xlu0 %v259, 256
    %v262 = vpop.permute.xlu0 %261
    %v263 = vmul.f32 %v255, %v24
    %v264 = vmul.f32 %v262, %v25
    %v265 = vsel %vm38, %v263, 0.0
    %v266 = vrot.slane %v265, 4
    %v267 = vadd.f32 %v265, %v266
    %v268 = vrot.slane %v267, 2
    %v269 = vadd.f32 %v267, %v268
    %v270 = vrot.slane %v269, 1
    %v271 = vadd.f32 %v269, %v270
    %v272 = vsel %vm38, %v264, 0.0
    %v273 = vrot.slane %v272, 4
    %v274 = vadd.f32 %v272, %v273
    %v275 = vrot.slane %v274, 2
    %v276 = vadd.f32 %v274, %v275
    %v277 = vrot.slane %v276, 1
    %v278 = vadd.f32 %v276, %v277
    %v281 = vsel %vm232, %v278, %v271
    %vm283 = vcmask 254976
    %284 = vst.msk [vmem:[#allocation2] sm:$0x3] %vm283, %v281
    // Predicated region
    $region22: #{hierarchical_attention_encoder_forward.7} parent=1 // pred_check
      _
    $region23: #{hierarchical_attention_encoder_forward.7} parent=1 // pred_check_branch
      %286 = sbr.rel (0) target = $region25
    $region24: #{hierarchical_attention_encoder_forward.7} parent=1 // pred_region
      %s288 = ssub.s32 32, 32
      %289 = vsyncadd [#allocation3], %s288
      %s291 = sshll.u32 [#allocation2], 4
      %s292 = int_to_ptr.vmem [resolvable:$true] %s291
      %294 = dma.vmem_to_hbm [thread:$0]  %s292, 32, %s5, [#allocation3]
    $region25: #{hierarchical_attention_encoder_forward.7} parent=1 // pred_fallthru
      _
    // Predicated region
    $region26: #{hierarchical_attention_encoder_forward.7} parent=1 // pred_check
      _
    $region27: #{hierarchical_attention_encoder_forward.7} parent=1 // pred_check_branch
      %296 = sbr.rel (0) target = $region29
    $region28: #{hierarchical_attention_encoder_forward.7} parent=1 // pred_region
      %s298 = ssub.s32 32, 32
      %299 = vsyncadd [#allocation5], %s298
      %s301 = sshll.u32 [#allocation4], 4
      %s302 = int_to_ptr.vmem [resolvable:$true] %s301
      %304 = dma.vmem_to_hbm [thread:$0]  %s302, 32, %s6, [#allocation5]
    $region29: #{hierarchical_attention_encoder_forward.7} parent=1 // pred_fallthru
      _
    // Predicated region
    $region30: #{hierarchical_attention_encoder_forward.7} parent=1 // pred_check
      _
    $region31: #{hierarchical_attention_encoder_forward.7} parent=1 // pred_check_branch
      %306 = sbr.rel (0) target = $region33
    $region32: #{hierarchical_attention_encoder_forward.7} parent=1 // pred_region
      %307 = dma.done [#allocation3], 32
    $region33: #{hierarchical_attention_encoder_forward.7} parent=1 // pred_fallthru
      _
    // Predicated region
    $region34: #{hierarchical_attention_encoder_forward.7} parent=1 // pred_check
      _
    $region35: #{hierarchical_attention_encoder_forward.7} parent=1 // pred_check_branch
      %309 = sbr.rel (0) target = $region37
    $region36: #{hierarchical_attention_encoder_forward.7} parent=1 // pred_region
      %310 = dma.done [#allocation5], 32
    $region37: #{hierarchical_attention_encoder_forward.7} parent=1 // pred_fallthru
      _
    %311 = vsyncpa [#allocation3], 1
    %312 = vsyncpa [#allocation5], 1

// kernel: hierarchical_attention_encoder_forward.5
$region0: #{hierarchical_attention_encoder_forward.5}
  #allocation0 [shape = 'u32[]', space=smem, size = 0x4, offset = 0x4, fixed_abs, tag = 'smem constant byte address 0x4 - core index']
  #allocation1 [shape = 'u32[144,128]{1,0:T(1,128)}', space=vmem, size = 0x12000, scoped, tag = 'internal scratch']
  %s0 = inlined_call_operand.vmem [shape: f32[16,8,32], index: 0, kind: input, shape index: {}]
  %s1 = inlined_call_operand.vmem [shape: s32[16,1], index: 1, kind: input, shape index: {}]
  %s2 = inlined_call_operand.vmem [shape: f32[32,16], index: 2, kind: input, shape index: {}]
  %s3 = inlined_call_operand.vmem [shape: f32[1,16], index: 3, kind: input, shape index: {}]
  %s4 = inlined_call_operand.vmem [shape: f32[16,1], index: 4, kind: input, shape index: {}]
  %s5 = inlined_call_operand.vmem [shape: f32[16,32], index: 5, kind: output, shape index: {0}]
  %s6 = inlined_call_operand.hbm [shape: f32[16,8], index: 6, kind: output, shape index: {1}]
  %7 = xla_tuple %s5, %s6
  %s8 = sld [smem:[#allocation0]]
  $region61: #{hierarchical_attention_encoder_forward.5} parent=0
    _
  %s10 = ssub.s32 1, %s8
  %s11 = scalar_select 0, %s10, %s8
  $region1: #{hierarchical_attention_encoder_forward.5} parent=0
    #allocation2 [shape = 'u8[8192]{0}', space=vmem, size = 0x2000, scoped, tag = 'output window, operand 1']
    #allocation3 [shape = 's32[2]{0}', space=sflag, size = 0x8, scoped, tag = 'scoped memory for hierarchical_attention_encoder_forward.5']
    %12 = vsyncpa [#allocation3], 0
    %s13 = scalar_lea.sflag [#allocation3], 1
    %14 = vsyncpa %s13, 0
    loop: start=0, step=1, limit=4
    $region2: #{hierarchical_attention_encoder_forward.5} parent=1 // loop_pre_header
      _
    $region3: #{hierarchical_attention_encoder_forward.5} parent=1 // loop_header
      %s16 = sphi 0, %s20
      %p17 = scmp.ge.s32.totalorder %s16, 4
      %s26 = sphi 0, %s28
      %s29 = sphi 0, %s26
      %s30 = sphi 0, %s29
      %s46 = sphi 0, %s30
      %s52 = sphi 0, %s54
      %s55 = sphi 0, %s52
      %s56 = sphi 0, %s55
      %s72 = sphi 0, %s56
      %s76 = sphi 0, %s76
      %s78 = sphi 0, %s76
      %s79 = sphi 0, %s78
      %s93 = sphi 0, %s79
      %s97 = sphi 0, %s97
      %s99 = sphi 0, %s97
      %s100 = sphi 0, %s99
      %s114 = sphi 0, %s100
      %s118 = sphi 0, %s118
      %s120 = sphi 0, %s118
      %s121 = sphi 0, %s120
      %s135 = sphi 0, %s121
      %s141 = sphi 0, %s143
      %s144 = sphi 0, %s141
      %s145 = sphi 0, %s144
      %s161 = sphi 0, %s145
      %s167 = sphi 0, %s169
      %s170 = sphi 0, %s167
      %s171 = sphi 0, %s170
      %s187 = sphi 0, %s171
    $region4: #{hierarchical_attention_encoder_forward.5} parent=1 // loop_header_branch
      %19 = sbr.rel (%p17) target = $region8
    $region5: #{hierarchical_attention_encoder_forward.5} parent=1 // loop_body
      %s21 = ssub.s32 %s16, 1
      %s22 = ssub.s32 %s16, 2
      %s23 = sadd.s32 %s16, 1
      %s24 = ssub.s32 %s16, %s23
      %p25 = scmp.eq.s32.totalorder %s24, 0
      %s27 = sadd.s32 %s26, 1
      %s28 = scalar_select %p25, %s26, %s27
      %p31 = pneg %p25
      %p32 = scmp.eq.s32.totalorder %s16, 1
      %p33 = por %p31, %p32
      %p34 = scmp.ne.s32.totalorder %s26, %s29
      %p35 = scmp.eq.s32.totalorder %s16, 0
      %p36 = por %p34, %p35
      %p37 = scmp.ne.s32.totalorder %s26, %s29
      %p38 = scmp.eq.s32.totalorder %s21, 1
      %p39 = por %p37, %p38
      %p40 = scmp.ne.s32.totalorder %s29, %s30
      %p41 = scmp.eq.s32.totalorder %s21, 0
      %p42 = por %p40, %p41
      %p43 = scmp.ne.s32.totalorder %s29, %s30
      %p44 = scmp.eq.s32.totalorder %s22, 1
      %p45 = por %p43, %p44
      %p47 = scmp.ne.s32.totalorder %s30, %s46
      %p48 = scmp.eq.s32.totalorder %s22, 0
      %p49 = por %p47, %p48
      %s50 = ssub.s32 %s16, %s23
      %p51 = scmp.eq.s32.totalorder %s50, 0
      %s53 = sadd.s32 %s52, 1
      %s54 = scalar_select %p51, %s52, %s53
      %p57 = pneg %p51
      %p58 = scmp.eq.s32.totalorder %s16, 1
      %p59 = por %p57, %p58
      %p60 = scmp.ne.s32.totalorder %s52, %s55
      %p61 = scmp.eq.s32.totalorder %s16, 0
      %p62 = por %p60, %p61
      %p63 = scmp.ne.s32.totalorder %s52, %s55
      %p64 = scmp.eq.s32.totalorder %s21, 1
      %p65 = por %p63, %p64
      %p66 = scmp.ne.s32.totalorder %s55, %s56
      %p67 = scmp.eq.s32.totalorder %s21, 0
      %p68 = por %p66, %p67
      %p69 = scmp.ne.s32.totalorder %s55, %s56
      %p70 = scmp.eq.s32.totalorder %s22, 1
      %p71 = por %p69, %p70
      %p73 = scmp.ne.s32.totalorder %s56, %s72
      %p74 = scmp.eq.s32.totalorder %s22, 0
      %p75 = por %p73, %p74
      %s77 = sadd.s32 %s76, 1
      %p80 = scmp.eq.s32.totalorder %s16, 1
      %p81 = scmp.ne.s32.totalorder %s76, %s78
      %p82 = scmp.eq.s32.totalorder %s16, 0
      %p83 = por %p81, %p82
      %p84 = scmp.ne.s32.totalorder %s76, %s78
      %p85 = scmp.eq.s32.totalorder %s21, 1
      %p86 = por %p84, %p85
      %p87 = scmp.ne.s32.totalorder %s78, %s79
      %p88 = scmp.eq.s32.totalorder %s21, 0
      %p89 = por %p87, %p88
      %p90 = scmp.ne.s32.totalorder %s78, %s79
      %p91 = scmp.eq.s32.totalorder %s22, 1
      %p92 = por %p90, %p91
      %p94 = scmp.ne.s32.totalorder %s79, %s93
      %p95 = scmp.eq.s32.totalorder %s22, 0
      %p96 = por %p94, %p95
      %s98 = sadd.s32 %s97, 1
      %p101 = scmp.eq.s32.totalorder %s16, 1
      %p102 = scmp.ne.s32.totalorder %s97, %s99
      %p103 = scmp.eq.s32.totalorder %s16, 0
      %p104 = por %p102, %p103
      %p105 = scmp.ne.s32.totalorder %s97, %s99
      %p106 = scmp.eq.s32.totalorder %s21, 1
      %p107 = por %p105, %p106
      %p108 = scmp.ne.s32.totalorder %s99, %s100
      %p109 = scmp.eq.s32.totalorder %s21, 0
      %p110 = por %p108, %p109
      %p111 = scmp.ne.s32.totalorder %s99, %s100
      %p112 = scmp.eq.s32.totalorder %s22, 1
      %p113 = por %p111, %p112
      %p115 = scmp.ne.s32.totalorder %s100, %s114
      %p116 = scmp.eq.s32.totalorder %s22, 0
      %p117 = por %p115, %p116
      %s119 = sadd.s32 %s118, 1
      %p122 = scmp.eq.s32.totalorder %s16, 1
      %p123 = scmp.ne.s32.totalorder %s118, %s120
      %p124 = scmp.eq.s32.totalorder %s16, 0
      %p125 = por %p123, %p124
      %p126 = scmp.ne.s32.totalorder %s118, %s120
      %p127 = scmp.eq.s32.totalorder %s21, 1
      %p128 = por %p126, %p127
      %p129 = scmp.ne.s32.totalorder %s120, %s121
      %p130 = scmp.eq.s32.totalorder %s21, 0
      %p131 = por %p129, %p130
      %p132 = scmp.ne.s32.totalorder %s120, %s121
      %p133 = scmp.eq.s32.totalorder %s22, 1
      %p134 = por %p132, %p133
      %p136 = scmp.ne.s32.totalorder %s121, %s135
      %p137 = scmp.eq.s32.totalorder %s22, 0
      %p138 = por %p136, %p137
      %s139 = ssub.s32 %s16, %s23
      %p140 = scmp.eq.s32.totalorder %s139, 0
      %s142 = sadd.s32 %s141, 1
      %s143 = scalar_select %p140, %s141, %s142
      %p146 = pneg %p140
      %p147 = scmp.eq.s32.totalorder %s16, 1
      %p148 = por %p146, %p147
      %p149 = scmp.ne.s32.totalorder %s141, %s144
      %p150 = scmp.eq.s32.totalorder %s16, 0
      %p151 = por %p149, %p150
      %p152 = scmp.ne.s32.totalorder %s141, %s144
      %p153 = scmp.eq.s32.totalorder %s21, 1
      %p154 = por %p152, %p153
      %p155 = scmp.ne.s32.totalorder %s144, %s145
      %p156 = scmp.eq.s32.totalorder %s21, 0
      %p157 = por %p155, %p156
      %p158 = scmp.ne.s32.totalorder %s144, %s145
      %p159 = scmp.eq.s32.totalorder %s22, 1
      %p160 = por %p158, %p159
      %p162 = scmp.ne.s32.totalorder %s145, %s161
      %p163 = scmp.eq.s32.totalorder %s22, 0
      %p164 = por %p162, %p163
      %s165 = ssub.s32 %s16, %s23
      %p166 = scmp.eq.s32.totalorder %s165, 0
      %s168 = sadd.s32 %s167, 1
      %s169 = scalar_select %p166, %s167, %s168
      %p172 = pneg %p166
      %p173 = scmp.eq.s32.totalorder %s16, 1
      %p174 = por %p172, %p173
      %p175 = scmp.ne.s32.totalorder %s167, %s170
      %p176 = scmp.eq.s32.totalorder %s16, 0
      %p177 = por %p175, %p176
      %p178 = scmp.ne.s32.totalorder %s167, %s170
      %p179 = scmp.eq.s32.totalorder %s21, 1
      %p180 = por %p178, %p179
      %p181 = scmp.ne.s32.totalorder %s170, %s171
      %p182 = scmp.eq.s32.totalorder %s21, 0
      %p183 = por %p181, %p182
      %p184 = scmp.ne.s32.totalorder %s170, %s171
      %p185 = scmp.eq.s32.totalorder %s22, 1
      %p186 = por %p184, %p185
      %p188 = scmp.ne.s32.totalorder %s171, %s187
      %p189 = scmp.eq.s32.totalorder %s22, 0
      %p190 = por %p188, %p189
      %p191 = scmp.le.s32.totalorder 1, %s16
      %p192 = scmp.lt.s32.totalorder %s16, 3
      %p193 = pnand %p191, %p192
      %p194 = pneg %p193
      // Predicated region
      $region9: #{hierarchical_attention_encoder_forward.5} parent=5 // pred_check
        _
      $region10: #{hierarchical_attention_encoder_forward.5} parent=5 // pred_check_branch
        %196 = sbr.rel (%p193) target = $region12
      $region11: #{hierarchical_attention_encoder_forward.5} parent=5 // pred_region
        %s197 = ssub.s32 %s16, 1
        // Predicated region
        $region13: #{hierarchical_attention_encoder_forward.5} parent=11 // pred_check
          %p198 = pneg %p89
        $region14: #{hierarchical_attention_encoder_forward.5} parent=11 // pred_check_branch
          %200 = sbr.rel (%p198) target = $region16
        $region15: #{hierarchical_attention_encoder_forward.5} parent=11 // pred_region
          _
        $region16: #{hierarchical_attention_encoder_forward.5} parent=11 // pred_fallthru
          _
        // Predicated region
        $region17: #{hierarchical_attention_encoder_forward.5} parent=11 // pred_check
          %p201 = pneg %p110
        $region18: #{hierarchical_attention_encoder_forward.5} parent=11 // pred_check_branch
          %203 = sbr.rel (%p201) target = $region20
        $region19: #{hierarchical_attention_encoder_forward.5} parent=11 // pred_region
          _
        $region20: #{hierarchical_attention_encoder_forward.5} parent=11 // pred_fallthru
          _
        // Predicated region
        $region21: #{hierarchical_attention_encoder_forward.5} parent=11 // pred_check
          %p204 = pneg %p131
        $region22: #{hierarchical_attention_encoder_forward.5} parent=11 // pred_check_branch
          %206 = sbr.rel (%p204) target = $region24
        $region23: #{hierarchical_attention_encoder_forward.5} parent=11 // pred_region
          _
        $region24: #{hierarchical_attention_encoder_forward.5} parent=11 // pred_fallthru
          _
      $region12: #{hierarchical_attention_encoder_forward.5} parent=5 // pred_fallthru
        _
      %p207 = scmp.lt.s32.totalorder %s16, 2
      // Predicated region
      $region25: #{hierarchical_attention_encoder_forward.5} parent=5 // pred_check
        %p208 = pneg %p207
      $region26: #{hierarchical_attention_encoder_forward.5} parent=5 // pred_check_branch
        %210 = sbr.rel (%p208) target = $region28
      $region27: #{hierarchical_attention_encoder_forward.5} parent=5 // pred_region
        // Predicated region
        $region29: #{hierarchical_attention_encoder_forward.5} parent=27 // pred_check
          %p211 = pneg %p36
        $region30: #{hierarchical_attention_encoder_forward.5} parent=27 // pred_check_branch
          %213 = sbr.rel (%p211) target = $region32
        $region31: #{hierarchical_attention_encoder_forward.5} parent=27 // pred_region
          %s214 = smul.u32 8, %s16
          %p215 = scmp.lt.s32.totalorder %s214, 15
          %s216 = scalar_select %p215, %s214, 15
          %s217 = smul.addr %s216, 8
          %s218 = scalar_lea.vmem %s0, %s217
          %s219 = smul.u32 8, %s16
        $region32: #{hierarchical_attention_encoder_forward.5} parent=27 // pred_fallthru
          _
        // Predicated region
        $region33: #{hierarchical_attention_encoder_forward.5} parent=27 // pred_check
          %p220 = pneg %p62
        $region34: #{hierarchical_attention_encoder_forward.5} parent=27 // pred_check_branch
          %222 = sbr.rel (%p220) target = $region36
        $region35: #{hierarchical_attention_encoder_forward.5} parent=27 // pred_region
          %p223 = scmp.lt.s32.totalorder %s16, 1
          %s224 = scalar_select %p223, %s16, 1
          %s225 = smul.addr %s224, 8
          %s226 = scalar_lea.vmem %s1, %s225
        $region36: #{hierarchical_attention_encoder_forward.5} parent=27 // pred_fallthru
          _
      $region28: #{hierarchical_attention_encoder_forward.5} parent=5 // pred_fallthru
        _
      %p227 = scmp.le.s32.totalorder 1, %s16
      %p228 = scmp.lt.s32.totalorder %s16, 3
      %p229 = pnand %p227, %p228
      %p230 = pneg %p229
      // Predicated region
      $region37: #{hierarchical_attention_encoder_forward.5} parent=5 // pred_check
        _
      $region38: #{hierarchical_attention_encoder_forward.5} parent=5 // pred_check_branch
        %232 = sbr.rel (%p229) target = $region40
      $region39: #{hierarchical_attention_encoder_forward.5} parent=5 // pred_region
        %s233 = ssub.s32 %s16, 1
        %s234 = smul.u32 8, %s21
        %p235 = scmp.lt.s32.totalorder %s234, 15
        %s236 = scalar_select %p235, %s234, 15
        %s237 = smul.addr %s236, 8
        %s238 = scalar_lea.vmem %s0, %s237
        %p239 = pneg %p42
        %p240 = pneg %p39
        %p241 = scmp.lt.s32.totalorder %s21, 1
        %s242 = scalar_select %p241, %s21, 1
        %s243 = smul.addr %s242, 8
        %s244 = scalar_lea.vmem %s1, %s243
        %p245 = pneg %p68
        %p246 = pneg %p65
        %p247 = pneg %p89
        %p248 = pneg %p86
        %p249 = pneg %p110
        %p250 = pneg %p107
        %p251 = pneg %p131
        %p252 = pneg %p128
        %p253 = pneg %p157
        %p254 = pneg %p154
        %p255 = scmp.lt.s32.totalorder %s21, 1
        %s256 = scalar_select %p255, %s21, 1
        %s257 = smul.addr %s256, 8
        %s258 = scalar_lea.vmem %s5, %s257
        %p259 = pneg %p183
        %p260 = pneg %p180
        %s261 = sand.u32 %s170, 1
        %s262 = scalar_lea.sflag [#allocation3], %s261
        %s263 = sand.u32 %s170, 1
        %s264 = smul.addr %s263, 8
        %s265 = scalar_lea.vmem [#allocation2], %s264
        %s266 = smul.u32 8, %s21
        %p267 = scmp.lt.s32.totalorder %s266, 15
        %s268 = scalar_select %p267, %s266, 15
        %s269 = smul.addr %s268, 8
        %s270 = scalar_lea.vmem %s0, %s269
        %s271 = smul.u32 8, %s21
        %p272 = scmp.lt.s32.totalorder %s21, 1
        %s273 = scalar_select %p272, %s21, 1
        %s274 = smul.addr %s273, 8
        %s275 = scalar_lea.vmem %s1, %s274
        %p276 = scmp.lt.s32.totalorder %s21, 1
        %s277 = scalar_select %p276, %s21, 1
        %s278 = smul.addr %s277, 8
        %s279 = scalar_lea.vmem %s5, %s278
        %v280 = vld [vmem:[%s270] sm:$0xff]
        %v281 = vld [vmem:[%s270 + $0x8] sm:$0xff]
        %v282 = vld [vmem:[%s270 + $0x10] sm:$0xff]
        %v283 = vld [vmem:[%s270 + $0x18] sm:$0xff]
        %v284 = vld [vmem:[%s270 + $0x20] sm:$0xff]
        %v285 = vld [vmem:[%s270 + $0x28] sm:$0xff]
        %v286 = vld [vmem:[%s270 + $0x30] sm:$0xff]
        %v287 = vld [vmem:[%s270 + $0x38] sm:$0xff]
        %v288 = vld [vmem:[%s275] sm:$0xff]
        %v289 = vld [vmem:[%s2] sm:$0xff]
        %v290 = vld [vmem:[%s2 + $0x8] sm:$0xff]
        %v291 = vld [vmem:[%s2 + $0x10] sm:$0xff]
        %v292 = vld [vmem:[%s2 + $0x18] sm:$0xff]
        %v293 = vld [vmem:[%s3] sm:$0x1]
        %v295 = vlaneseq
        %v296 = vshrl.u32 %v295, 7
        %v297 = vsub.s32 0, %v296
        %v298 = vrot.slane %v293, %v297
        %vm300 = vcmask 261120
        %v302 = vsel %vm300, %v280, 0
        %v305 = vsel %vm300, %v281, 0
        %v308 = vsel %vm300, %v282, 0
        %v311 = vsel %vm300, %v283, 0
        %v314 = vsel %vm300, %v284, 0
        %v317 = vsel %vm300, %v285, 0
        %v320 = vsel %vm300, %v286, 0
        %v323 = vsel %vm300, %v287, 0
        %325 = vmatprep.subr.mxu0 0.0
        %326 = vmatpush1.msra.mxu0 %v289
        %327 = vmatprep.subr.mxu0 0.0
        %328 = vmatpush1.msra.mxu0 %v290
        %329 = vmatprep.subr.mxu0 0.0
        %330 = vmatpush1.msra.mxu0 %v291
        %331 = vmatprep.subr.mxu0 0.0
        %332 = vmatpush1.msra.mxu0 %v292
        %333 = vmatprep.subr.mxu0 0.0
        %334 = vmatpush1.msra.mxu0 0.0
        %335 = vmatprep.subr.mxu0 0.0
        %336 = vmatpush1.msra.mxu0 0.0
        %337 = vmatprep.subr.mxu0 0.0
        %338 = vmatpush1.msra.mxu0 0.0
        %339 = vmatprep.subr.mxu0 0.0
        %340 = vmatpush1.msra.mxu0 0.0
        %341 = vmatprep.subr.mxu0 0.0
        %342 = vmatpush1.msra.mxu0 0.0
        %343 = vmatprep.subr.mxu0 0.0
        %344 = vmatpush1.msra.mxu0 0.0
        %345 = vmatprep.subr.mxu0 0.0
        %346 = vmatpush1.msra.mxu0 0.0
        %347 = vmatprep.subr.mxu0 0.0
        %348 = vmatpush1.msra.mxu0 0.0
        %349 = vmatprep.subr.mxu0 0.0
        %350 = vmatpush1.msra.mxu0 0.0
        %351 = vmatprep.subr.mxu0 0.0
        %352 = vmatpush1.msra.mxu0 0.0
        %353 = vmatprep.subr.mxu0 0.0
        %354 = vmatpush1.msra.mxu0 0.0
        %355 = vmatprep.subr.mxu0 0.0
        %356 = vmatpush1.msra.mxu0 0.0
        %357 = vmatprep.subr.mxu0 0.0
        %358 = vmatpush1.msra.mxu0 0.0
        %359 = vmatprep.subr.mxu0 0.0
        %360 = vmatpush1.msra.mxu0 0.0
        %361 = vmatprep.subr.mxu0 0.0
        %362 = vmatpush1.msra.mxu0 0.0
        %363 = vmatprep.subr.mxu0 0.0
        %364 = vmatpush1.msra.mxu0 0.0
        %365 = vmatprep.subr.mxu0 0.0
        %366 = vmatpush1.msra.mxu0 0.0
        %367 = vmatprep.subr.mxu0 0.0
        %368 = vmatpush1.msra.mxu0 0.0
        %369 = vmatprep.subr.mxu0 0.0
        %370 = vmatpush1.msra.mxu0 0.0
        %371 = vmatprep.subr.mxu0 0.0
        %372 = vmatpush1.msra.mxu0 0.0
        %373 = vmatprep.subr.mxu0 0.0
        %374 = vmatpush1.msra.mxu0 0.0
        %375 = vmatprep.subr.mxu0 0.0
        %376 = vmatpush1.msra.mxu0 0.0
        %377 = vmatprep.subr.mxu0 0.0
        %378 = vmatpush1.msra.mxu0 0.0
        %379 = vmatprep.subr.mxu0 0.0
        %380 = vmatpush1.msra.mxu0 0.0
        %381 = vmatprep.subr.mxu0 0.0
        %382 = vmatpush1.msra.mxu0 0.0
        %383 = vmatprep.subr.mxu0 0.0
        %384 = vmatpush1.msra.mxu0 0.0
        %385 = vmatprep.subr.mxu0 0.0
        %386 = vmatpush1.msra.mxu0 0.0
        %387 = vmatprep.subr.mxu0 0.0
        %388 = vmatpush1.msra.mxu0 0.0
        %389 = vmatprep.mubr.f32.mxu0 0.0
        %390 = vmatmul.mubr.f32.gmra.mrb[0].mxu0 %v302
        %v391 = vpop.f32.mrb[0].mxu0
        %v392 = vadd.f32 %v298, %v391
        %v393 = vpop.f32.mrb[0].mxu0
        %394 = vmatprep.mubr.f32.mxu0 0.0
        %395 = vmatmul.mubr.f32.gmra.mrb[0].mxu0 %v305
        %v396 = vpop.f32.mrb[0].mxu0
        %v397 = vadd.f32 %v298, %v396
        %v398 = vpop.f32.mrb[0].mxu0
        %399 = vmatprep.mubr.f32.mxu0 0.0
        %400 = vmatmul.mubr.f32.gmra.mrb[0].mxu0 %v308
        %v401 = vpop.f32.mrb[0].mxu0
        %v402 = vadd.f32 %v298, %v401
        %v403 = vpop.f32.mrb[0].mxu0
        %404 = vmatprep.mubr.f32.mxu0 0.0
        %405 = vmatmul.mubr.f32.gmra.mrb[0].mxu0 %v311
        %v406 = vpop.f32.mrb[0].mxu0
        %v407 = vadd.f32 %v298, %v406
        %v408 = vpop.f32.mrb[0].mxu0
        %409 = vmatprep.mubr.f32.mxu0 0.0
        %410 = vmatmul.mubr.f32.gmra.mrb[0].mxu0 %v314
        %v411 = vpop.f32.mrb[0].mxu0
        %v412 = vadd.f32 %v298, %v411
        %v413 = vpop.f32.mrb[0].mxu0
        %414 = vmatprep.mubr.f32.mxu0 0.0
        %415 = vmatmul.mubr.f32.gmra.mrb[0].mxu0 %v317
        %v416 = vpop.f32.mrb[0].mxu0
        %v417 = vadd.f32 %v298, %v416
        %v418 = vpop.f32.mrb[0].mxu0
        %419 = vmatprep.mubr.f32.mxu0 0.0
        %420 = vmatmul.mubr.f32.gmra.mrb[0].mxu0 %v320
        %v421 = vpop.f32.mrb[0].mxu0
        %v422 = vadd.f32 %v298, %v421
        %v423 = vpop.f32.mrb[0].mxu0
        %424 = vmatprep.mubr.f32.mxu0 0.0
        %425 = vmatmul.mubr.f32.gmra.mrb[0].mxu0 %v323
        %v426 = vpop.f32.mrb[0].mxu0
        %v427 = vadd.f32 %v298, %v426
        %v428 = vpop.f32.mrb[0].mxu0
        %429 = vdwg.mxu0
        %vm430 = vcmp.ge.f32.partialorder %v392, 0.0
        %vm431 = vcmp.ge.f32.partialorder %v397, 0.0
        %vm432 = vcmp.ge.f32.partialorder %v402, 0.0
        %vm433 = vcmp.ge.f32.partialorder %v407, 0.0
        %vm434 = vcmp.ge.f32.partialorder %v412, 0.0
        %vm435 = vcmp.ge.f32.partialorder %v417, 0.0
        %vm436 = vcmp.ge.f32.partialorder %v422, 0.0
        %vm437 = vcmp.ge.f32.partialorder %v427, 0.0
        %v438 = vmul.f32 %v392, 0.01
        %v439 = vmul.f32 %v397, 0.01
        %v440 = vmul.f32 %v402, 0.01
        %v441 = vmul.f32 %v407, 0.01
        %v442 = vmul.f32 %v412, 0.01
        %v443 = vmul.f32 %v417, 0.01
        %v444 = vmul.f32 %v422, 0.01
        %v445 = vmul.f32 %v427, 0.01
        %v446 = vsel %vm430, %v392, %v438
        %v447 = vsel %vm431, %v397, %v439
        %v448 = vsel %vm432, %v402, %v440
        %v449 = vsel %vm433, %v407, %v441
        %v450 = vsel %vm434, %v412, %v442
        %v451 = vsel %vm435, %v417, %v443
        %v452 = vsel %vm436, %v422, %v444
        %v453 = vsel %vm437, %v427, %v445
        %v454 = vld [vmem:[%s4] sm:$0xff]
        %v455 = vld [vmem:[%s4 + $0x8] sm:$0xff]
        %vm456 = vcmask 130048
        %v458 = vsel %vm456, %v446, 0
        %v461 = vsel %vm456, %v447, 0
        %v464 = vsel %vm456, %v448, 0
        %v467 = vsel %vm456, %v449, 0
        %v470 = vsel %vm456, %v450, 0
        %v473 = vsel %vm456, %v451, 0
        %v476 = vsel %vm456, %v452, 0
        %v479 = vsel %vm456, %v453, 0
        %481 = vmatprep.subr.mxu0 0.0
        %482 = vmatpush1.msra.mxu0 %v454
        %483 = vmatprep.subr.mxu0 0.0
        %484 = vmatpush1.msra.mxu0 %v455
        %485 = vmatprep.subr.mxu0 0.0
        %486 = vmatpush1.msra.mxu0 0.0
        %487 = vmatprep.subr.mxu0 0.0
        %488 = vmatpush1.msra.mxu0 0.0
        %489 = vmatprep.subr.mxu0 0.0
        %490 = vmatpush1.msra.mxu0 0.0
        %491 = vmatprep.subr.mxu0 0.0
        %492 = vmatpush1.msra.mxu0 0.0
        %493 = vmatprep.subr.mxu0 0.0
        %494 = vmatpush1.msra.mxu0 0.0
        %495 = vmatprep.subr.mxu0 0.0
        %496 = vmatpush1.msra.mxu0 0.0
        %497 = vmatprep.subr.mxu0 0.0
        %498 = vmatpush1.msra.mxu0 0.0
        %499 = vmatprep.subr.mxu0 0.0
        %500 = vmatpush1.msra.mxu0 0.0
        %501 = vmatprep.subr.mxu0 0.0
        %502 = vmatpush1.msra.mxu0 0.0
        %503 = vmatprep.subr.mxu0 0.0
        %504 = vmatpush1.msra.mxu0 0.0
        %505 = vmatprep.subr.mxu0 0.0
        %506 = vmatpush1.msra.mxu0 0.0
        %507 = vmatprep.subr.mxu0 0.0
        %508 = vmatpush1.msra.mxu0 0.0
        %509 = vmatprep.subr.mxu0 0.0
        %510 = vmatpush1.msra.mxu0 0.0
        %511 = vmatprep.subr.mxu0 0.0
        %512 = vmatpush1.msra.mxu0 0.0
        %513 = vmatprep.subr.mxu0 0.0
        %514 = vmatpush1.msra.mxu0 0.0
        %515 = vmatprep.subr.mxu0 0.0
        %516 = vmatpush1.msra.mxu0 0.0
        %517 = vmatprep.subr.mxu0 0.0
        %518 = vmatpush1.msra.mxu0 0.0
        %519 = vmatprep.subr.mxu0 0.0
        %520 = vmatpush1.msra.mxu0 0.0
        %521 = vmatprep.subr.mxu0 0.0
        %522 = vmatpush1.msra.mxu0 0.0
        %523 = vmatprep.subr.mxu0 0.0
        %524 = vmatpush1.msra.mxu0 0.0
        %525 = vmatprep.subr.mxu0 0.0
        %526 = vmatpush1.msra.mxu0 0.0
        %527 = vmatprep.subr.mxu0 0.0
        %528 = vmatpush1.msra.mxu0 0.0
        %529 = vmatprep.subr.mxu0 0.0
        %530 = vmatpush1.msra.mxu0 0.0
        %531 = vmatprep.subr.mxu0 0.0
        %532 = vmatpush1.msra.mxu0 0.0
        %533 = vmatprep.subr.mxu0 0.0
        %534 = vmatpush1.msra.mxu0 0.0
        %535 = vmatprep.subr.mxu0 0.0
        %536 = vmatpush1.msra.mxu0 0.0
        %537 = vmatprep.subr.mxu0 0.0
        %538 = vmatpush1.msra.mxu0 0.0
        %539 = vmatprep.subr.mxu0 0.0
        %540 = vmatpush1.msra.mxu0 0.0
        %541 = vmatprep.subr.mxu0 0.0
        %542 = vmatpush1.msra.mxu0 0.0
        %543 = vmatprep.subr.mxu0 0.0
        %544 = vmatpush1.msra.mxu0 0.0
        %545 = vmatprep.mubr.f32.mxu0 0.0
        %546 = vmatmul.mubr.f32.gmra.mrb[0].mxu0 %v458
        %v547 = vpop.f32.mrb[0].mxu0
        %v548 = vadd.f32 0.0, %v547
        %v549 = vpop.f32.mrb[0].mxu0
        %550 = vmatprep.mubr.f32.mxu0 0.0
        %551 = vmatmul.mubr.f32.gmra.mrb[0].mxu0 %v461
        %v552 = vpop.f32.mrb[0].mxu0
        %v553 = vadd.f32 0.0, %v552
        %v554 = vpop.f32.mrb[0].mxu0
        %555 = vmatprep.mubr.f32.mxu0 0.0
        %556 = vmatmul.mubr.f32.gmra.mrb[0].mxu0 %v464
        %v557 = vpop.f32.mrb[0].mxu0
        %v558 = vadd.f32 0.0, %v557
        %v559 = vpop.f32.mrb[0].mxu0
        %560 = vmatprep.mubr.f32.mxu0 0.0
        %561 = vmatmul.mubr.f32.gmra.mrb[0].mxu0 %v467
        %v562 = vpop.f32.mrb[0].mxu0
        %v563 = vadd.f32 0.0, %v562
        %v564 = vpop.f32.mrb[0].mxu0
        %565 = vmatprep.mubr.f32.mxu0 0.0
        %566 = vmatmul.mubr.f32.gmra.mrb[0].mxu0 %v470
        %v567 = vpop.f32.mrb[0].mxu0
        %v568 = vadd.f32 0.0, %v567
        %v569 = vpop.f32.mrb[0].mxu0
        %570 = vmatprep.mubr.f32.mxu0 0.0
        %571 = vmatmul.mubr.f32.gmra.mrb[0].mxu0 %v473
        %v572 = vpop.f32.mrb[0].mxu0
        %v573 = vadd.f32 0.0, %v572
        %v574 = vpop.f32.mrb[0].mxu0
        %575 = vmatprep.mubr.f32.mxu0 0.0
        %576 = vmatmul.mubr.f32.gmra.mrb[0].mxu0 %v476
        %v577 = vpop.f32.mrb[0].mxu0
        %v578 = vadd.f32 0.0, %v577
        %v579 = vpop.f32.mrb[0].mxu0
        %580 = vmatprep.mubr.f32.mxu0 0.0
        %581 = vmatmul.mubr.f32.gmra.mrb[0].mxu0 %v479
        %v582 = vpop.f32.mrb[0].mxu0
        %v583 = vadd.f32 0.0, %v582
        %v584 = vpop.f32.mrb[0].mxu0
        %585 = vdwg.mxu0
        %v586 = vlaneseq
        %v587 = vand.u32 %v586, 127
        %588 = vset.pattern.permute.xlu0 0
        %589 = vperm.xlu0 %588, %v288
        %v590 = vpop.permute.xlu0 %589
        %vm591 = vcmp.lt.s32.totalorder %v587, %v590
        %600 = vset.pattern.permute.xlu0 0
        %601 = vperm.xlu0 %600, %v548
        %v602 = vpop.permute.xlu0 %601
        %603 = vset.pattern.permute.xlu0 0
        %604 = vperm.xlu0 %603, %v553
        %v605 = vpop.permute.xlu0 %604
        %606 = vset.pattern.permute.xlu0 0
        %607 = vperm.xlu0 %606, %v558
        %v608 = vpop.permute.xlu0 %607
        %609 = vset.pattern.permute.xlu0 0
        %610 = vperm.xlu0 %609, %v563
        %v611 = vpop.permute.xlu0 %610
        %612 = vset.pattern.permute.xlu0 0
        %613 = vperm.xlu0 %612, %v568
        %v614 = vpop.permute.xlu0 %613
        %615 = vset.pattern.permute.xlu0 0
        %616 = vperm.xlu0 %615, %v573
        %v617 = vpop.permute.xlu0 %616
        %618 = vset.pattern.permute.xlu0 0
        %619 = vperm.xlu0 %618, %v578
        %v620 = vpop.permute.xlu0 %619
        %621 = vset.pattern.permute.xlu0 0
        %622 = vperm.xlu0 %621, %v583
        %v623 = vpop.permute.xlu0 %622
        %v624 = vlaneseq
        %v625 = vshrl.u32 %v624, 7
        %v626 = vsub.s32 %v587, %v625
        %v627 = vrot.slane %v602, %v626
        %v628 = vlaneseq
        %v629 = vshrl.u32 %v628, 7
        %v630 = vsub.s32 %v587, %v629
        %v631 = vrot.slane %v605, %v630
        %v632 = vlaneseq
        %v633 = vshrl.u32 %v632, 7
        %v634 = vsub.s32 %v587, %v633
        %v635 = vrot.slane %v608, %v634
        %v636 = vlaneseq
        %v637 = vshrl.u32 %v636, 7
        %v638 = vsub.s32 %v587, %v637
        %v639 = vrot.slane %v611, %v638
        %v640 = vlaneseq
        %v641 = vshrl.u32 %v640, 7
        %v642 = vsub.s32 %v587, %v641
        %v643 = vrot.slane %v614, %v642
        %v644 = vlaneseq
        %v645 = vshrl.u32 %v644, 7
        %v646 = vsub.s32 %v587, %v645
        %v647 = vrot.slane %v617, %v646
        %v648 = vlaneseq
        %v649 = vshrl.u32 %v648, 7
        %v650 = vsub.s32 %v587, %v649
        %v651 = vrot.slane %v620, %v650
        %v652 = vlaneseq
        %v653 = vshrl.u32 %v652, 7
        %v654 = vsub.s32 %v587, %v653
        %v655 = vrot.slane %v623, %v654
        %vm656 = vcmask 1041409
        %v657 = vsel %vm656, %v631, %v627
        %vm658 = vcmask 1042434
        %v659 = vsel %vm658, %v635, %v657
        %vm660 = vcmask 1043459
        %v661 = vsel %vm660, %v639, %v659
        %vm662 = vcmask 1044484
        %v663 = vsel %vm662, %v643, %v661
        %vm664 = vcmask 1045509
        %v665 = vsel %vm664, %v647, %v663
        %vm666 = vcmask 1046534
        %v667 = vsel %vm666, %v651, %v665
        %vm668 = vcmask 1047559
        %v669 = vsel %vm668, %v655, %v667
        %v671 = vsel %vm591, %v669, -99999.0
        %vm672 = vcmask 64512
        %v673 = vsel %vm672, %v671, -inf
        %674 = vmax.xlane.f32.xlu0 %v673
        %v675 = vpop.xlane.xlu0 %674
        %v676 = vsub.f32 %v671, %v675
        %v677 = vmul.f32 %v676, 1.442695
        %v678 = vpow.pop %v677
        %v679 = vsel %vm672, %v678, 0.0
        %680 = vadd.xlane.f32.xlu0 %v679
        %v681 = vpop.xlane.xlu0 %680
        %v682 = vrcp.pop %v681
        %v683 = vmul.f32 %v678, %v682
        %684 = vst.msk [vmem:[%s265] sm:$0xff] %vm672, %v683
        %v685 = vlaneseq
        %v686 = vshrl.u32 %v685, 7
        %v687 = vsub.s32 0, %v686
        %v688 = vrot.slane %v683, %v687
        %690 = vbcast.lane.b32.xlu0 %v688, 256
        %v691 = vpop.permute.xlu0 %690
        %v692 = vlaneseq
        %v693 = vshrl.u32 %v692, 7
        %v694 = vsub.s32 1, %v693
        %v695 = vrot.slane %v683, %v694
        %697 = vbcast.lane.b32.xlu0 %v695, 256
        %v698 = vpop.permute.xlu0 %697
        %v699 = vlaneseq
        %v700 = vshrl.u32 %v699, 7
        %v701 = vsub.s32 2, %v700
        %v702 = vrot.slane %v683, %v701
        %704 = vbcast.lane.b32.xlu0 %v702, 256
        %v705 = vpop.permute.xlu0 %704
        %v706 = vlaneseq
        %v707 = vshrl.u32 %v706, 7
        %v708 = vsub.s32 3, %v707
        %v709 = vrot.slane %v683, %v708
        %711 = vbcast.lane.b32.xlu0 %v709, 256
        %v712 = vpop.permute.xlu0 %711
        %v713 = vlaneseq
        %v714 = vshrl.u32 %v713, 7
        %v715 = vsub.s32 4, %v714
        %v716 = vrot.slane %v683, %v715
        %718 = vbcast.lane.b32.xlu0 %v716, 256
        %v719 = vpop.permute.xlu0 %718
        %v720 = vlaneseq
        %v721 = vshrl.u32 %v720, 7
        %v722 = vsub.s32 5, %v721
        %v723 = vrot.slane %v683, %v722
        %725 = vbcast.lane.b32.xlu0 %v723, 256
        %v726 = vpop.permute.xlu0 %725
        %v727 = vlaneseq
        %v728 = vshrl.u32 %v727, 7
        %v729 = vsub.s32 6, %v728
        %v730 = vrot.slane %v683, %v729
        %732 = vbcast.lane.b32.xlu0 %v730, 256
        %v733 = vpop.permute.xlu0 %732
        %v734 = vlaneseq
        %v735 = vshrl.u32 %v734, 7
        %v736 = vsub.s32 7, %v735
        %v737 = vrot.slane %v683, %v736
        %739 = vbcast.lane.b32.xlu0 %v737, 256
        %v740 = vpop.permute.xlu0 %739
        %v741 = vmul.f32 %v691, %v280
        %v742 = vmul.f32 %v698, %v281
        %v743 = vmul.f32 %v705, %v282
        %v744 = vmul.f32 %v712, %v283
        %v745 = vmul.f32 %v719, %v284
        %v746 = vmul.f32 %v726, %v285
        %v747 = vmul.f32 %v733, %v286
        %v748 = vmul.f32 %v740, %v287
        %v749 = vsel %vm300, %v741, 0.0
        %v750 = vrot.slane %v749, 4
        %v751 = vadd.f32 %v749, %v750
        %v752 = vrot.slane %v751, 2
        %v753 = vadd.f32 %v751, %v752
        %v754 = vrot.slane %v753, 1
        %v755 = vadd.f32 %v753, %v754
        %v756 = vsel %vm300, %v742, 0.0
        %v757 = vrot.slane %v756, 4
        %v758 = vadd.f32 %v756, %v757
        %v759 = vrot.slane %v758, 2
        %v760 = vadd.f32 %v758, %v759
        %v761 = vrot.slane %v760, 1
        %v762 = vadd.f32 %v760, %v761
        %v763 = vsel %vm300, %v743, 0.0
        %v764 = vrot.slane %v763, 4
        %v765 = vadd.f32 %v763, %v764
        %v766 = vrot.slane %v765, 2
        %v767 = vadd.f32 %v765, %v766
        %v768 = vrot.slane %v767, 1
        %v769 = vadd.f32 %v767, %v768
        %v770 = vsel %vm300, %v744, 0.0
        %v771 = vrot.slane %v770, 4
        %v772 = vadd.f32 %v770, %v771
        %v773 = vrot.slane %v772, 2
        %v774 = vadd.f32 %v772, %v773
        %v775 = vrot.slane %v774, 1
        %v776 = vadd.f32 %v774, %v775
        %v777 = vsel %vm300, %v745, 0.0
        %v778 = vrot.slane %v777, 4
        %v779 = vadd.f32 %v777, %v778
        %v780 = vrot.slane %v779, 2
        %v781 = vadd.f32 %v779, %v780
        %v782 = vrot.slane %v781, 1
        %v783 = vadd.f32 %v781, %v782
        %v784 = vsel %vm300, %v746, 0.0
        %v785 = vrot.slane %v784, 4
        %v786 = vadd.f32 %v784, %v785
        %v787 = vrot.slane %v786, 2
        %v788 = vadd.f32 %v786, %v787
        %v789 = vrot.slane %v788, 1
        %v790 = vadd.f32 %v788, %v789
        %v791 = vsel %vm300, %v747, 0.0
        %v792 = vrot.slane %v791, 4
        %v793 = vadd.f32 %v791, %v792
        %v794 = vrot.slane %v793, 2
        %v795 = vadd.f32 %v793, %v794
        %v796 = vrot.slane %v795, 1
        %v797 = vadd.f32 %v795, %v796
        %v798 = vsel %vm300, %v748, 0.0
        %v799 = vrot.slane %v798, 4
        %v800 = vadd.f32 %v798, %v799
        %v801 = vrot.slane %v800, 2
        %v802 = vadd.f32 %v800, %v801
        %v803 = vrot.slane %v802, 1
        %v804 = vadd.f32 %v802, %v803
        %v813 = vsel %vm656, %v762, %v755
        %v814 = vsel %vm658, %v769, %v813
        %v815 = vsel %vm660, %v776, %v814
        %v816 = vsel %vm662, %v783, %v815
        %v817 = vsel %vm664, %v790, %v816
        %v818 = vsel %vm666, %v797, %v817
        %v819 = vsel %vm668, %v804, %v818
        %821 = vst.msk [vmem:[%s279] sm:$0xff] %vm300, %v819
        %p822 = scmp.lt.s32.totalorder %s21, 1
        %s823 = scalar_select %p822, %s21, 1
        %s824 = smul.addr %s823, 8
        %s825 = scalar_lea.vmem %s5, %s824
        %s826 = sand.u32 %s170, 1
        %s827 = scalar_lea.sflag [#allocation3], %s826
        %s828 = sand.u32 %s170, 1
        %s829 = smul.addr %s828, 8
        %s830 = scalar_lea.vmem [#allocation2], %s829
        // Predicated region
        $region41: #{hierarchical_attention_encoder_forward.5} parent=39 // pred_check
          %p831 = pneg %p154
        $region42: #{hierarchical_attention_encoder_forward.5} parent=39 // pred_check_branch
          %833 = sbr.rel (%p831) target = $region44
        $region43: #{hierarchical_attention_encoder_forward.5} parent=39 // pred_region
          _
        $region44: #{hierarchical_attention_encoder_forward.5} parent=39 // pred_fallthru
          _
        // Predicated region
        $region45: #{hierarchical_attention_encoder_forward.5} parent=39 // pred_check
          %p834 = pneg %p180
        $region46: #{hierarchical_attention_encoder_forward.5} parent=39 // pred_check_branch
          %836 = sbr.rel (%p834) target = $region48
        $region47: #{hierarchical_attention_encoder_forward.5} parent=39 // pred_region
          %s838 = ssub.s32 128, 128
          %839 = vsyncadd %s827, %s838
          %s840 = smul.addr %s21, 128
          %s841 = scalar_lea.hbm %s6, %s840
          %s843 = sshll.u32 %s830, 4
          %s844 = int_to_ptr.vmem [resolvable:$true] %s843
          %846 = dma.vmem_to_hbm [thread:$0]  %s844, 128, %s841, %s827
        $region48: #{hierarchical_attention_encoder_forward.5} parent=39 // pred_fallthru
          _
      $region40: #{hierarchical_attention_encoder_forward.5} parent=5 // pred_fallthru
        _
      %p847 = scmp.le.s32.totalorder 2, %s16
      // Predicated region
      $region49: #{hierarchical_attention_encoder_forward.5} parent=5 // pred_check
        %p848 = pneg %p847
      $region50: #{hierarchical_attention_encoder_forward.5} parent=5 // pred_check_branch
        %850 = sbr.rel (%p848) target = $region52
      $region51: #{hierarchical_attention_encoder_forward.5} parent=5 // pred_region
        %s851 = ssub.s32 %s16, 2
        // Predicated region
        $region53: #{hierarchical_attention_encoder_forward.5} parent=51 // pred_check
          %p852 = pneg %p160
        $region54: #{hierarchical_attention_encoder_forward.5} parent=51 // pred_check_branch
          %854 = sbr.rel (%p852) target = $region56
        $region55: #{hierarchical_attention_encoder_forward.5} parent=51 // pred_region
          %p855 = scmp.lt.s32.totalorder %s22, 1
          %s856 = scalar_select %p855, %s22, 1
          %s857 = smul.addr %s856, 8
          %s858 = scalar_lea.vmem %s5, %s857
        $region56: #{hierarchical_attention_encoder_forward.5} parent=51 // pred_fallthru
          _
        // Predicated region
        $region57: #{hierarchical_attention_encoder_forward.5} parent=51 // pred_check
          %p859 = pneg %p186
        $region58: #{hierarchical_attention_encoder_forward.5} parent=51 // pred_check_branch
          %861 = sbr.rel (%p859) target = $region60
        $region59: #{hierarchical_attention_encoder_forward.5} parent=51 // pred_region
          %s862 = sand.u32 %s171, 1
          %s863 = scalar_lea.sflag [#allocation3], %s862
          %s864 = sand.u32 %s171, 1
          %s865 = smul.addr %s864, 8
          %s866 = scalar_lea.vmem [#allocation2], %s865
          %867 = dma.done %s863, 128
        $region60: #{hierarchical_attention_encoder_forward.5} parent=51 // pred_fallthru
          _
      $region52: #{hierarchical_attention_encoder_forward.5} parent=5 // pred_fallthru
        _
    $region6: #{hierarchical_attention_encoder_forward.5} parent=1 // loop_footer
      %s20 = sadd.s32 1, %s16
    $region7: #{hierarchical_attention_encoder_forward.5} parent=1 // loop_footer_branch
      %15 = sbr.rel target = $region3
    $region8: #{hierarchical_attention_encoder_forward.5} parent=1 // loop_exit
      _
    %868 = vsyncpa [#allocation3], 1
    %s869 = scalar_lea.sflag [#allocation3], 1
    %870 = vsyncpa %s869, 1

// kernel: hierarchical_attention_encoder_forward.6
$region0: #{hierarchical_attention_encoder_forward.6}
  #allocation0 [shape = 'u32[]', space=smem, size = 0x4, offset = 0x4, fixed_abs, tag = 'smem constant byte address 0x4 - core index']
  #allocation1 [shape = 'u32[144,128]{1,0:T(1,128)}', space=vmem, size = 0x12000, scoped, tag = 'internal scratch']
  %s0 = inlined_call_operand.vmem [shape: f32[2,8,32], index: 0, kind: input, shape index: {}]
  %s1 = inlined_call_operand.vmem [shape: s32[2,1], index: 1, kind: input, shape index: {}]
  %s2 = inlined_call_operand.vmem [shape: f32[32,96], index: 2, kind: input, shape index: {}]
  %s3 = inlined_call_operand.vmem [shape: f32[1,96], index: 3, kind: input, shape index: {}]
  %s4 = inlined_call_operand.vmem [shape: f32[1,32,96], index: 4, kind: input, shape index: {}]
  %s5 = inlined_call_operand.vmem [shape: f32[1,1,96], index: 5, kind: input, shape index: {}]
  %s6 = inlined_call_operand.vmem [shape: f32[2,8,32], index: 6, kind: output, shape index: {}]
  %s7 = sld [smem:[#allocation0]]
  $region34: #{hierarchical_attention_encoder_forward.6} parent=0
    _
  %s9 = ssub.s32 1, %s7
  %s10 = scalar_select 0, %s9, %s7
  // Predicated region
  $region2: #{hierarchical_attention_encoder_forward.6} parent=0 // pred_check
    _
  $region3: #{hierarchical_attention_encoder_forward.6} parent=0 // pred_check_branch
    %12 = sbr.rel (0) target = $region5
  $region4: #{hierarchical_attention_encoder_forward.6} parent=0 // pred_region
    _
  $region5: #{hierarchical_attention_encoder_forward.6} parent=0 // pred_fallthru
    _
  // Predicated region
  $region6: #{hierarchical_attention_encoder_forward.6} parent=0 // pred_check
    _
  $region7: #{hierarchical_attention_encoder_forward.6} parent=0 // pred_check_branch
    %14 = sbr.rel (0) target = $region9
  $region8: #{hierarchical_attention_encoder_forward.6} parent=0 // pred_region
    _
  $region9: #{hierarchical_attention_encoder_forward.6} parent=0 // pred_fallthru
    _
  // Predicated region
  $region10: #{hierarchical_attention_encoder_forward.6} parent=0 // pred_check
    _
  $region11: #{hierarchical_attention_encoder_forward.6} parent=0 // pred_check_branch
    %16 = sbr.rel (0) target = $region13
  $region12: #{hierarchical_attention_encoder_forward.6} parent=0 // pred_region
    _
  $region13: #{hierarchical_attention_encoder_forward.6} parent=0 // pred_fallthru
    _
  // Predicated region
  $region14: #{hierarchical_attention_encoder_forward.6} parent=0 // pred_check
    _
  $region15: #{hierarchical_attention_encoder_forward.6} parent=0 // pred_check_branch
    %18 = sbr.rel (0) target = $region17
  $region16: #{hierarchical_attention_encoder_forward.6} parent=0 // pred_region
    _
  $region17: #{hierarchical_attention_encoder_forward.6} parent=0 // pred_fallthru
    _
  // Predicated region
  $region18: #{hierarchical_attention_encoder_forward.6} parent=0 // pred_check
    _
  $region19: #{hierarchical_attention_encoder_forward.6} parent=0 // pred_check_branch
    %20 = sbr.rel (0) target = $region21
  $region20: #{hierarchical_attention_encoder_forward.6} parent=0 // pred_region
    _
  $region21: #{hierarchical_attention_encoder_forward.6} parent=0 // pred_fallthru
    _
  // Predicated region
  $region22: #{hierarchical_attention_encoder_forward.6} parent=0 // pred_check
    _
  $region23: #{hierarchical_attention_encoder_forward.6} parent=0 // pred_check_branch
    %22 = sbr.rel (0) target = $region25
  $region24: #{hierarchical_attention_encoder_forward.6} parent=0 // pred_region
    _
  $region25: #{hierarchical_attention_encoder_forward.6} parent=0 // pred_fallthru
    _
  %v23 = vld [vmem:[%s0] sm:$0xff]
  %v24 = vld [vmem:[%s0 + $0x8] sm:$0xff]
  %v25 = vld [vmem:[%s1] sm:$0x3]
  %vm26 = vcmp.gt.s32.totalorder %v25, 0
  %v27 = vsel %vm26, 1, 0
  %v28 = vcvt.s32.f32 %v27
  %vm29 = vcmp.gt.s32.totalorder %v25, 1
  %v30 = vsel %vm29, 1, 0
  %v31 = vcvt.s32.f32 %v30
  %vm32 = vcmp.gt.s32.totalorder %v25, 2
  %v33 = vsel %vm32, 1, 0
  %v34 = vcvt.s32.f32 %v33
  %vm35 = vcmp.gt.s32.totalorder %v25, 3
  %v36 = vsel %vm35, 1, 0
  %v37 = vcvt.s32.f32 %v36
  %vm38 = vcmp.gt.s32.totalorder %v25, 4
  %v39 = vsel %vm38, 1, 0
  %v40 = vcvt.s32.f32 %v39
  %vm41 = vcmp.gt.s32.totalorder %v25, 5
  %v42 = vsel %vm41, 1, 0
  %v43 = vcvt.s32.f32 %v42
  %vm44 = vcmp.gt.s32.totalorder %v25, 6
  %v45 = vsel %vm44, 1, 0
  %v46 = vcvt.s32.f32 %v45
  %vm47 = vcmp.gt.s32.totalorder %v25, 7
  %v48 = vsel %vm47, 1, 0
  %v49 = vcvt.s32.f32 %v48
  %v50 = vld [vmem:[%s2] sm:$0xff]
  %v51 = vld [vmem:[%s2 + $0x8] sm:$0xff]
  %v52 = vld [vmem:[%s2 + $0x10] sm:$0xff]
  %v53 = vld [vmem:[%s2 + $0x18] sm:$0xff]
  %v54 = vld [vmem:[%s3] sm:$0x1]
  %v56 = vlaneseq
  %v57 = vshrl.u32 %v56, 7
  %v58 = vsub.s32 0, %v57
  %v59 = vrot.slane %v54, %v58
  %vm61 = vcmask 261120
  %v63 = vsel %vm61, %v23, 0
  %v66 = vsel %vm61, %v24, 0
  %68 = vmatprep.subr.mxu0 0.0
  %69 = vmatpush1.msra.mxu0 %v50
  %70 = vmatprep.subr.mxu0 0.0
  %71 = vmatpush1.msra.mxu0 %v51
  %72 = vmatprep.subr.mxu0 0.0
  %73 = vmatpush1.msra.mxu0 %v52
  %74 = vmatprep.subr.mxu0 0.0
  %75 = vmatpush1.msra.mxu0 %v53
  %76 = vmatprep.subr.mxu0 0.0
  %77 = vmatpush1.msra.mxu0 0.0
  %78 = vmatprep.subr.mxu0 0.0
  %79 = vmatpush1.msra.mxu0 0.0
  %80 = vmatprep.subr.mxu0 0.0
  %81 = vmatpush1.msra.mxu0 0.0
  %82 = vmatprep.subr.mxu0 0.0
  %83 = vmatpush1.msra.mxu0 0.0
  %84 = vmatprep.subr.mxu0 0.0
  %85 = vmatpush1.msra.mxu0 0.0
  %86 = vmatprep.subr.mxu0 0.0
  %87 = vmatpush1.msra.mxu0 0.0
  %88 = vmatprep.subr.mxu0 0.0
  %89 = vmatpush1.msra.mxu0 0.0
  %90 = vmatprep.subr.mxu0 0.0
  %91 = vmatpush1.msra.mxu0 0.0
  %92 = vmatprep.subr.mxu0 0.0
  %93 = vmatpush1.msra.mxu0 0.0
  %94 = vmatprep.subr.mxu0 0.0
  %95 = vmatpush1.msra.mxu0 0.0
  %96 = vmatprep.subr.mxu0 0.0
  %97 = vmatpush1.msra.mxu0 0.0
  %98 = vmatprep.subr.mxu0 0.0
  %99 = vmatpush1.msra.mxu0 0.0
  %100 = vmatprep.subr.mxu0 0.0
  %101 = vmatpush1.msra.mxu0 0.0
  %102 = vmatprep.subr.mxu0 0.0
  %103 = vmatpush1.msra.mxu0 0.0
  %104 = vmatprep.subr.mxu0 0.0
  %105 = vmatpush1.msra.mxu0 0.0
  %106 = vmatprep.subr.mxu0 0.0
  %107 = vmatpush1.msra.mxu0 0.0
  %108 = vmatprep.subr.mxu0 0.0
  %109 = vmatpush1.msra.mxu0 0.0
  %110 = vmatprep.subr.mxu0 0.0
  %111 = vmatpush1.msra.mxu0 0.0
  %112 = vmatprep.subr.mxu0 0.0
  %113 = vmatpush1.msra.mxu0 0.0
  %114 = vmatprep.subr.mxu0 0.0
  %115 = vmatpush1.msra.mxu0 0.0
  %116 = vmatprep.subr.mxu0 0.0
  %117 = vmatpush1.msra.mxu0 0.0
  %118 = vmatprep.subr.mxu0 0.0
  %119 = vmatpush1.msra.mxu0 0.0
  %120 = vmatprep.subr.mxu0 0.0
  %121 = vmatpush1.msra.mxu0 0.0
  %122 = vmatprep.subr.mxu0 0.0
  %123 = vmatpush1.msra.mxu0 0.0
  %124 = vmatprep.subr.mxu0 0.0
  %125 = vmatpush1.msra.mxu0 0.0
  %126 = vmatprep.subr.mxu0 0.0
  %127 = vmatpush1.msra.mxu0 0.0
  %128 = vmatprep.subr.mxu0 0.0
  %129 = vmatpush1.msra.mxu0 0.0
  %130 = vmatprep.subr.mxu0 0.0
  %131 = vmatpush1.msra.mxu0 0.0
  %132 = vmatprep.mubr.f32.mxu0 0.0
  %133 = vmatmul.mubr.f32.gmra.mrb[0].mxu0 %v63
  %v134 = vpop.f32.mrb[0].mxu0
  %v135 = vadd.f32 %v59, %v134
  %v136 = vpop.f32.mrb[0].mxu0
  %137 = vmatprep.mubr.f32.mxu0 0.0
  %138 = vmatmul.mubr.f32.gmra.mrb[0].mxu0 %v66
  %v139 = vpop.f32.mrb[0].mxu0
  %v140 = vadd.f32 %v59, %v139
  %v141 = vpop.f32.mrb[0].mxu0
  %142 = vdwg.mxu0
  %v143 = vld [vmem:[%s4] sm:$0xff]
  %v144 = vld [vmem:[%s4 + $0x8] sm:$0xff]
  %v145 = vld [vmem:[%s4 + $0x10] sm:$0xff]
  %v146 = vld [vmem:[%s4 + $0x18] sm:$0xff]
  %v147 = vld [vmem:[%s5] sm:$0x1]
  %v149 = vlaneseq
  %v150 = vshrl.u32 %v149, 7
  %v151 = vsub.s32 0, %v150
  %v152 = vrot.slane %v147, %v151
  %v155 = vsel %vm61, 0.0, 0
  %157 = vmatprep.subr.mxu0 0.0
  %158 = vmatpush1.msra.mxu0 %v143
  %159 = vmatprep.subr.mxu0 0.0
  %160 = vmatpush1.msra.mxu0 %v144
  %161 = vmatprep.subr.mxu0 0.0
  %162 = vmatpush1.msra.mxu0 %v145
  %163 = vmatprep.subr.mxu0 0.0
  %164 = vmatpush1.msra.mxu0 %v146
  %165 = vmatprep.subr.mxu0 0.0
  %166 = vmatpush1.msra.mxu0 0.0
  %167 = vmatprep.subr.mxu0 0.0
  %168 = vmatpush1.msra.mxu0 0.0
  %169 = vmatprep.subr.mxu0 0.0
  %170 = vmatpush1.msra.mxu0 0.0
  %171 = vmatprep.subr.mxu0 0.0
  %172 = vmatpush1.msra.mxu0 0.0
  %173 = vmatprep.subr.mxu0 0.0
  %174 = vmatpush1.msra.mxu0 0.0
  %175 = vmatprep.subr.mxu0 0.0
  %176 = vmatpush1.msra.mxu0 0.0
  %177 = vmatprep.subr.mxu0 0.0
  %178 = vmatpush1.msra.mxu0 0.0
  %179 = vmatprep.subr.mxu0 0.0
  %180 = vmatpush1.msra.mxu0 0.0
  %181 = vmatprep.subr.mxu0 0.0
  %182 = vmatpush1.msra.mxu0 0.0
  %183 = vmatprep.subr.mxu0 0.0
  %184 = vmatpush1.msra.mxu0 0.0
  %185 = vmatprep.subr.mxu0 0.0
  %186 = vmatpush1.msra.mxu0 0.0
  %187 = vmatprep.subr.mxu0 0.0
  %188 = vmatpush1.msra.mxu0 0.0
  %189 = vmatprep.subr.mxu0 0.0
  %190 = vmatpush1.msra.mxu0 0.0
  %191 = vmatprep.subr.mxu0 0.0
  %192 = vmatpush1.msra.mxu0 0.0
  %193 = vmatprep.subr.mxu0 0.0
  %194 = vmatpush1.msra.mxu0 0.0
  %195 = vmatprep.subr.mxu0 0.0
  %196 = vmatpush1.msra.mxu0 0.0
  %197 = vmatprep.subr.mxu0 0.0
  %198 = vmatpush1.msra.mxu0 0.0
  %199 = vmatprep.subr.mxu0 0.0
  %200 = vmatpush1.msra.mxu0 0.0
  %201 = vmatprep.subr.mxu0 0.0
  %202 = vmatpush1.msra.mxu0 0.0
  %203 = vmatprep.subr.mxu0 0.0
  %204 = vmatpush1.msra.mxu0 0.0
  %205 = vmatprep.subr.mxu0 0.0
  %206 = vmatpush1.msra.mxu0 0.0
  %207 = vmatprep.subr.mxu0 0.0
  %208 = vmatpush1.msra.mxu0 0.0
  %209 = vmatprep.subr.mxu0 0.0
  %210 = vmatpush1.msra.mxu0 0.0
  %211 = vmatprep.subr.mxu0 0.0
  %212 = vmatpush1.msra.mxu0 0.0
  %213 = vmatprep.subr.mxu0 0.0
  %214 = vmatpush1.msra.mxu0 0.0
  %215 = vmatprep.subr.mxu0 0.0
  %216 = vmatpush1.msra.mxu0 0.0
  %217 = vmatprep.subr.mxu0 0.0
  %218 = vmatpush1.msra.mxu0 0.0
  %219 = vmatprep.subr.mxu0 0.0
  %220 = vmatpush1.msra.mxu0 0.0
  %221 = vmatprep.mubr.f32.mxu0 0.0
  %222 = vmatmul.mubr.f32.gmra.mrb[0].mxu0 %v155
  %v223 = vpop.f32.mrb[0].mxu0
  %v224 = vadd.f32 %v152, %v223
  %v225 = vpop.f32.mrb[0].mxu0
  %226 = vdwg.mxu0
  %v228 = vrot.slane %v224, 1
  %v231 = vadd.f32 %v135, %v224
  %v232 = vadd.f32 %v140, %v228
  %v233 = vxor.u32 %v231, 2147483648
  %v234 = vxor.u32 %v232, 2147483648
  %v235 = vmul.f32 %v233, 1.442695
  %v236 = vpow.pop %v235
  %v237 = vmul.f32 %v234, 1.442695
  %v238 = vpow.pop %v237
  %v239 = vadd.f32 %v236, 1.0
  %v240 = vadd.f32 %v238, 1.0
  %v241 = vrcp.pop %v239
  %v242 = vmul.f32 1.0, %v241
  %v243 = vrcp.pop %v240
  %v244 = vmul.f32 1.0, %v243
  %245 = vrot.lane.b32.xlu0 %v224, 64
  %v246 = vpop.permute.xlu0 %245
  %247 = vrot.lane.b32.xlu0 %v228, 64
  %v248 = vpop.permute.xlu0 %247
  %v251 = vmul.f32 %v242, %v246
  %v252 = vmul.f32 %v244, %v248
  %255 = vrot.lane.b32.xlu0 %v251, 64
  %v256 = vpop.permute.xlu0 %255
  %257 = vrot.lane.b32.xlu0 %v252, 64
  %v258 = vpop.permute.xlu0 %257
  %v261 = vadd.f32 %v135, %v256
  %v262 = vadd.f32 %v140, %v258
  %v263 = vtanh.pop %v261
  %v264 = vtanh.pop %v262
  %v265 = vsub.f32 1.0, %v242
  %v266 = vsub.f32 1.0, %v244
  %269 = vrot.lane.b32.xlu0 %v263, 96
  %v270 = vpop.permute.xlu0 %269
  %271 = vrot.lane.b32.xlu0 %v264, 96
  %v272 = vpop.permute.xlu0 %271
  %v275 = vmul.f32 %v265, %v270
  %v276 = vmul.f32 %v266, %v272
  %v277 = vmul.f32 %v242, 0.0
  %v278 = vmul.f32 %v244, 0.0
  %v279 = vadd.f32 %v275, %v277
  %v280 = vadd.f32 %v276, %v278
  %282 = vset.pattern.permute.xlu0 0
  %283 = vperm.xlu0 %282, %v28
  %v284 = vpop.permute.xlu0 %283
  %v288 = vrot.slane %v280, 7
  %vm289 = vcmask 1041409
  %v290 = vsel %vm289, %v288, %v279
  %291 = vrot.lane.b32.xlu0 %v290, 96
  %v292 = vpop.permute.xlu0 %291
  %v294 = vmul.f32 %v284, %v292
  %v295 = vsub.f32 1.0, %v28
  %297 = vset.pattern.permute.xlu0 0
  %298 = vperm.xlu0 %297, %v295
  %v299 = vpop.permute.xlu0 %298
  %v301 = vmul.f32 %v299, 0.0
  %v302 = vadd.f32 %v294, %v301
  %v304 = vsel %vm61, %v302, 0
  %306 = vmatprep.subr.mxu0 0.0
  %307 = vmatpush1.msra.mxu0 %v143
  %308 = vmatprep.subr.mxu0 0.0
  %309 = vmatpush1.msra.mxu0 %v144
  %310 = vmatprep.subr.mxu0 0.0
  %311 = vmatpush1.msra.mxu0 %v145
  %312 = vmatprep.subr.mxu0 0.0
  %313 = vmatpush1.msra.mxu0 %v146
  %314 = vmatprep.subr.mxu0 0.0
  %315 = vmatpush1.msra.mxu0 0.0
  %316 = vmatprep.subr.mxu0 0.0
  %317 = vmatpush1.msra.mxu0 0.0
  %318 = vmatprep.subr.mxu0 0.0
  %319 = vmatpush1.msra.mxu0 0.0
  %320 = vmatprep.subr.mxu0 0.0
  %321 = vmatpush1.msra.mxu0 0.0
  %322 = vmatprep.subr.mxu0 0.0
  %323 = vmatpush1.msra.mxu0 0.0
  %324 = vmatprep.subr.mxu0 0.0
  %325 = vmatpush1.msra.mxu0 0.0
  %326 = vmatprep.subr.mxu0 0.0
  %327 = vmatpush1.msra.mxu0 0.0
  %328 = vmatprep.subr.mxu0 0.0
  %329 = vmatpush1.msra.mxu0 0.0
  %330 = vmatprep.subr.mxu0 0.0
  %331 = vmatpush1.msra.mxu0 0.0
  %332 = vmatprep.subr.mxu0 0.0
  %333 = vmatpush1.msra.mxu0 0.0
  %334 = vmatprep.subr.mxu0 0.0
  %335 = vmatpush1.msra.mxu0 0.0
  %336 = vmatprep.subr.mxu0 0.0
  %337 = vmatpush1.msra.mxu0 0.0
  %338 = vmatprep.subr.mxu0 0.0
  %339 = vmatpush1.msra.mxu0 0.0
  %340 = vmatprep.subr.mxu0 0.0
  %341 = vmatpush1.msra.mxu0 0.0
  %342 = vmatprep.subr.mxu0 0.0
  %343 = vmatpush1.msra.mxu0 0.0
  %344 = vmatprep.subr.mxu0 0.0
  %345 = vmatpush1.msra.mxu0 0.0
  %346 = vmatprep.subr.mxu0 0.0
  %347 = vmatpush1.msra.mxu0 0.0
  %348 = vmatprep.subr.mxu0 0.0
  %349 = vmatpush1.msra.mxu0 0.0
  %350 = vmatprep.subr.mxu0 0.0
  %351 = vmatpush1.msra.mxu0 0.0
  %352 = vmatprep.subr.mxu0 0.0
  %353 = vmatpush1.msra.mxu0 0.0
  %354 = vmatprep.subr.mxu0 0.0
  %355 = vmatpush1.msra.mxu0 0.0
  %356 = vmatprep.subr.mxu0 0.0
  %357 = vmatpush1.msra.mxu0 0.0
  %358 = vmatprep.subr.mxu0 0.0
  %359 = vmatpush1.msra.mxu0 0.0
  %360 = vmatprep.subr.mxu0 0.0
  %361 = vmatpush1.msra.mxu0 0.0
  %362 = vmatprep.subr.mxu0 0.0
  %363 = vmatpush1.msra.mxu0 0.0
  %364 = vmatprep.subr.mxu0 0.0
  %365 = vmatpush1.msra.mxu0 0.0
  %366 = vmatprep.subr.mxu0 0.0
  %367 = vmatpush1.msra.mxu0 0.0
  %368 = vmatprep.subr.mxu0 0.0
  %369 = vmatpush1.msra.mxu0 0.0
  %370 = vmatprep.mubr.f32.mxu0 0.0
  %371 = vmatmul.mubr.f32.gmra.mrb[0].mxu0 %v304
  %v372 = vpop.f32.mrb[0].mxu0
  %v373 = vadd.f32 %v152, %v372
  %v374 = vpop.f32.mrb[0].mxu0
  %375 = vdwg.mxu0
  %v377 = vrot.slane %v373, 7
  %v380 = vadd.f32 %v135, %v377
  %v381 = vadd.f32 %v140, %v373
  %v382 = vxor.u32 %v380, 2147483648
  %v383 = vxor.u32 %v381, 2147483648
  %v384 = vmul.f32 %v382, 1.442695
  %v385 = vpow.pop %v384
  %v386 = vmul.f32 %v383, 1.442695
  %v387 = vpow.pop %v386
  %v388 = vadd.f32 %v385, 1.0
  %v389 = vadd.f32 %v387, 1.0
  %v390 = vrcp.pop %v388
  %v391 = vmul.f32 1.0, %v390
  %v392 = vrcp.pop %v389
  %v393 = vmul.f32 1.0, %v392
  %394 = vrot.lane.b32.xlu0 %v377, 64
  %v395 = vpop.permute.xlu0 %394
  %396 = vrot.lane.b32.xlu0 %v373, 64
  %v397 = vpop.permute.xlu0 %396
  %v400 = vmul.f32 %v391, %v395
  %v401 = vmul.f32 %v393, %v397
  %404 = vrot.lane.b32.xlu0 %v400, 64
  %v405 = vpop.permute.xlu0 %404
  %406 = vrot.lane.b32.xlu0 %v401, 64
  %v407 = vpop.permute.xlu0 %406
  %v410 = vadd.f32 %v135, %v405
  %v411 = vadd.f32 %v140, %v407
  %v412 = vtanh.pop %v410
  %v413 = vtanh.pop %v411
  %v414 = vsub.f32 1.0, %v391
  %v415 = vsub.f32 1.0, %v393
  %418 = vrot.lane.b32.xlu0 %v412, 96
  %v419 = vpop.permute.xlu0 %418
  %420 = vrot.lane.b32.xlu0 %v413, 96
  %v421 = vpop.permute.xlu0 %420
  %v424 = vmul.f32 %v414, %v419
  %v425 = vmul.f32 %v415, %v421
  %v426 = vrot.slane %v302, 7
  %427 = vrot.lane.b32.xlu0 %v426, 32
  %v428 = vpop.permute.xlu0 %427
  %429 = vrot.lane.b32.xlu0 %v302, 32
  %v430 = vpop.permute.xlu0 %429
  %v433 = vmul.f32 %v391, %v428
  %v434 = vmul.f32 %v393, %v430
  %v435 = vadd.f32 %v424, %v433
  %v436 = vadd.f32 %v425, %v434
  %438 = vset.pattern.permute.xlu0 0
  %439 = vperm.xlu0 %438, %v31
  %v440 = vpop.permute.xlu0 %439
  %v444 = vrot.slane %v435, 1
  %v445 = vsel %vm289, %v436, %v444
  %446 = vrot.lane.b32.xlu0 %v445, 96
  %v447 = vpop.permute.xlu0 %446
  %v449 = vmul.f32 %v440, %v447
  %v450 = vsub.f32 1.0, %v31
  %452 = vset.pattern.permute.xlu0 0
  %453 = vperm.xlu0 %452, %v450
  %v454 = vpop.permute.xlu0 %453
  %v456 = vmul.f32 %v454, %v302
  %v457 = vadd.f32 %v449, %v456
  %v459 = vsel %vm61, %v457, 0
  %461 = vmatprep.subr.mxu0 0.0
  %462 = vmatpush1.msra.mxu0 %v143
  %463 = vmatprep.subr.mxu0 0.0
  %464 = vmatpush1.msra.mxu0 %v144
  %465 = vmatprep.subr.mxu0 0.0
  %466 = vmatpush1.msra.mxu0 %v145
  %467 = vmatprep.subr.mxu0 0.0
  %468 = vmatpush1.msra.mxu0 %v146
  %469 = vmatprep.subr.mxu0 0.0
  %470 = vmatpush1.msra.mxu0 0.0
  %471 = vmatprep.subr.mxu0 0.0
  %472 = vmatpush1.msra.mxu0 0.0
  %473 = vmatprep.subr.mxu0 0.0
  %474 = vmatpush1.msra.mxu0 0.0
  %475 = vmatprep.subr.mxu0 0.0
  %476 = vmatpush1.msra.mxu0 0.0
  %477 = vmatprep.subr.mxu0 0.0
  %478 = vmatpush1.msra.mxu0 0.0
  %479 = vmatprep.subr.mxu0 0.0
  %480 = vmatpush1.msra.mxu0 0.0
  %481 = vmatprep.subr.mxu0 0.0
  %482 = vmatpush1.msra.mxu0 0.0
  %483 = vmatprep.subr.mxu0 0.0
  %484 = vmatpush1.msra.mxu0 0.0
  %485 = vmatprep.subr.mxu0 0.0
  %486 = vmatpush1.msra.mxu0 0.0
  %487 = vmatprep.subr.mxu0 0.0
  %488 = vmatpush1.msra.mxu0 0.0
  %489 = vmatprep.subr.mxu0 0.0
  %490 = vmatpush1.msra.mxu0 0.0
  %491 = vmatprep.subr.mxu0 0.0
  %492 = vmatpush1.msra.mxu0 0.0
  %493 = vmatprep.subr.mxu0 0.0
  %494 = vmatpush1.msra.mxu0 0.0
  %495 = vmatprep.subr.mxu0 0.0
  %496 = vmatpush1.msra.mxu0 0.0
  %497 = vmatprep.subr.mxu0 0.0
  %498 = vmatpush1.msra.mxu0 0.0
  %499 = vmatprep.subr.mxu0 0.0
  %500 = vmatpush1.msra.mxu0 0.0
  %501 = vmatprep.subr.mxu0 0.0
  %502 = vmatpush1.msra.mxu0 0.0
  %503 = vmatprep.subr.mxu0 0.0
  %504 = vmatpush1.msra.mxu0 0.0
  %505 = vmatprep.subr.mxu0 0.0
  %506 = vmatpush1.msra.mxu0 0.0
  %507 = vmatprep.subr.mxu0 0.0
  %508 = vmatpush1.msra.mxu0 0.0
  %509 = vmatprep.subr.mxu0 0.0
  %510 = vmatpush1.msra.mxu0 0.0
  %511 = vmatprep.subr.mxu0 0.0
  %512 = vmatpush1.msra.mxu0 0.0
  %513 = vmatprep.subr.mxu0 0.0
  %514 = vmatpush1.msra.mxu0 0.0
  %515 = vmatprep.subr.mxu0 0.0
  %516 = vmatpush1.msra.mxu0 0.0
  %517 = vmatprep.subr.mxu0 0.0
  %518 = vmatpush1.msra.mxu0 0.0
  %519 = vmatprep.subr.mxu0 0.0
  %520 = vmatpush1.msra.mxu0 0.0
  %521 = vmatprep.subr.mxu0 0.0
  %522 = vmatpush1.msra.mxu0 0.0
  %523 = vmatprep.subr.mxu0 0.0
  %524 = vmatpush1.msra.mxu0 0.0
  %525 = vmatprep.mubr.f32.mxu0 0.0
  %526 = vmatmul.mubr.f32.gmra.mrb[0].mxu0 %v459
  %v527 = vpop.f32.mrb[0].mxu0
  %v528 = vadd.f32 %v152, %v527
  %v529 = vpop.f32.mrb[0].mxu0
  %530 = vdwg.mxu0
  %v532 = vrot.slane %v528, 6
  %v533 = vrot.slane %v528, 7
  %v536 = vadd.f32 %v135, %v532
  %v537 = vadd.f32 %v140, %v533
  %v538 = vxor.u32 %v536, 2147483648
  %v539 = vxor.u32 %v537, 2147483648
  %v540 = vmul.f32 %v538, 1.442695
  %v541 = vpow.pop %v540
  %v542 = vmul.f32 %v539, 1.442695
  %v543 = vpow.pop %v542
  %v544 = vadd.f32 %v541, 1.0
  %v545 = vadd.f32 %v543, 1.0
  %v546 = vrcp.pop %v544
  %v547 = vmul.f32 1.0, %v546
  %v548 = vrcp.pop %v545
  %v549 = vmul.f32 1.0, %v548
  %550 = vrot.lane.b32.xlu0 %v532, 64
  %v551 = vpop.permute.xlu0 %550
  %552 = vrot.lane.b32.xlu0 %v533, 64
  %v553 = vpop.permute.xlu0 %552
  %v556 = vmul.f32 %v547, %v551
  %v557 = vmul.f32 %v549, %v553
  %560 = vrot.lane.b32.xlu0 %v556, 64
  %v561 = vpop.permute.xlu0 %560
  %562 = vrot.lane.b32.xlu0 %v557, 64
  %v563 = vpop.permute.xlu0 %562
  %v566 = vadd.f32 %v135, %v561
  %v567 = vadd.f32 %v140, %v563
  %v568 = vtanh.pop %v566
  %v569 = vtanh.pop %v567
  %v570 = vsub.f32 1.0, %v547
  %v571 = vsub.f32 1.0, %v549
  %574 = vrot.lane.b32.xlu0 %v568, 96
  %v575 = vpop.permute.xlu0 %574
  %576 = vrot.lane.b32.xlu0 %v569, 96
  %v577 = vpop.permute.xlu0 %576
  %v580 = vmul.f32 %v570, %v575
  %v581 = vmul.f32 %v571, %v577
  %v582 = vrot.slane %v457, 6
  %v583 = vrot.slane %v457, 7
  %584 = vrot.lane.b32.xlu0 %v582, 32
  %v585 = vpop.permute.xlu0 %584
  %586 = vrot.lane.b32.xlu0 %v583, 32
  %v587 = vpop.permute.xlu0 %586
  %v590 = vmul.f32 %v547, %v585
  %v591 = vmul.f32 %v549, %v587
  %v592 = vadd.f32 %v580, %v590
  %v593 = vadd.f32 %v581, %v591
  %595 = vset.pattern.permute.xlu0 0
  %596 = vperm.xlu0 %595, %v34
  %v597 = vpop.permute.xlu0 %596
  %v601 = vrot.slane %v592, 2
  %v602 = vrot.slane %v593, 1
  %v603 = vsel %vm289, %v602, %v601
  %604 = vrot.lane.b32.xlu0 %v603, 96
  %v605 = vpop.permute.xlu0 %604
  %v607 = vmul.f32 %v597, %v605
  %v608 = vsub.f32 1.0, %v34
  %610 = vset.pattern.permute.xlu0 0
  %611 = vperm.xlu0 %610, %v608
  %v612 = vpop.permute.xlu0 %611
  %v614 = vmul.f32 %v612, %v457
  %v615 = vadd.f32 %v607, %v614
  %v617 = vsel %vm61, %v615, 0
  %619 = vmatprep.subr.mxu0 0.0
  %620 = vmatpush1.msra.mxu0 %v143
  %621 = vmatprep.subr.mxu0 0.0
  %622 = vmatpush1.msra.mxu0 %v144
  %623 = vmatprep.subr.mxu0 0.0
  %624 = vmatpush1.msra.mxu0 %v145
  %625 = vmatprep.subr.mxu0 0.0
  %626 = vmatpush1.msra.mxu0 %v146
  %627 = vmatprep.subr.mxu0 0.0
  %628 = vmatpush1.msra.mxu0 0.0
  %629 = vmatprep.subr.mxu0 0.0
  %630 = vmatpush1.msra.mxu0 0.0
  %631 = vmatprep.subr.mxu0 0.0
  %632 = vmatpush1.msra.mxu0 0.0
  %633 = vmatprep.subr.mxu0 0.0
  %634 = vmatpush1.msra.mxu0 0.0
  %635 = vmatprep.subr.mxu0 0.0
  %636 = vmatpush1.msra.mxu0 0.0
  %637 = vmatprep.subr.mxu0 0.0
  %638 = vmatpush1.msra.mxu0 0.0
  %639 = vmatprep.subr.mxu0 0.0
  %640 = vmatpush1.msra.mxu0 0.0
  %641 = vmatprep.subr.mxu0 0.0
  %642 = vmatpush1.msra.mxu0 0.0
  %643 = vmatprep.subr.mxu0 0.0
  %644 = vmatpush1.msra.mxu0 0.0
  %645 = vmatprep.subr.mxu0 0.0
  %646 = vmatpush1.msra.mxu0 0.0
  %647 = vmatprep.subr.mxu0 0.0
  %648 = vmatpush1.msra.mxu0 0.0
  %649 = vmatprep.subr.mxu0 0.0
  %650 = vmatpush1.msra.mxu0 0.0
  %651 = vmatprep.subr.mxu0 0.0
  %652 = vmatpush1.msra.mxu0 0.0
  %653 = vmatprep.subr.mxu0 0.0
  %654 = vmatpush1.msra.mxu0 0.0
  %655 = vmatprep.subr.mxu0 0.0
  %656 = vmatpush1.msra.mxu0 0.0
  %657 = vmatprep.subr.mxu0 0.0
  %658 = vmatpush1.msra.mxu0 0.0
  %659 = vmatprep.subr.mxu0 0.0
  %660 = vmatpush1.msra.mxu0 0.0
  %661 = vmatprep.subr.mxu0 0.0
  %662 = vmatpush1.msra.mxu0 0.0
  %663 = vmatprep.subr.mxu0 0.0
  %664 = vmatpush1.msra.mxu0 0.0
  %665 = vmatprep.subr.mxu0 0.0
  %666 = vmatpush1.msra.mxu0 0.0
  %667 = vmatprep.subr.mxu0 0.0
  %668 = vmatpush1.msra.mxu0 0.0
  %669 = vmatprep.subr.mxu0 0.0
  %670 = vmatpush1.msra.mxu0 0.0
  %671 = vmatprep.subr.mxu0 0.0
  %672 = vmatpush1.msra.mxu0 0.0
  %673 = vmatprep.subr.mxu0 0.0
  %674 = vmatpush1.msra.mxu0 0.0
  %675 = vmatprep.subr.mxu0 0.0
  %676 = vmatpush1.msra.mxu0 0.0
  %677 = vmatprep.subr.mxu0 0.0
  %678 = vmatpush1.msra.mxu0 0.0
  %679 = vmatprep.subr.mxu0 0.0
  %680 = vmatpush1.msra.mxu0 0.0
  %681 = vmatprep.subr.mxu0 0.0
  %682 = vmatpush1.msra.mxu0 0.0
  %683 = vmatprep.mubr.f32.mxu0 0.0
  %684 = vmatmul.mubr.f32.gmra.mrb[0].mxu0 %v617
  %v685 = vpop.f32.mrb[0].mxu0
  %v686 = vadd.f32 %v152, %v685
  %v687 = vpop.f32.mrb[0].mxu0
  %688 = vdwg.mxu0
  %v690 = vrot.slane %v686, 5
  %v691 = vrot.slane %v686, 6
  %v694 = vadd.f32 %v135, %v690
  %v695 = vadd.f32 %v140, %v691
  %v696 = vxor.u32 %v694, 2147483648
  %v697 = vxor.u32 %v695, 2147483648
  %v698 = vmul.f32 %v696, 1.442695
  %v699 = vpow.pop %v698
  %v700 = vmul.f32 %v697, 1.442695
  %v701 = vpow.pop %v700
  %v702 = vadd.f32 %v699, 1.0
  %v703 = vadd.f32 %v701, 1.0
  %v704 = vrcp.pop %v702
  %v705 = vmul.f32 1.0, %v704
  %v706 = vrcp.pop %v703
  %v707 = vmul.f32 1.0, %v706
  %708 = vrot.lane.b32.xlu0 %v690, 64
  %v709 = vpop.permute.xlu0 %708
  %710 = vrot.lane.b32.xlu0 %v691, 64
  %v711 = vpop.permute.xlu0 %710
  %v714 = vmul.f32 %v705, %v709
  %v715 = vmul.f32 %v707, %v711
  %718 = vrot.lane.b32.xlu0 %v714, 64
  %v719 = vpop.permute.xlu0 %718
  %720 = vrot.lane.b32.xlu0 %v715, 64
  %v721 = vpop.permute.xlu0 %720
  %v724 = vadd.f32 %v135, %v719
  %v725 = vadd.f32 %v140, %v721
  %v726 = vtanh.pop %v724
  %v727 = vtanh.pop %v725
  %v728 = vsub.f32 1.0, %v705
  %v729 = vsub.f32 1.0, %v707
  %732 = vrot.lane.b32.xlu0 %v726, 96
  %v733 = vpop.permute.xlu0 %732
  %734 = vrot.lane.b32.xlu0 %v727, 96
  %v735 = vpop.permute.xlu0 %734
  %v738 = vmul.f32 %v728, %v733
  %v739 = vmul.f32 %v729, %v735
  %v740 = vrot.slane %v615, 5
  %v741 = vrot.slane %v615, 6
  %742 = vrot.lane.b32.xlu0 %v740, 32
  %v743 = vpop.permute.xlu0 %742
  %744 = vrot.lane.b32.xlu0 %v741, 32
  %v745 = vpop.permute.xlu0 %744
  %v748 = vmul.f32 %v705, %v743
  %v749 = vmul.f32 %v707, %v745
  %v750 = vadd.f32 %v738, %v748
  %v751 = vadd.f32 %v739, %v749
  %753 = vset.pattern.permute.xlu0 0
  %754 = vperm.xlu0 %753, %v37
  %v755 = vpop.permute.xlu0 %754
  %v759 = vrot.slane %v750, 3
  %v760 = vrot.slane %v751, 2
  %v761 = vsel %vm289, %v760, %v759
  %762 = vrot.lane.b32.xlu0 %v761, 96
  %v763 = vpop.permute.xlu0 %762
  %v765 = vmul.f32 %v755, %v763
  %v766 = vsub.f32 1.0, %v37
  %768 = vset.pattern.permute.xlu0 0
  %769 = vperm.xlu0 %768, %v766
  %v770 = vpop.permute.xlu0 %769
  %v772 = vmul.f32 %v770, %v615
  %v773 = vadd.f32 %v765, %v772
  %v775 = vsel %vm61, %v773, 0
  %777 = vmatprep.subr.mxu0 0.0
  %778 = vmatpush1.msra.mxu0 %v143
  %779 = vmatprep.subr.mxu0 0.0
  %780 = vmatpush1.msra.mxu0 %v144
  %781 = vmatprep.subr.mxu0 0.0
  %782 = vmatpush1.msra.mxu0 %v145
  %783 = vmatprep.subr.mxu0 0.0
  %784 = vmatpush1.msra.mxu0 %v146
  %785 = vmatprep.subr.mxu0 0.0
  %786 = vmatpush1.msra.mxu0 0.0
  %787 = vmatprep.subr.mxu0 0.0
  %788 = vmatpush1.msra.mxu0 0.0
  %789 = vmatprep.subr.mxu0 0.0
  %790 = vmatpush1.msra.mxu0 0.0
  %791 = vmatprep.subr.mxu0 0.0
  %792 = vmatpush1.msra.mxu0 0.0
  %793 = vmatprep.subr.mxu0 0.0
  %794 = vmatpush1.msra.mxu0 0.0
  %795 = vmatprep.subr.mxu0 0.0
  %796 = vmatpush1.msra.mxu0 0.0
  %797 = vmatprep.subr.mxu0 0.0
  %798 = vmatpush1.msra.mxu0 0.0
  %799 = vmatprep.subr.mxu0 0.0
  %800 = vmatpush1.msra.mxu0 0.0
  %801 = vmatprep.subr.mxu0 0.0
  %802 = vmatpush1.msra.mxu0 0.0
  %803 = vmatprep.subr.mxu0 0.0
  %804 = vmatpush1.msra.mxu0 0.0
  %805 = vmatprep.subr.mxu0 0.0
  %806 = vmatpush1.msra.mxu0 0.0
  %807 = vmatprep.subr.mxu0 0.0
  %808 = vmatpush1.msra.mxu0 0.0
  %809 = vmatprep.subr.mxu0 0.0
  %810 = vmatpush1.msra.mxu0 0.0
  %811 = vmatprep.subr.mxu0 0.0
  %812 = vmatpush1.msra.mxu0 0.0
  %813 = vmatprep.subr.mxu0 0.0
  %814 = vmatpush1.msra.mxu0 0.0
  %815 = vmatprep.subr.mxu0 0.0
  %816 = vmatpush1.msra.mxu0 0.0
  %817 = vmatprep.subr.mxu0 0.0
  %818 = vmatpush1.msra.mxu0 0.0
  %819 = vmatprep.subr.mxu0 0.0
  %820 = vmatpush1.msra.mxu0 0.0
  %821 = vmatprep.subr.mxu0 0.0
  %822 = vmatpush1.msra.mxu0 0.0
  %823 = vmatprep.subr.mxu0 0.0
  %824 = vmatpush1.msra.mxu0 0.0
  %825 = vmatprep.subr.mxu0 0.0
  %826 = vmatpush1.msra.mxu0 0.0
  %827 = vmatprep.subr.mxu0 0.0
  %828 = vmatpush1.msra.mxu0 0.0
  %829 = vmatprep.subr.mxu0 0.0
  %830 = vmatpush1.msra.mxu0 0.0
  %831 = vmatprep.subr.mxu0 0.0
  %832 = vmatpush1.msra.mxu0 0.0
  %833 = vmatprep.subr.mxu0 0.0
  %834 = vmatpush1.msra.mxu0 0.0
  %835 = vmatprep.subr.mxu0 0.0
  %836 = vmatpush1.msra.mxu0 0.0
  %837 = vmatprep.subr.mxu0 0.0
  %838 = vmatpush1.msra.mxu0 0.0
  %839 = vmatprep.subr.mxu0 0.0
  %840 = vmatpush1.msra.mxu0 0.0
  %841 = vmatprep.mubr.f32.mxu0 0.0
  %842 = vmatmul.mubr.f32.gmra.mrb[0].mxu0 %v775
  %v843 = vpop.f32.mrb[0].mxu0
  %v844 = vadd.f32 %v152, %v843
  %v845 = vpop.f32.mrb[0].mxu0
  %846 = vdwg.mxu0
  %v848 = vrot.slane %v844, 4
  %v849 = vrot.slane %v844, 5
  %v852 = vadd.f32 %v135, %v848
  %v853 = vadd.f32 %v140, %v849
  %v854 = vxor.u32 %v852, 2147483648
  %v855 = vxor.u32 %v853, 2147483648
  %v856 = vmul.f32 %v854, 1.442695
  %v857 = vpow.pop %v856
  %v858 = vmul.f32 %v855, 1.442695
  %v859 = vpow.pop %v858
  %v860 = vadd.f32 %v857, 1.0
  %v861 = vadd.f32 %v859, 1.0
  %v862 = vrcp.pop %v860
  %v863 = vmul.f32 1.0, %v862
  %v864 = vrcp.pop %v861
  %v865 = vmul.f32 1.0, %v864
  %866 = vrot.lane.b32.xlu0 %v848, 64
  %v867 = vpop.permute.xlu0 %866
  %868 = vrot.lane.b32.xlu0 %v849, 64
  %v869 = vpop.permute.xlu0 %868
  %v872 = vmul.f32 %v863, %v867
  %v873 = vmul.f32 %v865, %v869
  %876 = vrot.lane.b32.xlu0 %v872, 64
  %v877 = vpop.permute.xlu0 %876
  %878 = vrot.lane.b32.xlu0 %v873, 64
  %v879 = vpop.permute.xlu0 %878
  %v882 = vadd.f32 %v135, %v877
  %v883 = vadd.f32 %v140, %v879
  %v884 = vtanh.pop %v882
  %v885 = vtanh.pop %v883
  %v886 = vsub.f32 1.0, %v863
  %v887 = vsub.f32 1.0, %v865
  %890 = vrot.lane.b32.xlu0 %v884, 96
  %v891 = vpop.permute.xlu0 %890
  %892 = vrot.lane.b32.xlu0 %v885, 96
  %v893 = vpop.permute.xlu0 %892
  %v896 = vmul.f32 %v886, %v891
  %v897 = vmul.f32 %v887, %v893
  %v898 = vrot.slane %v773, 4
  %v899 = vrot.slane %v773, 5
  %900 = vrot.lane.b32.xlu0 %v898, 32
  %v901 = vpop.permute.xlu0 %900
  %902 = vrot.lane.b32.xlu0 %v899, 32
  %v903 = vpop.permute.xlu0 %902
  %v906 = vmul.f32 %v863, %v901
  %v907 = vmul.f32 %v865, %v903
  %v908 = vadd.f32 %v896, %v906
  %v909 = vadd.f32 %v897, %v907
  %911 = vset.pattern.permute.xlu0 0
  %912 = vperm.xlu0 %911, %v40
  %v913 = vpop.permute.xlu0 %912
  %v917 = vrot.slane %v908, 4
  %v918 = vrot.slane %v909, 3
  %v919 = vsel %vm289, %v918, %v917
  %920 = vrot.lane.b32.xlu0 %v919, 96
  %v921 = vpop.permute.xlu0 %920
  %v923 = vmul.f32 %v913, %v921
  %v924 = vsub.f32 1.0, %v40
  %926 = vset.pattern.permute.xlu0 0
  %927 = vperm.xlu0 %926, %v924
  %v928 = vpop.permute.xlu0 %927
  %v930 = vmul.f32 %v928, %v773
  %v931 = vadd.f32 %v923, %v930
  %v933 = vsel %vm61, %v931, 0
  %935 = vmatprep.subr.mxu0 0.0
  %936 = vmatpush1.msra.mxu0 %v143
  %937 = vmatprep.subr.mxu0 0.0
  %938 = vmatpush1.msra.mxu0 %v144
  %939 = vmatprep.subr.mxu0 0.0
  %940 = vmatpush1.msra.mxu0 %v145
  %941 = vmatprep.subr.mxu0 0.0
  %942 = vmatpush1.msra.mxu0 %v146
  %943 = vmatprep.subr.mxu0 0.0
  %944 = vmatpush1.msra.mxu0 0.0
  %945 = vmatprep.subr.mxu0 0.0
  %946 = vmatpush1.msra.mxu0 0.0
  %947 = vmatprep.subr.mxu0 0.0
  %948 = vmatpush1.msra.mxu0 0.0
  %949 = vmatprep.subr.mxu0 0.0
  %950 = vmatpush1.msra.mxu0 0.0
  %951 = vmatprep.subr.mxu0 0.0
  %952 = vmatpush1.msra.mxu0 0.0
  %953 = vmatprep.subr.mxu0 0.0
  %954 = vmatpush1.msra.mxu0 0.0
  %955 = vmatprep.subr.mxu0 0.0
  %956 = vmatpush1.msra.mxu0 0.0
  %957 = vmatprep.subr.mxu0 0.0
  %958 = vmatpush1.msra.mxu0 0.0
  %959 = vmatprep.subr.mxu0 0.0
  %960 = vmatpush1.msra.mxu0 0.0
  %961 = vmatprep.subr.mxu0 0.0
  %962 = vmatpush1.msra.mxu0 0.0
  %963 = vmatprep.subr.mxu0 0.0
  %964 = vmatpush1.msra.mxu0 0.0
  %965 = vmatprep.subr.mxu0 0.0
  %966 = vmatpush1.msra.mxu0 0.0
  %967 = vmatprep.subr.mxu0 0.0
  %968 = vmatpush1.msra.mxu0 0.0
  %969 = vmatprep.subr.mxu0 0.0
  %970 = vmatpush1.msra.mxu0 0.0
  %971 = vmatprep.subr.mxu0 0.0
  %972 = vmatpush1.msra.mxu0 0.0
  %973 = vmatprep.subr.mxu0 0.0
  %974 = vmatpush1.msra.mxu0 0.0
  %975 = vmatprep.subr.mxu0 0.0
  %976 = vmatpush1.msra.mxu0 0.0
  %977 = vmatprep.subr.mxu0 0.0
  %978 = vmatpush1.msra.mxu0 0.0
  %979 = vmatprep.subr.mxu0 0.0
  %980 = vmatpush1.msra.mxu0 0.0
  %981 = vmatprep.subr.mxu0 0.0
  %982 = vmatpush1.msra.mxu0 0.0
  %983 = vmatprep.subr.mxu0 0.0
  %984 = vmatpush1.msra.mxu0 0.0
  %985 = vmatprep.subr.mxu0 0.0
  %986 = vmatpush1.msra.mxu0 0.0
  %987 = vmatprep.subr.mxu0 0.0
  %988 = vmatpush1.msra.mxu0 0.0
  %989 = vmatprep.subr.mxu0 0.0
  %990 = vmatpush1.msra.mxu0 0.0
  %991 = vmatprep.subr.mxu0 0.0
  %992 = vmatpush1.msra.mxu0 0.0
  %993 = vmatprep.subr.mxu0 0.0
  %994 = vmatpush1.msra.mxu0 0.0
  %995 = vmatprep.subr.mxu0 0.0
  %996 = vmatpush1.msra.mxu0 0.0
  %997 = vmatprep.subr.mxu0 0.0
  %998 = vmatpush1.msra.mxu0 0.0
  %999 = vmatprep.mubr.f32.mxu0 0.0
  %1000 = vmatmul.mubr.f32.gmra.mrb[0].mxu0 %v933
  %v1001 = vpop.f32.mrb[0].mxu0
  %v1002 = vadd.f32 %v152, %v1001
  %v1003 = vpop.f32.mrb[0].mxu0
  %1004 = vdwg.mxu0
  %v1006 = vrot.slane %v1002, 3
  %v1007 = vrot.slane %v1002, 4
  %v1010 = vadd.f32 %v135, %v1006
  %v1011 = vadd.f32 %v140, %v1007
  %v1012 = vxor.u32 %v1010, 2147483648
  %v1013 = vxor.u32 %v1011, 2147483648
  %v1014 = vmul.f32 %v1012, 1.442695
  %v1015 = vpow.pop %v1014
  %v1016 = vmul.f32 %v1013, 1.442695
  %v1017 = vpow.pop %v1016
  %v1018 = vadd.f32 %v1015, 1.0
  %v1019 = vadd.f32 %v1017, 1.0
  %v1020 = vrcp.pop %v1018
  %v1021 = vmul.f32 1.0, %v1020
  %v1022 = vrcp.pop %v1019
  %v1023 = vmul.f32 1.0, %v1022
  %1024 = vrot.lane.b32.xlu0 %v1006, 64
  %v1025 = vpop.permute.xlu0 %1024
  %1026 = vrot.lane.b32.xlu0 %v1007, 64
  %v1027 = vpop.permute.xlu0 %1026
  %v1030 = vmul.f32 %v1021, %v1025
  %v1031 = vmul.f32 %v1023, %v1027
  %1034 = vrot.lane.b32.xlu0 %v1030, 64
  %v1035 = vpop.permute.xlu0 %1034
  %1036 = vrot.lane.b32.xlu0 %v1031, 64
  %v1037 = vpop.permute.xlu0 %1036
  %v1040 = vadd.f32 %v135, %v1035
  %v1041 = vadd.f32 %v140, %v1037
  %v1042 = vtanh.pop %v1040
  %v1043 = vtanh.pop %v1041
  %v1044 = vsub.f32 1.0, %v1021
  %v1045 = vsub.f32 1.0, %v1023
  %1048 = vrot.lane.b32.xlu0 %v1042, 96
  %v1049 = vpop.permute.xlu0 %1048
  %1050 = vrot.lane.b32.xlu0 %v1043, 96
  %v1051 = vpop.permute.xlu0 %1050
  %v1054 = vmul.f32 %v1044, %v1049
  %v1055 = vmul.f32 %v1045, %v1051
  %v1056 = vrot.slane %v931, 3
  %v1057 = vrot.slane %v931, 4
  %1058 = vrot.lane.b32.xlu0 %v1056, 32
  %v1059 = vpop.permute.xlu0 %1058
  %1060 = vrot.lane.b32.xlu0 %v1057, 32
  %v1061 = vpop.permute.xlu0 %1060
  %v1064 = vmul.f32 %v1021, %v1059
  %v1065 = vmul.f32 %v1023, %v1061
  %v1066 = vadd.f32 %v1054, %v1064
  %v1067 = vadd.f32 %v1055, %v1065
  %1069 = vset.pattern.permute.xlu0 0
  %1070 = vperm.xlu0 %1069, %v43
  %v1071 = vpop.permute.xlu0 %1070
  %v1075 = vrot.slane %v1066, 5
  %v1076 = vrot.slane %v1067, 4
  %v1077 = vsel %vm289, %v1076, %v1075
  %1078 = vrot.lane.b32.xlu0 %v1077, 96
  %v1079 = vpop.permute.xlu0 %1078
  %v1081 = vmul.f32 %v1071, %v1079
  %v1082 = vsub.f32 1.0, %v43
  %1084 = vset.pattern.permute.xlu0 0
  %1085 = vperm.xlu0 %1084, %v1082
  %v1086 = vpop.permute.xlu0 %1085
  %v1088 = vmul.f32 %v1086, %v931
  %v1089 = vadd.f32 %v1081, %v1088
  %v1091 = vsel %vm61, %v1089, 0
  %1093 = vmatprep.subr.mxu0 0.0
  %1094 = vmatpush1.msra.mxu0 %v143
  %1095 = vmatprep.subr.mxu0 0.0
  %1096 = vmatpush1.msra.mxu0 %v144
  %1097 = vmatprep.subr.mxu0 0.0
  %1098 = vmatpush1.msra.mxu0 %v145
  %1099 = vmatprep.subr.mxu0 0.0
  %1100 = vmatpush1.msra.mxu0 %v146
  %1101 = vmatprep.subr.mxu0 0.0
  %1102 = vmatpush1.msra.mxu0 0.0
  %1103 = vmatprep.subr.mxu0 0.0
  %1104 = vmatpush1.msra.mxu0 0.0
  %1105 = vmatprep.subr.mxu0 0.0
  %1106 = vmatpush1.msra.mxu0 0.0
  %1107 = vmatprep.subr.mxu0 0.0
  %1108 = vmatpush1.msra.mxu0 0.0
  %1109 = vmatprep.subr.mxu0 0.0
  %1110 = vmatpush1.msra.mxu0 0.0
  %1111 = vmatprep.subr.mxu0 0.0
  %1112 = vmatpush1.msra.mxu0 0.0
  %1113 = vmatprep.subr.mxu0 0.0
  %1114 = vmatpush1.msra.mxu0 0.0
  %1115 = vmatprep.subr.mxu0 0.0
  %1116 = vmatpush1.msra.mxu0 0.0
  %1117 = vmatprep.subr.mxu0 0.0
  %1118 = vmatpush1.msra.mxu0 0.0
  %1119 = vmatprep.subr.mxu0 0.0
  %1120 = vmatpush1.msra.mxu0 0.0
  %1121 = vmatprep.subr.mxu0 0.0
  %1122 = vmatpush1.msra.mxu0 0.0
  %1123 = vmatprep.subr.mxu0 0.0
  %1124 = vmatpush1.msra.mxu0 0.0
  %1125 = vmatprep.subr.mxu0 0.0
  %1126 = vmatpush1.msra.mxu0 0.0
  %1127 = vmatprep.subr.mxu0 0.0
  %1128 = vmatpush1.msra.mxu0 0.0
  %1129 = vmatprep.subr.mxu0 0.0
  %1130 = vmatpush1.msra.mxu0 0.0
  %1131 = vmatprep.subr.mxu0 0.0
  %1132 = vmatpush1.msra.mxu0 0.0
  %1133 = vmatprep.subr.mxu0 0.0
  %1134 = vmatpush1.msra.mxu0 0.0
  %1135 = vmatprep.subr.mxu0 0.0
  %1136 = vmatpush1.msra.mxu0 0.0
  %1137 = vmatprep.subr.mxu0 0.0
  %1138 = vmatpush1.msra.mxu0 0.0
  %1139 = vmatprep.subr.mxu0 0.0
  %1140 = vmatpush1.msra.mxu0 0.0
  %1141 = vmatprep.subr.mxu0 0.0
  %1142 = vmatpush1.msra.mxu0 0.0
  %1143 = vmatprep.subr.mxu0 0.0
  %1144 = vmatpush1.msra.mxu0 0.0
  %1145 = vmatprep.subr.mxu0 0.0
  %1146 = vmatpush1.msra.mxu0 0.0
  %1147 = vmatprep.subr.mxu0 0.0
  %1148 = vmatpush1.msra.mxu0 0.0
  %1149 = vmatprep.subr.mxu0 0.0
  %1150 = vmatpush1.msra.mxu0 0.0
  %1151 = vmatprep.subr.mxu0 0.0
  %1152 = vmatpush1.msra.mxu0 0.0
  %1153 = vmatprep.subr.mxu0 0.0
  %1154 = vmatpush1.msra.mxu0 0.0
  %1155 = vmatprep.subr.mxu0 0.0
  %1156 = vmatpush1.msra.mxu0 0.0
  %1157 = vmatprep.mubr.f32.mxu0 0.0
  %1158 = vmatmul.mubr.f32.gmra.mrb[0].mxu0 %v1091
  %v1159 = vpop.f32.mrb[0].mxu0
  %v1160 = vadd.f32 %v152, %v1159
  %v1161 = vpop.f32.mrb[0].mxu0
  %1162 = vdwg.mxu0
  %v1164 = vrot.slane %v1160, 2
  %v1165 = vrot.slane %v1160, 3
  %v1168 = vadd.f32 %v135, %v1164
  %v1169 = vadd.f32 %v140, %v1165
  %v1170 = vxor.u32 %v1168, 2147483648
  %v1171 = vxor.u32 %v1169, 2147483648
  %v1172 = vmul.f32 %v1170, 1.442695
  %v1173 = vpow.pop %v1172
  %v1174 = vmul.f32 %v1171, 1.442695
  %v1175 = vpow.pop %v1174
  %v1176 = vadd.f32 %v1173, 1.0
  %v1177 = vadd.f32 %v1175, 1.0
  %v1178 = vrcp.pop %v1176
  %v1179 = vmul.f32 1.0, %v1178
  %v1180 = vrcp.pop %v1177
  %v1181 = vmul.f32 1.0, %v1180
  %1182 = vrot.lane.b32.xlu0 %v1164, 64
  %v1183 = vpop.permute.xlu0 %1182
  %1184 = vrot.lane.b32.xlu0 %v1165, 64
  %v1185 = vpop.permute.xlu0 %1184
  %v1188 = vmul.f32 %v1179, %v1183
  %v1189 = vmul.f32 %v1181, %v1185
  %1192 = vrot.lane.b32.xlu0 %v1188, 64
  %v1193 = vpop.permute.xlu0 %1192
  %1194 = vrot.lane.b32.xlu0 %v1189, 64
  %v1195 = vpop.permute.xlu0 %1194
  %v1198 = vadd.f32 %v135, %v1193
  %v1199 = vadd.f32 %v140, %v1195
  %v1200 = vtanh.pop %v1198
  %v1201 = vtanh.pop %v1199
  %v1202 = vsub.f32 1.0, %v1179
  %v1203 = vsub.f32 1.0, %v1181
  %1206 = vrot.lane.b32.xlu0 %v1200, 96
  %v1207 = vpop.permute.xlu0 %1206
  %1208 = vrot.lane.b32.xlu0 %v1201, 96
  %v1209 = vpop.permute.xlu0 %1208
  %v1212 = vmul.f32 %v1202, %v1207
  %v1213 = vmul.f32 %v1203, %v1209
  %v1214 = vrot.slane %v1089, 2
  %v1215 = vrot.slane %v1089, 3
  %1216 = vrot.lane.b32.xlu0 %v1214, 32
  %v1217 = vpop.permute.xlu0 %1216
  %1218 = vrot.lane.b32.xlu0 %v1215, 32
  %v1219 = vpop.permute.xlu0 %1218
  %v1222 = vmul.f32 %v1179, %v1217
  %v1223 = vmul.f32 %v1181, %v1219
  %v1224 = vadd.f32 %v1212, %v1222
  %v1225 = vadd.f32 %v1213, %v1223
  %1227 = vset.pattern.permute.xlu0 0
  %1228 = vperm.xlu0 %1227, %v46
  %v1229 = vpop.permute.xlu0 %1228
  %v1233 = vrot.slane %v1224, 6
  %v1234 = vrot.slane %v1225, 5
  %v1235 = vsel %vm289, %v1234, %v1233
  %1236 = vrot.lane.b32.xlu0 %v1235, 96
  %v1237 = vpop.permute.xlu0 %1236
  %v1239 = vmul.f32 %v1229, %v1237
  %v1240 = vsub.f32 1.0, %v46
  %1242 = vset.pattern.permute.xlu0 0
  %1243 = vperm.xlu0 %1242, %v1240
  %v1244 = vpop.permute.xlu0 %1243
  %v1246 = vmul.f32 %v1244, %v1089
  %v1247 = vadd.f32 %v1239, %v1246
  %v1249 = vsel %vm61, %v1247, 0
  %1251 = vmatprep.subr.mxu0 0.0
  %1252 = vmatpush1.msra.mxu0 %v143
  %1253 = vmatprep.subr.mxu0 0.0
  %1254 = vmatpush1.msra.mxu0 %v144
  %1255 = vmatprep.subr.mxu0 0.0
  %1256 = vmatpush1.msra.mxu0 %v145
  %1257 = vmatprep.subr.mxu0 0.0
  %1258 = vmatpush1.msra.mxu0 %v146
  %1259 = vmatprep.subr.mxu0 0.0
  %1260 = vmatpush1.msra.mxu0 0.0
  %1261 = vmatprep.subr.mxu0 0.0
  %1262 = vmatpush1.msra.mxu0 0.0
  %1263 = vmatprep.subr.mxu0 0.0
  %1264 = vmatpush1.msra.mxu0 0.0
  %1265 = vmatprep.subr.mxu0 0.0
  %1266 = vmatpush1.msra.mxu0 0.0
  %1267 = vmatprep.subr.mxu0 0.0
  %1268 = vmatpush1.msra.mxu0 0.0
  %1269 = vmatprep.subr.mxu0 0.0
  %1270 = vmatpush1.msra.mxu0 0.0
  %1271 = vmatprep.subr.mxu0 0.0
  %1272 = vmatpush1.msra.mxu0 0.0
  %1273 = vmatprep.subr.mxu0 0.0
  %1274 = vmatpush1.msra.mxu0 0.0
  %1275 = vmatprep.subr.mxu0 0.0
  %1276 = vmatpush1.msra.mxu0 0.0
  %1277 = vmatprep.subr.mxu0 0.0
  %1278 = vmatpush1.msra.mxu0 0.0
  %1279 = vmatprep.subr.mxu0 0.0
  %1280 = vmatpush1.msra.mxu0 0.0
  %1281 = vmatprep.subr.mxu0 0.0
  %1282 = vmatpush1.msra.mxu0 0.0
  %1283 = vmatprep.subr.mxu0 0.0
  %1284 = vmatpush1.msra.mxu0 0.0
  %1285 = vmatprep.subr.mxu0 0.0
  %1286 = vmatpush1.msra.mxu0 0.0
  %1287 = vmatprep.subr.mxu0 0.0
  %1288 = vmatpush1.msra.mxu0 0.0
  %1289 = vmatprep.subr.mxu0 0.0
  %1290 = vmatpush1.msra.mxu0 0.0
  %1291 = vmatprep.subr.mxu0 0.0
  %1292 = vmatpush1.msra.mxu0 0.0
  %1293 = vmatprep.subr.mxu0 0.0
  %1294 = vmatpush1.msra.mxu0 0.0
  %1295 = vmatprep.subr.mxu0 0.0
  %1296 = vmatpush1.msra.mxu0 0.0
  %1297 = vmatprep.subr.mxu0 0.0
  %1298 = vmatpush1.msra.mxu0 0.0
  %1299 = vmatprep.subr.mxu0 0.0
  %1300 = vmatpush1.msra.mxu0 0.0
  %1301 = vmatprep.subr.mxu0 0.0
  %1302 = vmatpush1.msra.mxu0 0.0
  %1303 = vmatprep.subr.mxu0 0.0
  %1304 = vmatpush1.msra.mxu0 0.0
  %1305 = vmatprep.subr.mxu0 0.0
  %1306 = vmatpush1.msra.mxu0 0.0
  %1307 = vmatprep.subr.mxu0 0.0
  %1308 = vmatpush1.msra.mxu0 0.0
  %1309 = vmatprep.subr.mxu0 0.0
  %1310 = vmatpush1.msra.mxu0 0.0
  %1311 = vmatprep.subr.mxu0 0.0
  %1312 = vmatpush1.msra.mxu0 0.0
  %1313 = vmatprep.subr.mxu0 0.0
  %1314 = vmatpush1.msra.mxu0 0.0
  %1315 = vmatprep.mubr.f32.mxu0 0.0
  %1316 = vmatmul.mubr.f32.gmra.mrb[0].mxu0 %v1249
  %v1317 = vpop.f32.mrb[0].mxu0
  %v1318 = vadd.f32 %v152, %v1317
  %v1319 = vpop.f32.mrb[0].mxu0
  %1320 = vdwg.mxu0
  %v1322 = vrot.slane %v1318, 1
  %v1323 = vrot.slane %v1318, 2
  %v1326 = vadd.f32 %v135, %v1322
  %v1327 = vadd.f32 %v140, %v1323
  %v1328 = vxor.u32 %v1326, 2147483648
  %v1329 = vxor.u32 %v1327, 2147483648
  %v1330 = vmul.f32 %v1328, 1.442695
  %v1331 = vpow.pop %v1330
  %v1332 = vmul.f32 %v1329, 1.442695
  %v1333 = vpow.pop %v1332
  %v1334 = vadd.f32 %v1331, 1.0
  %v1335 = vadd.f32 %v1333, 1.0
  %v1336 = vrcp.pop %v1334
  %v1337 = vmul.f32 1.0, %v1336
  %v1338 = vrcp.pop %v1335
  %v1339 = vmul.f32 1.0, %v1338
  %1340 = vrot.lane.b32.xlu0 %v1322, 64
  %v1341 = vpop.permute.xlu0 %1340
  %1342 = vrot.lane.b32.xlu0 %v1323, 64
  %v1343 = vpop.permute.xlu0 %1342
  %v1346 = vmul.f32 %v1337, %v1341
  %v1347 = vmul.f32 %v1339, %v1343
  %1350 = vrot.lane.b32.xlu0 %v1346, 64
  %v1351 = vpop.permute.xlu0 %1350
  %1352 = vrot.lane.b32.xlu0 %v1347, 64
  %v1353 = vpop.permute.xlu0 %1352
  %v1356 = vadd.f32 %v135, %v1351
  %v1357 = vadd.f32 %v140, %v1353
  %v1358 = vtanh.pop %v1356
  %v1359 = vtanh.pop %v1357
  %v1360 = vsub.f32 1.0, %v1337
  %v1361 = vsub.f32 1.0, %v1339
  %1364 = vrot.lane.b32.xlu0 %v1358, 96
  %v1365 = vpop.permute.xlu0 %1364
  %1366 = vrot.lane.b32.xlu0 %v1359, 96
  %v1367 = vpop.permute.xlu0 %1366
  %v1370 = vmul.f32 %v1360, %v1365
  %v1371 = vmul.f32 %v1361, %v1367
  %v1372 = vrot.slane %v1247, 1
  %v1373 = vrot.slane %v1247, 2
  %1374 = vrot.lane.b32.xlu0 %v1372, 32
  %v1375 = vpop.permute.xlu0 %1374
  %1376 = vrot.lane.b32.xlu0 %v1373, 32
  %v1377 = vpop.permute.xlu0 %1376
  %v1380 = vmul.f32 %v1337, %v1375
  %v1381 = vmul.f32 %v1339, %v1377
  %v1382 = vadd.f32 %v1370, %v1380
  %v1383 = vadd.f32 %v1371, %v1381
  %1385 = vset.pattern.permute.xlu0 0
  %1386 = vperm.xlu0 %1385, %v49
  %v1387 = vpop.permute.xlu0 %1386
  %v1391 = vrot.slane %v1382, 7
  %v1392 = vrot.slane %v1383, 6
  %v1393 = vsel %vm289, %v1392, %v1391
  %1394 = vrot.lane.b32.xlu0 %v1393, 96
  %v1395 = vpop.permute.xlu0 %1394
  %v1397 = vmul.f32 %v1387, %v1395
  %v1400 = vunpack.c.l.s4 1966171168
  %v1401 = vunpack.c.0.s8 %v1400
  %v1402 = vlaneseq
  %v1403 = vshrl.u32 %v1402, 7
  %v1404 = vsub.s32 %v1401, %v1403
  %v1405 = vrot.slane %v294, %v1404
  %v1406 = vcombine.high %v1405, %v1405
  %v1408 = vunpack.c.l.s4 1966171168
  %v1409 = vunpack.c.0.s8 %v1408
  %v1410 = vlaneseq
  %v1411 = vshrl.u32 %v1410, 7
  %v1412 = vsub.s32 %v1409, %v1411
  %v1413 = vrot.slane %v1405, %v1412
  %v1415 = vunpack.c.l.s4 1966171168
  %v1416 = vunpack.c.0.s8 %v1415
  %v1417 = vlaneseq
  %v1418 = vshrl.u32 %v1417, 7
  %v1419 = vsub.s32 %v1416, %v1418
  %v1420 = vrot.slane %v1406, %v1419
  %vm1423 = vcmask 253952
  %1424 = vst.msk [vmem:[%s6] sm:$0x1] %vm1423, %v1413
  %1425 = vst.msk [vmem:[%s6 + $0x8] sm:$0x1] %vm1423, %v1420
  %v1428 = vunpack.c.l.s4 1966171168
  %v1429 = vunpack.c.0.s8 %v1428
  %v1430 = vlaneseq
  %v1431 = vshrl.u32 %v1430, 7
  %v1432 = vsub.s32 %v1429, %v1431
  %v1433 = vrot.slane %v449, %v1432
  %v1434 = vcombine.high %v1433, %v1433
  %v1436 = vunpack.c.l.s4 1966171168
  %v1437 = vunpack.c.0.s8 %v1436
  %v1438 = vlaneseq
  %v1439 = vshrl.u32 %v1438, 7
  %v1440 = vsub.s32 %v1437, %v1439
  %v1441 = vrot.slane %v1433, %v1440
  %v1443 = vunpack.c.l.s4 1966171168
  %v1444 = vunpack.c.0.s8 %v1443
  %v1445 = vlaneseq
  %v1446 = vshrl.u32 %v1445, 7
  %v1447 = vsub.s32 %v1444, %v1446
  %v1448 = vrot.slane %v1434, %v1447
  %1451 = vst.msk [vmem:[%s6 + $0x1] sm:$0x1] %vm1423, %v1441
  %1452 = vst.msk [vmem:[%s6 + $0x9] sm:$0x1] %vm1423, %v1448
  %v1455 = vunpack.c.l.s4 1966171168
  %v1456 = vunpack.c.0.s8 %v1455
  %v1457 = vlaneseq
  %v1458 = vshrl.u32 %v1457, 7
  %v1459 = vsub.s32 %v1456, %v1458
  %v1460 = vrot.slane %v607, %v1459
  %v1461 = vcombine.high %v1460, %v1460
  %v1463 = vunpack.c.l.s4 1966171168
  %v1464 = vunpack.c.0.s8 %v1463
  %v1465 = vlaneseq
  %v1466 = vshrl.u32 %v1465, 7
  %v1467 = vsub.s32 %v1464, %v1466
  %v1468 = vrot.slane %v1460, %v1467
  %v1470 = vunpack.c.l.s4 1966171168
  %v1471 = vunpack.c.0.s8 %v1470
  %v1472 = vlaneseq
  %v1473 = vshrl.u32 %v1472, 7
  %v1474 = vsub.s32 %v1471, %v1473
  %v1475 = vrot.slane %v1461, %v1474
  %1478 = vst.msk [vmem:[%s6 + $0x2] sm:$0x1] %vm1423, %v1468
  %1479 = vst.msk [vmem:[%s6 + $0xa] sm:$0x1] %vm1423, %v1475
  %v1482 = vunpack.c.l.s4 1966171168
  %v1483 = vunpack.c.0.s8 %v1482
  %v1484 = vlaneseq
  %v1485 = vshrl.u32 %v1484, 7
  %v1486 = vsub.s32 %v1483, %v1485
  %v1487 = vrot.slane %v765, %v1486
  %v1488 = vcombine.high %v1487, %v1487
  %v1490 = vunpack.c.l.s4 1966171168
  %v1491 = vunpack.c.0.s8 %v1490
  %v1492 = vlaneseq
  %v1493 = vshrl.u32 %v1492, 7
  %v1494 = vsub.s32 %v1491, %v1493
  %v1495 = vrot.slane %v1487, %v1494
  %v1497 = vunpack.c.l.s4 1966171168
  %v1498 = vunpack.c.0.s8 %v1497
  %v1499 = vlaneseq
  %v1500 = vshrl.u32 %v1499, 7
  %v1501 = vsub.s32 %v1498, %v1500
  %v1502 = vrot.slane %v1488, %v1501
  %1505 = vst.msk [vmem:[%s6 + $0x3] sm:$0x1] %vm1423, %v1495
  %1506 = vst.msk [vmem:[%s6 + $0xb] sm:$0x1] %vm1423, %v1502
  %v1509 = vunpack.c.l.s4 1966171168
  %v1510 = vunpack.c.0.s8 %v1509
  %v1511 = vlaneseq
  %v1512 = vshrl.u32 %v1511, 7
  %v1513 = vsub.s32 %v1510, %v1512
  %v1514 = vrot.slane %v923, %v1513
  %v1515 = vcombine.high %v1514, %v1514
  %v1517 = vunpack.c.l.s4 1966171168
  %v1518 = vunpack.c.0.s8 %v1517
  %v1519 = vlaneseq
  %v1520 = vshrl.u32 %v1519, 7
  %v1521 = vsub.s32 %v1518, %v1520
  %v1522 = vrot.slane %v1514, %v1521
  %v1524 = vunpack.c.l.s4 1966171168
  %v1525 = vunpack.c.0.s8 %v1524
  %v1526 = vlaneseq
  %v1527 = vshrl.u32 %v1526, 7
  %v1528 = vsub.s32 %v1525, %v1527
  %v1529 = vrot.slane %v1515, %v1528
  %1532 = vst.msk [vmem:[%s6 + $0x4] sm:$0x1] %vm1423, %v1522
  %1533 = vst.msk [vmem:[%s6 + $0xc] sm:$0x1] %vm1423, %v1529
  %v1536 = vunpack.c.l.s4 1966171168
  %v1537 = vunpack.c.0.s8 %v1536
  %v1538 = vlaneseq
  %v1539 = vshrl.u32 %v1538, 7
  %v1540 = vsub.s32 %v1537, %v1539
  %v1541 = vrot.slane %v1081, %v1540
  %v1542 = vcombine.high %v1541, %v1541
  %v1544 = vunpack.c.l.s4 1966171168
  %v1545 = vunpack.c.0.s8 %v1544
  %v1546 = vlaneseq
  %v1547 = vshrl.u32 %v1546, 7
  %v1548 = vsub.s32 %v1545, %v1547
  %v1549 = vrot.slane %v1541, %v1548
  %v1551 = vunpack.c.l.s4 1966171168
  %v1552 = vunpack.c.0.s8 %v1551
  %v1553 = vlaneseq
  %v1554 = vshrl.u32 %v1553, 7
  %v1555 = vsub.s32 %v1552, %v1554
  %v1556 = vrot.slane %v1542, %v1555
  %1559 = vst.msk [vmem:[%s6 + $0x5] sm:$0x1] %vm1423, %v1549
  %1560 = vst.msk [vmem:[%s6 + $0xd] sm:$0x1] %vm1423, %v1556
  %v1563 = vunpack.c.l.s4 1966171168
  %v1564 = vunpack.c.0.s8 %v1563
  %v1565 = vlaneseq
  %v1566 = vshrl.u32 %v1565, 7
  %v1567 = vsub.s32 %v1564, %v1566
  %v1568 = vrot.slane %v1239, %v1567
  %v1569 = vcombine.high %v1568, %v1568
  %v1571 = vunpack.c.l.s4 1966171168
  %v1572 = vunpack.c.0.s8 %v1571
  %v1573 = vlaneseq
  %v1574 = vshrl.u32 %v1573, 7
  %v1575 = vsub.s32 %v1572, %v1574
  %v1576 = vrot.slane %v1568, %v1575
  %v1578 = vunpack.c.l.s4 1966171168
  %v1579 = vunpack.c.0.s8 %v1578
  %v1580 = vlaneseq
  %v1581 = vshrl.u32 %v1580, 7
  %v1582 = vsub.s32 %v1579, %v1581
  %v1583 = vrot.slane %v1569, %v1582
  %1586 = vst.msk [vmem:[%s6 + $0x6] sm:$0x1] %vm1423, %v1576
  %1587 = vst.msk [vmem:[%s6 + $0xe] sm:$0x1] %vm1423, %v1583
  %v1590 = vunpack.c.l.s4 1966171168
  %v1591 = vunpack.c.0.s8 %v1590
  %v1592 = vlaneseq
  %v1593 = vshrl.u32 %v1592, 7
  %v1594 = vsub.s32 %v1591, %v1593
  %v1595 = vrot.slane %v1397, %v1594
  %v1596 = vcombine.high %v1595, %v1595
  %v1598 = vunpack.c.l.s4 1966171168
  %v1599 = vunpack.c.0.s8 %v1598
  %v1600 = vlaneseq
  %v1601 = vshrl.u32 %v1600, 7
  %v1602 = vsub.s32 %v1599, %v1601
  %v1603 = vrot.slane %v1595, %v1602
  %v1605 = vunpack.c.l.s4 1966171168
  %v1606 = vunpack.c.0.s8 %v1605
  %v1607 = vlaneseq
  %v1608 = vshrl.u32 %v1607, 7
  %v1609 = vsub.s32 %v1606, %v1608
  %v1610 = vrot.slane %v1596, %v1609
  %1613 = vst.msk [vmem:[%s6 + $0x7] sm:$0x1] %vm1423, %v1603
  %1614 = vst.msk [vmem:[%s6 + $0xf] sm:$0x1] %vm1423, %v1610
  // Predicated region
  $region26: #{hierarchical_attention_encoder_forward.6} parent=0 // pred_check
    _
  $region27: #{hierarchical_attention_encoder_forward.6} parent=0 // pred_check_branch
    %1616 = sbr.rel (0) target = $region29
  $region28: #{hierarchical_attention_encoder_forward.6} parent=0 // pred_region
    _
  $region29: #{hierarchical_attention_encoder_forward.6} parent=0 // pred_fallthru
    _
  // Predicated region
  $region30: #{hierarchical_attention_encoder_forward.6} parent=0 // pred_check
    _
  $region31: #{hierarchical_attention_encoder_forward.6} parent=0 // pred_check_branch
    %1618 = sbr.rel (0) target = $region33
  $region32: #{hierarchical_attention_encoder_forward.6} parent=0 // pred_region
    _
  $region33: #{hierarchical_attention_encoder_forward.6} parent=0 // pred_fallthru
    _

// kernel: hierarchical_attention_encoder_forward.4
$region0: #{hierarchical_attention_encoder_forward.4}
  #allocation0 [shape = 'u32[]', space=smem, size = 0x4, offset = 0x4, fixed_abs, tag = 'smem constant byte address 0x4 - core index']
  #allocation1 [shape = 'u32[144,128]{1,0:T(1,128)}', space=vmem, size = 0x12000, scoped, tag = 'internal scratch']
  %s0 = inlined_call_operand.hbm [shape: f32[16,8,16], index: 0, kind: input, shape index: {}]
  %s1 = inlined_call_operand.vmem [shape: s32[16,1], index: 1, kind: input, shape index: {}]
  %s2 = inlined_call_operand.vmem [shape: f32[16,96], index: 2, kind: input, shape index: {}]
  %s3 = inlined_call_operand.vmem [shape: f32[1,96], index: 3, kind: input, shape index: {}]
  %s4 = inlined_call_operand.vmem [shape: f32[2,16,48], index: 4, kind: input, shape index: {}]
  %s5 = inlined_call_operand.vmem [shape: f32[2,1,48], index: 5, kind: input, shape index: {}]
  %s6 = inlined_call_operand.vmem [shape: f32[16,8,32], index: 6, kind: output, shape index: {}]
  %s7 = sld [smem:[#allocation0]]
  $region61: #{hierarchical_attention_encoder_forward.4} parent=0
    _
  %s9 = ssub.s32 1, %s7
  %s10 = scalar_select 0, %s9, %s7
  $region1: #{hierarchical_attention_encoder_forward.4} parent=0
    #allocation2 [shape = 'u8[65536]{0}', space=vmem, size = 0x10000, scoped, tag = 'input window, operand 0']
    #allocation3 [shape = 's32[2]{0}', space=sflag, size = 0x8, scoped, tag = 'scoped memory for hierarchical_attention_encoder_forward.4']
    %11 = vsyncpa [#allocation3], 0
    %s12 = scalar_lea.sflag [#allocation3], 1
    %13 = vsyncpa %s12, 0
    loop: start=0, step=1, limit=4
    $region2: #{hierarchical_attention_encoder_forward.4} parent=1 // loop_pre_header
      _
    $region3: #{hierarchical_attention_encoder_forward.4} parent=1 // loop_header
      %s15 = sphi 0, %s19
      %p16 = scmp.ge.s32.totalorder %s15, 4
      %s25 = sphi 0, %s27
      %s28 = sphi 0, %s25
      %s29 = sphi 0, %s28
      %s45 = sphi 0, %s29
      %s51 = sphi 0, %s53
      %s54 = sphi 0, %s51
      %s55 = sphi 0, %s54
      %s71 = sphi 0, %s55
      %s75 = sphi 0, %s75
      %s77 = sphi 0, %s75
      %s78 = sphi 0, %s77
      %s92 = sphi 0, %s78
      %s96 = sphi 0, %s96
      %s98 = sphi 0, %s96
      %s99 = sphi 0, %s98
      %s113 = sphi 0, %s99
      %s117 = sphi 0, %s117
      %s119 = sphi 0, %s117
      %s120 = sphi 0, %s119
      %s134 = sphi 0, %s120
      %s138 = sphi 0, %s138
      %s140 = sphi 0, %s138
      %s141 = sphi 0, %s140
      %s155 = sphi 0, %s141
      %s161 = sphi 0, %s163
      %s164 = sphi 0, %s161
      %s165 = sphi 0, %s164
      %s181 = sphi 0, %s165
    $region4: #{hierarchical_attention_encoder_forward.4} parent=1 // loop_header_branch
      %18 = sbr.rel (%p16) target = $region8
    $region5: #{hierarchical_attention_encoder_forward.4} parent=1 // loop_body
      %s20 = ssub.s32 %s15, 1
      %s21 = ssub.s32 %s15, 2
      %s22 = sadd.s32 %s15, 1
      %s23 = ssub.s32 %s15, %s22
      %p24 = scmp.eq.s32.totalorder %s23, 0
      %s26 = sadd.s32 %s25, 1
      %s27 = scalar_select %p24, %s25, %s26
      %p30 = pneg %p24
      %p31 = scmp.eq.s32.totalorder %s15, 1
      %p32 = por %p30, %p31
      %p33 = scmp.ne.s32.totalorder %s25, %s28
      %p34 = scmp.eq.s32.totalorder %s15, 0
      %p35 = por %p33, %p34
      %p36 = scmp.ne.s32.totalorder %s25, %s28
      %p37 = scmp.eq.s32.totalorder %s20, 1
      %p38 = por %p36, %p37
      %p39 = scmp.ne.s32.totalorder %s28, %s29
      %p40 = scmp.eq.s32.totalorder %s20, 0
      %p41 = por %p39, %p40
      %p42 = scmp.ne.s32.totalorder %s28, %s29
      %p43 = scmp.eq.s32.totalorder %s21, 1
      %p44 = por %p42, %p43
      %p46 = scmp.ne.s32.totalorder %s29, %s45
      %p47 = scmp.eq.s32.totalorder %s21, 0
      %p48 = por %p46, %p47
      %s49 = ssub.s32 %s15, %s22
      %p50 = scmp.eq.s32.totalorder %s49, 0
      %s52 = sadd.s32 %s51, 1
      %s53 = scalar_select %p50, %s51, %s52
      %p56 = pneg %p50
      %p57 = scmp.eq.s32.totalorder %s15, 1
      %p58 = por %p56, %p57
      %p59 = scmp.ne.s32.totalorder %s51, %s54
      %p60 = scmp.eq.s32.totalorder %s15, 0
      %p61 = por %p59, %p60
      %p62 = scmp.ne.s32.totalorder %s51, %s54
      %p63 = scmp.eq.s32.totalorder %s20, 1
      %p64 = por %p62, %p63
      %p65 = scmp.ne.s32.totalorder %s54, %s55
      %p66 = scmp.eq.s32.totalorder %s20, 0
      %p67 = por %p65, %p66
      %p68 = scmp.ne.s32.totalorder %s54, %s55
      %p69 = scmp.eq.s32.totalorder %s21, 1
      %p70 = por %p68, %p69
      %p72 = scmp.ne.s32.totalorder %s55, %s71
      %p73 = scmp.eq.s32.totalorder %s21, 0
      %p74 = por %p72, %p73
      %s76 = sadd.s32 %s75, 1
      %p79 = scmp.eq.s32.totalorder %s15, 1
      %p80 = scmp.ne.s32.totalorder %s75, %s77
      %p81 = scmp.eq.s32.totalorder %s15, 0
      %p82 = por %p80, %p81
      %p83 = scmp.ne.s32.totalorder %s75, %s77
      %p84 = scmp.eq.s32.totalorder %s20, 1
      %p85 = por %p83, %p84
      %p86 = scmp.ne.s32.totalorder %s77, %s78
      %p87 = scmp.eq.s32.totalorder %s20, 0
      %p88 = por %p86, %p87
      %p89 = scmp.ne.s32.totalorder %s77, %s78
      %p90 = scmp.eq.s32.totalorder %s21, 1
      %p91 = por %p89, %p90
      %p93 = scmp.ne.s32.totalorder %s78, %s92
      %p94 = scmp.eq.s32.totalorder %s21, 0
      %p95 = por %p93, %p94
      %s97 = sadd.s32 %s96, 1
      %p100 = scmp.eq.s32.totalorder %s15, 1
      %p101 = scmp.ne.s32.totalorder %s96, %s98
      %p102 = scmp.eq.s32.totalorder %s15, 0
      %p103 = por %p101, %p102
      %p104 = scmp.ne.s32.totalorder %s96, %s98
      %p105 = scmp.eq.s32.totalorder %s20, 1
      %p106 = por %p104, %p105
      %p107 = scmp.ne.s32.totalorder %s98, %s99
      %p108 = scmp.eq.s32.totalorder %s20, 0
      %p109 = por %p107, %p108
      %p110 = scmp.ne.s32.totalorder %s98, %s99
      %p111 = scmp.eq.s32.totalorder %s21, 1
      %p112 = por %p110, %p111
      %p114 = scmp.ne.s32.totalorder %s99, %s113
      %p115 = scmp.eq.s32.totalorder %s21, 0
      %p116 = por %p114, %p115
      %s118 = sadd.s32 %s117, 1
      %p121 = scmp.eq.s32.totalorder %s15, 1
      %p122 = scmp.ne.s32.totalorder %s117, %s119
      %p123 = scmp.eq.s32.totalorder %s15, 0
      %p124 = por %p122, %p123
      %p125 = scmp.ne.s32.totalorder %s117, %s119
      %p126 = scmp.eq.s32.totalorder %s20, 1
      %p127 = por %p125, %p126
      %p128 = scmp.ne.s32.totalorder %s119, %s120
      %p129 = scmp.eq.s32.totalorder %s20, 0
      %p130 = por %p128, %p129
      %p131 = scmp.ne.s32.totalorder %s119, %s120
      %p132 = scmp.eq.s32.totalorder %s21, 1
      %p133 = por %p131, %p132
      %p135 = scmp.ne.s32.totalorder %s120, %s134
      %p136 = scmp.eq.s32.totalorder %s21, 0
      %p137 = por %p135, %p136
      %s139 = sadd.s32 %s138, 1
      %p142 = scmp.eq.s32.totalorder %s15, 1
      %p143 = scmp.ne.s32.totalorder %s138, %s140
      %p144 = scmp.eq.s32.totalorder %s15, 0
      %p145 = por %p143, %p144
      %p146 = scmp.ne.s32.totalorder %s138, %s140
      %p147 = scmp.eq.s32.totalorder %s20, 1
      %p148 = por %p146, %p147
      %p149 = scmp.ne.s32.totalorder %s140, %s141
      %p150 = scmp.eq.s32.totalorder %s20, 0
      %p151 = por %p149, %p150
      %p152 = scmp.ne.s32.totalorder %s140, %s141
      %p153 = scmp.eq.s32.totalorder %s21, 1
      %p154 = por %p152, %p153
      %p156 = scmp.ne.s32.totalorder %s141, %s155
      %p157 = scmp.eq.s32.totalorder %s21, 0
      %p158 = por %p156, %p157
      %s159 = ssub.s32 %s15, %s22
      %p160 = scmp.eq.s32.totalorder %s159, 0
      %s162 = sadd.s32 %s161, 1
      %s163 = scalar_select %p160, %s161, %s162
      %p166 = pneg %p160
      %p167 = scmp.eq.s32.totalorder %s15, 1
      %p168 = por %p166, %p167
      %p169 = scmp.ne.s32.totalorder %s161, %s164
      %p170 = scmp.eq.s32.totalorder %s15, 0
      %p171 = por %p169, %p170
      %p172 = scmp.ne.s32.totalorder %s161, %s164
      %p173 = scmp.eq.s32.totalorder %s20, 1
      %p174 = por %p172, %p173
      %p175 = scmp.ne.s32.totalorder %s164, %s165
      %p176 = scmp.eq.s32.totalorder %s20, 0
      %p177 = por %p175, %p176
      %p178 = scmp.ne.s32.totalorder %s164, %s165
      %p179 = scmp.eq.s32.totalorder %s21, 1
      %p180 = por %p178, %p179
      %p182 = scmp.ne.s32.totalorder %s165, %s181
      %p183 = scmp.eq.s32.totalorder %s21, 0
      %p184 = por %p182, %p183
      %p185 = scmp.le.s32.totalorder 1, %s15
      %p186 = scmp.lt.s32.totalorder %s15, 3
      %p187 = pnand %p185, %p186
      %p188 = pneg %p187
      // Predicated region
      $region9: #{hierarchical_attention_encoder_forward.4} parent=5 // pred_check
        _
      $region10: #{hierarchical_attention_encoder_forward.4} parent=5 // pred_check_branch
        %190 = sbr.rel (%p187) target = $region12
      $region11: #{hierarchical_attention_encoder_forward.4} parent=5 // pred_region
        %s191 = ssub.s32 %s15, 1
        // Predicated region
        $region13: #{hierarchical_attention_encoder_forward.4} parent=11 // pred_check
          %p192 = pneg %p88
        $region14: #{hierarchical_attention_encoder_forward.4} parent=11 // pred_check_branch
          %194 = sbr.rel (%p192) target = $region16
        $region15: #{hierarchical_attention_encoder_forward.4} parent=11 // pred_region
          _
        $region16: #{hierarchical_attention_encoder_forward.4} parent=11 // pred_fallthru
          _
        // Predicated region
        $region17: #{hierarchical_attention_encoder_forward.4} parent=11 // pred_check
          %p195 = pneg %p109
        $region18: #{hierarchical_attention_encoder_forward.4} parent=11 // pred_check_branch
          %197 = sbr.rel (%p195) target = $region20
        $region19: #{hierarchical_attention_encoder_forward.4} parent=11 // pred_region
          _
        $region20: #{hierarchical_attention_encoder_forward.4} parent=11 // pred_fallthru
          _
        // Predicated region
        $region21: #{hierarchical_attention_encoder_forward.4} parent=11 // pred_check
          %p198 = pneg %p130
        $region22: #{hierarchical_attention_encoder_forward.4} parent=11 // pred_check_branch
          %200 = sbr.rel (%p198) target = $region24
        $region23: #{hierarchical_attention_encoder_forward.4} parent=11 // pred_region
          _
        $region24: #{hierarchical_attention_encoder_forward.4} parent=11 // pred_fallthru
          _
        // Predicated region
        $region25: #{hierarchical_attention_encoder_forward.4} parent=11 // pred_check
          %p201 = pneg %p151
        $region26: #{hierarchical_attention_encoder_forward.4} parent=11 // pred_check_branch
          %203 = sbr.rel (%p201) target = $region28
        $region27: #{hierarchical_attention_encoder_forward.4} parent=11 // pred_region
          _
        $region28: #{hierarchical_attention_encoder_forward.4} parent=11 // pred_fallthru
          _
      $region12: #{hierarchical_attention_encoder_forward.4} parent=5 // pred_fallthru
        _
      %p204 = scmp.lt.s32.totalorder %s15, 2
      // Predicated region
      $region29: #{hierarchical_attention_encoder_forward.4} parent=5 // pred_check
        %p205 = pneg %p204
      $region30: #{hierarchical_attention_encoder_forward.4} parent=5 // pred_check_branch
        %207 = sbr.rel (%p205) target = $region32
      $region31: #{hierarchical_attention_encoder_forward.4} parent=5 // pred_region
        // Predicated region
        $region33: #{hierarchical_attention_encoder_forward.4} parent=31 // pred_check
          %p208 = pneg %p35
        $region34: #{hierarchical_attention_encoder_forward.4} parent=31 // pred_check_branch
          %210 = sbr.rel (%p208) target = $region36
        $region35: #{hierarchical_attention_encoder_forward.4} parent=31 // pred_region
          %s211 = sand.u32 %s25, 1
          %s212 = scalar_lea.sflag [#allocation3], %s211
          %s213 = sand.u32 %s25, 1
          %s214 = smul.addr %s213, 64
          %s215 = scalar_lea.vmem [#allocation2], %s214
          %s216 = smul.u32 8, %s15
          %s218 = ssub.s32 1024, 1024
          %219 = vsyncadd %s212, %s218
          %s220 = smul.addr %s216, 128
          %s221 = scalar_lea.hbm %s0, %s220
          %s222 = sshll.u32 %s215, 4
          %s223 = int_to_ptr.vmem [resolvable:$true] %s222
          %228 = dma.hbm_to_vmem [thread:$0]  %s221, 1024, %s223, %s212, 128, 128, 8
        $region36: #{hierarchical_attention_encoder_forward.4} parent=31 // pred_fallthru
          _
        // Predicated region
        $region37: #{hierarchical_attention_encoder_forward.4} parent=31 // pred_check
          %p229 = pneg %p61
        $region38: #{hierarchical_attention_encoder_forward.4} parent=31 // pred_check_branch
          %231 = sbr.rel (%p229) target = $region40
        $region39: #{hierarchical_attention_encoder_forward.4} parent=31 // pred_region
          %p232 = scmp.lt.s32.totalorder %s15, 1
          %s233 = scalar_select %p232, %s15, 1
          %s234 = smul.addr %s233, 8
          %s235 = scalar_lea.vmem %s1, %s234
        $region40: #{hierarchical_attention_encoder_forward.4} parent=31 // pred_fallthru
          _
      $region32: #{hierarchical_attention_encoder_forward.4} parent=5 // pred_fallthru
        _
      %p236 = scmp.le.s32.totalorder 1, %s15
      %p237 = scmp.lt.s32.totalorder %s15, 3
      %p238 = pnand %p236, %p237
      %p239 = pneg %p238
      // Predicated region
      $region41: #{hierarchical_attention_encoder_forward.4} parent=5 // pred_check
        _
      $region42: #{hierarchical_attention_encoder_forward.4} parent=5 // pred_check_branch
        %241 = sbr.rel (%p238) target = $region44
      $region43: #{hierarchical_attention_encoder_forward.4} parent=5 // pred_region
        %s242 = ssub.s32 %s15, 1
        %s243 = sand.u32 %s28, 1
        %s244 = scalar_lea.sflag [#allocation3], %s243
        %s245 = sand.u32 %s28, 1
        %s246 = smul.addr %s245, 64
        %s247 = scalar_lea.vmem [#allocation2], %s246
        // Predicated region
        $region45: #{hierarchical_attention_encoder_forward.4} parent=43 // pred_check
          %p248 = pneg %p41
        $region46: #{hierarchical_attention_encoder_forward.4} parent=43 // pred_check_branch
          %250 = sbr.rel (%p248) target = $region48
        $region47: #{hierarchical_attention_encoder_forward.4} parent=43 // pred_region
          %251 = dma.done %s244, 1024
        $region48: #{hierarchical_attention_encoder_forward.4} parent=43 // pred_fallthru
          _
        %s252 = sand.u32 %s28, 1
        %s253 = scalar_lea.sflag [#allocation3], %s252
        %s254 = sand.u32 %s28, 1
        %s255 = smul.addr %s254, 64
        %s256 = scalar_lea.vmem [#allocation2], %s255
        %p257 = pneg %p41
        %p258 = pneg %p38
        %p259 = scmp.lt.s32.totalorder %s20, 1
        %s260 = scalar_select %p259, %s20, 1
        %s261 = smul.addr %s260, 8
        %s262 = scalar_lea.vmem %s1, %s261
        %p263 = pneg %p67
        %p264 = pneg %p64
        %p265 = pneg %p88
        %p266 = pneg %p85
        %p267 = pneg %p109
        %p268 = pneg %p106
        %p269 = pneg %p130
        %p270 = pneg %p127
        %p271 = pneg %p151
        %p272 = pneg %p148
        %p273 = pneg %p177
        %p274 = pneg %p174
        %s275 = smul.u32 8, %s20
        %p276 = scmp.lt.s32.totalorder %s275, 15
        %s277 = scalar_select %p276, %s275, 15
        %s278 = smul.addr %s277, 8
        %s279 = scalar_lea.vmem %s6, %s278
        %s280 = smul.u32 8, %s20
        %p281 = scmp.lt.s32.totalorder %s20, 1
        %s282 = scalar_select %p281, %s20, 1
        %s283 = smul.addr %s282, 8
        %s284 = scalar_lea.vmem %s1, %s283
        %s285 = smul.u32 8, %s20
        %p286 = scmp.lt.s32.totalorder %s285, 15
        %s287 = scalar_select %p286, %s285, 15
        %s288 = smul.addr %s287, 8
        %s289 = scalar_lea.vmem %s6, %s288
        %s290 = smul.u32 8, %s20
        %v291 = vld [vmem:[%s247] sm:$0xff]
        %v292 = vld [vmem:[%s247 + $0x8] sm:$0xff]
        %v293 = vld [vmem:[%s247 + $0x10] sm:$0xff]
        %v294 = vld [vmem:[%s247 + $0x18] sm:$0xff]
        %v295 = vld [vmem:[%s247 + $0x20] sm:$0xff]
        %v296 = vld [vmem:[%s247 + $0x28] sm:$0xff]
        %v297 = vld [vmem:[%s247 + $0x30] sm:$0xff]
        %v298 = vld [vmem:[%s247 + $0x38] sm:$0xff]
        %v299 = vld [vmem:[%s284] sm:$0xff]
        %vm300 = vcmp.gt.s32.totalorder %v299, 0
        %v301 = vsel %vm300, 1, 0
        %v302 = vcvt.s32.f32 %v301
        %vm303 = vcmp.gt.s32.totalorder %v299, 1
        %v304 = vsel %vm303, 1, 0
        %v305 = vcvt.s32.f32 %v304
        %vm306 = vcmp.gt.s32.totalorder %v299, 2
        %v307 = vsel %vm306, 1, 0
        %v308 = vcvt.s32.f32 %v307
        %vm309 = vcmp.gt.s32.totalorder %v299, 3
        %v310 = vsel %vm309, 1, 0
        %v311 = vcvt.s32.f32 %v310
        %vm312 = vcmp.gt.s32.totalorder %v299, 4
        %v313 = vsel %vm312, 1, 0
        %v314 = vcvt.s32.f32 %v313
        %vm315 = vcmp.gt.s32.totalorder %v299, 5
        %v316 = vsel %vm315, 1, 0
        %v317 = vcvt.s32.f32 %v316
        %vm318 = vcmp.gt.s32.totalorder %v299, 6
        %v319 = vsel %vm318, 1, 0
        %v320 = vcvt.s32.f32 %v319
        %vm321 = vcmp.gt.s32.totalorder %v299, 7
        %v322 = vsel %vm321, 1, 0
        %v323 = vcvt.s32.f32 %v322
        %v324 = vld [vmem:[%s2] sm:$0xff]
        %v325 = vld [vmem:[%s2 + $0x8] sm:$0xff]
        %v326 = vld [vmem:[%s3] sm:$0x1]
        %v328 = vlaneseq
        %v329 = vshrl.u32 %v328, 7
        %v330 = vsub.s32 0, %v329
        %v331 = vrot.slane %v326, %v330
        %vm333 = vcmask 130048
        %v335 = vsel %vm333, %v291, 0
        %v338 = vsel %vm333, %v292, 0
        %v341 = vsel %vm333, %v293, 0
        %v344 = vsel %vm333, %v294, 0
        %v347 = vsel %vm333, %v295, 0
        %v350 = vsel %vm333, %v296, 0
        %v353 = vsel %vm333, %v297, 0
        %v356 = vsel %vm333, %v298, 0
        %358 = vmatprep.subr.mxu0 0.0
        %359 = vmatpush1.msra.mxu0 %v324
        %360 = vmatprep.subr.mxu0 0.0
        %361 = vmatpush1.msra.mxu0 %v325
        %362 = vmatprep.subr.mxu0 0.0
        %363 = vmatpush1.msra.mxu0 0.0
        %364 = vmatprep.subr.mxu0 0.0
        %365 = vmatpush1.msra.mxu0 0.0
        %366 = vmatprep.subr.mxu0 0.0
        %367 = vmatpush1.msra.mxu0 0.0
        %368 = vmatprep.subr.mxu0 0.0
        %369 = vmatpush1.msra.mxu0 0.0
        %370 = vmatprep.subr.mxu0 0.0
        %371 = vmatpush1.msra.mxu0 0.0
        %372 = vmatprep.subr.mxu0 0.0
        %373 = vmatpush1.msra.mxu0 0.0
        %374 = vmatprep.subr.mxu0 0.0
        %375 = vmatpush1.msra.mxu0 0.0
        %376 = vmatprep.subr.mxu0 0.0
        %377 = vmatpush1.msra.mxu0 0.0
        %378 = vmatprep.subr.mxu0 0.0
        %379 = vmatpush1.msra.mxu0 0.0
        %380 = vmatprep.subr.mxu0 0.0
        %381 = vmatpush1.msra.mxu0 0.0
        %382 = vmatprep.subr.mxu0 0.0
        %383 = vmatpush1.msra.mxu0 0.0
        %384 = vmatprep.subr.mxu0 0.0
        %385 = vmatpush1.msra.mxu0 0.0
        %386 = vmatprep.subr.mxu0 0.0
        %387 = vmatpush1.msra.mxu0 0.0
        %388 = vmatprep.subr.mxu0 0.0
        %389 = vmatpush1.msra.mxu0 0.0
        %390 = vmatprep.subr.mxu0 0.0
        %391 = vmatpush1.msra.mxu0 0.0
        %392 = vmatprep.subr.mxu0 0.0
        %393 = vmatpush1.msra.mxu0 0.0
        %394 = vmatprep.subr.mxu0 0.0
        %395 = vmatpush1.msra.mxu0 0.0
        %396 = vmatprep.subr.mxu0 0.0
        %397 = vmatpush1.msra.mxu0 0.0
        %398 = vmatprep.subr.mxu0 0.0
        %399 = vmatpush1.msra.mxu0 0.0
        %400 = vmatprep.subr.mxu0 0.0
        %401 = vmatpush1.msra.mxu0 0.0
        %402 = vmatprep.subr.mxu0 0.0
        %403 = vmatpush1.msra.mxu0 0.0
        %404 = vmatprep.subr.mxu0 0.0
        %405 = vmatpush1.msra.mxu0 0.0
        %406 = vmatprep.subr.mxu0 0.0
        %407 = vmatpush1.msra.mxu0 0.0
        %408 = vmatprep.subr.mxu0 0.0
        %409 = vmatpush1.msra.mxu0 0.0
        %410 = vmatprep.subr.mxu0 0.0
        %411 = vmatpush1.msra.mxu0 0.0
        %412 = vmatprep.subr.mxu0 0.0
        %413 = vmatpush1.msra.mxu0 0.0
        %414 = vmatprep.subr.mxu0 0.0
        %415 = vmatpush1.msra.mxu0 0.0
        %416 = vmatprep.subr.mxu0 0.0
        %417 = vmatpush1.msra.mxu0 0.0
        %418 = vmatprep.subr.mxu0 0.0
        %419 = vmatpush1.msra.mxu0 0.0
        %420 = vmatprep.subr.mxu0 0.0
        %421 = vmatpush1.msra.mxu0 0.0
        %422 = vmatprep.mubr.f32.mxu0 0.0
        %423 = vmatmul.mubr.f32.gmra.mrb[0].mxu0 %v335
        %v424 = vpop.f32.mrb[0].mxu0
        %v425 = vadd.f32 %v331, %v424
        %v426 = vpop.f32.mrb[0].mxu0
        %427 = vmatprep.mubr.f32.mxu0 0.0
        %428 = vmatmul.mubr.f32.gmra.mrb[0].mxu0 %v338
        %v429 = vpop.f32.mrb[0].mxu0
        %v430 = vadd.f32 %v331, %v429
        %v431 = vpop.f32.mrb[0].mxu0
        %432 = vmatprep.mubr.f32.mxu0 0.0
        %433 = vmatmul.mubr.f32.gmra.mrb[0].mxu0 %v341
        %v434 = vpop.f32.mrb[0].mxu0
        %v435 = vadd.f32 %v331, %v434
        %v436 = vpop.f32.mrb[0].mxu0
        %437 = vmatprep.mubr.f32.mxu0 0.0
        %438 = vmatmul.mubr.f32.gmra.mrb[0].mxu0 %v344
        %v439 = vpop.f32.mrb[0].mxu0
        %v440 = vadd.f32 %v331, %v439
        %v441 = vpop.f32.mrb[0].mxu0
        %442 = vmatprep.mubr.f32.mxu0 0.0
        %443 = vmatmul.mubr.f32.gmra.mrb[0].mxu0 %v347
        %v444 = vpop.f32.mrb[0].mxu0
        %v445 = vadd.f32 %v331, %v444
        %v446 = vpop.f32.mrb[0].mxu0
        %447 = vmatprep.mubr.f32.mxu0 0.0
        %448 = vmatmul.mubr.f32.gmra.mrb[0].mxu0 %v350
        %v449 = vpop.f32.mrb[0].mxu0
        %v450 = vadd.f32 %v331, %v449
        %v451 = vpop.f32.mrb[0].mxu0
        %452 = vmatprep.mubr.f32.mxu0 0.0
        %453 = vmatmul.mubr.f32.gmra.mrb[0].mxu0 %v353
        %v454 = vpop.f32.mrb[0].mxu0
        %v455 = vadd.f32 %v331, %v454
        %v456 = vpop.f32.mrb[0].mxu0
        %457 = vmatprep.mubr.f32.mxu0 0.0
        %458 = vmatmul.mubr.f32.gmra.mrb[0].mxu0 %v356
        %v459 = vpop.f32.mrb[0].mxu0
        %v460 = vadd.f32 %v331, %v459
        %v461 = vpop.f32.mrb[0].mxu0
        %462 = vdwg.mxu0
        %v463 = vld [vmem:[%s4] sm:$0xff]
        %v464 = vld [vmem:[%s4 + $0x8] sm:$0xff]
        %v465 = vld [vmem:[%s5] sm:$0x1]
        %v467 = vlaneseq
        %v468 = vshrl.u32 %v467, 7
        %v469 = vsub.s32 0, %v468
        %v470 = vrot.slane %v465, %v469
        %v473 = vsel %vm333, 0.0, 0
        %475 = vmatprep.subr.mxu0 0.0
        %476 = vmatpush1.msra.mxu0 %v463
        %477 = vmatprep.subr.mxu0 0.0
        %478 = vmatpush1.msra.mxu0 %v464
        %479 = vmatprep.subr.mxu0 0.0
        %480 = vmatpush1.msra.mxu0 0.0
        %481 = vmatprep.subr.mxu0 0.0
        %482 = vmatpush1.msra.mxu0 0.0
        %483 = vmatprep.subr.mxu0 0.0
        %484 = vmatpush1.msra.mxu0 0.0
        %485 = vmatprep.subr.mxu0 0.0
        %486 = vmatpush1.msra.mxu0 0.0
        %487 = vmatprep.subr.mxu0 0.0
        %488 = vmatpush1.msra.mxu0 0.0
        %489 = vmatprep.subr.mxu0 0.0
        %490 = vmatpush1.msra.mxu0 0.0
        %491 = vmatprep.subr.mxu0 0.0
        %492 = vmatpush1.msra.mxu0 0.0
        %493 = vmatprep.subr.mxu0 0.0
        %494 = vmatpush1.msra.mxu0 0.0
        %495 = vmatprep.subr.mxu0 0.0
        %496 = vmatpush1.msra.mxu0 0.0
        %497 = vmatprep.subr.mxu0 0.0
        %498 = vmatpush1.msra.mxu0 0.0
        %499 = vmatprep.subr.mxu0 0.0
        %500 = vmatpush1.msra.mxu0 0.0
        %501 = vmatprep.subr.mxu0 0.0
        %502 = vmatpush1.msra.mxu0 0.0
        %503 = vmatprep.subr.mxu0 0.0
        %504 = vmatpush1.msra.mxu0 0.0
        %505 = vmatprep.subr.mxu0 0.0
        %506 = vmatpush1.msra.mxu0 0.0
        %507 = vmatprep.subr.mxu0 0.0
        %508 = vmatpush1.msra.mxu0 0.0
        %509 = vmatprep.subr.mxu0 0.0
        %510 = vmatpush1.msra.mxu0 0.0
        %511 = vmatprep.subr.mxu0 0.0
        %512 = vmatpush1.msra.mxu0 0.0
        %513 = vmatprep.subr.mxu0 0.0
        %514 = vmatpush1.msra.mxu0 0.0
        %515 = vmatprep.subr.mxu0 0.0
        %516 = vmatpush1.msra.mxu0 0.0
        %517 = vmatprep.subr.mxu0 0.0
        %518 = vmatpush1.msra.mxu0 0.0
        %519 = vmatprep.subr.mxu0 0.0
        %520 = vmatpush1.msra.mxu0 0.0
        %521 = vmatprep.subr.mxu0 0.0
        %522 = vmatpush1.msra.mxu0 0.0
        %523 = vmatprep.subr.mxu0 0.0
        %524 = vmatpush1.msra.mxu0 0.0
        %525 = vmatprep.subr.mxu0 0.0
        %526 = vmatpush1.msra.mxu0 0.0
        %527 = vmatprep.subr.mxu0 0.0
        %528 = vmatpush1.msra.mxu0 0.0
        %529 = vmatprep.subr.mxu0 0.0
        %530 = vmatpush1.msra.mxu0 0.0
        %531 = vmatprep.subr.mxu0 0.0
        %532 = vmatpush1.msra.mxu0 0.0
        %533 = vmatprep.subr.mxu0 0.0
        %534 = vmatpush1.msra.mxu0 0.0
        %535 = vmatprep.subr.mxu0 0.0
        %536 = vmatpush1.msra.mxu0 0.0
        %537 = vmatprep.subr.mxu0 0.0
        %538 = vmatpush1.msra.mxu0 0.0
        %539 = vmatprep.mubr.f32.mxu0 0.0
        %540 = vmatmul.mubr.f32.gmra.mrb[0].mxu0 %v473
        %v541 = vpop.f32.mrb[0].mxu0
        %v542 = vadd.f32 %v470, %v541
        %v543 = vpop.f32.mrb[0].mxu0
        %544 = vdwg.mxu0
        %v546 = vrot.slane %v542, 1
        %v547 = vrot.slane %v542, 2
        %v548 = vrot.slane %v542, 3
        %v549 = vrot.slane %v542, 4
        %v550 = vrot.slane %v542, 5
        %v551 = vrot.slane %v542, 6
        %v552 = vrot.slane %v542, 7
        %v561 = vadd.f32 %v425, %v542
        %v562 = vadd.f32 %v430, %v546
        %v563 = vadd.f32 %v435, %v547
        %v564 = vadd.f32 %v440, %v548
        %v565 = vadd.f32 %v445, %v549
        %v566 = vadd.f32 %v450, %v550
        %v567 = vadd.f32 %v455, %v551
        %v568 = vadd.f32 %v460, %v552
        %v569 = vxor.u32 %v561, 2147483648
        %v570 = vxor.u32 %v562, 2147483648
        %v571 = vxor.u32 %v563, 2147483648
        %v572 = vxor.u32 %v564, 2147483648
        %v573 = vxor.u32 %v565, 2147483648
        %v574 = vxor.u32 %v566, 2147483648
        %v575 = vxor.u32 %v567, 2147483648
        %v576 = vxor.u32 %v568, 2147483648
        %v577 = vmul.f32 %v569, 1.442695
        %v578 = vpow.pop %v577
        %v579 = vmul.f32 %v570, 1.442695
        %v580 = vpow.pop %v579
        %v581 = vmul.f32 %v571, 1.442695
        %v582 = vpow.pop %v581
        %v583 = vmul.f32 %v572, 1.442695
        %v584 = vpow.pop %v583
        %v585 = vmul.f32 %v573, 1.442695
        %v586 = vpow.pop %v585
        %v587 = vmul.f32 %v574, 1.442695
        %v588 = vpow.pop %v587
        %v589 = vmul.f32 %v575, 1.442695
        %v590 = vpow.pop %v589
        %v591 = vmul.f32 %v576, 1.442695
        %v592 = vpow.pop %v591
        %v593 = vadd.f32 %v578, 1.0
        %v594 = vadd.f32 %v580, 1.0
        %v595 = vadd.f32 %v582, 1.0
        %v596 = vadd.f32 %v584, 1.0
        %v597 = vadd.f32 %v586, 1.0
        %v598 = vadd.f32 %v588, 1.0
        %v599 = vadd.f32 %v590, 1.0
        %v600 = vadd.f32 %v592, 1.0
        %v601 = vrcp.pop %v593
        %v602 = vmul.f32 1.0, %v601
        %v603 = vrcp.pop %v594
        %v604 = vmul.f32 1.0, %v603
        %v605 = vrcp.pop %v595
        %v606 = vmul.f32 1.0, %v605
        %v607 = vrcp.pop %v596
        %v608 = vmul.f32 1.0, %v607
        %v609 = vrcp.pop %v597
        %v610 = vmul.f32 1.0, %v609
        %v611 = vrcp.pop %v598
        %v612 = vmul.f32 1.0, %v611
        %v613 = vrcp.pop %v599
        %v614 = vmul.f32 1.0, %v613
        %v615 = vrcp.pop %v600
        %v616 = vmul.f32 1.0, %v615
        %617 = vrot.lane.b32.xlu0 %v542, 96
        %v618 = vpop.permute.xlu0 %617
        %619 = vrot.lane.b32.xlu0 %v546, 96
        %v620 = vpop.permute.xlu0 %619
        %621 = vrot.lane.b32.xlu0 %v547, 96
        %v622 = vpop.permute.xlu0 %621
        %623 = vrot.lane.b32.xlu0 %v548, 96
        %v624 = vpop.permute.xlu0 %623
        %625 = vrot.lane.b32.xlu0 %v549, 96
        %v626 = vpop.permute.xlu0 %625
        %627 = vrot.lane.b32.xlu0 %v550, 96
        %v628 = vpop.permute.xlu0 %627
        %629 = vrot.lane.b32.xlu0 %v551, 96
        %v630 = vpop.permute.xlu0 %629
        %631 = vrot.lane.b32.xlu0 %v552, 96
        %v632 = vpop.permute.xlu0 %631
        %v641 = vmul.f32 %v602, %v618
        %v642 = vmul.f32 %v604, %v620
        %v643 = vmul.f32 %v606, %v622
        %v644 = vmul.f32 %v608, %v624
        %v645 = vmul.f32 %v610, %v626
        %v646 = vmul.f32 %v612, %v628
        %v647 = vmul.f32 %v614, %v630
        %v648 = vmul.f32 %v616, %v632
        %657 = vrot.lane.b32.xlu0 %v641, 32
        %v658 = vpop.permute.xlu0 %657
        %659 = vrot.lane.b32.xlu0 %v642, 32
        %v660 = vpop.permute.xlu0 %659
        %661 = vrot.lane.b32.xlu0 %v643, 32
        %v662 = vpop.permute.xlu0 %661
        %663 = vrot.lane.b32.xlu0 %v644, 32
        %v664 = vpop.permute.xlu0 %663
        %665 = vrot.lane.b32.xlu0 %v645, 32
        %v666 = vpop.permute.xlu0 %665
        %667 = vrot.lane.b32.xlu0 %v646, 32
        %v668 = vpop.permute.xlu0 %667
        %669 = vrot.lane.b32.xlu0 %v647, 32
        %v670 = vpop.permute.xlu0 %669
        %671 = vrot.lane.b32.xlu0 %v648, 32
        %v672 = vpop.permute.xlu0 %671
        %v681 = vadd.f32 %v425, %v658
        %v682 = vadd.f32 %v430, %v660
        %v683 = vadd.f32 %v435, %v662
        %v684 = vadd.f32 %v440, %v664
        %v685 = vadd.f32 %v445, %v666
        %v686 = vadd.f32 %v450, %v668
        %v687 = vadd.f32 %v455, %v670
        %v688 = vadd.f32 %v460, %v672
        %v689 = vtanh.pop %v681
        %v690 = vtanh.pop %v682
        %v691 = vtanh.pop %v683
        %v692 = vtanh.pop %v684
        %v693 = vtanh.pop %v685
        %v694 = vtanh.pop %v686
        %v695 = vtanh.pop %v687
        %v696 = vtanh.pop %v688
        %v697 = vsub.f32 1.0, %v602
        %v698 = vsub.f32 1.0, %v604
        %v699 = vsub.f32 1.0, %v606
        %v700 = vsub.f32 1.0, %v608
        %v701 = vsub.f32 1.0, %v610
        %v702 = vsub.f32 1.0, %v612
        %v703 = vsub.f32 1.0, %v614
        %v704 = vsub.f32 1.0, %v616
        %713 = vrot.lane.b32.xlu0 %v689, 112
        %v714 = vpop.permute.xlu0 %713
        %715 = vrot.lane.b32.xlu0 %v690, 112
        %v716 = vpop.permute.xlu0 %715
        %717 = vrot.lane.b32.xlu0 %v691, 112
        %v718 = vpop.permute.xlu0 %717
        %719 = vrot.lane.b32.xlu0 %v692, 112
        %v720 = vpop.permute.xlu0 %719
        %721 = vrot.lane.b32.xlu0 %v693, 112
        %v722 = vpop.permute.xlu0 %721
        %723 = vrot.lane.b32.xlu0 %v694, 112
        %v724 = vpop.permute.xlu0 %723
        %725 = vrot.lane.b32.xlu0 %v695, 112
        %v726 = vpop.permute.xlu0 %725
        %727 = vrot.lane.b32.xlu0 %v696, 112
        %v728 = vpop.permute.xlu0 %727
        %v737 = vmul.f32 %v697, %v714
        %v738 = vmul.f32 %v698, %v716
        %v739 = vmul.f32 %v699, %v718
        %v740 = vmul.f32 %v700, %v720
        %v741 = vmul.f32 %v701, %v722
        %v742 = vmul.f32 %v702, %v724
        %v743 = vmul.f32 %v703, %v726
        %v744 = vmul.f32 %v704, %v728
        %v745 = vmul.f32 %v602, 0.0
        %v746 = vmul.f32 %v604, 0.0
        %v747 = vmul.f32 %v606, 0.0
        %v748 = vmul.f32 %v608, 0.0
        %v749 = vmul.f32 %v610, 0.0
        %v750 = vmul.f32 %v612, 0.0
        %v751 = vmul.f32 %v614, 0.0
        %v752 = vmul.f32 %v616, 0.0
        %v753 = vadd.f32 %v737, %v745
        %v754 = vadd.f32 %v738, %v746
        %v755 = vadd.f32 %v739, %v747
        %v756 = vadd.f32 %v740, %v748
        %v757 = vadd.f32 %v741, %v749
        %v758 = vadd.f32 %v742, %v750
        %v759 = vadd.f32 %v743, %v751
        %v760 = vadd.f32 %v744, %v752
        %762 = vset.pattern.permute.xlu0 0
        %763 = vperm.xlu0 %762, %v302
        %v764 = vpop.permute.xlu0 %763
        %v774 = vrot.slane %v754, 7
        %vm775 = vcmask 1041409
        %v776 = vsel %vm775, %v774, %v753
        %v777 = vrot.slane %v755, 6
        %vm778 = vcmask 1042434
        %v779 = vsel %vm778, %v777, %v776
        %v780 = vrot.slane %v756, 5
        %vm781 = vcmask 1043459
        %v782 = vsel %vm781, %v780, %v779
        %v783 = vrot.slane %v757, 4
        %vm784 = vcmask 1044484
        %v785 = vsel %vm784, %v783, %v782
        %v786 = vrot.slane %v758, 3
        %vm787 = vcmask 1045509
        %v788 = vsel %vm787, %v786, %v785
        %v789 = vrot.slane %v759, 2
        %vm790 = vcmask 1046534
        %v791 = vsel %vm790, %v789, %v788
        %v792 = vrot.slane %v760, 1
        %vm793 = vcmask 1047559
        %v794 = vsel %vm793, %v792, %v791
        %795 = vrot.lane.b32.xlu0 %v794, 112
        %v796 = vpop.permute.xlu0 %795
        %v798 = vmul.f32 %v764, %v796
        %v799 = vsub.f32 1.0, %v302
        %801 = vset.pattern.permute.xlu0 0
        %802 = vperm.xlu0 %801, %v799
        %v803 = vpop.permute.xlu0 %802
        %v805 = vmul.f32 %v803, 0.0
        %v806 = vadd.f32 %v798, %v805
        %v808 = vsel %vm333, %v806, 0
        %810 = vmatprep.subr.mxu0 0.0
        %811 = vmatpush1.msra.mxu0 %v463
        %812 = vmatprep.subr.mxu0 0.0
        %813 = vmatpush1.msra.mxu0 %v464
        %814 = vmatprep.subr.mxu0 0.0
        %815 = vmatpush1.msra.mxu0 0.0
        %816 = vmatprep.subr.mxu0 0.0
        %817 = vmatpush1.msra.mxu0 0.0
        %818 = vmatprep.subr.mxu0 0.0
        %819 = vmatpush1.msra.mxu0 0.0
        %820 = vmatprep.subr.mxu0 0.0
        %821 = vmatpush1.msra.mxu0 0.0
        %822 = vmatprep.subr.mxu0 0.0
        %823 = vmatpush1.msra.mxu0 0.0
        %824 = vmatprep.subr.mxu0 0.0
        %825 = vmatpush1.msra.mxu0 0.0
        %826 = vmatprep.subr.mxu0 0.0
        %827 = vmatpush1.msra.mxu0 0.0
        %828 = vmatprep.subr.mxu0 0.0
        %829 = vmatpush1.msra.mxu0 0.0
        %830 = vmatprep.subr.mxu0 0.0
        %831 = vmatpush1.msra.mxu0 0.0
        %832 = vmatprep.subr.mxu0 0.0
        %833 = vmatpush1.msra.mxu0 0.0
        %834 = vmatprep.subr.mxu0 0.0
        %835 = vmatpush1.msra.mxu0 0.0
        %836 = vmatprep.subr.mxu0 0.0
        %837 = vmatpush1.msra.mxu0 0.0
        %838 = vmatprep.subr.mxu0 0.0
        %839 = vmatpush1.msra.mxu0 0.0
        %840 = vmatprep.subr.mxu0 0.0
        %841 = vmatpush1.msra.mxu0 0.0
        %842 = vmatprep.subr.mxu0 0.0
        %843 = vmatpush1.msra.mxu0 0.0
        %844 = vmatprep.subr.mxu0 0.0
        %845 = vmatpush1.msra.mxu0 0.0
        %846 = vmatprep.subr.mxu0 0.0
        %847 = vmatpush1.msra.mxu0 0.0
        %848 = vmatprep.subr.mxu0 0.0
        %849 = vmatpush1.msra.mxu0 0.0
        %850 = vmatprep.subr.mxu0 0.0
        %851 = vmatpush1.msra.mxu0 0.0
        %852 = vmatprep.subr.mxu0 0.0
        %853 = vmatpush1.msra.mxu0 0.0
        %854 = vmatprep.subr.mxu0 0.0
        %855 = vmatpush1.msra.mxu0 0.0
        %856 = vmatprep.subr.mxu0 0.0
        %857 = vmatpush1.msra.mxu0 0.0
        %858 = vmatprep.subr.mxu0 0.0
        %859 = vmatpush1.msra.mxu0 0.0
        %860 = vmatprep.subr.mxu0 0.0
        %861 = vmatpush1.msra.mxu0 0.0
        %862 = vmatprep.subr.mxu0 0.0
        %863 = vmatpush1.msra.mxu0 0.0
        %864 = vmatprep.subr.mxu0 0.0
        %865 = vmatpush1.msra.mxu0 0.0
        %866 = vmatprep.subr.mxu0 0.0
        %867 = vmatpush1.msra.mxu0 0.0
        %868 = vmatprep.subr.mxu0 0.0
        %869 = vmatpush1.msra.mxu0 0.0
        %870 = vmatprep.subr.mxu0 0.0
        %871 = vmatpush1.msra.mxu0 0.0
        %872 = vmatprep.subr.mxu0 0.0
        %873 = vmatpush1.msra.mxu0 0.0
        %874 = vmatprep.mubr.f32.mxu0 0.0
        %875 = vmatmul.mubr.f32.gmra.mrb[0].mxu0 %v808
        %v876 = vpop.f32.mrb[0].mxu0
        %v877 = vadd.f32 %v470, %v876
        %v878 = vpop.f32.mrb[0].mxu0
        %879 = vdwg.mxu0
        %v881 = vrot.slane %v877, 7
        %v882 = vrot.slane %v877, 1
        %v883 = vrot.slane %v877, 2
        %v884 = vrot.slane %v877, 3
        %v885 = vrot.slane %v877, 4
        %v886 = vrot.slane %v877, 5
        %v887 = vrot.slane %v877, 6
        %v896 = vadd.f32 %v425, %v881
        %v897 = vadd.f32 %v430, %v877
        %v898 = vadd.f32 %v435, %v882
        %v899 = vadd.f32 %v440, %v883
        %v900 = vadd.f32 %v445, %v884
        %v901 = vadd.f32 %v450, %v885
        %v902 = vadd.f32 %v455, %v886
        %v903 = vadd.f32 %v460, %v887
        %v904 = vxor.u32 %v896, 2147483648
        %v905 = vxor.u32 %v897, 2147483648
        %v906 = vxor.u32 %v898, 2147483648
        %v907 = vxor.u32 %v899, 2147483648
        %v908 = vxor.u32 %v900, 2147483648
        %v909 = vxor.u32 %v901, 2147483648
        %v910 = vxor.u32 %v902, 2147483648
        %v911 = vxor.u32 %v903, 2147483648
        %v912 = vmul.f32 %v904, 1.442695
        %v913 = vpow.pop %v912
        %v914 = vmul.f32 %v905, 1.442695
        %v915 = vpow.pop %v914
        %v916 = vmul.f32 %v906, 1.442695
        %v917 = vpow.pop %v916
        %v918 = vmul.f32 %v907, 1.442695
        %v919 = vpow.pop %v918
        %v920 = vmul.f32 %v908, 1.442695
        %v921 = vpow.pop %v920
        %v922 = vmul.f32 %v909, 1.442695
        %v923 = vpow.pop %v922
        %v924 = vmul.f32 %v910, 1.442695
        %v925 = vpow.pop %v924
        %v926 = vmul.f32 %v911, 1.442695
        %v927 = vpow.pop %v926
        %v928 = vadd.f32 %v913, 1.0
        %v929 = vadd.f32 %v915, 1.0
        %v930 = vadd.f32 %v917, 1.0
        %v931 = vadd.f32 %v919, 1.0
        %v932 = vadd.f32 %v921, 1.0
        %v933 = vadd.f32 %v923, 1.0
        %v934 = vadd.f32 %v925, 1.0
        %v935 = vadd.f32 %v927, 1.0
        %v936 = vrcp.pop %v928
        %v937 = vmul.f32 1.0, %v936
        %v938 = vrcp.pop %v929
        %v939 = vmul.f32 1.0, %v938
        %v940 = vrcp.pop %v930
        %v941 = vmul.f32 1.0, %v940
        %v942 = vrcp.pop %v931
        %v943 = vmul.f32 1.0, %v942
        %v944 = vrcp.pop %v932
        %v945 = vmul.f32 1.0, %v944
        %v946 = vrcp.pop %v933
        %v947 = vmul.f32 1.0, %v946
        %v948 = vrcp.pop %v934
        %v949 = vmul.f32 1.0, %v948
        %v950 = vrcp.pop %v935
        %v951 = vmul.f32 1.0, %v950
        %952 = vrot.lane.b32.xlu0 %v881, 96
        %v953 = vpop.permute.xlu0 %952
        %954 = vrot.lane.b32.xlu0 %v877, 96
        %v955 = vpop.permute.xlu0 %954
        %956 = vrot.lane.b32.xlu0 %v882, 96
        %v957 = vpop.permute.xlu0 %956
        %958 = vrot.lane.b32.xlu0 %v883, 96
        %v959 = vpop.permute.xlu0 %958
        %960 = vrot.lane.b32.xlu0 %v884, 96
        %v961 = vpop.permute.xlu0 %960
        %962 = vrot.lane.b32.xlu0 %v885, 96
        %v963 = vpop.permute.xlu0 %962
        %964 = vrot.lane.b32.xlu0 %v886, 96
        %v965 = vpop.permute.xlu0 %964
        %966 = vrot.lane.b32.xlu0 %v887, 96
        %v967 = vpop.permute.xlu0 %966
        %v976 = vmul.f32 %v937, %v953
        %v977 = vmul.f32 %v939, %v955
        %v978 = vmul.f32 %v941, %v957
        %v979 = vmul.f32 %v943, %v959
        %v980 = vmul.f32 %v945, %v961
        %v981 = vmul.f32 %v947, %v963
        %v982 = vmul.f32 %v949, %v965
        %v983 = vmul.f32 %v951, %v967
        %992 = vrot.lane.b32.xlu0 %v976, 32
        %v993 = vpop.permute.xlu0 %992
        %994 = vrot.lane.b32.xlu0 %v977, 32
        %v995 = vpop.permute.xlu0 %994
        %996 = vrot.lane.b32.xlu0 %v978, 32
        %v997 = vpop.permute.xlu0 %996
        %998 = vrot.lane.b32.xlu0 %v979, 32
        %v999 = vpop.permute.xlu0 %998
        %1000 = vrot.lane.b32.xlu0 %v980, 32
        %v1001 = vpop.permute.xlu0 %1000
        %1002 = vrot.lane.b32.xlu0 %v981, 32
        %v1003 = vpop.permute.xlu0 %1002
        %1004 = vrot.lane.b32.xlu0 %v982, 32
        %v1005 = vpop.permute.xlu0 %1004
        %1006 = vrot.lane.b32.xlu0 %v983, 32
        %v1007 = vpop.permute.xlu0 %1006
        %v1016 = vadd.f32 %v425, %v993
        %v1017 = vadd.f32 %v430, %v995
        %v1018 = vadd.f32 %v435, %v997
        %v1019 = vadd.f32 %v440, %v999
        %v1020 = vadd.f32 %v445, %v1001
        %v1021 = vadd.f32 %v450, %v1003
        %v1022 = vadd.f32 %v455, %v1005
        %v1023 = vadd.f32 %v460, %v1007
        %v1024 = vtanh.pop %v1016
        %v1025 = vtanh.pop %v1017
        %v1026 = vtanh.pop %v1018
        %v1027 = vtanh.pop %v1019
        %v1028 = vtanh.pop %v1020
        %v1029 = vtanh.pop %v1021
        %v1030 = vtanh.pop %v1022
        %v1031 = vtanh.pop %v1023
        %v1032 = vsub.f32 1.0, %v937
        %v1033 = vsub.f32 1.0, %v939
        %v1034 = vsub.f32 1.0, %v941
        %v1035 = vsub.f32 1.0, %v943
        %v1036 = vsub.f32 1.0, %v945
        %v1037 = vsub.f32 1.0, %v947
        %v1038 = vsub.f32 1.0, %v949
        %v1039 = vsub.f32 1.0, %v951
        %1048 = vrot.lane.b32.xlu0 %v1024, 112
        %v1049 = vpop.permute.xlu0 %1048
        %1050 = vrot.lane.b32.xlu0 %v1025, 112
        %v1051 = vpop.permute.xlu0 %1050
        %1052 = vrot.lane.b32.xlu0 %v1026, 112
        %v1053 = vpop.permute.xlu0 %1052
        %1054 = vrot.lane.b32.xlu0 %v1027, 112
        %v1055 = vpop.permute.xlu0 %1054
        %1056 = vrot.lane.b32.xlu0 %v1028, 112
        %v1057 = vpop.permute.xlu0 %1056
        %1058 = vrot.lane.b32.xlu0 %v1029, 112
        %v1059 = vpop.permute.xlu0 %1058
        %1060 = vrot.lane.b32.xlu0 %v1030, 112
        %v1061 = vpop.permute.xlu0 %1060
        %1062 = vrot.lane.b32.xlu0 %v1031, 112
        %v1063 = vpop.permute.xlu0 %1062
        %v1072 = vmul.f32 %v1032, %v1049
        %v1073 = vmul.f32 %v1033, %v1051
        %v1074 = vmul.f32 %v1034, %v1053
        %v1075 = vmul.f32 %v1035, %v1055
        %v1076 = vmul.f32 %v1036, %v1057
        %v1077 = vmul.f32 %v1037, %v1059
        %v1078 = vmul.f32 %v1038, %v1061
        %v1079 = vmul.f32 %v1039, %v1063
        %v1080 = vrot.slane %v806, 7
        %v1081 = vrot.slane %v806, 1
        %v1082 = vrot.slane %v806, 2
        %v1083 = vrot.slane %v806, 3
        %v1084 = vrot.slane %v806, 4
        %v1085 = vrot.slane %v806, 5
        %v1086 = vrot.slane %v806, 6
        %1087 = vrot.lane.b32.xlu0 %v1080, 16
        %v1088 = vpop.permute.xlu0 %1087
        %1089 = vrot.lane.b32.xlu0 %v806, 16
        %v1090 = vpop.permute.xlu0 %1089
        %1091 = vrot.lane.b32.xlu0 %v1081, 16
        %v1092 = vpop.permute.xlu0 %1091
        %1093 = vrot.lane.b32.xlu0 %v1082, 16
        %v1094 = vpop.permute.xlu0 %1093
        %1095 = vrot.lane.b32.xlu0 %v1083, 16
        %v1096 = vpop.permute.xlu0 %1095
        %1097 = vrot.lane.b32.xlu0 %v1084, 16
        %v1098 = vpop.permute.xlu0 %1097
        %1099 = vrot.lane.b32.xlu0 %v1085, 16
        %v1100 = vpop.permute.xlu0 %1099
        %1101 = vrot.lane.b32.xlu0 %v1086, 16
        %v1102 = vpop.permute.xlu0 %1101
        %v1111 = vmul.f32 %v937, %v1088
        %v1112 = vmul.f32 %v939, %v1090
        %v1113 = vmul.f32 %v941, %v1092
        %v1114 = vmul.f32 %v943, %v1094
        %v1115 = vmul.f32 %v945, %v1096
        %v1116 = vmul.f32 %v947, %v1098
        %v1117 = vmul.f32 %v949, %v1100
        %v1118 = vmul.f32 %v951, %v1102
        %v1119 = vadd.f32 %v1072, %v1111
        %v1120 = vadd.f32 %v1073, %v1112
        %v1121 = vadd.f32 %v1074, %v1113
        %v1122 = vadd.f32 %v1075, %v1114
        %v1123 = vadd.f32 %v1076, %v1115
        %v1124 = vadd.f32 %v1077, %v1116
        %v1125 = vadd.f32 %v1078, %v1117
        %v1126 = vadd.f32 %v1079, %v1118
        %1128 = vset.pattern.permute.xlu0 0
        %1129 = vperm.xlu0 %1128, %v305
        %v1130 = vpop.permute.xlu0 %1129
        %v1140 = vrot.slane %v1119, 1
        %v1141 = vsel %vm775, %v1120, %v1140
        %v1142 = vrot.slane %v1121, 7
        %v1143 = vsel %vm778, %v1142, %v1141
        %v1144 = vrot.slane %v1122, 6
        %v1145 = vsel %vm781, %v1144, %v1143
        %v1146 = vrot.slane %v1123, 5
        %v1147 = vsel %vm784, %v1146, %v1145
        %v1148 = vrot.slane %v1124, 4
        %v1149 = vsel %vm787, %v1148, %v1147
        %v1150 = vrot.slane %v1125, 3
        %v1151 = vsel %vm790, %v1150, %v1149
        %v1152 = vrot.slane %v1126, 2
        %v1153 = vsel %vm793, %v1152, %v1151
        %1154 = vrot.lane.b32.xlu0 %v1153, 112
        %v1155 = vpop.permute.xlu0 %1154
        %v1157 = vmul.f32 %v1130, %v1155
        %v1158 = vsub.f32 1.0, %v305
        %1160 = vset.pattern.permute.xlu0 0
        %1161 = vperm.xlu0 %1160, %v1158
        %v1162 = vpop.permute.xlu0 %1161
        %v1164 = vmul.f32 %v1162, %v806
        %v1165 = vadd.f32 %v1157, %v1164
        %v1167 = vsel %vm333, %v1165, 0
        %1169 = vmatprep.subr.mxu0 0.0
        %1170 = vmatpush1.msra.mxu0 %v463
        %1171 = vmatprep.subr.mxu0 0.0
        %1172 = vmatpush1.msra.mxu0 %v464
        %1173 = vmatprep.subr.mxu0 0.0
        %1174 = vmatpush1.msra.mxu0 0.0
        %1175 = vmatprep.subr.mxu0 0.0
        %1176 = vmatpush1.msra.mxu0 0.0
        %1177 = vmatprep.subr.mxu0 0.0
        %1178 = vmatpush1.msra.mxu0 0.0
        %1179 = vmatprep.subr.mxu0 0.0
        %1180 = vmatpush1.msra.mxu0 0.0
        %1181 = vmatprep.subr.mxu0 0.0
        %1182 = vmatpush1.msra.mxu0 0.0
        %1183 = vmatprep.subr.mxu0 0.0
        %1184 = vmatpush1.msra.mxu0 0.0
        %1185 = vmatprep.subr.mxu0 0.0
        %1186 = vmatpush1.msra.mxu0 0.0
        %1187 = vmatprep.subr.mxu0 0.0
        %1188 = vmatpush1.msra.mxu0 0.0
        %1189 = vmatprep.subr.mxu0 0.0
        %1190 = vmatpush1.msra.mxu0 0.0
        %1191 = vmatprep.subr.mxu0 0.0
        %1192 = vmatpush1.msra.mxu0 0.0
        %1193 = vmatprep.subr.mxu0 0.0
        %1194 = vmatpush1.msra.mxu0 0.0
        %1195 = vmatprep.subr.mxu0 0.0
        %1196 = vmatpush1.msra.mxu0 0.0
        %1197 = vmatprep.subr.mxu0 0.0
        %1198 = vmatpush1.msra.mxu0 0.0
        %1199 = vmatprep.subr.mxu0 0.0
        %1200 = vmatpush1.msra.mxu0 0.0
        %1201 = vmatprep.subr.mxu0 0.0
        %1202 = vmatpush1.msra.mxu0 0.0
        %1203 = vmatprep.subr.mxu0 0.0
        %1204 = vmatpush1.msra.mxu0 0.0
        %1205 = vmatprep.subr.mxu0 0.0
        %1206 = vmatpush1.msra.mxu0 0.0
        %1207 = vmatprep.subr.mxu0 0.0
        %1208 = vmatpush1.msra.mxu0 0.0
        %1209 = vmatprep.subr.mxu0 0.0
        %1210 = vmatpush1.msra.mxu0 0.0
        %1211 = vmatprep.subr.mxu0 0.0
        %1212 = vmatpush1.msra.mxu0 0.0
        %1213 = vmatprep.subr.mxu0 0.0
        %1214 = vmatpush1.msra.mxu0 0.0
        %1215 = vmatprep.subr.mxu0 0.0
        %1216 = vmatpush1.msra.mxu0 0.0
        %1217 = vmatprep.subr.mxu0 0.0
        %1218 = vmatpush1.msra.mxu0 0.0
        %1219 = vmatprep.subr.mxu0 0.0
        %1220 = vmatpush1.msra.mxu0 0.0
        %1221 = vmatprep.subr.mxu0 0.0
        %1222 = vmatpush1.msra.mxu0 0.0
        %1223 = vmatprep.subr.mxu0 0.0
        %1224 = vmatpush1.msra.mxu0 0.0
        %1225 = vmatprep.subr.mxu0 0.0
        %1226 = vmatpush1.msra.mxu0 0.0
        %1227 = vmatprep.subr.mxu0 0.0
        %1228 = vmatpush1.msra.mxu0 0.0
        %1229 = vmatprep.subr.mxu0 0.0
        %1230 = vmatpush1.msra.mxu0 0.0
        %1231 = vmatprep.subr.mxu0 0.0
        %1232 = vmatpush1.msra.mxu0 0.0
        %1233 = vmatprep.mubr.f32.mxu0 0.0
        %1234 = vmatmul.mubr.f32.gmra.mrb[0].mxu0 %v1167
        %v1235 = vpop.f32.mrb[0].mxu0
        %v1236 = vadd.f32 %v470, %v1235
        %v1237 = vpop.f32.mrb[0].mxu0
        %1238 = vdwg.mxu0
        %v1240 = vrot.slane %v1236, 6
        %v1241 = vrot.slane %v1236, 7
        %v1242 = vrot.slane %v1236, 1
        %v1243 = vrot.slane %v1236, 2
        %v1244 = vrot.slane %v1236, 3
        %v1245 = vrot.slane %v1236, 4
        %v1246 = vrot.slane %v1236, 5
        %v1255 = vadd.f32 %v425, %v1240
        %v1256 = vadd.f32 %v430, %v1241
        %v1257 = vadd.f32 %v435, %v1236
        %v1258 = vadd.f32 %v440, %v1242
        %v1259 = vadd.f32 %v445, %v1243
        %v1260 = vadd.f32 %v450, %v1244
        %v1261 = vadd.f32 %v455, %v1245
        %v1262 = vadd.f32 %v460, %v1246
        %v1263 = vxor.u32 %v1255, 2147483648
        %v1264 = vxor.u32 %v1256, 2147483648
        %v1265 = vxor.u32 %v1257, 2147483648
        %v1266 = vxor.u32 %v1258, 2147483648
        %v1267 = vxor.u32 %v1259, 2147483648
        %v1268 = vxor.u32 %v1260, 2147483648
        %v1269 = vxor.u32 %v1261, 2147483648
        %v1270 = vxor.u32 %v1262, 2147483648
        %v1271 = vmul.f32 %v1263, 1.442695
        %v1272 = vpow.pop %v1271
        %v1273 = vmul.f32 %v1264, 1.442695
        %v1274 = vpow.pop %v1273
        %v1275 = vmul.f32 %v1265, 1.442695
        %v1276 = vpow.pop %v1275
        %v1277 = vmul.f32 %v1266, 1.442695
        %v1278 = vpow.pop %v1277
        %v1279 = vmul.f32 %v1267, 1.442695
        %v1280 = vpow.pop %v1279
        %v1281 = vmul.f32 %v1268, 1.442695
        %v1282 = vpow.pop %v1281
        %v1283 = vmul.f32 %v1269, 1.442695
        %v1284 = vpow.pop %v1283
        %v1285 = vmul.f32 %v1270, 1.442695
        %v1286 = vpow.pop %v1285
        %v1287 = vadd.f32 %v1272, 1.0
        %v1288 = vadd.f32 %v1274, 1.0
        %v1289 = vadd.f32 %v1276, 1.0
        %v1290 = vadd.f32 %v1278, 1.0
        %v1291 = vadd.f32 %v1280, 1.0
        %v1292 = vadd.f32 %v1282, 1.0
        %v1293 = vadd.f32 %v1284, 1.0
        %v1294 = vadd.f32 %v1286, 1.0
        %v1295 = vrcp.pop %v1287
        %v1296 = vmul.f32 1.0, %v1295
        %v1297 = vrcp.pop %v1288
        %v1298 = vmul.f32 1.0, %v1297
        %v1299 = vrcp.pop %v1289
        %v1300 = vmul.f32 1.0, %v1299
        %v1301 = vrcp.pop %v1290
        %v1302 = vmul.f32 1.0, %v1301
        %v1303 = vrcp.pop %v1291
        %v1304 = vmul.f32 1.0, %v1303
        %v1305 = vrcp.pop %v1292
        %v1306 = vmul.f32 1.0, %v1305
        %v1307 = vrcp.pop %v1293
        %v1308 = vmul.f32 1.0, %v1307
        %v1309 = vrcp.pop %v1294
        %v1310 = vmul.f32 1.0, %v1309
        %1311 = vrot.lane.b32.xlu0 %v1240, 96
        %v1312 = vpop.permute.xlu0 %1311
        %1313 = vrot.lane.b32.xlu0 %v1241, 96
        %v1314 = vpop.permute.xlu0 %1313
        %1315 = vrot.lane.b32.xlu0 %v1236, 96
        %v1316 = vpop.permute.xlu0 %1315
        %1317 = vrot.lane.b32.xlu0 %v1242, 96
        %v1318 = vpop.permute.xlu0 %1317
        %1319 = vrot.lane.b32.xlu0 %v1243, 96
        %v1320 = vpop.permute.xlu0 %1319
        %1321 = vrot.lane.b32.xlu0 %v1244, 96
        %v1322 = vpop.permute.xlu0 %1321
        %1323 = vrot.lane.b32.xlu0 %v1245, 96
        %v1324 = vpop.permute.xlu0 %1323
        %1325 = vrot.lane.b32.xlu0 %v1246, 96
        %v1326 = vpop.permute.xlu0 %1325
        %v1335 = vmul.f32 %v1296, %v1312
        %v1336 = vmul.f32 %v1298, %v1314
        %v1337 = vmul.f32 %v1300, %v1316
        %v1338 = vmul.f32 %v1302, %v1318
        %v1339 = vmul.f32 %v1304, %v1320
        %v1340 = vmul.f32 %v1306, %v1322
        %v1341 = vmul.f32 %v1308, %v1324
        %v1342 = vmul.f32 %v1310, %v1326
        %1351 = vrot.lane.b32.xlu0 %v1335, 32
        %v1352 = vpop.permute.xlu0 %1351
        %1353 = vrot.lane.b32.xlu0 %v1336, 32
        %v1354 = vpop.permute.xlu0 %1353
        %1355 = vrot.lane.b32.xlu0 %v1337, 32
        %v1356 = vpop.permute.xlu0 %1355
        %1357 = vrot.lane.b32.xlu0 %v1338, 32
        %v1358 = vpop.permute.xlu0 %1357
        %1359 = vrot.lane.b32.xlu0 %v1339, 32
        %v1360 = vpop.permute.xlu0 %1359
        %1361 = vrot.lane.b32.xlu0 %v1340, 32
        %v1362 = vpop.permute.xlu0 %1361
        %1363 = vrot.lane.b32.xlu0 %v1341, 32
        %v1364 = vpop.permute.xlu0 %1363
        %1365 = vrot.lane.b32.xlu0 %v1342, 32
        %v1366 = vpop.permute.xlu0 %1365
        %v1375 = vadd.f32 %v425, %v1352
        %v1376 = vadd.f32 %v430, %v1354
        %v1377 = vadd.f32 %v435, %v1356
        %v1378 = vadd.f32 %v440, %v1358
        %v1379 = vadd.f32 %v445, %v1360
        %v1380 = vadd.f32 %v450, %v1362
        %v1381 = vadd.f32 %v455, %v1364
        %v1382 = vadd.f32 %v460, %v1366
        %v1383 = vtanh.pop %v1375
        %v1384 = vtanh.pop %v1376
        %v1385 = vtanh.pop %v1377
        %v1386 = vtanh.pop %v1378
        %v1387 = vtanh.pop %v1379
        %v1388 = vtanh.pop %v1380
        %v1389 = vtanh.pop %v1381
        %v1390 = vtanh.pop %v1382
        %v1391 = vsub.f32 1.0, %v1296
        %v1392 = vsub.f32 1.0, %v1298
        %v1393 = vsub.f32 1.0, %v1300
        %v1394 = vsub.f32 1.0, %v1302
        %v1395 = vsub.f32 1.0, %v1304
        %v1396 = vsub.f32 1.0, %v1306
        %v1397 = vsub.f32 1.0, %v1308
        %v1398 = vsub.f32 1.0, %v1310
        %1407 = vrot.lane.b32.xlu0 %v1383, 112
        %v1408 = vpop.permute.xlu0 %1407
        %1409 = vrot.lane.b32.xlu0 %v1384, 112
        %v1410 = vpop.permute.xlu0 %1409
        %1411 = vrot.lane.b32.xlu0 %v1385, 112
        %v1412 = vpop.permute.xlu0 %1411
        %1413 = vrot.lane.b32.xlu0 %v1386, 112
        %v1414 = vpop.permute.xlu0 %1413
        %1415 = vrot.lane.b32.xlu0 %v1387, 112
        %v1416 = vpop.permute.xlu0 %1415
        %1417 = vrot.lane.b32.xlu0 %v1388, 112
        %v1418 = vpop.permute.xlu0 %1417
        %1419 = vrot.lane.b32.xlu0 %v1389, 112
        %v1420 = vpop.permute.xlu0 %1419
        %1421 = vrot.lane.b32.xlu0 %v1390, 112
        %v1422 = vpop.permute.xlu0 %1421
        %v1431 = vmul.f32 %v1391, %v1408
        %v1432 = vmul.f32 %v1392, %v1410
        %v1433 = vmul.f32 %v1393, %v1412
        %v1434 = vmul.f32 %v1394, %v1414
        %v1435 = vmul.f32 %v1395, %v1416
        %v1436 = vmul.f32 %v1396, %v1418
        %v1437 = vmul.f32 %v1397, %v1420
        %v1438 = vmul.f32 %v1398, %v1422
        %v1439 = vrot.slane %v1165, 6
        %v1440 = vrot.slane %v1165, 7
        %v1441 = vrot.slane %v1165, 1
        %v1442 = vrot.slane %v1165, 2
        %v1443 = vrot.slane %v1165, 3
        %v1444 = vrot.slane %v1165, 4
        %v1445 = vrot.slane %v1165, 5
        %1446 = vrot.lane.b32.xlu0 %v1439, 16
        %v1447 = vpop.permute.xlu0 %1446
        %1448 = vrot.lane.b32.xlu0 %v1440, 16
        %v1449 = vpop.permute.xlu0 %1448
        %1450 = vrot.lane.b32.xlu0 %v1165, 16
        %v1451 = vpop.permute.xlu0 %1450
        %1452 = vrot.lane.b32.xlu0 %v1441, 16
        %v1453 = vpop.permute.xlu0 %1452
        %1454 = vrot.lane.b32.xlu0 %v1442, 16
        %v1455 = vpop.permute.xlu0 %1454
        %1456 = vrot.lane.b32.xlu0 %v1443, 16
        %v1457 = vpop.permute.xlu0 %1456
        %1458 = vrot.lane.b32.xlu0 %v1444, 16
        %v1459 = vpop.permute.xlu0 %1458
        %1460 = vrot.lane.b32.xlu0 %v1445, 16
        %v1461 = vpop.permute.xlu0 %1460
        %v1470 = vmul.f32 %v1296, %v1447
        %v1471 = vmul.f32 %v1298, %v1449
        %v1472 = vmul.f32 %v1300, %v1451
        %v1473 = vmul.f32 %v1302, %v1453
        %v1474 = vmul.f32 %v1304, %v1455
        %v1475 = vmul.f32 %v1306, %v1457
        %v1476 = vmul.f32 %v1308, %v1459
        %v1477 = vmul.f32 %v1310, %v1461
        %v1478 = vadd.f32 %v1431, %v1470
        %v1479 = vadd.f32 %v1432, %v1471
        %v1480 = vadd.f32 %v1433, %v1472
        %v1481 = vadd.f32 %v1434, %v1473
        %v1482 = vadd.f32 %v1435, %v1474
        %v1483 = vadd.f32 %v1436, %v1475
        %v1484 = vadd.f32 %v1437, %v1476
        %v1485 = vadd.f32 %v1438, %v1477
        %1487 = vset.pattern.permute.xlu0 0
        %1488 = vperm.xlu0 %1487, %v308
        %v1489 = vpop.permute.xlu0 %1488
        %v1499 = vrot.slane %v1478, 2
        %v1500 = vrot.slane %v1479, 1
        %v1501 = vsel %vm775, %v1500, %v1499
        %v1502 = vsel %vm778, %v1480, %v1501
        %v1503 = vrot.slane %v1481, 7
        %v1504 = vsel %vm781, %v1503, %v1502
        %v1505 = vrot.slane %v1482, 6
        %v1506 = vsel %vm784, %v1505, %v1504
        %v1507 = vrot.slane %v1483, 5
        %v1508 = vsel %vm787, %v1507, %v1506
        %v1509 = vrot.slane %v1484, 4
        %v1510 = vsel %vm790, %v1509, %v1508
        %v1511 = vrot.slane %v1485, 3
        %v1512 = vsel %vm793, %v1511, %v1510
        %1513 = vrot.lane.b32.xlu0 %v1512, 112
        %v1514 = vpop.permute.xlu0 %1513
        %v1516 = vmul.f32 %v1489, %v1514
        %v1517 = vsub.f32 1.0, %v308
        %1519 = vset.pattern.permute.xlu0 0
        %1520 = vperm.xlu0 %1519, %v1517
        %v1521 = vpop.permute.xlu0 %1520
        %v1523 = vmul.f32 %v1521, %v1165
        %v1524 = vadd.f32 %v1516, %v1523
        %v1526 = vsel %vm333, %v1524, 0
        %1528 = vmatprep.subr.mxu0 0.0
        %1529 = vmatpush1.msra.mxu0 %v463
        %1530 = vmatprep.subr.mxu0 0.0
        %1531 = vmatpush1.msra.mxu0 %v464
        %1532 = vmatprep.subr.mxu0 0.0
        %1533 = vmatpush1.msra.mxu0 0.0
        %1534 = vmatprep.subr.mxu0 0.0
        %1535 = vmatpush1.msra.mxu0 0.0
        %1536 = vmatprep.subr.mxu0 0.0
        %1537 = vmatpush1.msra.mxu0 0.0
        %1538 = vmatprep.subr.mxu0 0.0
        %1539 = vmatpush1.msra.mxu0 0.0
        %1540 = vmatprep.subr.mxu0 0.0
        %1541 = vmatpush1.msra.mxu0 0.0
        %1542 = vmatprep.subr.mxu0 0.0
        %1543 = vmatpush1.msra.mxu0 0.0
        %1544 = vmatprep.subr.mxu0 0.0
        %1545 = vmatpush1.msra.mxu0 0.0
        %1546 = vmatprep.subr.mxu0 0.0
        %1547 = vmatpush1.msra.mxu0 0.0
        %1548 = vmatprep.subr.mxu0 0.0
        %1549 = vmatpush1.msra.mxu0 0.0
        %1550 = vmatprep.subr.mxu0 0.0
        %1551 = vmatpush1.msra.mxu0 0.0
        %1552 = vmatprep.subr.mxu0 0.0
        %1553 = vmatpush1.msra.mxu0 0.0
        %1554 = vmatprep.subr.mxu0 0.0
        %1555 = vmatpush1.msra.mxu0 0.0
        %1556 = vmatprep.subr.mxu0 0.0
        %1557 = vmatpush1.msra.mxu0 0.0
        %1558 = vmatprep.subr.mxu0 0.0
        %1559 = vmatpush1.msra.mxu0 0.0
        %1560 = vmatprep.subr.mxu0 0.0
        %1561 = vmatpush1.msra.mxu0 0.0
        %1562 = vmatprep.subr.mxu0 0.0
        %1563 = vmatpush1.msra.mxu0 0.0
        %1564 = vmatprep.subr.mxu0 0.0
        %1565 = vmatpush1.msra.mxu0 0.0
        %1566 = vmatprep.subr.mxu0 0.0
        %1567 = vmatpush1.msra.mxu0 0.0
        %1568 = vmatprep.subr.mxu0 0.0
        %1569 = vmatpush1.msra.mxu0 0.0
        %1570 = vmatprep.subr.mxu0 0.0
        %1571 = vmatpush1.msra.mxu0 0.0
        %1572 = vmatprep.subr.mxu0 0.0
        %1573 = vmatpush1.msra.mxu0 0.0
        %1574 = vmatprep.subr.mxu0 0.0
        %1575 = vmatpush1.msra.mxu0 0.0
        %1576 = vmatprep.subr.mxu0 0.0
        %1577 = vmatpush1.msra.mxu0 0.0
        %1578 = vmatprep.subr.mxu0 0.0
        %1579 = vmatpush1.msra.mxu0 0.0
        %1580 = vmatprep.subr.mxu0 0.0
        %1581 = vmatpush1.msra.mxu0 0.0
        %1582 = vmatprep.subr.mxu0 0.0
        %1583 = vmatpush1.msra.mxu0 0.0
        %1584 = vmatprep.subr.mxu0 0.0
        %1585 = vmatpush1.msra.mxu0 0.0
        %1586 = vmatprep.subr.mxu0 0.0
        %1587 = vmatpush1.msra.mxu0 0.0
        %1588 = vmatprep.subr.mxu0 0.0
        %1589 = vmatpush1.msra.mxu0 0.0
        %1590 = vmatprep.subr.mxu0 0.0
        %1591 = vmatpush1.msra.mxu0 0.0
        %1592 = vmatprep.mubr.f32.mxu0 0.0
        %1593 = vmatmul.mubr.f32.gmra.mrb[0].mxu0 %v1526
        %v1594 = vpop.f32.mrb[0].mxu0
        %v1595 = vadd.f32 %v470, %v1594
        %v1596 = vpop.f32.mrb[0].mxu0
        %1597 = vdwg.mxu0
        %v1599 = vrot.slane %v1595, 5
        %v1600 = vrot.slane %v1595, 6
        %v1601 = vrot.slane %v1595, 7
        %v1602 = vrot.slane %v1595, 1
        %v1603 = vrot.slane %v1595, 2
        %v1604 = vrot.slane %v1595, 3
        %v1605 = vrot.slane %v1595, 4
        %v1614 = vadd.f32 %v425, %v1599
        %v1615 = vadd.f32 %v430, %v1600
        %v1616 = vadd.f32 %v435, %v1601
        %v1617 = vadd.f32 %v440, %v1595
        %v1618 = vadd.f32 %v445, %v1602
        %v1619 = vadd.f32 %v450, %v1603
        %v1620 = vadd.f32 %v455, %v1604
        %v1621 = vadd.f32 %v460, %v1605
        %v1622 = vxor.u32 %v1614, 2147483648
        %v1623 = vxor.u32 %v1615, 2147483648
        %v1624 = vxor.u32 %v1616, 2147483648
        %v1625 = vxor.u32 %v1617, 2147483648
        %v1626 = vxor.u32 %v1618, 2147483648
        %v1627 = vxor.u32 %v1619, 2147483648
        %v1628 = vxor.u32 %v1620, 2147483648
        %v1629 = vxor.u32 %v1621, 2147483648
        %v1630 = vmul.f32 %v1622, 1.442695
        %v1631 = vpow.pop %v1630
        %v1632 = vmul.f32 %v1623, 1.442695
        %v1633 = vpow.pop %v1632
        %v1634 = vmul.f32 %v1624, 1.442695
        %v1635 = vpow.pop %v1634
        %v1636 = vmul.f32 %v1625, 1.442695
        %v1637 = vpow.pop %v1636
        %v1638 = vmul.f32 %v1626, 1.442695
        %v1639 = vpow.pop %v1638
        %v1640 = vmul.f32 %v1627, 1.442695
        %v1641 = vpow.pop %v1640
        %v1642 = vmul.f32 %v1628, 1.442695
        %v1643 = vpow.pop %v1642
        %v1644 = vmul.f32 %v1629, 1.442695
        %v1645 = vpow.pop %v1644
        %v1646 = vadd.f32 %v1631, 1.0
        %v1647 = vadd.f32 %v1633, 1.0
        %v1648 = vadd.f32 %v1635, 1.0
        %v1649 = vadd.f32 %v1637, 1.0
        %v1650 = vadd.f32 %v1639, 1.0
        %v1651 = vadd.f32 %v1641, 1.0
        %v1652 = vadd.f32 %v1643, 1.0
        %v1653 = vadd.f32 %v1645, 1.0
        %v1654 = vrcp.pop %v1646
        %v1655 = vmul.f32 1.0, %v1654
        %v1656 = vrcp.pop %v1647
        %v1657 = vmul.f32 1.0, %v1656
        %v1658 = vrcp.pop %v1648
        %v1659 = vmul.f32 1.0, %v1658
        %v1660 = vrcp.pop %v1649
        %v1661 = vmul.f32 1.0, %v1660
        %v1662 = vrcp.pop %v1650
        %v1663 = vmul.f32 1.0, %v1662
        %v1664 = vrcp.pop %v1651
        %v1665 = vmul.f32 1.0, %v1664
        %v1666 = vrcp.pop %v1652
        %v1667 = vmul.f32 1.0, %v1666
        %v1668 = vrcp.pop %v1653
        %v1669 = vmul.f32 1.0, %v1668
        %1670 = vrot.lane.b32.xlu0 %v1599, 96
        %v1671 = vpop.permute.xlu0 %1670
        %1672 = vrot.lane.b32.xlu0 %v1600, 96
        %v1673 = vpop.permute.xlu0 %1672
        %1674 = vrot.lane.b32.xlu0 %v1601, 96
        %v1675 = vpop.permute.xlu0 %1674
        %1676 = vrot.lane.b32.xlu0 %v1595, 96
        %v1677 = vpop.permute.xlu0 %1676
        %1678 = vrot.lane.b32.xlu0 %v1602, 96
        %v1679 = vpop.permute.xlu0 %1678
        %1680 = vrot.lane.b32.xlu0 %v1603, 96
        %v1681 = vpop.permute.xlu0 %1680
        %1682 = vrot.lane.b32.xlu0 %v1604, 96
        %v1683 = vpop.permute.xlu0 %1682
        %1684 = vrot.lane.b32.xlu0 %v1605, 96
        %v1685 = vpop.permute.xlu0 %1684
        %v1694 = vmul.f32 %v1655, %v1671
        %v1695 = vmul.f32 %v1657, %v1673
        %v1696 = vmul.f32 %v1659, %v1675
        %v1697 = vmul.f32 %v1661, %v1677
        %v1698 = vmul.f32 %v1663, %v1679
        %v1699 = vmul.f32 %v1665, %v1681
        %v1700 = vmul.f32 %v1667, %v1683
        %v1701 = vmul.f32 %v1669, %v1685
        %1710 = vrot.lane.b32.xlu0 %v1694, 32
        %v1711 = vpop.permute.xlu0 %1710
        %1712 = vrot.lane.b32.xlu0 %v1695, 32
        %v1713 = vpop.permute.xlu0 %1712
        %1714 = vrot.lane.b32.xlu0 %v1696, 32
        %v1715 = vpop.permute.xlu0 %1714
        %1716 = vrot.lane.b32.xlu0 %v1697, 32
        %v1717 = vpop.permute.xlu0 %1716
        %1718 = vrot.lane.b32.xlu0 %v1698, 32
        %v1719 = vpop.permute.xlu0 %1718
        %1720 = vrot.lane.b32.xlu0 %v1699, 32
        %v1721 = vpop.permute.xlu0 %1720
        %1722 = vrot.lane.b32.xlu0 %v1700, 32
        %v1723 = vpop.permute.xlu0 %1722
        %1724 = vrot.lane.b32.xlu0 %v1701, 32
        %v1725 = vpop.permute.xlu0 %1724
        %v1734 = vadd.f32 %v425, %v1711
        %v1735 = vadd.f32 %v430, %v1713
        %v1736 = vadd.f32 %v435, %v1715
        %v1737 = vadd.f32 %v440, %v1717
        %v1738 = vadd.f32 %v445, %v1719
        %v1739 = vadd.f32 %v450, %v1721
        %v1740 = vadd.f32 %v455, %v1723
        %v1741 = vadd.f32 %v460, %v1725
        %v1742 = vtanh.pop %v1734
        %v1743 = vtanh.pop %v1735
        %v1744 = vtanh.pop %v1736
        %v1745 = vtanh.pop %v1737
        %v1746 = vtanh.pop %v1738
        %v1747 = vtanh.pop %v1739
        %v1748 = vtanh.pop %v1740
        %v1749 = vtanh.pop %v1741
        %v1750 = vsub.f32 1.0, %v1655
        %v1751 = vsub.f32 1.0, %v1657
        %v1752 = vsub.f32 1.0, %v1659
        %v1753 = vsub.f32 1.0, %v1661
        %v1754 = vsub.f32 1.0, %v1663
        %v1755 = vsub.f32 1.0, %v1665
        %v1756 = vsub.f32 1.0, %v1667
        %v1757 = vsub.f32 1.0, %v1669
        %1766 = vrot.lane.b32.xlu0 %v1742, 112
        %v1767 = vpop.permute.xlu0 %1766
        %1768 = vrot.lane.b32.xlu0 %v1743, 112
        %v1769 = vpop.permute.xlu0 %1768
        %1770 = vrot.lane.b32.xlu0 %v1744, 112
        %v1771 = vpop.permute.xlu0 %1770
        %1772 = vrot.lane.b32.xlu0 %v1745, 112
        %v1773 = vpop.permute.xlu0 %1772
        %1774 = vrot.lane.b32.xlu0 %v1746, 112
        %v1775 = vpop.permute.xlu0 %1774
        %1776 = vrot.lane.b32.xlu0 %v1747, 112
        %v1777 = vpop.permute.xlu0 %1776
        %1778 = vrot.lane.b32.xlu0 %v1748, 112
        %v1779 = vpop.permute.xlu0 %1778
        %1780 = vrot.lane.b32.xlu0 %v1749, 112
        %v1781 = vpop.permute.xlu0 %1780
        %v1790 = vmul.f32 %v1750, %v1767
        %v1791 = vmul.f32 %v1751, %v1769
        %v1792 = vmul.f32 %v1752, %v1771
        %v1793 = vmul.f32 %v1753, %v1773
        %v1794 = vmul.f32 %v1754, %v1775
        %v1795 = vmul.f32 %v1755, %v1777
        %v1796 = vmul.f32 %v1756, %v1779
        %v1797 = vmul.f32 %v1757, %v1781
        %v1798 = vrot.slane %v1524, 5
        %v1799 = vrot.slane %v1524, 6
        %v1800 = vrot.slane %v1524, 7
        %v1801 = vrot.slane %v1524, 1
        %v1802 = vrot.slane %v1524, 2
        %v1803 = vrot.slane %v1524, 3
        %v1804 = vrot.slane %v1524, 4
        %1805 = vrot.lane.b32.xlu0 %v1798, 16
        %v1806 = vpop.permute.xlu0 %1805
        %1807 = vrot.lane.b32.xlu0 %v1799, 16
        %v1808 = vpop.permute.xlu0 %1807
        %1809 = vrot.lane.b32.xlu0 %v1800, 16
        %v1810 = vpop.permute.xlu0 %1809
        %1811 = vrot.lane.b32.xlu0 %v1524, 16
        %v1812 = vpop.permute.xlu0 %1811
        %1813 = vrot.lane.b32.xlu0 %v1801, 16
        %v1814 = vpop.permute.xlu0 %1813
        %1815 = vrot.lane.b32.xlu0 %v1802, 16
        %v1816 = vpop.permute.xlu0 %1815
        %1817 = vrot.lane.b32.xlu0 %v1803, 16
        %v1818 = vpop.permute.xlu0 %1817
        %1819 = vrot.lane.b32.xlu0 %v1804, 16
        %v1820 = vpop.permute.xlu0 %1819
        %v1829 = vmul.f32 %v1655, %v1806
        %v1830 = vmul.f32 %v1657, %v1808
        %v1831 = vmul.f32 %v1659, %v1810
        %v1832 = vmul.f32 %v1661, %v1812
        %v1833 = vmul.f32 %v1663, %v1814
        %v1834 = vmul.f32 %v1665, %v1816
        %v1835 = vmul.f32 %v1667, %v1818
        %v1836 = vmul.f32 %v1669, %v1820
        %v1837 = vadd.f32 %v1790, %v1829
        %v1838 = vadd.f32 %v1791, %v1830
        %v1839 = vadd.f32 %v1792, %v1831
        %v1840 = vadd.f32 %v1793, %v1832
        %v1841 = vadd.f32 %v1794, %v1833
        %v1842 = vadd.f32 %v1795, %v1834
        %v1843 = vadd.f32 %v1796, %v1835
        %v1844 = vadd.f32 %v1797, %v1836
        %1846 = vset.pattern.permute.xlu0 0
        %1847 = vperm.xlu0 %1846, %v311
        %v1848 = vpop.permute.xlu0 %1847
        %v1858 = vrot.slane %v1837, 3
        %v1859 = vrot.slane %v1838, 2
        %v1860 = vsel %vm775, %v1859, %v1858
        %v1861 = vrot.slane %v1839, 1
        %v1862 = vsel %vm778, %v1861, %v1860
        %v1863 = vsel %vm781, %v1840, %v1862
        %v1864 = vrot.slane %v1841, 7
        %v1865 = vsel %vm784, %v1864, %v1863
        %v1866 = vrot.slane %v1842, 6
        %v1867 = vsel %vm787, %v1866, %v1865
        %v1868 = vrot.slane %v1843, 5
        %v1869 = vsel %vm790, %v1868, %v1867
        %v1870 = vrot.slane %v1844, 4
        %v1871 = vsel %vm793, %v1870, %v1869
        %1872 = vrot.lane.b32.xlu0 %v1871, 112
        %v1873 = vpop.permute.xlu0 %1872
        %v1875 = vmul.f32 %v1848, %v1873
        %v1876 = vsub.f32 1.0, %v311
        %1878 = vset.pattern.permute.xlu0 0
        %1879 = vperm.xlu0 %1878, %v1876
        %v1880 = vpop.permute.xlu0 %1879
        %v1882 = vmul.f32 %v1880, %v1524
        %v1883 = vadd.f32 %v1875, %v1882
        %v1885 = vsel %vm333, %v1883, 0
        %1887 = vmatprep.subr.mxu0 0.0
        %1888 = vmatpush1.msra.mxu0 %v463
        %1889 = vmatprep.subr.mxu0 0.0
        %1890 = vmatpush1.msra.mxu0 %v464
        %1891 = vmatprep.subr.mxu0 0.0
        %1892 = vmatpush1.msra.mxu0 0.0
        %1893 = vmatprep.subr.mxu0 0.0
        %1894 = vmatpush1.msra.mxu0 0.0
        %1895 = vmatprep.subr.mxu0 0.0
        %1896 = vmatpush1.msra.mxu0 0.0
        %1897 = vmatprep.subr.mxu0 0.0
        %1898 = vmatpush1.msra.mxu0 0.0
        %1899 = vmatprep.subr.mxu0 0.0
        %1900 = vmatpush1.msra.mxu0 0.0
        %1901 = vmatprep.subr.mxu0 0.0
        %1902 = vmatpush1.msra.mxu0 0.0
        %1903 = vmatprep.subr.mxu0 0.0
        %1904 = vmatpush1.msra.mxu0 0.0
        %1905 = vmatprep.subr.mxu0 0.0
        %1906 = vmatpush1.msra.mxu0 0.0
        %1907 = vmatprep.subr.mxu0 0.0
        %1908 = vmatpush1.msra.mxu0 0.0
        %1909 = vmatprep.subr.mxu0 0.0
        %1910 = vmatpush1.msra.mxu0 0.0
        %1911 = vmatprep.subr.mxu0 0.0
        %1912 = vmatpush1.msra.mxu0 0.0
        %1913 = vmatprep.subr.mxu0 0.0
        %1914 = vmatpush1.msra.mxu0 0.0
        %1915 = vmatprep.subr.mxu0 0.0
        %1916 = vmatpush1.msra.mxu0 0.0
        %1917 = vmatprep.subr.mxu0 0.0
        %1918 = vmatpush1.msra.mxu0 0.0
        %1919 = vmatprep.subr.mxu0 0.0
        %1920 = vmatpush1.msra.mxu0 0.0
        %1921 = vmatprep.subr.mxu0 0.0
        %1922 = vmatpush1.msra.mxu0 0.0
        %1923 = vmatprep.subr.mxu0 0.0
        %1924 = vmatpush1.msra.mxu0 0.0
        %1925 = vmatprep.subr.mxu0 0.0
        %1926 = vmatpush1.msra.mxu0 0.0
        %1927 = vmatprep.subr.mxu0 0.0
        %1928 = vmatpush1.msra.mxu0 0.0
        %1929 = vmatprep.subr.mxu0 0.0
        %1930 = vmatpush1.msra.mxu0 0.0
        %1931 = vmatprep.subr.mxu0 0.0
        %1932 = vmatpush1.msra.mxu0 0.0
        %1933 = vmatprep.subr.mxu0 0.0
        %1934 = vmatpush1.msra.mxu0 0.0
        %1935 = vmatprep.subr.mxu0 0.0
        %1936 = vmatpush1.msra.mxu0 0.0
        %1937 = vmatprep.subr.mxu0 0.0
        %1938 = vmatpush1.msra.mxu0 0.0
        %1939 = vmatprep.subr.mxu0 0.0
        %1940 = vmatpush1.msra.mxu0 0.0
        %1941 = vmatprep.subr.mxu0 0.0
        %1942 = vmatpush1.msra.mxu0 0.0
        %1943 = vmatprep.subr.mxu0 0.0
        %1944 = vmatpush1.msra.mxu0 0.0
        %1945 = vmatprep.subr.mxu0 0.0
        %1946 = vmatpush1.msra.mxu0 0.0
        %1947 = vmatprep.subr.mxu0 0.0
        %1948 = vmatpush1.msra.mxu0 0.0
        %1949 = vmatprep.subr.mxu0 0.0
        %1950 = vmatpush1.msra.mxu0 0.0
        %1951 = vmatprep.mubr.f32.mxu0 0.0
        %1952 = vmatmul.mubr.f32.gmra.mrb[0].mxu0 %v1885
        %v1953 = vpop.f32.mrb[0].mxu0
        %v1954 = vadd.f32 %v470, %v1953
        %v1955 = vpop.f32.mrb[0].mxu0
        %1956 = vdwg.mxu0
        %v1958 = vrot.slane %v1954, 4
        %v1959 = vrot.slane %v1954, 5
        %v1960 = vrot.slane %v1954, 6
        %v1961 = vrot.slane %v1954, 7
        %v1962 = vrot.slane %v1954, 1
        %v1963 = vrot.slane %v1954, 2
        %v1964 = vrot.slane %v1954, 3
        %v1973 = vadd.f32 %v425, %v1958
        %v1974 = vadd.f32 %v430, %v1959
        %v1975 = vadd.f32 %v435, %v1960
        %v1976 = vadd.f32 %v440, %v1961
        %v1977 = vadd.f32 %v445, %v1954
        %v1978 = vadd.f32 %v450, %v1962
        %v1979 = vadd.f32 %v455, %v1963
        %v1980 = vadd.f32 %v460, %v1964
        %v1981 = vxor.u32 %v1973, 2147483648
        %v1982 = vxor.u32 %v1974, 2147483648
        %v1983 = vxor.u32 %v1975, 2147483648
        %v1984 = vxor.u32 %v1976, 2147483648
        %v1985 = vxor.u32 %v1977, 2147483648
        %v1986 = vxor.u32 %v1978, 2147483648
        %v1987 = vxor.u32 %v1979, 2147483648
        %v1988 = vxor.u32 %v1980, 2147483648
        %v1989 = vmul.f32 %v1981, 1.442695
        %v1990 = vpow.pop %v1989
        %v1991 = vmul.f32 %v1982, 1.442695
        %v1992 = vpow.pop %v1991
        %v1993 = vmul.f32 %v1983, 1.442695
        %v1994 = vpow.pop %v1993
        %v1995 = vmul.f32 %v1984, 1.442695
        %v1996 = vpow.pop %v1995
        %v1997 = vmul.f32 %v1985, 1.442695
        %v1998 = vpow.pop %v1997
        %v1999 = vmul.f32 %v1986, 1.442695
        %v2000 = vpow.pop %v1999
        %v2001 = vmul.f32 %v1987, 1.442695
        %v2002 = vpow.pop %v2001
        %v2003 = vmul.f32 %v1988, 1.442695
        %v2004 = vpow.pop %v2003
        %v2005 = vadd.f32 %v1990, 1.0
        %v2006 = vadd.f32 %v1992, 1.0
        %v2007 = vadd.f32 %v1994, 1.0
        %v2008 = vadd.f32 %v1996, 1.0
        %v2009 = vadd.f32 %v1998, 1.0
        %v2010 = vadd.f32 %v2000, 1.0
        %v2011 = vadd.f32 %v2002, 1.0
        %v2012 = vadd.f32 %v2004, 1.0
        %v2013 = vrcp.pop %v2005
        %v2014 = vmul.f32 1.0, %v2013
        %v2015 = vrcp.pop %v2006
        %v2016 = vmul.f32 1.0, %v2015
        %v2017 = vrcp.pop %v2007
        %v2018 = vmul.f32 1.0, %v2017
        %v2019 = vrcp.pop %v2008
        %v2020 = vmul.f32 1.0, %v2019
        %v2021 = vrcp.pop %v2009
        %v2022 = vmul.f32 1.0, %v2021
        %v2023 = vrcp.pop %v2010
        %v2024 = vmul.f32 1.0, %v2023
        %v2025 = vrcp.pop %v2011
        %v2026 = vmul.f32 1.0, %v2025
        %v2027 = vrcp.pop %v2012
        %v2028 = vmul.f32 1.0, %v2027
        %2029 = vrot.lane.b32.xlu0 %v1958, 96
        %v2030 = vpop.permute.xlu0 %2029
        %2031 = vrot.lane.b32.xlu0 %v1959, 96
        %v2032 = vpop.permute.xlu0 %2031
        %2033 = vrot.lane.b32.xlu0 %v1960, 96
        %v2034 = vpop.permute.xlu0 %2033
        %2035 = vrot.lane.b32.xlu0 %v1961, 96
        %v2036 = vpop.permute.xlu0 %2035
        %2037 = vrot.lane.b32.xlu0 %v1954, 96
        %v2038 = vpop.permute.xlu0 %2037
        %2039 = vrot.lane.b32.xlu0 %v1962, 96
        %v2040 = vpop.permute.xlu0 %2039
        %2041 = vrot.lane.b32.xlu0 %v1963, 96
        %v2042 = vpop.permute.xlu0 %2041
        %2043 = vrot.lane.b32.xlu0 %v1964, 96
        %v2044 = vpop.permute.xlu0 %2043
        %v2053 = vmul.f32 %v2014, %v2030
        %v2054 = vmul.f32 %v2016, %v2032
        %v2055 = vmul.f32 %v2018, %v2034
        %v2056 = vmul.f32 %v2020, %v2036
        %v2057 = vmul.f32 %v2022, %v2038
        %v2058 = vmul.f32 %v2024, %v2040
        %v2059 = vmul.f32 %v2026, %v2042
        %v2060 = vmul.f32 %v2028, %v2044
        %2069 = vrot.lane.b32.xlu0 %v2053, 32
        %v2070 = vpop.permute.xlu0 %2069
        %2071 = vrot.lane.b32.xlu0 %v2054, 32
        %v2072 = vpop.permute.xlu0 %2071
        %2073 = vrot.lane.b32.xlu0 %v2055, 32
        %v2074 = vpop.permute.xlu0 %2073
        %2075 = vrot.lane.b32.xlu0 %v2056, 32
        %v2076 = vpop.permute.xlu0 %2075
        %2077 = vrot.lane.b32.xlu0 %v2057, 32
        %v2078 = vpop.permute.xlu0 %2077
        %2079 = vrot.lane.b32.xlu0 %v2058, 32
        %v2080 = vpop.permute.xlu0 %2079
        %2081 = vrot.lane.b32.xlu0 %v2059, 32
        %v2082 = vpop.permute.xlu0 %2081
        %2083 = vrot.lane.b32.xlu0 %v2060, 32
        %v2084 = vpop.permute.xlu0 %2083
        %v2093 = vadd.f32 %v425, %v2070
        %v2094 = vadd.f32 %v430, %v2072
        %v2095 = vadd.f32 %v435, %v2074
        %v2096 = vadd.f32 %v440, %v2076
        %v2097 = vadd.f32 %v445, %v2078
        %v2098 = vadd.f32 %v450, %v2080
        %v2099 = vadd.f32 %v455, %v2082
        %v2100 = vadd.f32 %v460, %v2084
        %v2101 = vtanh.pop %v2093
        %v2102 = vtanh.pop %v2094
        %v2103 = vtanh.pop %v2095
        %v2104 = vtanh.pop %v2096
        %v2105 = vtanh.pop %v2097
        %v2106 = vtanh.pop %v2098
        %v2107 = vtanh.pop %v2099
        %v2108 = vtanh.pop %v2100
        %v2109 = vsub.f32 1.0, %v2014
        %v2110 = vsub.f32 1.0, %v2016
        %v2111 = vsub.f32 1.0, %v2018
        %v2112 = vsub.f32 1.0, %v2020
        %v2113 = vsub.f32 1.0, %v2022
        %v2114 = vsub.f32 1.0, %v2024
        %v2115 = vsub.f32 1.0, %v2026
        %v2116 = vsub.f32 1.0, %v2028
        %2125 = vrot.lane.b32.xlu0 %v2101, 112
        %v2126 = vpop.permute.xlu0 %2125
        %2127 = vrot.lane.b32.xlu0 %v2102, 112
        %v2128 = vpop.permute.xlu0 %2127
        %2129 = vrot.lane.b32.xlu0 %v2103, 112
        %v2130 = vpop.permute.xlu0 %2129
        %2131 = vrot.lane.b32.xlu0 %v2104, 112
        %v2132 = vpop.permute.xlu0 %2131
        %2133 = vrot.lane.b32.xlu0 %v2105, 112
        %v2134 = vpop.permute.xlu0 %2133
        %2135 = vrot.lane.b32.xlu0 %v2106, 112
        %v2136 = vpop.permute.xlu0 %2135
        %2137 = vrot.lane.b32.xlu0 %v2107, 112
        %v2138 = vpop.permute.xlu0 %2137
        %2139 = vrot.lane.b32.xlu0 %v2108, 112
        %v2140 = vpop.permute.xlu0 %2139
        %v2149 = vmul.f32 %v2109, %v2126
        %v2150 = vmul.f32 %v2110, %v2128
        %v2151 = vmul.f32 %v2111, %v2130
        %v2152 = vmul.f32 %v2112, %v2132
        %v2153 = vmul.f32 %v2113, %v2134
        %v2154 = vmul.f32 %v2114, %v2136
        %v2155 = vmul.f32 %v2115, %v2138
        %v2156 = vmul.f32 %v2116, %v2140
        %v2157 = vrot.slane %v1883, 4
        %v2158 = vrot.slane %v1883, 5
        %v2159 = vrot.slane %v1883, 6
        %v2160 = vrot.slane %v1883, 7
        %v2161 = vrot.slane %v1883, 1
        %v2162 = vrot.slane %v1883, 2
        %v2163 = vrot.slane %v1883, 3
        %2164 = vrot.lane.b32.xlu0 %v2157, 16
        %v2165 = vpop.permute.xlu0 %2164
        %2166 = vrot.lane.b32.xlu0 %v2158, 16
        %v2167 = vpop.permute.xlu0 %2166
        %2168 = vrot.lane.b32.xlu0 %v2159, 16
        %v2169 = vpop.permute.xlu0 %2168
        %2170 = vrot.lane.b32.xlu0 %v2160, 16
        %v2171 = vpop.permute.xlu0 %2170
        %2172 = vrot.lane.b32.xlu0 %v1883, 16
        %v2173 = vpop.permute.xlu0 %2172
        %2174 = vrot.lane.b32.xlu0 %v2161, 16
        %v2175 = vpop.permute.xlu0 %2174
        %2176 = vrot.lane.b32.xlu0 %v2162, 16
        %v2177 = vpop.permute.xlu0 %2176
        %2178 = vrot.lane.b32.xlu0 %v2163, 16
        %v2179 = vpop.permute.xlu0 %2178
        %v2188 = vmul.f32 %v2014, %v2165
        %v2189 = vmul.f32 %v2016, %v2167
        %v2190 = vmul.f32 %v2018, %v2169
        %v2191 = vmul.f32 %v2020, %v2171
        %v2192 = vmul.f32 %v2022, %v2173
        %v2193 = vmul.f32 %v2024, %v2175
        %v2194 = vmul.f32 %v2026, %v2177
        %v2195 = vmul.f32 %v2028, %v2179
        %v2196 = vadd.f32 %v2149, %v2188
        %v2197 = vadd.f32 %v2150, %v2189
        %v2198 = vadd.f32 %v2151, %v2190
        %v2199 = vadd.f32 %v2152, %v2191
        %v2200 = vadd.f32 %v2153, %v2192
        %v2201 = vadd.f32 %v2154, %v2193
        %v2202 = vadd.f32 %v2155, %v2194
        %v2203 = vadd.f32 %v2156, %v2195
        %2205 = vset.pattern.permute.xlu0 0
        %2206 = vperm.xlu0 %2205, %v314
        %v2207 = vpop.permute.xlu0 %2206
        %v2217 = vrot.slane %v2196, 4
        %v2218 = vrot.slane %v2197, 3
        %v2219 = vsel %vm775, %v2218, %v2217
        %v2220 = vrot.slane %v2198, 2
        %v2221 = vsel %vm778, %v2220, %v2219
        %v2222 = vrot.slane %v2199, 1
        %v2223 = vsel %vm781, %v2222, %v2221
        %v2224 = vsel %vm784, %v2200, %v2223
        %v2225 = vrot.slane %v2201, 7
        %v2226 = vsel %vm787, %v2225, %v2224
        %v2227 = vrot.slane %v2202, 6
        %v2228 = vsel %vm790, %v2227, %v2226
        %v2229 = vrot.slane %v2203, 5
        %v2230 = vsel %vm793, %v2229, %v2228
        %2231 = vrot.lane.b32.xlu0 %v2230, 112
        %v2232 = vpop.permute.xlu0 %2231
        %v2234 = vmul.f32 %v2207, %v2232
        %v2235 = vsub.f32 1.0, %v314
        %2237 = vset.pattern.permute.xlu0 0
        %2238 = vperm.xlu0 %2237, %v2235
        %v2239 = vpop.permute.xlu0 %2238
        %v2241 = vmul.f32 %v2239, %v1883
        %v2242 = vadd.f32 %v2234, %v2241
        %v2244 = vsel %vm333, %v2242, 0
        %2246 = vmatprep.subr.mxu0 0.0
        %2247 = vmatpush1.msra.mxu0 %v463
        %2248 = vmatprep.subr.mxu0 0.0
        %2249 = vmatpush1.msra.mxu0 %v464
        %2250 = vmatprep.subr.mxu0 0.0
        %2251 = vmatpush1.msra.mxu0 0.0
        %2252 = vmatprep.subr.mxu0 0.0
        %2253 = vmatpush1.msra.mxu0 0.0
        %2254 = vmatprep.subr.mxu0 0.0
        %2255 = vmatpush1.msra.mxu0 0.0
        %2256 = vmatprep.subr.mxu0 0.0
        %2257 = vmatpush1.msra.mxu0 0.0
        %2258 = vmatprep.subr.mxu0 0.0
        %2259 = vmatpush1.msra.mxu0 0.0
        %2260 = vmatprep.subr.mxu0 0.0
        %2261 = vmatpush1.msra.mxu0 0.0
        %2262 = vmatprep.subr.mxu0 0.0
        %2263 = vmatpush1.msra.mxu0 0.0
        %2264 = vmatprep.subr.mxu0 0.0
        %2265 = vmatpush1.msra.mxu0 0.0
        %2266 = vmatprep.subr.mxu0 0.0
        %2267 = vmatpush1.msra.mxu0 0.0
        %2268 = vmatprep.subr.mxu0 0.0
        %2269 = vmatpush1.msra.mxu0 0.0
        %2270 = vmatprep.subr.mxu0 0.0
        %2271 = vmatpush1.msra.mxu0 0.0
        %2272 = vmatprep.subr.mxu0 0.0
        %2273 = vmatpush1.msra.mxu0 0.0
        %2274 = vmatprep.subr.mxu0 0.0
        %2275 = vmatpush1.msra.mxu0 0.0
        %2276 = vmatprep.subr.mxu0 0.0
        %2277 = vmatpush1.msra.mxu0 0.0
        %2278 = vmatprep.subr.mxu0 0.0
        %2279 = vmatpush1.msra.mxu0 0.0
        %2280 = vmatprep.subr.mxu0 0.0
        %2281 = vmatpush1.msra.mxu0 0.0
        %2282 = vmatprep.subr.mxu0 0.0
        %2283 = vmatpush1.msra.mxu0 0.0
        %2284 = vmatprep.subr.mxu0 0.0
        %2285 = vmatpush1.msra.mxu0 0.0
        %2286 = vmatprep.subr.mxu0 0.0
        %2287 = vmatpush1.msra.mxu0 0.0
        %2288 = vmatprep.subr.mxu0 0.0
        %2289 = vmatpush1.msra.mxu0 0.0
        %2290 = vmatprep.subr.mxu0 0.0
        %2291 = vmatpush1.msra.mxu0 0.0
        %2292 = vmatprep.subr.mxu0 0.0
        %2293 = vmatpush1.msra.mxu0 0.0
        %2294 = vmatprep.subr.mxu0 0.0
        %2295 = vmatpush1.msra.mxu0 0.0
        %2296 = vmatprep.subr.mxu0 0.0
        %2297 = vmatpush1.msra.mxu0 0.0
        %2298 = vmatprep.subr.mxu0 0.0
        %2299 = vmatpush1.msra.mxu0 0.0
        %2300 = vmatprep.subr.mxu0 0.0
        %2301 = vmatpush1.msra.mxu0 0.0
        %2302 = vmatprep.subr.mxu0 0.0
        %2303 = vmatpush1.msra.mxu0 0.0
        %2304 = vmatprep.subr.mxu0 0.0
        %2305 = vmatpush1.msra.mxu0 0.0
        %2306 = vmatprep.subr.mxu0 0.0
        %2307 = vmatpush1.msra.mxu0 0.0
        %2308 = vmatprep.subr.mxu0 0.0
        %2309 = vmatpush1.msra.mxu0 0.0
        %2310 = vmatprep.mubr.f32.mxu0 0.0
        %2311 = vmatmul.mubr.f32.gmra.mrb[0].mxu0 %v2244
        %v2312 = vpop.f32.mrb[0].mxu0
        %v2313 = vadd.f32 %v470, %v2312
        %v2314 = vpop.f32.mrb[0].mxu0
        %2315 = vdwg.mxu0
        %v2317 = vrot.slane %v2313, 3
        %v2318 = vrot.slane %v2313, 4
        %v2319 = vrot.slane %v2313, 5
        %v2320 = vrot.slane %v2313, 6
        %v2321 = vrot.slane %v2313, 7
        %v2322 = vrot.slane %v2313, 1
        %v2323 = vrot.slane %v2313, 2
        %v2332 = vadd.f32 %v425, %v2317
        %v2333 = vadd.f32 %v430, %v2318
        %v2334 = vadd.f32 %v435, %v2319
        %v2335 = vadd.f32 %v440, %v2320
        %v2336 = vadd.f32 %v445, %v2321
        %v2337 = vadd.f32 %v450, %v2313
        %v2338 = vadd.f32 %v455, %v2322
        %v2339 = vadd.f32 %v460, %v2323
        %v2340 = vxor.u32 %v2332, 2147483648
        %v2341 = vxor.u32 %v2333, 2147483648
        %v2342 = vxor.u32 %v2334, 2147483648
        %v2343 = vxor.u32 %v2335, 2147483648
        %v2344 = vxor.u32 %v2336, 2147483648
        %v2345 = vxor.u32 %v2337, 2147483648
        %v2346 = vxor.u32 %v2338, 2147483648
        %v2347 = vxor.u32 %v2339, 2147483648
        %v2348 = vmul.f32 %v2340, 1.442695
        %v2349 = vpow.pop %v2348
        %v2350 = vmul.f32 %v2341, 1.442695
        %v2351 = vpow.pop %v2350
        %v2352 = vmul.f32 %v2342, 1.442695
        %v2353 = vpow.pop %v2352
        %v2354 = vmul.f32 %v2343, 1.442695
        %v2355 = vpow.pop %v2354
        %v2356 = vmul.f32 %v2344, 1.442695
        %v2357 = vpow.pop %v2356
        %v2358 = vmul.f32 %v2345, 1.442695
        %v2359 = vpow.pop %v2358
        %v2360 = vmul.f32 %v2346, 1.442695
        %v2361 = vpow.pop %v2360
        %v2362 = vmul.f32 %v2347, 1.442695
        %v2363 = vpow.pop %v2362
        %v2364 = vadd.f32 %v2349, 1.0
        %v2365 = vadd.f32 %v2351, 1.0
        %v2366 = vadd.f32 %v2353, 1.0
        %v2367 = vadd.f32 %v2355, 1.0
        %v2368 = vadd.f32 %v2357, 1.0
        %v2369 = vadd.f32 %v2359, 1.0
        %v2370 = vadd.f32 %v2361, 1.0
        %v2371 = vadd.f32 %v2363, 1.0
        %v2372 = vrcp.pop %v2364
        %v2373 = vmul.f32 1.0, %v2372
        %v2374 = vrcp.pop %v2365
        %v2375 = vmul.f32 1.0, %v2374
        %v2376 = vrcp.pop %v2366
        %v2377 = vmul.f32 1.0, %v2376
        %v2378 = vrcp.pop %v2367
        %v2379 = vmul.f32 1.0, %v2378
        %v2380 = vrcp.pop %v2368
        %v2381 = vmul.f32 1.0, %v2380
        %v2382 = vrcp.pop %v2369
        %v2383 = vmul.f32 1.0, %v2382
        %v2384 = vrcp.pop %v2370
        %v2385 = vmul.f32 1.0, %v2384
        %v2386 = vrcp.pop %v2371
        %v2387 = vmul.f32 1.0, %v2386
        %2388 = vrot.lane.b32.xlu0 %v2317, 96
        %v2389 = vpop.permute.xlu0 %2388
        %2390 = vrot.lane.b32.xlu0 %v2318, 96
        %v2391 = vpop.permute.xlu0 %2390
        %2392 = vrot.lane.b32.xlu0 %v2319, 96
        %v2393 = vpop.permute.xlu0 %2392
        %2394 = vrot.lane.b32.xlu0 %v2320, 96
        %v2395 = vpop.permute.xlu0 %2394
        %2396 = vrot.lane.b32.xlu0 %v2321, 96
        %v2397 = vpop.permute.xlu0 %2396
        %2398 = vrot.lane.b32.xlu0 %v2313, 96
        %v2399 = vpop.permute.xlu0 %2398
        %2400 = vrot.lane.b32.xlu0 %v2322, 96
        %v2401 = vpop.permute.xlu0 %2400
        %2402 = vrot.lane.b32.xlu0 %v2323, 96
        %v2403 = vpop.permute.xlu0 %2402
        %v2412 = vmul.f32 %v2373, %v2389
        %v2413 = vmul.f32 %v2375, %v2391
        %v2414 = vmul.f32 %v2377, %v2393
        %v2415 = vmul.f32 %v2379, %v2395
        %v2416 = vmul.f32 %v2381, %v2397
        %v2417 = vmul.f32 %v2383, %v2399
        %v2418 = vmul.f32 %v2385, %v2401
        %v2419 = vmul.f32 %v2387, %v2403
        %2428 = vrot.lane.b32.xlu0 %v2412, 32
        %v2429 = vpop.permute.xlu0 %2428
        %2430 = vrot.lane.b32.xlu0 %v2413, 32
        %v2431 = vpop.permute.xlu0 %2430
        %2432 = vrot.lane.b32.xlu0 %v2414, 32
        %v2433 = vpop.permute.xlu0 %2432
        %2434 = vrot.lane.b32.xlu0 %v2415, 32
        %v2435 = vpop.permute.xlu0 %2434
        %2436 = vrot.lane.b32.xlu0 %v2416, 32
        %v2437 = vpop.permute.xlu0 %2436
        %2438 = vrot.lane.b32.xlu0 %v2417, 32
        %v2439 = vpop.permute.xlu0 %2438
        %2440 = vrot.lane.b32.xlu0 %v2418, 32
        %v2441 = vpop.permute.xlu0 %2440
        %2442 = vrot.lane.b32.xlu0 %v2419, 32
        %v2443 = vpop.permute.xlu0 %2442
        %v2452 = vadd.f32 %v425, %v2429
        %v2453 = vadd.f32 %v430, %v2431
        %v2454 = vadd.f32 %v435, %v2433
        %v2455 = vadd.f32 %v440, %v2435
        %v2456 = vadd.f32 %v445, %v2437
        %v2457 = vadd.f32 %v450, %v2439
        %v2458 = vadd.f32 %v455, %v2441
        %v2459 = vadd.f32 %v460, %v2443
        %v2460 = vtanh.pop %v2452
        %v2461 = vtanh.pop %v2453
        %v2462 = vtanh.pop %v2454
        %v2463 = vtanh.pop %v2455
        %v2464 = vtanh.pop %v2456
        %v2465 = vtanh.pop %v2457
        %v2466 = vtanh.pop %v2458
        %v2467 = vtanh.pop %v2459
        %v2468 = vsub.f32 1.0, %v2373
        %v2469 = vsub.f32 1.0, %v2375
        %v2470 = vsub.f32 1.0, %v2377
        %v2471 = vsub.f32 1.0, %v2379
        %v2472 = vsub.f32 1.0, %v2381
        %v2473 = vsub.f32 1.0, %v2383
        %v2474 = vsub.f32 1.0, %v2385
        %v2475 = vsub.f32 1.0, %v2387
        %2484 = vrot.lane.b32.xlu0 %v2460, 112
        %v2485 = vpop.permute.xlu0 %2484
        %2486 = vrot.lane.b32.xlu0 %v2461, 112
        %v2487 = vpop.permute.xlu0 %2486
        %2488 = vrot.lane.b32.xlu0 %v2462, 112
        %v2489 = vpop.permute.xlu0 %2488
        %2490 = vrot.lane.b32.xlu0 %v2463, 112
        %v2491 = vpop.permute.xlu0 %2490
        %2492 = vrot.lane.b32.xlu0 %v2464, 112
        %v2493 = vpop.permute.xlu0 %2492
        %2494 = vrot.lane.b32.xlu0 %v2465, 112
        %v2495 = vpop.permute.xlu0 %2494
        %2496 = vrot.lane.b32.xlu0 %v2466, 112
        %v2497 = vpop.permute.xlu0 %2496
        %2498 = vrot.lane.b32.xlu0 %v2467, 112
        %v2499 = vpop.permute.xlu0 %2498
        %v2508 = vmul.f32 %v2468, %v2485
        %v2509 = vmul.f32 %v2469, %v2487
        %v2510 = vmul.f32 %v2470, %v2489
        %v2511 = vmul.f32 %v2471, %v2491
        %v2512 = vmul.f32 %v2472, %v2493
        %v2513 = vmul.f32 %v2473, %v2495
        %v2514 = vmul.f32 %v2474, %v2497
        %v2515 = vmul.f32 %v2475, %v2499
        %v2516 = vrot.slane %v2242, 3
        %v2517 = vrot.slane %v2242, 4
        %v2518 = vrot.slane %v2242, 5
        %v2519 = vrot.slane %v2242, 6
        %v2520 = vrot.slane %v2242, 7
        %v2521 = vrot.slane %v2242, 1
        %v2522 = vrot.slane %v2242, 2
        %2523 = vrot.lane.b32.xlu0 %v2516, 16
        %v2524 = vpop.permute.xlu0 %2523
        %2525 = vrot.lane.b32.xlu0 %v2517, 16
        %v2526 = vpop.permute.xlu0 %2525
        %2527 = vrot.lane.b32.xlu0 %v2518, 16
        %v2528 = vpop.permute.xlu0 %2527
        %2529 = vrot.lane.b32.xlu0 %v2519, 16
        %v2530 = vpop.permute.xlu0 %2529
        %2531 = vrot.lane.b32.xlu0 %v2520, 16
        %v2532 = vpop.permute.xlu0 %2531
        %2533 = vrot.lane.b32.xlu0 %v2242, 16
        %v2534 = vpop.permute.xlu0 %2533
        %2535 = vrot.lane.b32.xlu0 %v2521, 16
        %v2536 = vpop.permute.xlu0 %2535
        %2537 = vrot.lane.b32.xlu0 %v2522, 16
        %v2538 = vpop.permute.xlu0 %2537
        %v2547 = vmul.f32 %v2373, %v2524
        %v2548 = vmul.f32 %v2375, %v2526
        %v2549 = vmul.f32 %v2377, %v2528
        %v2550 = vmul.f32 %v2379, %v2530
        %v2551 = vmul.f32 %v2381, %v2532
        %v2552 = vmul.f32 %v2383, %v2534
        %v2553 = vmul.f32 %v2385, %v2536
        %v2554 = vmul.f32 %v2387, %v2538
        %v2555 = vadd.f32 %v2508, %v2547
        %v2556 = vadd.f32 %v2509, %v2548
        %v2557 = vadd.f32 %v2510, %v2549
        %v2558 = vadd.f32 %v2511, %v2550
        %v2559 = vadd.f32 %v2512, %v2551
        %v2560 = vadd.f32 %v2513, %v2552
        %v2561 = vadd.f32 %v2514, %v2553
        %v2562 = vadd.f32 %v2515, %v2554
        %2564 = vset.pattern.permute.xlu0 0
        %2565 = vperm.xlu0 %2564, %v317
        %v2566 = vpop.permute.xlu0 %2565
        %v2576 = vrot.slane %v2555, 5
        %v2577 = vrot.slane %v2556, 4
        %v2578 = vsel %vm775, %v2577, %v2576
        %v2579 = vrot.slane %v2557, 3
        %v2580 = vsel %vm778, %v2579, %v2578
        %v2581 = vrot.slane %v2558, 2
        %v2582 = vsel %vm781, %v2581, %v2580
        %v2583 = vrot.slane %v2559, 1
        %v2584 = vsel %vm784, %v2583, %v2582
        %v2585 = vsel %vm787, %v2560, %v2584
        %v2586 = vrot.slane %v2561, 7
        %v2587 = vsel %vm790, %v2586, %v2585
        %v2588 = vrot.slane %v2562, 6
        %v2589 = vsel %vm793, %v2588, %v2587
        %2590 = vrot.lane.b32.xlu0 %v2589, 112
        %v2591 = vpop.permute.xlu0 %2590
        %v2593 = vmul.f32 %v2566, %v2591
        %v2594 = vsub.f32 1.0, %v317
        %2596 = vset.pattern.permute.xlu0 0
        %2597 = vperm.xlu0 %2596, %v2594
        %v2598 = vpop.permute.xlu0 %2597
        %v2600 = vmul.f32 %v2598, %v2242
        %v2601 = vadd.f32 %v2593, %v2600
        %v2603 = vsel %vm333, %v2601, 0
        %2605 = vmatprep.subr.mxu0 0.0
        %2606 = vmatpush1.msra.mxu0 %v463
        %2607 = vmatprep.subr.mxu0 0.0
        %2608 = vmatpush1.msra.mxu0 %v464
        %2609 = vmatprep.subr.mxu0 0.0
        %2610 = vmatpush1.msra.mxu0 0.0
        %2611 = vmatprep.subr.mxu0 0.0
        %2612 = vmatpush1.msra.mxu0 0.0
        %2613 = vmatprep.subr.mxu0 0.0
        %2614 = vmatpush1.msra.mxu0 0.0
        %2615 = vmatprep.subr.mxu0 0.0
        %2616 = vmatpush1.msra.mxu0 0.0
        %2617 = vmatprep.subr.mxu0 0.0
        %2618 = vmatpush1.msra.mxu0 0.0
        %2619 = vmatprep.subr.mxu0 0.0
        %2620 = vmatpush1.msra.mxu0 0.0
        %2621 = vmatprep.subr.mxu0 0.0
        %2622 = vmatpush1.msra.mxu0 0.0
        %2623 = vmatprep.subr.mxu0 0.0
        %2624 = vmatpush1.msra.mxu0 0.0
        %2625 = vmatprep.subr.mxu0 0.0
        %2626 = vmatpush1.msra.mxu0 0.0
        %2627 = vmatprep.subr.mxu0 0.0
        %2628 = vmatpush1.msra.mxu0 0.0
        %2629 = vmatprep.subr.mxu0 0.0
        %2630 = vmatpush1.msra.mxu0 0.0
        %2631 = vmatprep.subr.mxu0 0.0
        %2632 = vmatpush1.msra.mxu0 0.0
        %2633 = vmatprep.subr.mxu0 0.0
        %2634 = vmatpush1.msra.mxu0 0.0
        %2635 = vmatprep.subr.mxu0 0.0
        %2636 = vmatpush1.msra.mxu0 0.0
        %2637 = vmatprep.subr.mxu0 0.0
        %2638 = vmatpush1.msra.mxu0 0.0
        %2639 = vmatprep.subr.mxu0 0.0
        %2640 = vmatpush1.msra.mxu0 0.0
        %2641 = vmatprep.subr.mxu0 0.0
        %2642 = vmatpush1.msra.mxu0 0.0
        %2643 = vmatprep.subr.mxu0 0.0
        %2644 = vmatpush1.msra.mxu0 0.0
        %2645 = vmatprep.subr.mxu0 0.0
        %2646 = vmatpush1.msra.mxu0 0.0
        %2647 = vmatprep.subr.mxu0 0.0
        %2648 = vmatpush1.msra.mxu0 0.0
        %2649 = vmatprep.subr.mxu0 0.0
        %2650 = vmatpush1.msra.mxu0 0.0
        %2651 = vmatprep.subr.mxu0 0.0
        %2652 = vmatpush1.msra.mxu0 0.0
        %2653 = vmatprep.subr.mxu0 0.0
        %2654 = vmatpush1.msra.mxu0 0.0
        %2655 = vmatprep.subr.mxu0 0.0
        %2656 = vmatpush1.msra.mxu0 0.0
        %2657 = vmatprep.subr.mxu0 0.0
        %2658 = vmatpush1.msra.mxu0 0.0
        %2659 = vmatprep.subr.mxu0 0.0
        %2660 = vmatpush1.msra.mxu0 0.0
        %2661 = vmatprep.subr.mxu0 0.0
        %2662 = vmatpush1.msra.mxu0 0.0
        %2663 = vmatprep.subr.mxu0 0.0
        %2664 = vmatpush1.msra.mxu0 0.0
        %2665 = vmatprep.subr.mxu0 0.0
        %2666 = vmatpush1.msra.mxu0 0.0
        %2667 = vmatprep.subr.mxu0 0.0
        %2668 = vmatpush1.msra.mxu0 0.0
        %2669 = vmatprep.mubr.f32.mxu0 0.0
        %2670 = vmatmul.mubr.f32.gmra.mrb[0].mxu0 %v2603
        %v2671 = vpop.f32.mrb[0].mxu0
        %v2672 = vadd.f32 %v470, %v2671
        %v2673 = vpop.f32.mrb[0].mxu0
        %2674 = vdwg.mxu0
        %v2676 = vrot.slane %v2672, 2
        %v2677 = vrot.slane %v2672, 3
        %v2678 = vrot.slane %v2672, 4
        %v2679 = vrot.slane %v2672, 5
        %v2680 = vrot.slane %v2672, 6
        %v2681 = vrot.slane %v2672, 7
        %v2682 = vrot.slane %v2672, 1
        %v2691 = vadd.f32 %v425, %v2676
        %v2692 = vadd.f32 %v430, %v2677
        %v2693 = vadd.f32 %v435, %v2678
        %v2694 = vadd.f32 %v440, %v2679
        %v2695 = vadd.f32 %v445, %v2680
        %v2696 = vadd.f32 %v450, %v2681
        %v2697 = vadd.f32 %v455, %v2672
        %v2698 = vadd.f32 %v460, %v2682
        %v2699 = vxor.u32 %v2691, 2147483648
        %v2700 = vxor.u32 %v2692, 2147483648
        %v2701 = vxor.u32 %v2693, 2147483648
        %v2702 = vxor.u32 %v2694, 2147483648
        %v2703 = vxor.u32 %v2695, 2147483648
        %v2704 = vxor.u32 %v2696, 2147483648
        %v2705 = vxor.u32 %v2697, 2147483648
        %v2706 = vxor.u32 %v2698, 2147483648
        %v2707 = vmul.f32 %v2699, 1.442695
        %v2708 = vpow.pop %v2707
        %v2709 = vmul.f32 %v2700, 1.442695
        %v2710 = vpow.pop %v2709
        %v2711 = vmul.f32 %v2701, 1.442695
        %v2712 = vpow.pop %v2711
        %v2713 = vmul.f32 %v2702, 1.442695
        %v2714 = vpow.pop %v2713
        %v2715 = vmul.f32 %v2703, 1.442695
        %v2716 = vpow.pop %v2715
        %v2717 = vmul.f32 %v2704, 1.442695
        %v2718 = vpow.pop %v2717
        %v2719 = vmul.f32 %v2705, 1.442695
        %v2720 = vpow.pop %v2719
        %v2721 = vmul.f32 %v2706, 1.442695
        %v2722 = vpow.pop %v2721
        %v2723 = vadd.f32 %v2708, 1.0
        %v2724 = vadd.f32 %v2710, 1.0
        %v2725 = vadd.f32 %v2712, 1.0
        %v2726 = vadd.f32 %v2714, 1.0
        %v2727 = vadd.f32 %v2716, 1.0
        %v2728 = vadd.f32 %v2718, 1.0
        %v2729 = vadd.f32 %v2720, 1.0
        %v2730 = vadd.f32 %v2722, 1.0
        %v2731 = vrcp.pop %v2723
        %v2732 = vmul.f32 1.0, %v2731
        %v2733 = vrcp.pop %v2724
        %v2734 = vmul.f32 1.0, %v2733
        %v2735 = vrcp.pop %v2725
        %v2736 = vmul.f32 1.0, %v2735
        %v2737 = vrcp.pop %v2726
        %v2738 = vmul.f32 1.0, %v2737
        %v2739 = vrcp.pop %v2727
        %v2740 = vmul.f32 1.0, %v2739
        %v2741 = vrcp.pop %v2728
        %v2742 = vmul.f32 1.0, %v2741
        %v2743 = vrcp.pop %v2729
        %v2744 = vmul.f32 1.0, %v2743
        %v2745 = vrcp.pop %v2730
        %v2746 = vmul.f32 1.0, %v2745
        %2747 = vrot.lane.b32.xlu0 %v2676, 96
        %v2748 = vpop.permute.xlu0 %2747
        %2749 = vrot.lane.b32.xlu0 %v2677, 96
        %v2750 = vpop.permute.xlu0 %2749
        %2751 = vrot.lane.b32.xlu0 %v2678, 96
        %v2752 = vpop.permute.xlu0 %2751
        %2753 = vrot.lane.b32.xlu0 %v2679, 96
        %v2754 = vpop.permute.xlu0 %2753
        %2755 = vrot.lane.b32.xlu0 %v2680, 96
        %v2756 = vpop.permute.xlu0 %2755
        %2757 = vrot.lane.b32.xlu0 %v2681, 96
        %v2758 = vpop.permute.xlu0 %2757
        %2759 = vrot.lane.b32.xlu0 %v2672, 96
        %v2760 = vpop.permute.xlu0 %2759
        %2761 = vrot.lane.b32.xlu0 %v2682, 96
        %v2762 = vpop.permute.xlu0 %2761
        %v2771 = vmul.f32 %v2732, %v2748
        %v2772 = vmul.f32 %v2734, %v2750
        %v2773 = vmul.f32 %v2736, %v2752
        %v2774 = vmul.f32 %v2738, %v2754
        %v2775 = vmul.f32 %v2740, %v2756
        %v2776 = vmul.f32 %v2742, %v2758
        %v2777 = vmul.f32 %v2744, %v2760
        %v2778 = vmul.f32 %v2746, %v2762
        %2787 = vrot.lane.b32.xlu0 %v2771, 32
        %v2788 = vpop.permute.xlu0 %2787
        %2789 = vrot.lane.b32.xlu0 %v2772, 32
        %v2790 = vpop.permute.xlu0 %2789
        %2791 = vrot.lane.b32.xlu0 %v2773, 32
        %v2792 = vpop.permute.xlu0 %2791
        %2793 = vrot.lane.b32.xlu0 %v2774, 32
        %v2794 = vpop.permute.xlu0 %2793
        %2795 = vrot.lane.b32.xlu0 %v2775, 32
        %v2796 = vpop.permute.xlu0 %2795
        %2797 = vrot.lane.b32.xlu0 %v2776, 32
        %v2798 = vpop.permute.xlu0 %2797
        %2799 = vrot.lane.b32.xlu0 %v2777, 32
        %v2800 = vpop.permute.xlu0 %2799
        %2801 = vrot.lane.b32.xlu0 %v2778, 32
        %v2802 = vpop.permute.xlu0 %2801
        %v2811 = vadd.f32 %v425, %v2788
        %v2812 = vadd.f32 %v430, %v2790
        %v2813 = vadd.f32 %v435, %v2792
        %v2814 = vadd.f32 %v440, %v2794
        %v2815 = vadd.f32 %v445, %v2796
        %v2816 = vadd.f32 %v450, %v2798
        %v2817 = vadd.f32 %v455, %v2800
        %v2818 = vadd.f32 %v460, %v2802
        %v2819 = vtanh.pop %v2811
        %v2820 = vtanh.pop %v2812
        %v2821 = vtanh.pop %v2813
        %v2822 = vtanh.pop %v2814
        %v2823 = vtanh.pop %v2815
        %v2824 = vtanh.pop %v2816
        %v2825 = vtanh.pop %v2817
        %v2826 = vtanh.pop %v2818
        %v2827 = vsub.f32 1.0, %v2732
        %v2828 = vsub.f32 1.0, %v2734
        %v2829 = vsub.f32 1.0, %v2736
        %v2830 = vsub.f32 1.0, %v2738
        %v2831 = vsub.f32 1.0, %v2740
        %v2832 = vsub.f32 1.0, %v2742
        %v2833 = vsub.f32 1.0, %v2744
        %v2834 = vsub.f32 1.0, %v2746
        %2843 = vrot.lane.b32.xlu0 %v2819, 112
        %v2844 = vpop.permute.xlu0 %2843
        %2845 = vrot.lane.b32.xlu0 %v2820, 112
        %v2846 = vpop.permute.xlu0 %2845
        %2847 = vrot.lane.b32.xlu0 %v2821, 112
        %v2848 = vpop.permute.xlu0 %2847
        %2849 = vrot.lane.b32.xlu0 %v2822, 112
        %v2850 = vpop.permute.xlu0 %2849
        %2851 = vrot.lane.b32.xlu0 %v2823, 112
        %v2852 = vpop.permute.xlu0 %2851
        %2853 = vrot.lane.b32.xlu0 %v2824, 112
        %v2854 = vpop.permute.xlu0 %2853
        %2855 = vrot.lane.b32.xlu0 %v2825, 112
        %v2856 = vpop.permute.xlu0 %2855
        %2857 = vrot.lane.b32.xlu0 %v2826, 112
        %v2858 = vpop.permute.xlu0 %2857
        %v2867 = vmul.f32 %v2827, %v2844
        %v2868 = vmul.f32 %v2828, %v2846
        %v2869 = vmul.f32 %v2829, %v2848
        %v2870 = vmul.f32 %v2830, %v2850
        %v2871 = vmul.f32 %v2831, %v2852
        %v2872 = vmul.f32 %v2832, %v2854
        %v2873 = vmul.f32 %v2833, %v2856
        %v2874 = vmul.f32 %v2834, %v2858
        %v2875 = vrot.slane %v2601, 2
        %v2876 = vrot.slane %v2601, 3
        %v2877 = vrot.slane %v2601, 4
        %v2878 = vrot.slane %v2601, 5
        %v2879 = vrot.slane %v2601, 6
        %v2880 = vrot.slane %v2601, 7
        %v2881 = vrot.slane %v2601, 1
        %2882 = vrot.lane.b32.xlu0 %v2875, 16
        %v2883 = vpop.permute.xlu0 %2882
        %2884 = vrot.lane.b32.xlu0 %v2876, 16
        %v2885 = vpop.permute.xlu0 %2884
        %2886 = vrot.lane.b32.xlu0 %v2877, 16
        %v2887 = vpop.permute.xlu0 %2886
        %2888 = vrot.lane.b32.xlu0 %v2878, 16
        %v2889 = vpop.permute.xlu0 %2888
        %2890 = vrot.lane.b32.xlu0 %v2879, 16
        %v2891 = vpop.permute.xlu0 %2890
        %2892 = vrot.lane.b32.xlu0 %v2880, 16
        %v2893 = vpop.permute.xlu0 %2892
        %2894 = vrot.lane.b32.xlu0 %v2601, 16
        %v2895 = vpop.permute.xlu0 %2894
        %2896 = vrot.lane.b32.xlu0 %v2881, 16
        %v2897 = vpop.permute.xlu0 %2896
        %v2906 = vmul.f32 %v2732, %v2883
        %v2907 = vmul.f32 %v2734, %v2885
        %v2908 = vmul.f32 %v2736, %v2887
        %v2909 = vmul.f32 %v2738, %v2889
        %v2910 = vmul.f32 %v2740, %v2891
        %v2911 = vmul.f32 %v2742, %v2893
        %v2912 = vmul.f32 %v2744, %v2895
        %v2913 = vmul.f32 %v2746, %v2897
        %v2914 = vadd.f32 %v2867, %v2906
        %v2915 = vadd.f32 %v2868, %v2907
        %v2916 = vadd.f32 %v2869, %v2908
        %v2917 = vadd.f32 %v2870, %v2909
        %v2918 = vadd.f32 %v2871, %v2910
        %v2919 = vadd.f32 %v2872, %v2911
        %v2920 = vadd.f32 %v2873, %v2912
        %v2921 = vadd.f32 %v2874, %v2913
        %2923 = vset.pattern.permute.xlu0 0
        %2924 = vperm.xlu0 %2923, %v320
        %v2925 = vpop.permute.xlu0 %2924
        %v2935 = vrot.slane %v2914, 6
        %v2936 = vrot.slane %v2915, 5
        %v2937 = vsel %vm775, %v2936, %v2935
        %v2938 = vrot.slane %v2916, 4
        %v2939 = vsel %vm778, %v2938, %v2937
        %v2940 = vrot.slane %v2917, 3
        %v2941 = vsel %vm781, %v2940, %v2939
        %v2942 = vrot.slane %v2918, 2
        %v2943 = vsel %vm784, %v2942, %v2941
        %v2944 = vrot.slane %v2919, 1
        %v2945 = vsel %vm787, %v2944, %v2943
        %v2946 = vsel %vm790, %v2920, %v2945
        %v2947 = vrot.slane %v2921, 7
        %v2948 = vsel %vm793, %v2947, %v2946
        %2949 = vrot.lane.b32.xlu0 %v2948, 112
        %v2950 = vpop.permute.xlu0 %2949
        %v2952 = vmul.f32 %v2925, %v2950
        %v2953 = vsub.f32 1.0, %v320
        %2955 = vset.pattern.permute.xlu0 0
        %2956 = vperm.xlu0 %2955, %v2953
        %v2957 = vpop.permute.xlu0 %2956
        %v2959 = vmul.f32 %v2957, %v2601
        %v2960 = vadd.f32 %v2952, %v2959
        %v2962 = vsel %vm333, %v2960, 0
        %2964 = vmatprep.subr.mxu0 0.0
        %2965 = vmatpush1.msra.mxu0 %v463
        %2966 = vmatprep.subr.mxu0 0.0
        %2967 = vmatpush1.msra.mxu0 %v464
        %2968 = vmatprep.subr.mxu0 0.0
        %2969 = vmatpush1.msra.mxu0 0.0
        %2970 = vmatprep.subr.mxu0 0.0
        %2971 = vmatpush1.msra.mxu0 0.0
        %2972 = vmatprep.subr.mxu0 0.0
        %2973 = vmatpush1.msra.mxu0 0.0
        %2974 = vmatprep.subr.mxu0 0.0
        %2975 = vmatpush1.msra.mxu0 0.0
        %2976 = vmatprep.subr.mxu0 0.0
        %2977 = vmatpush1.msra.mxu0 0.0
        %2978 = vmatprep.subr.mxu0 0.0
        %2979 = vmatpush1.msra.mxu0 0.0
        %2980 = vmatprep.subr.mxu0 0.0
        %2981 = vmatpush1.msra.mxu0 0.0
        %2982 = vmatprep.subr.mxu0 0.0
        %2983 = vmatpush1.msra.mxu0 0.0
        %2984 = vmatprep.subr.mxu0 0.0
        %2985 = vmatpush1.msra.mxu0 0.0
        %2986 = vmatprep.subr.mxu0 0.0
        %2987 = vmatpush1.msra.mxu0 0.0
        %2988 = vmatprep.subr.mxu0 0.0
        %2989 = vmatpush1.msra.mxu0 0.0
        %2990 = vmatprep.subr.mxu0 0.0
        %2991 = vmatpush1.msra.mxu0 0.0
        %2992 = vmatprep.subr.mxu0 0.0
        %2993 = vmatpush1.msra.mxu0 0.0
        %2994 = vmatprep.subr.mxu0 0.0
        %2995 = vmatpush1.msra.mxu0 0.0
        %2996 = vmatprep.subr.mxu0 0.0
        %2997 = vmatpush1.msra.mxu0 0.0
        %2998 = vmatprep.subr.mxu0 0.0
        %2999 = vmatpush1.msra.mxu0 0.0
        %3000 = vmatprep.subr.mxu0 0.0
        %3001 = vmatpush1.msra.mxu0 0.0
        %3002 = vmatprep.subr.mxu0 0.0
        %3003 = vmatpush1.msra.mxu0 0.0
        %3004 = vmatprep.subr.mxu0 0.0
        %3005 = vmatpush1.msra.mxu0 0.0
        %3006 = vmatprep.subr.mxu0 0.0
        %3007 = vmatpush1.msra.mxu0 0.0
        %3008 = vmatprep.subr.mxu0 0.0
        %3009 = vmatpush1.msra.mxu0 0.0
        %3010 = vmatprep.subr.mxu0 0.0
        %3011 = vmatpush1.msra.mxu0 0.0
        %3012 = vmatprep.subr.mxu0 0.0
        %3013 = vmatpush1.msra.mxu0 0.0
        %3014 = vmatprep.subr.mxu0 0.0
        %3015 = vmatpush1.msra.mxu0 0.0
        %3016 = vmatprep.subr.mxu0 0.0
        %3017 = vmatpush1.msra.mxu0 0.0
        %3018 = vmatprep.subr.mxu0 0.0
        %3019 = vmatpush1.msra.mxu0 0.0
        %3020 = vmatprep.subr.mxu0 0.0
        %3021 = vmatpush1.msra.mxu0 0.0
        %3022 = vmatprep.subr.mxu0 0.0
        %3023 = vmatpush1.msra.mxu0 0.0
        %3024 = vmatprep.subr.mxu0 0.0
        %3025 = vmatpush1.msra.mxu0 0.0
        %3026 = vmatprep.subr.mxu0 0.0
        %3027 = vmatpush1.msra.mxu0 0.0
        %3028 = vmatprep.mubr.f32.mxu0 0.0
        %3029 = vmatmul.mubr.f32.gmra.mrb[0].mxu0 %v2962
        %v3030 = vpop.f32.mrb[0].mxu0
        %v3031 = vadd.f32 %v470, %v3030
        %v3032 = vpop.f32.mrb[0].mxu0
        %3033 = vdwg.mxu0
        %v3035 = vrot.slane %v3031, 1
        %v3036 = vrot.slane %v3031, 2
        %v3037 = vrot.slane %v3031, 3
        %v3038 = vrot.slane %v3031, 4
        %v3039 = vrot.slane %v3031, 5
        %v3040 = vrot.slane %v3031, 6
        %v3041 = vrot.slane %v3031, 7
        %v3050 = vadd.f32 %v425, %v3035
        %v3051 = vadd.f32 %v430, %v3036
        %v3052 = vadd.f32 %v435, %v3037
        %v3053 = vadd.f32 %v440, %v3038
        %v3054 = vadd.f32 %v445, %v3039
        %v3055 = vadd.f32 %v450, %v3040
        %v3056 = vadd.f32 %v455, %v3041
        %v3057 = vadd.f32 %v460, %v3031
        %v3058 = vxor.u32 %v3050, 2147483648
        %v3059 = vxor.u32 %v3051, 2147483648
        %v3060 = vxor.u32 %v3052, 2147483648
        %v3061 = vxor.u32 %v3053, 2147483648
        %v3062 = vxor.u32 %v3054, 2147483648
        %v3063 = vxor.u32 %v3055, 2147483648
        %v3064 = vxor.u32 %v3056, 2147483648
        %v3065 = vxor.u32 %v3057, 2147483648
        %v3066 = vmul.f32 %v3058, 1.442695
        %v3067 = vpow.pop %v3066
        %v3068 = vmul.f32 %v3059, 1.442695
        %v3069 = vpow.pop %v3068
        %v3070 = vmul.f32 %v3060, 1.442695
        %v3071 = vpow.pop %v3070
        %v3072 = vmul.f32 %v3061, 1.442695
        %v3073 = vpow.pop %v3072
        %v3074 = vmul.f32 %v3062, 1.442695
        %v3075 = vpow.pop %v3074
        %v3076 = vmul.f32 %v3063, 1.442695
        %v3077 = vpow.pop %v3076
        %v3078 = vmul.f32 %v3064, 1.442695
        %v3079 = vpow.pop %v3078
        %v3080 = vmul.f32 %v3065, 1.442695
        %v3081 = vpow.pop %v3080
        %v3082 = vadd.f32 %v3067, 1.0
        %v3083 = vadd.f32 %v3069, 1.0
        %v3084 = vadd.f32 %v3071, 1.0
        %v3085 = vadd.f32 %v3073, 1.0
        %v3086 = vadd.f32 %v3075, 1.0
        %v3087 = vadd.f32 %v3077, 1.0
        %v3088 = vadd.f32 %v3079, 1.0
        %v3089 = vadd.f32 %v3081, 1.0
        %v3090 = vrcp.pop %v3082
        %v3091 = vmul.f32 1.0, %v3090
        %v3092 = vrcp.pop %v3083
        %v3093 = vmul.f32 1.0, %v3092
        %v3094 = vrcp.pop %v3084
        %v3095 = vmul.f32 1.0, %v3094
        %v3096 = vrcp.pop %v3085
        %v3097 = vmul.f32 1.0, %v3096
        %v3098 = vrcp.pop %v3086
        %v3099 = vmul.f32 1.0, %v3098
        %v3100 = vrcp.pop %v3087
        %v3101 = vmul.f32 1.0, %v3100
        %v3102 = vrcp.pop %v3088
        %v3103 = vmul.f32 1.0, %v3102
        %v3104 = vrcp.pop %v3089
        %v3105 = vmul.f32 1.0, %v3104
        %3106 = vrot.lane.b32.xlu0 %v3035, 96
        %v3107 = vpop.permute.xlu0 %3106
        %3108 = vrot.lane.b32.xlu0 %v3036, 96
        %v3109 = vpop.permute.xlu0 %3108
        %3110 = vrot.lane.b32.xlu0 %v3037, 96
        %v3111 = vpop.permute.xlu0 %3110
        %3112 = vrot.lane.b32.xlu0 %v3038, 96
        %v3113 = vpop.permute.xlu0 %3112
        %3114 = vrot.lane.b32.xlu0 %v3039, 96
        %v3115 = vpop.permute.xlu0 %3114
        %3116 = vrot.lane.b32.xlu0 %v3040, 96
        %v3117 = vpop.permute.xlu0 %3116
        %3118 = vrot.lane.b32.xlu0 %v3041, 96
        %v3119 = vpop.permute.xlu0 %3118
        %3120 = vrot.lane.b32.xlu0 %v3031, 96
        %v3121 = vpop.permute.xlu0 %3120
        %v3130 = vmul.f32 %v3091, %v3107
        %v3131 = vmul.f32 %v3093, %v3109
        %v3132 = vmul.f32 %v3095, %v3111
        %v3133 = vmul.f32 %v3097, %v3113
        %v3134 = vmul.f32 %v3099, %v3115
        %v3135 = vmul.f32 %v3101, %v3117
        %v3136 = vmul.f32 %v3103, %v3119
        %v3137 = vmul.f32 %v3105, %v3121
        %3146 = vrot.lane.b32.xlu0 %v3130, 32
        %v3147 = vpop.permute.xlu0 %3146
        %3148 = vrot.lane.b32.xlu0 %v3131, 32
        %v3149 = vpop.permute.xlu0 %3148
        %3150 = vrot.lane.b32.xlu0 %v3132, 32
        %v3151 = vpop.permute.xlu0 %3150
        %3152 = vrot.lane.b32.xlu0 %v3133, 32
        %v3153 = vpop.permute.xlu0 %3152
        %3154 = vrot.lane.b32.xlu0 %v3134, 32
        %v3155 = vpop.permute.xlu0 %3154
        %3156 = vrot.lane.b32.xlu0 %v3135, 32
        %v3157 = vpop.permute.xlu0 %3156
        %3158 = vrot.lane.b32.xlu0 %v3136, 32
        %v3159 = vpop.permute.xlu0 %3158
        %3160 = vrot.lane.b32.xlu0 %v3137, 32
        %v3161 = vpop.permute.xlu0 %3160
        %v3170 = vadd.f32 %v425, %v3147
        %v3171 = vadd.f32 %v430, %v3149
        %v3172 = vadd.f32 %v435, %v3151
        %v3173 = vadd.f32 %v440, %v3153
        %v3174 = vadd.f32 %v445, %v3155
        %v3175 = vadd.f32 %v450, %v3157
        %v3176 = vadd.f32 %v455, %v3159
        %v3177 = vadd.f32 %v460, %v3161
        %v3178 = vtanh.pop %v3170
        %v3179 = vtanh.pop %v3171
        %v3180 = vtanh.pop %v3172
        %v3181 = vtanh.pop %v3173
        %v3182 = vtanh.pop %v3174
        %v3183 = vtanh.pop %v3175
        %v3184 = vtanh.pop %v3176
        %v3185 = vtanh.pop %v3177
        %v3186 = vsub.f32 1.0, %v3091
        %v3187 = vsub.f32 1.0, %v3093
        %v3188 = vsub.f32 1.0, %v3095
        %v3189 = vsub.f32 1.0, %v3097
        %v3190 = vsub.f32 1.0, %v3099
        %v3191 = vsub.f32 1.0, %v3101
        %v3192 = vsub.f32 1.0, %v3103
        %v3193 = vsub.f32 1.0, %v3105
        %3202 = vrot.lane.b32.xlu0 %v3178, 112
        %v3203 = vpop.permute.xlu0 %3202
        %3204 = vrot.lane.b32.xlu0 %v3179, 112
        %v3205 = vpop.permute.xlu0 %3204
        %3206 = vrot.lane.b32.xlu0 %v3180, 112
        %v3207 = vpop.permute.xlu0 %3206
        %3208 = vrot.lane.b32.xlu0 %v3181, 112
        %v3209 = vpop.permute.xlu0 %3208
        %3210 = vrot.lane.b32.xlu0 %v3182, 112
        %v3211 = vpop.permute.xlu0 %3210
        %3212 = vrot.lane.b32.xlu0 %v3183, 112
        %v3213 = vpop.permute.xlu0 %3212
        %3214 = vrot.lane.b32.xlu0 %v3184, 112
        %v3215 = vpop.permute.xlu0 %3214
        %3216 = vrot.lane.b32.xlu0 %v3185, 112
        %v3217 = vpop.permute.xlu0 %3216
        %v3226 = vmul.f32 %v3186, %v3203
        %v3227 = vmul.f32 %v3187, %v3205
        %v3228 = vmul.f32 %v3188, %v3207
        %v3229 = vmul.f32 %v3189, %v3209
        %v3230 = vmul.f32 %v3190, %v3211
        %v3231 = vmul.f32 %v3191, %v3213
        %v3232 = vmul.f32 %v3192, %v3215
        %v3233 = vmul.f32 %v3193, %v3217
        %v3234 = vrot.slane %v2960, 1
        %v3235 = vrot.slane %v2960, 2
        %v3236 = vrot.slane %v2960, 3
        %v3237 = vrot.slane %v2960, 4
        %v3238 = vrot.slane %v2960, 5
        %v3239 = vrot.slane %v2960, 6
        %v3240 = vrot.slane %v2960, 7
        %3241 = vrot.lane.b32.xlu0 %v3234, 16
        %v3242 = vpop.permute.xlu0 %3241
        %3243 = vrot.lane.b32.xlu0 %v3235, 16
        %v3244 = vpop.permute.xlu0 %3243
        %3245 = vrot.lane.b32.xlu0 %v3236, 16
        %v3246 = vpop.permute.xlu0 %3245
        %3247 = vrot.lane.b32.xlu0 %v3237, 16
        %v3248 = vpop.permute.xlu0 %3247
        %3249 = vrot.lane.b32.xlu0 %v3238, 16
        %v3250 = vpop.permute.xlu0 %3249
        %3251 = vrot.lane.b32.xlu0 %v3239, 16
        %v3252 = vpop.permute.xlu0 %3251
        %3253 = vrot.lane.b32.xlu0 %v3240, 16
        %v3254 = vpop.permute.xlu0 %3253
        %3255 = vrot.lane.b32.xlu0 %v2960, 16
        %v3256 = vpop.permute.xlu0 %3255
        %v3265 = vmul.f32 %v3091, %v3242
        %v3266 = vmul.f32 %v3093, %v3244
        %v3267 = vmul.f32 %v3095, %v3246
        %v3268 = vmul.f32 %v3097, %v3248
        %v3269 = vmul.f32 %v3099, %v3250
        %v3270 = vmul.f32 %v3101, %v3252
        %v3271 = vmul.f32 %v3103, %v3254
        %v3272 = vmul.f32 %v3105, %v3256
        %v3273 = vadd.f32 %v3226, %v3265
        %v3274 = vadd.f32 %v3227, %v3266
        %v3275 = vadd.f32 %v3228, %v3267
        %v3276 = vadd.f32 %v3229, %v3268
        %v3277 = vadd.f32 %v3230, %v3269
        %v3278 = vadd.f32 %v3231, %v3270
        %v3279 = vadd.f32 %v3232, %v3271
        %v3280 = vadd.f32 %v3233, %v3272
        %3282 = vset.pattern.permute.xlu0 0
        %3283 = vperm.xlu0 %3282, %v323
        %v3284 = vpop.permute.xlu0 %3283
        %v3294 = vrot.slane %v3273, 7
        %v3295 = vrot.slane %v3274, 6
        %v3296 = vsel %vm775, %v3295, %v3294
        %v3297 = vrot.slane %v3275, 5
        %v3298 = vsel %vm778, %v3297, %v3296
        %v3299 = vrot.slane %v3276, 4
        %v3300 = vsel %vm781, %v3299, %v3298
        %v3301 = vrot.slane %v3277, 3
        %v3302 = vsel %vm784, %v3301, %v3300
        %v3303 = vrot.slane %v3278, 2
        %v3304 = vsel %vm787, %v3303, %v3302
        %v3305 = vrot.slane %v3279, 1
        %v3306 = vsel %vm790, %v3305, %v3304
        %v3307 = vsel %vm793, %v3280, %v3306
        %3308 = vrot.lane.b32.xlu0 %v3307, 112
        %v3309 = vpop.permute.xlu0 %3308
        %v3311 = vmul.f32 %v3284, %v3309
        %s3312 = scalar_lea.vmem %s4, 16
        %v3313 = vld [vmem:[%s3312] sm:$0xff]
        %v3314 = vld [vmem:[%s3312 + $0x8] sm:$0xff]
        %s3315 = scalar_lea.vmem %s5, 1
        %v3316 = vld [vmem:[%s3315] sm:$0x1]
        %v3318 = vlaneseq
        %v3319 = vshrl.u32 %v3318, 7
        %v3320 = vsub.s32 0, %v3319
        %v3321 = vrot.slane %v3316, %v3320
        %3323 = vmatprep.subr.mxu0 0.0
        %3324 = vmatpush1.msra.mxu0 %v3313
        %3325 = vmatprep.subr.mxu0 0.0
        %3326 = vmatpush1.msra.mxu0 %v3314
        %3327 = vmatprep.subr.mxu0 0.0
        %3328 = vmatpush1.msra.mxu0 0.0
        %3329 = vmatprep.subr.mxu0 0.0
        %3330 = vmatpush1.msra.mxu0 0.0
        %3331 = vmatprep.subr.mxu0 0.0
        %3332 = vmatpush1.msra.mxu0 0.0
        %3333 = vmatprep.subr.mxu0 0.0
        %3334 = vmatpush1.msra.mxu0 0.0
        %3335 = vmatprep.subr.mxu0 0.0
        %3336 = vmatpush1.msra.mxu0 0.0
        %3337 = vmatprep.subr.mxu0 0.0
        %3338 = vmatpush1.msra.mxu0 0.0
        %3339 = vmatprep.subr.mxu0 0.0
        %3340 = vmatpush1.msra.mxu0 0.0
        %3341 = vmatprep.subr.mxu0 0.0
        %3342 = vmatpush1.msra.mxu0 0.0
        %3343 = vmatprep.subr.mxu0 0.0
        %3344 = vmatpush1.msra.mxu0 0.0
        %3345 = vmatprep.subr.mxu0 0.0
        %3346 = vmatpush1.msra.mxu0 0.0
        %3347 = vmatprep.subr.mxu0 0.0
        %3348 = vmatpush1.msra.mxu0 0.0
        %3349 = vmatprep.subr.mxu0 0.0
        %3350 = vmatpush1.msra.mxu0 0.0
        %3351 = vmatprep.subr.mxu0 0.0
        %3352 = vmatpush1.msra.mxu0 0.0
        %3353 = vmatprep.subr.mxu0 0.0
        %3354 = vmatpush1.msra.mxu0 0.0
        %3355 = vmatprep.subr.mxu0 0.0
        %3356 = vmatpush1.msra.mxu0 0.0
        %3357 = vmatprep.subr.mxu0 0.0
        %3358 = vmatpush1.msra.mxu0 0.0
        %3359 = vmatprep.subr.mxu0 0.0
        %3360 = vmatpush1.msra.mxu0 0.0
        %3361 = vmatprep.subr.mxu0 0.0
        %3362 = vmatpush1.msra.mxu0 0.0
        %3363 = vmatprep.subr.mxu0 0.0
        %3364 = vmatpush1.msra.mxu0 0.0
        %3365 = vmatprep.subr.mxu0 0.0
        %3366 = vmatpush1.msra.mxu0 0.0
        %3367 = vmatprep.subr.mxu0 0.0
        %3368 = vmatpush1.msra.mxu0 0.0
        %3369 = vmatprep.subr.mxu0 0.0
        %3370 = vmatpush1.msra.mxu0 0.0
        %3371 = vmatprep.subr.mxu0 0.0
        %3372 = vmatpush1.msra.mxu0 0.0
        %3373 = vmatprep.subr.mxu0 0.0
        %3374 = vmatpush1.msra.mxu0 0.0
        %3375 = vmatprep.subr.mxu0 0.0
        %3376 = vmatpush1.msra.mxu0 0.0
        %3377 = vmatprep.subr.mxu0 0.0
        %3378 = vmatpush1.msra.mxu0 0.0
        %3379 = vmatprep.subr.mxu0 0.0
        %3380 = vmatpush1.msra.mxu0 0.0
        %3381 = vmatprep.subr.mxu0 0.0
        %3382 = vmatpush1.msra.mxu0 0.0
        %3383 = vmatprep.subr.mxu0 0.0
        %3384 = vmatpush1.msra.mxu0 0.0
        %3385 = vmatprep.subr.mxu0 0.0
        %3386 = vmatpush1.msra.mxu0 0.0
        %3387 = vmatprep.mubr.f32.mxu0 0.0
        %3388 = vmatmul.mubr.f32.gmra.mrb[0].mxu0 %v473
        %v3389 = vpop.f32.mrb[0].mxu0
        %v3390 = vadd.f32 %v3321, %v3389
        %v3391 = vpop.f32.mrb[0].mxu0
        %3392 = vdwg.mxu0
        %v3394 = vrot.slane %v3390, 1
        %v3395 = vrot.slane %v3390, 2
        %v3396 = vrot.slane %v3390, 3
        %v3397 = vrot.slane %v3390, 4
        %v3398 = vrot.slane %v3390, 5
        %v3399 = vrot.slane %v3390, 6
        %v3400 = vrot.slane %v3390, 7
        %3401 = vrot.lane.b32.xlu0 %v3394, 48
        %v3402 = vpop.permute.xlu0 %3401
        %3403 = vrot.lane.b32.xlu0 %v3395, 48
        %v3404 = vpop.permute.xlu0 %3403
        %3405 = vrot.lane.b32.xlu0 %v3396, 48
        %v3406 = vpop.permute.xlu0 %3405
        %3407 = vrot.lane.b32.xlu0 %v3397, 48
        %v3408 = vpop.permute.xlu0 %3407
        %3409 = vrot.lane.b32.xlu0 %v3398, 48
        %v3410 = vpop.permute.xlu0 %3409
        %3411 = vrot.lane.b32.xlu0 %v3399, 48
        %v3412 = vpop.permute.xlu0 %3411
        %3413 = vrot.lane.b32.xlu0 %v3400, 48
        %v3414 = vpop.permute.xlu0 %3413
        %3415 = vrot.lane.b32.xlu0 %v3390, 48
        %v3416 = vpop.permute.xlu0 %3415
        %v3425 = vadd.f32 %v425, %v3402
        %v3426 = vadd.f32 %v430, %v3404
        %v3427 = vadd.f32 %v435, %v3406
        %v3428 = vadd.f32 %v440, %v3408
        %v3429 = vadd.f32 %v445, %v3410
        %v3430 = vadd.f32 %v450, %v3412
        %v3431 = vadd.f32 %v455, %v3414
        %v3432 = vadd.f32 %v460, %v3416
        %v3433 = vxor.u32 %v3425, 2147483648
        %v3434 = vxor.u32 %v3426, 2147483648
        %v3435 = vxor.u32 %v3427, 2147483648
        %v3436 = vxor.u32 %v3428, 2147483648
        %v3437 = vxor.u32 %v3429, 2147483648
        %v3438 = vxor.u32 %v3430, 2147483648
        %v3439 = vxor.u32 %v3431, 2147483648
        %v3440 = vxor.u32 %v3432, 2147483648
        %v3441 = vmul.f32 %v3433, 1.442695
        %v3442 = vpow.pop %v3441
        %v3443 = vmul.f32 %v3434, 1.442695
        %v3444 = vpow.pop %v3443
        %v3445 = vmul.f32 %v3435, 1.442695
        %v3446 = vpow.pop %v3445
        %v3447 = vmul.f32 %v3436, 1.442695
        %v3448 = vpow.pop %v3447
        %v3449 = vmul.f32 %v3437, 1.442695
        %v3450 = vpow.pop %v3449
        %v3451 = vmul.f32 %v3438, 1.442695
        %v3452 = vpow.pop %v3451
        %v3453 = vmul.f32 %v3439, 1.442695
        %v3454 = vpow.pop %v3453
        %v3455 = vmul.f32 %v3440, 1.442695
        %v3456 = vpow.pop %v3455
        %v3457 = vadd.f32 %v3442, 1.0
        %v3458 = vadd.f32 %v3444, 1.0
        %v3459 = vadd.f32 %v3446, 1.0
        %v3460 = vadd.f32 %v3448, 1.0
        %v3461 = vadd.f32 %v3450, 1.0
        %v3462 = vadd.f32 %v3452, 1.0
        %v3463 = vadd.f32 %v3454, 1.0
        %v3464 = vadd.f32 %v3456, 1.0
        %v3465 = vrcp.pop %v3457
        %v3466 = vmul.f32 1.0, %v3465
        %v3467 = vrcp.pop %v3458
        %v3468 = vmul.f32 1.0, %v3467
        %v3469 = vrcp.pop %v3459
        %v3470 = vmul.f32 1.0, %v3469
        %v3471 = vrcp.pop %v3460
        %v3472 = vmul.f32 1.0, %v3471
        %v3473 = vrcp.pop %v3461
        %v3474 = vmul.f32 1.0, %v3473
        %v3475 = vrcp.pop %v3462
        %v3476 = vmul.f32 1.0, %v3475
        %v3477 = vrcp.pop %v3463
        %v3478 = vmul.f32 1.0, %v3477
        %v3479 = vrcp.pop %v3464
        %v3480 = vmul.f32 1.0, %v3479
        %3481 = vrot.lane.b32.xlu0 %v3394, 16
        %v3482 = vpop.permute.xlu0 %3481
        %3483 = vrot.lane.b32.xlu0 %v3395, 16
        %v3484 = vpop.permute.xlu0 %3483
        %3485 = vrot.lane.b32.xlu0 %v3396, 16
        %v3486 = vpop.permute.xlu0 %3485
        %3487 = vrot.lane.b32.xlu0 %v3397, 16
        %v3488 = vpop.permute.xlu0 %3487
        %3489 = vrot.lane.b32.xlu0 %v3398, 16
        %v3490 = vpop.permute.xlu0 %3489
        %3491 = vrot.lane.b32.xlu0 %v3399, 16
        %v3492 = vpop.permute.xlu0 %3491
        %3493 = vrot.lane.b32.xlu0 %v3400, 16
        %v3494 = vpop.permute.xlu0 %3493
        %3495 = vrot.lane.b32.xlu0 %v3390, 16
        %v3496 = vpop.permute.xlu0 %3495
        %v3505 = vmul.f32 %v3466, %v3482
        %v3506 = vmul.f32 %v3468, %v3484
        %v3507 = vmul.f32 %v3470, %v3486
        %v3508 = vmul.f32 %v3472, %v3488
        %v3509 = vmul.f32 %v3474, %v3490
        %v3510 = vmul.f32 %v3476, %v3492
        %v3511 = vmul.f32 %v3478, %v3494
        %v3512 = vmul.f32 %v3480, %v3496
        %3521 = vrot.lane.b32.xlu0 %v3505, 32
        %v3522 = vpop.permute.xlu0 %3521
        %3523 = vrot.lane.b32.xlu0 %v3506, 32
        %v3524 = vpop.permute.xlu0 %3523
        %3525 = vrot.lane.b32.xlu0 %v3507, 32
        %v3526 = vpop.permute.xlu0 %3525
        %3527 = vrot.lane.b32.xlu0 %v3508, 32
        %v3528 = vpop.permute.xlu0 %3527
        %3529 = vrot.lane.b32.xlu0 %v3509, 32
        %v3530 = vpop.permute.xlu0 %3529
        %3531 = vrot.lane.b32.xlu0 %v3510, 32
        %v3532 = vpop.permute.xlu0 %3531
        %3533 = vrot.lane.b32.xlu0 %v3511, 32
        %v3534 = vpop.permute.xlu0 %3533
        %3535 = vrot.lane.b32.xlu0 %v3512, 32
        %v3536 = vpop.permute.xlu0 %3535
        %v3545 = vadd.f32 %v425, %v3522
        %v3546 = vadd.f32 %v430, %v3524
        %v3547 = vadd.f32 %v435, %v3526
        %v3548 = vadd.f32 %v440, %v3528
        %v3549 = vadd.f32 %v445, %v3530
        %v3550 = vadd.f32 %v450, %v3532
        %v3551 = vadd.f32 %v455, %v3534
        %v3552 = vadd.f32 %v460, %v3536
        %v3553 = vtanh.pop %v3545
        %v3554 = vtanh.pop %v3546
        %v3555 = vtanh.pop %v3547
        %v3556 = vtanh.pop %v3548
        %v3557 = vtanh.pop %v3549
        %v3558 = vtanh.pop %v3550
        %v3559 = vtanh.pop %v3551
        %v3560 = vtanh.pop %v3552
        %v3561 = vsub.f32 1.0, %v3466
        %v3562 = vsub.f32 1.0, %v3468
        %v3563 = vsub.f32 1.0, %v3470
        %v3564 = vsub.f32 1.0, %v3472
        %v3565 = vsub.f32 1.0, %v3474
        %v3566 = vsub.f32 1.0, %v3476
        %v3567 = vsub.f32 1.0, %v3478
        %v3568 = vsub.f32 1.0, %v3480
        %3577 = vrot.lane.b32.xlu0 %v3553, 112
        %v3578 = vpop.permute.xlu0 %3577
        %3579 = vrot.lane.b32.xlu0 %v3554, 112
        %v3580 = vpop.permute.xlu0 %3579
        %3581 = vrot.lane.b32.xlu0 %v3555, 112
        %v3582 = vpop.permute.xlu0 %3581
        %3583 = vrot.lane.b32.xlu0 %v3556, 112
        %v3584 = vpop.permute.xlu0 %3583
        %3585 = vrot.lane.b32.xlu0 %v3557, 112
        %v3586 = vpop.permute.xlu0 %3585
        %3587 = vrot.lane.b32.xlu0 %v3558, 112
        %v3588 = vpop.permute.xlu0 %3587
        %3589 = vrot.lane.b32.xlu0 %v3559, 112
        %v3590 = vpop.permute.xlu0 %3589
        %3591 = vrot.lane.b32.xlu0 %v3560, 112
        %v3592 = vpop.permute.xlu0 %3591
        %v3601 = vmul.f32 %v3561, %v3578
        %v3602 = vmul.f32 %v3562, %v3580
        %v3603 = vmul.f32 %v3563, %v3582
        %v3604 = vmul.f32 %v3564, %v3584
        %v3605 = vmul.f32 %v3565, %v3586
        %v3606 = vmul.f32 %v3566, %v3588
        %v3607 = vmul.f32 %v3567, %v3590
        %v3608 = vmul.f32 %v3568, %v3592
        %v3609 = vmul.f32 %v3466, 0.0
        %v3610 = vmul.f32 %v3468, 0.0
        %v3611 = vmul.f32 %v3470, 0.0
        %v3612 = vmul.f32 %v3472, 0.0
        %v3613 = vmul.f32 %v3474, 0.0
        %v3614 = vmul.f32 %v3476, 0.0
        %v3615 = vmul.f32 %v3478, 0.0
        %v3616 = vmul.f32 %v3480, 0.0
        %v3617 = vadd.f32 %v3601, %v3609
        %v3618 = vadd.f32 %v3602, %v3610
        %v3619 = vadd.f32 %v3603, %v3611
        %v3620 = vadd.f32 %v3604, %v3612
        %v3621 = vadd.f32 %v3605, %v3613
        %v3622 = vadd.f32 %v3606, %v3614
        %v3623 = vadd.f32 %v3607, %v3615
        %v3624 = vadd.f32 %v3608, %v3616
        %v3633 = vrot.slane %v3617, 7
        %v3634 = vrot.slane %v3618, 6
        %v3635 = vsel %vm775, %v3634, %v3633
        %v3636 = vrot.slane %v3619, 5
        %v3637 = vsel %vm778, %v3636, %v3635
        %v3638 = vrot.slane %v3620, 4
        %v3639 = vsel %vm781, %v3638, %v3637
        %v3640 = vrot.slane %v3621, 3
        %v3641 = vsel %vm784, %v3640, %v3639
        %v3642 = vrot.slane %v3622, 2
        %v3643 = vsel %vm787, %v3642, %v3641
        %v3644 = vrot.slane %v3623, 1
        %v3645 = vsel %vm790, %v3644, %v3643
        %v3646 = vsel %vm793, %v3624, %v3645
        %3647 = vrot.lane.b32.xlu0 %v3646, 64
        %v3648 = vpop.permute.xlu0 %3647
        %v3650 = vmul.f32 %v3284, %v3648
        %v3651 = vsub.f32 1.0, %v323
        %3653 = vset.pattern.permute.xlu0 0
        %3654 = vperm.xlu0 %3653, %v3651
        %v3655 = vpop.permute.xlu0 %3654
        %v3657 = vmul.f32 %v3655, 0.0
        %v3658 = vadd.f32 %v3650, %v3657
        %v3660 = vsel %vm333, %v3658, 0
        %3662 = vmatprep.subr.mxu0 0.0
        %3663 = vmatpush1.msra.mxu0 %v3313
        %3664 = vmatprep.subr.mxu0 0.0
        %3665 = vmatpush1.msra.mxu0 %v3314
        %3666 = vmatprep.subr.mxu0 0.0
        %3667 = vmatpush1.msra.mxu0 0.0
        %3668 = vmatprep.subr.mxu0 0.0
        %3669 = vmatpush1.msra.mxu0 0.0
        %3670 = vmatprep.subr.mxu0 0.0
        %3671 = vmatpush1.msra.mxu0 0.0
        %3672 = vmatprep.subr.mxu0 0.0
        %3673 = vmatpush1.msra.mxu0 0.0
        %3674 = vmatprep.subr.mxu0 0.0
        %3675 = vmatpush1.msra.mxu0 0.0
        %3676 = vmatprep.subr.mxu0 0.0
        %3677 = vmatpush1.msra.mxu0 0.0
        %3678 = vmatprep.subr.mxu0 0.0
        %3679 = vmatpush1.msra.mxu0 0.0
        %3680 = vmatprep.subr.mxu0 0.0
        %3681 = vmatpush1.msra.mxu0 0.0
        %3682 = vmatprep.subr.mxu0 0.0
        %3683 = vmatpush1.msra.mxu0 0.0
        %3684 = vmatprep.subr.mxu0 0.0
        %3685 = vmatpush1.msra.mxu0 0.0
        %3686 = vmatprep.subr.mxu0 0.0
        %3687 = vmatpush1.msra.mxu0 0.0
        %3688 = vmatprep.subr.mxu0 0.0
        %3689 = vmatpush1.msra.mxu0 0.0
        %3690 = vmatprep.subr.mxu0 0.0
        %3691 = vmatpush1.msra.mxu0 0.0
        %3692 = vmatprep.subr.mxu0 0.0
        %3693 = vmatpush1.msra.mxu0 0.0
        %3694 = vmatprep.subr.mxu0 0.0
        %3695 = vmatpush1.msra.mxu0 0.0
        %3696 = vmatprep.subr.mxu0 0.0
        %3697 = vmatpush1.msra.mxu0 0.0
        %3698 = vmatprep.subr.mxu0 0.0
        %3699 = vmatpush1.msra.mxu0 0.0
        %3700 = vmatprep.subr.mxu0 0.0
        %3701 = vmatpush1.msra.mxu0 0.0
        %3702 = vmatprep.subr.mxu0 0.0
        %3703 = vmatpush1.msra.mxu0 0.0
        %3704 = vmatprep.subr.mxu0 0.0
        %3705 = vmatpush1.msra.mxu0 0.0
        %3706 = vmatprep.subr.mxu0 0.0
        %3707 = vmatpush1.msra.mxu0 0.0
        %3708 = vmatprep.subr.mxu0 0.0
        %3709 = vmatpush1.msra.mxu0 0.0
        %3710 = vmatprep.subr.mxu0 0.0
        %3711 = vmatpush1.msra.mxu0 0.0
        %3712 = vmatprep.subr.mxu0 0.0
        %3713 = vmatpush1.msra.mxu0 0.0
        %3714 = vmatprep.subr.mxu0 0.0
        %3715 = vmatpush1.msra.mxu0 0.0
        %3716 = vmatprep.subr.mxu0 0.0
        %3717 = vmatpush1.msra.mxu0 0.0
        %3718 = vmatprep.subr.mxu0 0.0
        %3719 = vmatpush1.msra.mxu0 0.0
        %3720 = vmatprep.subr.mxu0 0.0
        %3721 = vmatpush1.msra.mxu0 0.0
        %3722 = vmatprep.subr.mxu0 0.0
        %3723 = vmatpush1.msra.mxu0 0.0
        %3724 = vmatprep.subr.mxu0 0.0
        %3725 = vmatpush1.msra.mxu0 0.0
        %3726 = vmatprep.mubr.f32.mxu0 0.0
        %3727 = vmatmul.mubr.f32.gmra.mrb[0].mxu0 %v3660
        %v3728 = vpop.f32.mrb[0].mxu0
        %v3729 = vadd.f32 %v3321, %v3728
        %v3730 = vpop.f32.mrb[0].mxu0
        %3731 = vdwg.mxu0
        %v3733 = vrot.slane %v3729, 2
        %v3734 = vrot.slane %v3729, 3
        %v3735 = vrot.slane %v3729, 4
        %v3736 = vrot.slane %v3729, 5
        %v3737 = vrot.slane %v3729, 6
        %v3738 = vrot.slane %v3729, 7
        %v3739 = vrot.slane %v3729, 1
        %3740 = vrot.lane.b32.xlu0 %v3733, 48
        %v3741 = vpop.permute.xlu0 %3740
        %3742 = vrot.lane.b32.xlu0 %v3734, 48
        %v3743 = vpop.permute.xlu0 %3742
        %3744 = vrot.lane.b32.xlu0 %v3735, 48
        %v3745 = vpop.permute.xlu0 %3744
        %3746 = vrot.lane.b32.xlu0 %v3736, 48
        %v3747 = vpop.permute.xlu0 %3746
        %3748 = vrot.lane.b32.xlu0 %v3737, 48
        %v3749 = vpop.permute.xlu0 %3748
        %3750 = vrot.lane.b32.xlu0 %v3738, 48
        %v3751 = vpop.permute.xlu0 %3750
        %3752 = vrot.lane.b32.xlu0 %v3729, 48
        %v3753 = vpop.permute.xlu0 %3752
        %3754 = vrot.lane.b32.xlu0 %v3739, 48
        %v3755 = vpop.permute.xlu0 %3754
        %v3764 = vadd.f32 %v425, %v3741
        %v3765 = vadd.f32 %v430, %v3743
        %v3766 = vadd.f32 %v435, %v3745
        %v3767 = vadd.f32 %v440, %v3747
        %v3768 = vadd.f32 %v445, %v3749
        %v3769 = vadd.f32 %v450, %v3751
        %v3770 = vadd.f32 %v455, %v3753
        %v3771 = vadd.f32 %v460, %v3755
        %v3772 = vxor.u32 %v3764, 2147483648
        %v3773 = vxor.u32 %v3765, 2147483648
        %v3774 = vxor.u32 %v3766, 2147483648
        %v3775 = vxor.u32 %v3767, 2147483648
        %v3776 = vxor.u32 %v3768, 2147483648
        %v3777 = vxor.u32 %v3769, 2147483648
        %v3778 = vxor.u32 %v3770, 2147483648
        %v3779 = vxor.u32 %v3771, 2147483648
        %v3780 = vmul.f32 %v3772, 1.442695
        %v3781 = vpow.pop %v3780
        %v3782 = vmul.f32 %v3773, 1.442695
        %v3783 = vpow.pop %v3782
        %v3784 = vmul.f32 %v3774, 1.442695
        %v3785 = vpow.pop %v3784
        %v3786 = vmul.f32 %v3775, 1.442695
        %v3787 = vpow.pop %v3786
        %v3788 = vmul.f32 %v3776, 1.442695
        %v3789 = vpow.pop %v3788
        %v3790 = vmul.f32 %v3777, 1.442695
        %v3791 = vpow.pop %v3790
        %v3792 = vmul.f32 %v3778, 1.442695
        %v3793 = vpow.pop %v3792
        %v3794 = vmul.f32 %v3779, 1.442695
        %v3795 = vpow.pop %v3794
        %v3796 = vadd.f32 %v3781, 1.0
        %v3797 = vadd.f32 %v3783, 1.0
        %v3798 = vadd.f32 %v3785, 1.0
        %v3799 = vadd.f32 %v3787, 1.0
        %v3800 = vadd.f32 %v3789, 1.0
        %v3801 = vadd.f32 %v3791, 1.0
        %v3802 = vadd.f32 %v3793, 1.0
        %v3803 = vadd.f32 %v3795, 1.0
        %v3804 = vrcp.pop %v3796
        %v3805 = vmul.f32 1.0, %v3804
        %v3806 = vrcp.pop %v3797
        %v3807 = vmul.f32 1.0, %v3806
        %v3808 = vrcp.pop %v3798
        %v3809 = vmul.f32 1.0, %v3808
        %v3810 = vrcp.pop %v3799
        %v3811 = vmul.f32 1.0, %v3810
        %v3812 = vrcp.pop %v3800
        %v3813 = vmul.f32 1.0, %v3812
        %v3814 = vrcp.pop %v3801
        %v3815 = vmul.f32 1.0, %v3814
        %v3816 = vrcp.pop %v3802
        %v3817 = vmul.f32 1.0, %v3816
        %v3818 = vrcp.pop %v3803
        %v3819 = vmul.f32 1.0, %v3818
        %3820 = vrot.lane.b32.xlu0 %v3733, 16
        %v3821 = vpop.permute.xlu0 %3820
        %3822 = vrot.lane.b32.xlu0 %v3734, 16
        %v3823 = vpop.permute.xlu0 %3822
        %3824 = vrot.lane.b32.xlu0 %v3735, 16
        %v3825 = vpop.permute.xlu0 %3824
        %3826 = vrot.lane.b32.xlu0 %v3736, 16
        %v3827 = vpop.permute.xlu0 %3826
        %3828 = vrot.lane.b32.xlu0 %v3737, 16
        %v3829 = vpop.permute.xlu0 %3828
        %3830 = vrot.lane.b32.xlu0 %v3738, 16
        %v3831 = vpop.permute.xlu0 %3830
        %3832 = vrot.lane.b32.xlu0 %v3729, 16
        %v3833 = vpop.permute.xlu0 %3832
        %3834 = vrot.lane.b32.xlu0 %v3739, 16
        %v3835 = vpop.permute.xlu0 %3834
        %v3844 = vmul.f32 %v3805, %v3821
        %v3845 = vmul.f32 %v3807, %v3823
        %v3846 = vmul.f32 %v3809, %v3825
        %v3847 = vmul.f32 %v3811, %v3827
        %v3848 = vmul.f32 %v3813, %v3829
        %v3849 = vmul.f32 %v3815, %v3831
        %v3850 = vmul.f32 %v3817, %v3833
        %v3851 = vmul.f32 %v3819, %v3835
        %3860 = vrot.lane.b32.xlu0 %v3844, 32
        %v3861 = vpop.permute.xlu0 %3860
        %3862 = vrot.lane.b32.xlu0 %v3845, 32
        %v3863 = vpop.permute.xlu0 %3862
        %3864 = vrot.lane.b32.xlu0 %v3846, 32
        %v3865 = vpop.permute.xlu0 %3864
        %3866 = vrot.lane.b32.xlu0 %v3847, 32
        %v3867 = vpop.permute.xlu0 %3866
        %3868 = vrot.lane.b32.xlu0 %v3848, 32
        %v3869 = vpop.permute.xlu0 %3868
        %3870 = vrot.lane.b32.xlu0 %v3849, 32
        %v3871 = vpop.permute.xlu0 %3870
        %3872 = vrot.lane.b32.xlu0 %v3850, 32
        %v3873 = vpop.permute.xlu0 %3872
        %3874 = vrot.lane.b32.xlu0 %v3851, 32
        %v3875 = vpop.permute.xlu0 %3874
        %v3884 = vadd.f32 %v425, %v3861
        %v3885 = vadd.f32 %v430, %v3863
        %v3886 = vadd.f32 %v435, %v3865
        %v3887 = vadd.f32 %v440, %v3867
        %v3888 = vadd.f32 %v445, %v3869
        %v3889 = vadd.f32 %v450, %v3871
        %v3890 = vadd.f32 %v455, %v3873
        %v3891 = vadd.f32 %v460, %v3875
        %v3892 = vtanh.pop %v3884
        %v3893 = vtanh.pop %v3885
        %v3894 = vtanh.pop %v3886
        %v3895 = vtanh.pop %v3887
        %v3896 = vtanh.pop %v3888
        %v3897 = vtanh.pop %v3889
        %v3898 = vtanh.pop %v3890
        %v3899 = vtanh.pop %v3891
        %v3900 = vsub.f32 1.0, %v3805
        %v3901 = vsub.f32 1.0, %v3807
        %v3902 = vsub.f32 1.0, %v3809
        %v3903 = vsub.f32 1.0, %v3811
        %v3904 = vsub.f32 1.0, %v3813
        %v3905 = vsub.f32 1.0, %v3815
        %v3906 = vsub.f32 1.0, %v3817
        %v3907 = vsub.f32 1.0, %v3819
        %3916 = vrot.lane.b32.xlu0 %v3892, 112
        %v3917 = vpop.permute.xlu0 %3916
        %3918 = vrot.lane.b32.xlu0 %v3893, 112
        %v3919 = vpop.permute.xlu0 %3918
        %3920 = vrot.lane.b32.xlu0 %v3894, 112
        %v3921 = vpop.permute.xlu0 %3920
        %3922 = vrot.lane.b32.xlu0 %v3895, 112
        %v3923 = vpop.permute.xlu0 %3922
        %3924 = vrot.lane.b32.xlu0 %v3896, 112
        %v3925 = vpop.permute.xlu0 %3924
        %3926 = vrot.lane.b32.xlu0 %v3897, 112
        %v3927 = vpop.permute.xlu0 %3926
        %3928 = vrot.lane.b32.xlu0 %v3898, 112
        %v3929 = vpop.permute.xlu0 %3928
        %3930 = vrot.lane.b32.xlu0 %v3899, 112
        %v3931 = vpop.permute.xlu0 %3930
        %v3940 = vmul.f32 %v3900, %v3917
        %v3941 = vmul.f32 %v3901, %v3919
        %v3942 = vmul.f32 %v3902, %v3921
        %v3943 = vmul.f32 %v3903, %v3923
        %v3944 = vmul.f32 %v3904, %v3925
        %v3945 = vmul.f32 %v3905, %v3927
        %v3946 = vmul.f32 %v3906, %v3929
        %v3947 = vmul.f32 %v3907, %v3931
        %v3948 = vrot.slane %v3658, 2
        %v3949 = vrot.slane %v3658, 3
        %v3950 = vrot.slane %v3658, 4
        %v3951 = vrot.slane %v3658, 5
        %v3952 = vrot.slane %v3658, 6
        %v3953 = vrot.slane %v3658, 7
        %v3954 = vrot.slane %v3658, 1
        %3955 = vrot.lane.b32.xlu0 %v3948, 64
        %v3956 = vpop.permute.xlu0 %3955
        %3957 = vrot.lane.b32.xlu0 %v3949, 64
        %v3958 = vpop.permute.xlu0 %3957
        %3959 = vrot.lane.b32.xlu0 %v3950, 64
        %v3960 = vpop.permute.xlu0 %3959
        %3961 = vrot.lane.b32.xlu0 %v3951, 64
        %v3962 = vpop.permute.xlu0 %3961
        %3963 = vrot.lane.b32.xlu0 %v3952, 64
        %v3964 = vpop.permute.xlu0 %3963
        %3965 = vrot.lane.b32.xlu0 %v3953, 64
        %v3966 = vpop.permute.xlu0 %3965
        %3967 = vrot.lane.b32.xlu0 %v3658, 64
        %v3968 = vpop.permute.xlu0 %3967
        %3969 = vrot.lane.b32.xlu0 %v3954, 64
        %v3970 = vpop.permute.xlu0 %3969
        %v3979 = vmul.f32 %v3805, %v3956
        %v3980 = vmul.f32 %v3807, %v3958
        %v3981 = vmul.f32 %v3809, %v3960
        %v3982 = vmul.f32 %v3811, %v3962
        %v3983 = vmul.f32 %v3813, %v3964
        %v3984 = vmul.f32 %v3815, %v3966
        %v3985 = vmul.f32 %v3817, %v3968
        %v3986 = vmul.f32 %v3819, %v3970
        %v3987 = vadd.f32 %v3940, %v3979
        %v3988 = vadd.f32 %v3941, %v3980
        %v3989 = vadd.f32 %v3942, %v3981
        %v3990 = vadd.f32 %v3943, %v3982
        %v3991 = vadd.f32 %v3944, %v3983
        %v3992 = vadd.f32 %v3945, %v3984
        %v3993 = vadd.f32 %v3946, %v3985
        %v3994 = vadd.f32 %v3947, %v3986
        %v4003 = vrot.slane %v3987, 6
        %v4004 = vrot.slane %v3988, 5
        %v4005 = vsel %vm775, %v4004, %v4003
        %v4006 = vrot.slane %v3989, 4
        %v4007 = vsel %vm778, %v4006, %v4005
        %v4008 = vrot.slane %v3990, 3
        %v4009 = vsel %vm781, %v4008, %v4007
        %v4010 = vrot.slane %v3991, 2
        %v4011 = vsel %vm784, %v4010, %v4009
        %v4012 = vrot.slane %v3992, 1
        %v4013 = vsel %vm787, %v4012, %v4011
        %v4014 = vsel %vm790, %v3993, %v4013
        %v4015 = vrot.slane %v3994, 7
        %v4016 = vsel %vm793, %v4015, %v4014
        %4017 = vrot.lane.b32.xlu0 %v4016, 64
        %v4018 = vpop.permute.xlu0 %4017
        %v4020 = vmul.f32 %v2925, %v4018
        %v4021 = vmul.f32 %v2957, %v3658
        %v4022 = vadd.f32 %v4020, %v4021
        %v4024 = vsel %vm333, %v4022, 0
        %4026 = vmatprep.subr.mxu0 0.0
        %4027 = vmatpush1.msra.mxu0 %v3313
        %4028 = vmatprep.subr.mxu0 0.0
        %4029 = vmatpush1.msra.mxu0 %v3314
        %4030 = vmatprep.subr.mxu0 0.0
        %4031 = vmatpush1.msra.mxu0 0.0
        %4032 = vmatprep.subr.mxu0 0.0
        %4033 = vmatpush1.msra.mxu0 0.0
        %4034 = vmatprep.subr.mxu0 0.0
        %4035 = vmatpush1.msra.mxu0 0.0
        %4036 = vmatprep.subr.mxu0 0.0
        %4037 = vmatpush1.msra.mxu0 0.0
        %4038 = vmatprep.subr.mxu0 0.0
        %4039 = vmatpush1.msra.mxu0 0.0
        %4040 = vmatprep.subr.mxu0 0.0
        %4041 = vmatpush1.msra.mxu0 0.0
        %4042 = vmatprep.subr.mxu0 0.0
        %4043 = vmatpush1.msra.mxu0 0.0
        %4044 = vmatprep.subr.mxu0 0.0
        %4045 = vmatpush1.msra.mxu0 0.0
        %4046 = vmatprep.subr.mxu0 0.0
        %4047 = vmatpush1.msra.mxu0 0.0
        %4048 = vmatprep.subr.mxu0 0.0
        %4049 = vmatpush1.msra.mxu0 0.0
        %4050 = vmatprep.subr.mxu0 0.0
        %4051 = vmatpush1.msra.mxu0 0.0
        %4052 = vmatprep.subr.mxu0 0.0
        %4053 = vmatpush1.msra.mxu0 0.0
        %4054 = vmatprep.subr.mxu0 0.0
        %4055 = vmatpush1.msra.mxu0 0.0
        %4056 = vmatprep.subr.mxu0 0.0
        %4057 = vmatpush1.msra.mxu0 0.0
        %4058 = vmatprep.subr.mxu0 0.0
        %4059 = vmatpush1.msra.mxu0 0.0
        %4060 = vmatprep.subr.mxu0 0.0
        %4061 = vmatpush1.msra.mxu0 0.0
        %4062 = vmatprep.subr.mxu0 0.0
        %4063 = vmatpush1.msra.mxu0 0.0
        %4064 = vmatprep.subr.mxu0 0.0
        %4065 = vmatpush1.msra.mxu0 0.0
        %4066 = vmatprep.subr.mxu0 0.0
        %4067 = vmatpush1.msra.mxu0 0.0
        %4068 = vmatprep.subr.mxu0 0.0
        %4069 = vmatpush1.msra.mxu0 0.0
        %4070 = vmatprep.subr.mxu0 0.0
        %4071 = vmatpush1.msra.mxu0 0.0
        %4072 = vmatprep.subr.mxu0 0.0
        %4073 = vmatpush1.msra.mxu0 0.0
        %4074 = vmatprep.subr.mxu0 0.0
        %4075 = vmatpush1.msra.mxu0 0.0
        %4076 = vmatprep.subr.mxu0 0.0
        %4077 = vmatpush1.msra.mxu0 0.0
        %4078 = vmatprep.subr.mxu0 0.0
        %4079 = vmatpush1.msra.mxu0 0.0
        %4080 = vmatprep.subr.mxu0 0.0
        %4081 = vmatpush1.msra.mxu0 0.0
        %4082 = vmatprep.subr.mxu0 0.0
        %4083 = vmatpush1.msra.mxu0 0.0
        %4084 = vmatprep.subr.mxu0 0.0
        %4085 = vmatpush1.msra.mxu0 0.0
        %4086 = vmatprep.subr.mxu0 0.0
        %4087 = vmatpush1.msra.mxu0 0.0
        %4088 = vmatprep.subr.mxu0 0.0
        %4089 = vmatpush1.msra.mxu0 0.0
        %4090 = vmatprep.mubr.f32.mxu0 0.0
        %4091 = vmatmul.mubr.f32.gmra.mrb[0].mxu0 %v4024
        %v4092 = vpop.f32.mrb[0].mxu0
        %v4093 = vadd.f32 %v3321, %v4092
        %v4094 = vpop.f32.mrb[0].mxu0
        %4095 = vdwg.mxu0
        %v4097 = vrot.slane %v4093, 3
        %v4098 = vrot.slane %v4093, 4
        %v4099 = vrot.slane %v4093, 5
        %v4100 = vrot.slane %v4093, 6
        %v4101 = vrot.slane %v4093, 7
        %v4102 = vrot.slane %v4093, 1
        %v4103 = vrot.slane %v4093, 2
        %4104 = vrot.lane.b32.xlu0 %v4097, 48
        %v4105 = vpop.permute.xlu0 %4104
        %4106 = vrot.lane.b32.xlu0 %v4098, 48
        %v4107 = vpop.permute.xlu0 %4106
        %4108 = vrot.lane.b32.xlu0 %v4099, 48
        %v4109 = vpop.permute.xlu0 %4108
        %4110 = vrot.lane.b32.xlu0 %v4100, 48
        %v4111 = vpop.permute.xlu0 %4110
        %4112 = vrot.lane.b32.xlu0 %v4101, 48
        %v4113 = vpop.permute.xlu0 %4112
        %4114 = vrot.lane.b32.xlu0 %v4093, 48
        %v4115 = vpop.permute.xlu0 %4114
        %4116 = vrot.lane.b32.xlu0 %v4102, 48
        %v4117 = vpop.permute.xlu0 %4116
        %4118 = vrot.lane.b32.xlu0 %v4103, 48
        %v4119 = vpop.permute.xlu0 %4118
        %v4128 = vadd.f32 %v425, %v4105
        %v4129 = vadd.f32 %v430, %v4107
        %v4130 = vadd.f32 %v435, %v4109
        %v4131 = vadd.f32 %v440, %v4111
        %v4132 = vadd.f32 %v445, %v4113
        %v4133 = vadd.f32 %v450, %v4115
        %v4134 = vadd.f32 %v455, %v4117
        %v4135 = vadd.f32 %v460, %v4119
        %v4136 = vxor.u32 %v4128, 2147483648
        %v4137 = vxor.u32 %v4129, 2147483648
        %v4138 = vxor.u32 %v4130, 2147483648
        %v4139 = vxor.u32 %v4131, 2147483648
        %v4140 = vxor.u32 %v4132, 2147483648
        %v4141 = vxor.u32 %v4133, 2147483648
        %v4142 = vxor.u32 %v4134, 2147483648
        %v4143 = vxor.u32 %v4135, 2147483648
        %v4144 = vmul.f32 %v4136, 1.442695
        %v4145 = vpow.pop %v4144
        %v4146 = vmul.f32 %v4137, 1.442695
        %v4147 = vpow.pop %v4146
        %v4148 = vmul.f32 %v4138, 1.442695
        %v4149 = vpow.pop %v4148
        %v4150 = vmul.f32 %v4139, 1.442695
        %v4151 = vpow.pop %v4150
        %v4152 = vmul.f32 %v4140, 1.442695
        %v4153 = vpow.pop %v4152
        %v4154 = vmul.f32 %v4141, 1.442695
        %v4155 = vpow.pop %v4154
        %v4156 = vmul.f32 %v4142, 1.442695
        %v4157 = vpow.pop %v4156
        %v4158 = vmul.f32 %v4143, 1.442695
        %v4159 = vpow.pop %v4158
        %v4160 = vadd.f32 %v4145, 1.0
        %v4161 = vadd.f32 %v4147, 1.0
        %v4162 = vadd.f32 %v4149, 1.0
        %v4163 = vadd.f32 %v4151, 1.0
        %v4164 = vadd.f32 %v4153, 1.0
        %v4165 = vadd.f32 %v4155, 1.0
        %v4166 = vadd.f32 %v4157, 1.0
        %v4167 = vadd.f32 %v4159, 1.0
        %v4168 = vrcp.pop %v4160
        %v4169 = vmul.f32 1.0, %v4168
        %v4170 = vrcp.pop %v4161
        %v4171 = vmul.f32 1.0, %v4170
        %v4172 = vrcp.pop %v4162
        %v4173 = vmul.f32 1.0, %v4172
        %v4174 = vrcp.pop %v4163
        %v4175 = vmul.f32 1.0, %v4174
        %v4176 = vrcp.pop %v4164
        %v4177 = vmul.f32 1.0, %v4176
        %v4178 = vrcp.pop %v4165
        %v4179 = vmul.f32 1.0, %v4178
        %v4180 = vrcp.pop %v4166
        %v4181 = vmul.f32 1.0, %v4180
        %v4182 = vrcp.pop %v4167
        %v4183 = vmul.f32 1.0, %v4182
        %4184 = vrot.lane.b32.xlu0 %v4097, 16
        %v4185 = vpop.permute.xlu0 %4184
        %4186 = vrot.lane.b32.xlu0 %v4098, 16
        %v4187 = vpop.permute.xlu0 %4186
        %4188 = vrot.lane.b32.xlu0 %v4099, 16
        %v4189 = vpop.permute.xlu0 %4188
        %4190 = vrot.lane.b32.xlu0 %v4100, 16
        %v4191 = vpop.permute.xlu0 %4190
        %4192 = vrot.lane.b32.xlu0 %v4101, 16
        %v4193 = vpop.permute.xlu0 %4192
        %4194 = vrot.lane.b32.xlu0 %v4093, 16
        %v4195 = vpop.permute.xlu0 %4194
        %4196 = vrot.lane.b32.xlu0 %v4102, 16
        %v4197 = vpop.permute.xlu0 %4196
        %4198 = vrot.lane.b32.xlu0 %v4103, 16
        %v4199 = vpop.permute.xlu0 %4198
        %v4208 = vmul.f32 %v4169, %v4185
        %v4209 = vmul.f32 %v4171, %v4187
        %v4210 = vmul.f32 %v4173, %v4189
        %v4211 = vmul.f32 %v4175, %v4191
        %v4212 = vmul.f32 %v4177, %v4193
        %v4213 = vmul.f32 %v4179, %v4195
        %v4214 = vmul.f32 %v4181, %v4197
        %v4215 = vmul.f32 %v4183, %v4199
        %4224 = vrot.lane.b32.xlu0 %v4208, 32
        %v4225 = vpop.permute.xlu0 %4224
        %4226 = vrot.lane.b32.xlu0 %v4209, 32
        %v4227 = vpop.permute.xlu0 %4226
        %4228 = vrot.lane.b32.xlu0 %v4210, 32
        %v4229 = vpop.permute.xlu0 %4228
        %4230 = vrot.lane.b32.xlu0 %v4211, 32
        %v4231 = vpop.permute.xlu0 %4230
        %4232 = vrot.lane.b32.xlu0 %v4212, 32
        %v4233 = vpop.permute.xlu0 %4232
        %4234 = vrot.lane.b32.xlu0 %v4213, 32
        %v4235 = vpop.permute.xlu0 %4234
        %4236 = vrot.lane.b32.xlu0 %v4214, 32
        %v4237 = vpop.permute.xlu0 %4236
        %4238 = vrot.lane.b32.xlu0 %v4215, 32
        %v4239 = vpop.permute.xlu0 %4238
        %v4248 = vadd.f32 %v425, %v4225
        %v4249 = vadd.f32 %v430, %v4227
        %v4250 = vadd.f32 %v435, %v4229
        %v4251 = vadd.f32 %v440, %v4231
        %v4252 = vadd.f32 %v445, %v4233
        %v4253 = vadd.f32 %v450, %v4235
        %v4254 = vadd.f32 %v455, %v4237
        %v4255 = vadd.f32 %v460, %v4239
        %v4256 = vtanh.pop %v4248
        %v4257 = vtanh.pop %v4249
        %v4258 = vtanh.pop %v4250
        %v4259 = vtanh.pop %v4251
        %v4260 = vtanh.pop %v4252
        %v4261 = vtanh.pop %v4253
        %v4262 = vtanh.pop %v4254
        %v4263 = vtanh.pop %v4255
        %v4264 = vsub.f32 1.0, %v4169
        %v4265 = vsub.f32 1.0, %v4171
        %v4266 = vsub.f32 1.0, %v4173
        %v4267 = vsub.f32 1.0, %v4175
        %v4268 = vsub.f32 1.0, %v4177
        %v4269 = vsub.f32 1.0, %v4179
        %v4270 = vsub.f32 1.0, %v4181
        %v4271 = vsub.f32 1.0, %v4183
        %4280 = vrot.lane.b32.xlu0 %v4256, 112
        %v4281 = vpop.permute.xlu0 %4280
        %4282 = vrot.lane.b32.xlu0 %v4257, 112
        %v4283 = vpop.permute.xlu0 %4282
        %4284 = vrot.lane.b32.xlu0 %v4258, 112
        %v4285 = vpop.permute.xlu0 %4284
        %4286 = vrot.lane.b32.xlu0 %v4259, 112
        %v4287 = vpop.permute.xlu0 %4286
        %4288 = vrot.lane.b32.xlu0 %v4260, 112
        %v4289 = vpop.permute.xlu0 %4288
        %4290 = vrot.lane.b32.xlu0 %v4261, 112
        %v4291 = vpop.permute.xlu0 %4290
        %4292 = vrot.lane.b32.xlu0 %v4262, 112
        %v4293 = vpop.permute.xlu0 %4292
        %4294 = vrot.lane.b32.xlu0 %v4263, 112
        %v4295 = vpop.permute.xlu0 %4294
        %v4304 = vmul.f32 %v4264, %v4281
        %v4305 = vmul.f32 %v4265, %v4283
        %v4306 = vmul.f32 %v4266, %v4285
        %v4307 = vmul.f32 %v4267, %v4287
        %v4308 = vmul.f32 %v4268, %v4289
        %v4309 = vmul.f32 %v4269, %v4291
        %v4310 = vmul.f32 %v4270, %v4293
        %v4311 = vmul.f32 %v4271, %v4295
        %v4312 = vrot.slane %v4022, 3
        %v4313 = vrot.slane %v4022, 4
        %v4314 = vrot.slane %v4022, 5
        %v4315 = vrot.slane %v4022, 6
        %v4316 = vrot.slane %v4022, 7
        %v4317 = vrot.slane %v4022, 1
        %v4318 = vrot.slane %v4022, 2
        %4319 = vrot.lane.b32.xlu0 %v4312, 64
        %v4320 = vpop.permute.xlu0 %4319
        %4321 = vrot.lane.b32.xlu0 %v4313, 64
        %v4322 = vpop.permute.xlu0 %4321
        %4323 = vrot.lane.b32.xlu0 %v4314, 64
        %v4324 = vpop.permute.xlu0 %4323
        %4325 = vrot.lane.b32.xlu0 %v4315, 64
        %v4326 = vpop.permute.xlu0 %4325
        %4327 = vrot.lane.b32.xlu0 %v4316, 64
        %v4328 = vpop.permute.xlu0 %4327
        %4329 = vrot.lane.b32.xlu0 %v4022, 64
        %v4330 = vpop.permute.xlu0 %4329
        %4331 = vrot.lane.b32.xlu0 %v4317, 64
        %v4332 = vpop.permute.xlu0 %4331
        %4333 = vrot.lane.b32.xlu0 %v4318, 64
        %v4334 = vpop.permute.xlu0 %4333
        %v4343 = vmul.f32 %v4169, %v4320
        %v4344 = vmul.f32 %v4171, %v4322
        %v4345 = vmul.f32 %v4173, %v4324
        %v4346 = vmul.f32 %v4175, %v4326
        %v4347 = vmul.f32 %v4177, %v4328
        %v4348 = vmul.f32 %v4179, %v4330
        %v4349 = vmul.f32 %v4181, %v4332
        %v4350 = vmul.f32 %v4183, %v4334
        %v4351 = vadd.f32 %v4304, %v4343
        %v4352 = vadd.f32 %v4305, %v4344
        %v4353 = vadd.f32 %v4306, %v4345
        %v4354 = vadd.f32 %v4307, %v4346
        %v4355 = vadd.f32 %v4308, %v4347
        %v4356 = vadd.f32 %v4309, %v4348
        %v4357 = vadd.f32 %v4310, %v4349
        %v4358 = vadd.f32 %v4311, %v4350
        %v4367 = vrot.slane %v4351, 5
        %v4368 = vrot.slane %v4352, 4
        %v4369 = vsel %vm775, %v4368, %v4367
        %v4370 = vrot.slane %v4353, 3
        %v4371 = vsel %vm778, %v4370, %v4369
        %v4372 = vrot.slane %v4354, 2
        %v4373 = vsel %vm781, %v4372, %v4371
        %v4374 = vrot.slane %v4355, 1
        %v4375 = vsel %vm784, %v4374, %v4373
        %v4376 = vsel %vm787, %v4356, %v4375
        %v4377 = vrot.slane %v4357, 7
        %v4378 = vsel %vm790, %v4377, %v4376
        %v4379 = vrot.slane %v4358, 6
        %v4380 = vsel %vm793, %v4379, %v4378
        %4381 = vrot.lane.b32.xlu0 %v4380, 64
        %v4382 = vpop.permute.xlu0 %4381
        %v4384 = vmul.f32 %v2566, %v4382
        %v4385 = vmul.f32 %v2598, %v4022
        %v4386 = vadd.f32 %v4384, %v4385
        %v4388 = vsel %vm333, %v4386, 0
        %4390 = vmatprep.subr.mxu0 0.0
        %4391 = vmatpush1.msra.mxu0 %v3313
        %4392 = vmatprep.subr.mxu0 0.0
        %4393 = vmatpush1.msra.mxu0 %v3314
        %4394 = vmatprep.subr.mxu0 0.0
        %4395 = vmatpush1.msra.mxu0 0.0
        %4396 = vmatprep.subr.mxu0 0.0
        %4397 = vmatpush1.msra.mxu0 0.0
        %4398 = vmatprep.subr.mxu0 0.0
        %4399 = vmatpush1.msra.mxu0 0.0
        %4400 = vmatprep.subr.mxu0 0.0
        %4401 = vmatpush1.msra.mxu0 0.0
        %4402 = vmatprep.subr.mxu0 0.0
        %4403 = vmatpush1.msra.mxu0 0.0
        %4404 = vmatprep.subr.mxu0 0.0
        %4405 = vmatpush1.msra.mxu0 0.0
        %4406 = vmatprep.subr.mxu0 0.0
        %4407 = vmatpush1.msra.mxu0 0.0
        %4408 = vmatprep.subr.mxu0 0.0
        %4409 = vmatpush1.msra.mxu0 0.0
        %4410 = vmatprep.subr.mxu0 0.0
        %4411 = vmatpush1.msra.mxu0 0.0
        %4412 = vmatprep.subr.mxu0 0.0
        %4413 = vmatpush1.msra.mxu0 0.0
        %4414 = vmatprep.subr.mxu0 0.0
        %4415 = vmatpush1.msra.mxu0 0.0
        %4416 = vmatprep.subr.mxu0 0.0
        %4417 = vmatpush1.msra.mxu0 0.0
        %4418 = vmatprep.subr.mxu0 0.0
        %4419 = vmatpush1.msra.mxu0 0.0
        %4420 = vmatprep.subr.mxu0 0.0
        %4421 = vmatpush1.msra.mxu0 0.0
        %4422 = vmatprep.subr.mxu0 0.0
        %4423 = vmatpush1.msra.mxu0 0.0
        %4424 = vmatprep.subr.mxu0 0.0
        %4425 = vmatpush1.msra.mxu0 0.0
        %4426 = vmatprep.subr.mxu0 0.0
        %4427 = vmatpush1.msra.mxu0 0.0
        %4428 = vmatprep.subr.mxu0 0.0
        %4429 = vmatpush1.msra.mxu0 0.0
        %4430 = vmatprep.subr.mxu0 0.0
        %4431 = vmatpush1.msra.mxu0 0.0
        %4432 = vmatprep.subr.mxu0 0.0
        %4433 = vmatpush1.msra.mxu0 0.0
        %4434 = vmatprep.subr.mxu0 0.0
        %4435 = vmatpush1.msra.mxu0 0.0
        %4436 = vmatprep.subr.mxu0 0.0
        %4437 = vmatpush1.msra.mxu0 0.0
        %4438 = vmatprep.subr.mxu0 0.0
        %4439 = vmatpush1.msra.mxu0 0.0
        %4440 = vmatprep.subr.mxu0 0.0
        %4441 = vmatpush1.msra.mxu0 0.0
        %4442 = vmatprep.subr.mxu0 0.0
        %4443 = vmatpush1.msra.mxu0 0.0
        %4444 = vmatprep.subr.mxu0 0.0
        %4445 = vmatpush1.msra.mxu0 0.0
        %4446 = vmatprep.subr.mxu0 0.0
        %4447 = vmatpush1.msra.mxu0 0.0
        %4448 = vmatprep.subr.mxu0 0.0
        %4449 = vmatpush1.msra.mxu0 0.0
        %4450 = vmatprep.subr.mxu0 0.0
        %4451 = vmatpush1.msra.mxu0 0.0
        %4452 = vmatprep.subr.mxu0 0.0
        %4453 = vmatpush1.msra.mxu0 0.0
        %4454 = vmatprep.mubr.f32.mxu0 0.0
        %4455 = vmatmul.mubr.f32.gmra.mrb[0].mxu0 %v4388
        %v4456 = vpop.f32.mrb[0].mxu0
        %v4457 = vadd.f32 %v3321, %v4456
        %v4458 = vpop.f32.mrb[0].mxu0
        %4459 = vdwg.mxu0
        %v4461 = vrot.slane %v4457, 4
        %v4462 = vrot.slane %v4457, 5
        %v4463 = vrot.slane %v4457, 6
        %v4464 = vrot.slane %v4457, 7
        %v4465 = vrot.slane %v4457, 1
        %v4466 = vrot.slane %v4457, 2
        %v4467 = vrot.slane %v4457, 3
        %4468 = vrot.lane.b32.xlu0 %v4461, 48
        %v4469 = vpop.permute.xlu0 %4468
        %4470 = vrot.lane.b32.xlu0 %v4462, 48
        %v4471 = vpop.permute.xlu0 %4470
        %4472 = vrot.lane.b32.xlu0 %v4463, 48
        %v4473 = vpop.permute.xlu0 %4472
        %4474 = vrot.lane.b32.xlu0 %v4464, 48
        %v4475 = vpop.permute.xlu0 %4474
        %4476 = vrot.lane.b32.xlu0 %v4457, 48
        %v4477 = vpop.permute.xlu0 %4476
        %4478 = vrot.lane.b32.xlu0 %v4465, 48
        %v4479 = vpop.permute.xlu0 %4478
        %4480 = vrot.lane.b32.xlu0 %v4466, 48
        %v4481 = vpop.permute.xlu0 %4480
        %4482 = vrot.lane.b32.xlu0 %v4467, 48
        %v4483 = vpop.permute.xlu0 %4482
        %v4492 = vadd.f32 %v425, %v4469
        %v4493 = vadd.f32 %v430, %v4471
        %v4494 = vadd.f32 %v435, %v4473
        %v4495 = vadd.f32 %v440, %v4475
        %v4496 = vadd.f32 %v445, %v4477
        %v4497 = vadd.f32 %v450, %v4479
        %v4498 = vadd.f32 %v455, %v4481
        %v4499 = vadd.f32 %v460, %v4483
        %v4500 = vxor.u32 %v4492, 2147483648
        %v4501 = vxor.u32 %v4493, 2147483648
        %v4502 = vxor.u32 %v4494, 2147483648
        %v4503 = vxor.u32 %v4495, 2147483648
        %v4504 = vxor.u32 %v4496, 2147483648
        %v4505 = vxor.u32 %v4497, 2147483648
        %v4506 = vxor.u32 %v4498, 2147483648
        %v4507 = vxor.u32 %v4499, 2147483648
        %v4508 = vmul.f32 %v4500, 1.442695
        %v4509 = vpow.pop %v4508
        %v4510 = vmul.f32 %v4501, 1.442695
        %v4511 = vpow.pop %v4510
        %v4512 = vmul.f32 %v4502, 1.442695
        %v4513 = vpow.pop %v4512
        %v4514 = vmul.f32 %v4503, 1.442695
        %v4515 = vpow.pop %v4514
        %v4516 = vmul.f32 %v4504, 1.442695
        %v4517 = vpow.pop %v4516
        %v4518 = vmul.f32 %v4505, 1.442695
        %v4519 = vpow.pop %v4518
        %v4520 = vmul.f32 %v4506, 1.442695
        %v4521 = vpow.pop %v4520
        %v4522 = vmul.f32 %v4507, 1.442695
        %v4523 = vpow.pop %v4522
        %v4524 = vadd.f32 %v4509, 1.0
        %v4525 = vadd.f32 %v4511, 1.0
        %v4526 = vadd.f32 %v4513, 1.0
        %v4527 = vadd.f32 %v4515, 1.0
        %v4528 = vadd.f32 %v4517, 1.0
        %v4529 = vadd.f32 %v4519, 1.0
        %v4530 = vadd.f32 %v4521, 1.0
        %v4531 = vadd.f32 %v4523, 1.0
        %v4532 = vrcp.pop %v4524
        %v4533 = vmul.f32 1.0, %v4532
        %v4534 = vrcp.pop %v4525
        %v4535 = vmul.f32 1.0, %v4534
        %v4536 = vrcp.pop %v4526
        %v4537 = vmul.f32 1.0, %v4536
        %v4538 = vrcp.pop %v4527
        %v4539 = vmul.f32 1.0, %v4538
        %v4540 = vrcp.pop %v4528
        %v4541 = vmul.f32 1.0, %v4540
        %v4542 = vrcp.pop %v4529
        %v4543 = vmul.f32 1.0, %v4542
        %v4544 = vrcp.pop %v4530
        %v4545 = vmul.f32 1.0, %v4544
        %v4546 = vrcp.pop %v4531
        %v4547 = vmul.f32 1.0, %v4546
        %4548 = vrot.lane.b32.xlu0 %v4461, 16
        %v4549 = vpop.permute.xlu0 %4548
        %4550 = vrot.lane.b32.xlu0 %v4462, 16
        %v4551 = vpop.permute.xlu0 %4550
        %4552 = vrot.lane.b32.xlu0 %v4463, 16
        %v4553 = vpop.permute.xlu0 %4552
        %4554 = vrot.lane.b32.xlu0 %v4464, 16
        %v4555 = vpop.permute.xlu0 %4554
        %4556 = vrot.lane.b32.xlu0 %v4457, 16
        %v4557 = vpop.permute.xlu0 %4556
        %4558 = vrot.lane.b32.xlu0 %v4465, 16
        %v4559 = vpop.permute.xlu0 %4558
        %4560 = vrot.lane.b32.xlu0 %v4466, 16
        %v4561 = vpop.permute.xlu0 %4560
        %4562 = vrot.lane.b32.xlu0 %v4467, 16
        %v4563 = vpop.permute.xlu0 %4562
        %v4572 = vmul.f32 %v4533, %v4549
        %v4573 = vmul.f32 %v4535, %v4551
        %v4574 = vmul.f32 %v4537, %v4553
        %v4575 = vmul.f32 %v4539, %v4555
        %v4576 = vmul.f32 %v4541, %v4557
        %v4577 = vmul.f32 %v4543, %v4559
        %v4578 = vmul.f32 %v4545, %v4561
        %v4579 = vmul.f32 %v4547, %v4563
        %4588 = vrot.lane.b32.xlu0 %v4572, 32
        %v4589 = vpop.permute.xlu0 %4588
        %4590 = vrot.lane.b32.xlu0 %v4573, 32
        %v4591 = vpop.permute.xlu0 %4590
        %4592 = vrot.lane.b32.xlu0 %v4574, 32
        %v4593 = vpop.permute.xlu0 %4592
        %4594 = vrot.lane.b32.xlu0 %v4575, 32
        %v4595 = vpop.permute.xlu0 %4594
        %4596 = vrot.lane.b32.xlu0 %v4576, 32
        %v4597 = vpop.permute.xlu0 %4596
        %4598 = vrot.lane.b32.xlu0 %v4577, 32
        %v4599 = vpop.permute.xlu0 %4598
        %4600 = vrot.lane.b32.xlu0 %v4578, 32
        %v4601 = vpop.permute.xlu0 %4600
        %4602 = vrot.lane.b32.xlu0 %v4579, 32
        %v4603 = vpop.permute.xlu0 %4602
        %v4612 = vadd.f32 %v425, %v4589
        %v4613 = vadd.f32 %v430, %v4591
        %v4614 = vadd.f32 %v435, %v4593
        %v4615 = vadd.f32 %v440, %v4595
        %v4616 = vadd.f32 %v445, %v4597
        %v4617 = vadd.f32 %v450, %v4599
        %v4618 = vadd.f32 %v455, %v4601
        %v4619 = vadd.f32 %v460, %v4603
        %v4620 = vtanh.pop %v4612
        %v4621 = vtanh.pop %v4613
        %v4622 = vtanh.pop %v4614
        %v4623 = vtanh.pop %v4615
        %v4624 = vtanh.pop %v4616
        %v4625 = vtanh.pop %v4617
        %v4626 = vtanh.pop %v4618
        %v4627 = vtanh.pop %v4619
        %v4628 = vsub.f32 1.0, %v4533
        %v4629 = vsub.f32 1.0, %v4535
        %v4630 = vsub.f32 1.0, %v4537
        %v4631 = vsub.f32 1.0, %v4539
        %v4632 = vsub.f32 1.0, %v4541
        %v4633 = vsub.f32 1.0, %v4543
        %v4634 = vsub.f32 1.0, %v4545
        %v4635 = vsub.f32 1.0, %v4547
        %4644 = vrot.lane.b32.xlu0 %v4620, 112
        %v4645 = vpop.permute.xlu0 %4644
        %4646 = vrot.lane.b32.xlu0 %v4621, 112
        %v4647 = vpop.permute.xlu0 %4646
        %4648 = vrot.lane.b32.xlu0 %v4622, 112
        %v4649 = vpop.permute.xlu0 %4648
        %4650 = vrot.lane.b32.xlu0 %v4623, 112
        %v4651 = vpop.permute.xlu0 %4650
        %4652 = vrot.lane.b32.xlu0 %v4624, 112
        %v4653 = vpop.permute.xlu0 %4652
        %4654 = vrot.lane.b32.xlu0 %v4625, 112
        %v4655 = vpop.permute.xlu0 %4654
        %4656 = vrot.lane.b32.xlu0 %v4626, 112
        %v4657 = vpop.permute.xlu0 %4656
        %4658 = vrot.lane.b32.xlu0 %v4627, 112
        %v4659 = vpop.permute.xlu0 %4658
        %v4668 = vmul.f32 %v4628, %v4645
        %v4669 = vmul.f32 %v4629, %v4647
        %v4670 = vmul.f32 %v4630, %v4649
        %v4671 = vmul.f32 %v4631, %v4651
        %v4672 = vmul.f32 %v4632, %v4653
        %v4673 = vmul.f32 %v4633, %v4655
        %v4674 = vmul.f32 %v4634, %v4657
        %v4675 = vmul.f32 %v4635, %v4659
        %v4676 = vrot.slane %v4386, 4
        %v4677 = vrot.slane %v4386, 5
        %v4678 = vrot.slane %v4386, 6
        %v4679 = vrot.slane %v4386, 7
        %v4680 = vrot.slane %v4386, 1
        %v4681 = vrot.slane %v4386, 2
        %v4682 = vrot.slane %v4386, 3
        %4683 = vrot.lane.b32.xlu0 %v4676, 64
        %v4684 = vpop.permute.xlu0 %4683
        %4685 = vrot.lane.b32.xlu0 %v4677, 64
        %v4686 = vpop.permute.xlu0 %4685
        %4687 = vrot.lane.b32.xlu0 %v4678, 64
        %v4688 = vpop.permute.xlu0 %4687
        %4689 = vrot.lane.b32.xlu0 %v4679, 64
        %v4690 = vpop.permute.xlu0 %4689
        %4691 = vrot.lane.b32.xlu0 %v4386, 64
        %v4692 = vpop.permute.xlu0 %4691
        %4693 = vrot.lane.b32.xlu0 %v4680, 64
        %v4694 = vpop.permute.xlu0 %4693
        %4695 = vrot.lane.b32.xlu0 %v4681, 64
        %v4696 = vpop.permute.xlu0 %4695
        %4697 = vrot.lane.b32.xlu0 %v4682, 64
        %v4698 = vpop.permute.xlu0 %4697
        %v4707 = vmul.f32 %v4533, %v4684
        %v4708 = vmul.f32 %v4535, %v4686
        %v4709 = vmul.f32 %v4537, %v4688
        %v4710 = vmul.f32 %v4539, %v4690
        %v4711 = vmul.f32 %v4541, %v4692
        %v4712 = vmul.f32 %v4543, %v4694
        %v4713 = vmul.f32 %v4545, %v4696
        %v4714 = vmul.f32 %v4547, %v4698
        %v4715 = vadd.f32 %v4668, %v4707
        %v4716 = vadd.f32 %v4669, %v4708
        %v4717 = vadd.f32 %v4670, %v4709
        %v4718 = vadd.f32 %v4671, %v4710
        %v4719 = vadd.f32 %v4672, %v4711
        %v4720 = vadd.f32 %v4673, %v4712
        %v4721 = vadd.f32 %v4674, %v4713
        %v4722 = vadd.f32 %v4675, %v4714
        %v4731 = vrot.slane %v4715, 4
        %v4732 = vrot.slane %v4716, 3
        %v4733 = vsel %vm775, %v4732, %v4731
        %v4734 = vrot.slane %v4717, 2
        %v4735 = vsel %vm778, %v4734, %v4733
        %v4736 = vrot.slane %v4718, 1
        %v4737 = vsel %vm781, %v4736, %v4735
        %v4738 = vsel %vm784, %v4719, %v4737
        %v4739 = vrot.slane %v4720, 7
        %v4740 = vsel %vm787, %v4739, %v4738
        %v4741 = vrot.slane %v4721, 6
        %v4742 = vsel %vm790, %v4741, %v4740
        %v4743 = vrot.slane %v4722, 5
        %v4744 = vsel %vm793, %v4743, %v4742
        %4745 = vrot.lane.b32.xlu0 %v4744, 64
        %v4746 = vpop.permute.xlu0 %4745
        %v4748 = vmul.f32 %v2207, %v4746
        %v4749 = vmul.f32 %v2239, %v4386
        %v4750 = vadd.f32 %v4748, %v4749
        %v4752 = vsel %vm333, %v4750, 0
        %4754 = vmatprep.subr.mxu0 0.0
        %4755 = vmatpush1.msra.mxu0 %v3313
        %4756 = vmatprep.subr.mxu0 0.0
        %4757 = vmatpush1.msra.mxu0 %v3314
        %4758 = vmatprep.subr.mxu0 0.0
        %4759 = vmatpush1.msra.mxu0 0.0
        %4760 = vmatprep.subr.mxu0 0.0
        %4761 = vmatpush1.msra.mxu0 0.0
        %4762 = vmatprep.subr.mxu0 0.0
        %4763 = vmatpush1.msra.mxu0 0.0
        %4764 = vmatprep.subr.mxu0 0.0
        %4765 = vmatpush1.msra.mxu0 0.0
        %4766 = vmatprep.subr.mxu0 0.0
        %4767 = vmatpush1.msra.mxu0 0.0
        %4768 = vmatprep.subr.mxu0 0.0
        %4769 = vmatpush1.msra.mxu0 0.0
        %4770 = vmatprep.subr.mxu0 0.0
        %4771 = vmatpush1.msra.mxu0 0.0
        %4772 = vmatprep.subr.mxu0 0.0
        %4773 = vmatpush1.msra.mxu0 0.0
        %4774 = vmatprep.subr.mxu0 0.0
        %4775 = vmatpush1.msra.mxu0 0.0
        %4776 = vmatprep.subr.mxu0 0.0
        %4777 = vmatpush1.msra.mxu0 0.0
        %4778 = vmatprep.subr.mxu0 0.0
        %4779 = vmatpush1.msra.mxu0 0.0
        %4780 = vmatprep.subr.mxu0 0.0
        %4781 = vmatpush1.msra.mxu0 0.0
        %4782 = vmatprep.subr.mxu0 0.0
        %4783 = vmatpush1.msra.mxu0 0.0
        %4784 = vmatprep.subr.mxu0 0.0
        %4785 = vmatpush1.msra.mxu0 0.0
        %4786 = vmatprep.subr.mxu0 0.0
        %4787 = vmatpush1.msra.mxu0 0.0
        %4788 = vmatprep.subr.mxu0 0.0
        %4789 = vmatpush1.msra.mxu0 0.0
        %4790 = vmatprep.subr.mxu0 0.0
        %4791 = vmatpush1.msra.mxu0 0.0
        %4792 = vmatprep.subr.mxu0 0.0
        %4793 = vmatpush1.msra.mxu0 0.0
        %4794 = vmatprep.subr.mxu0 0.0
        %4795 = vmatpush1.msra.mxu0 0.0
        %4796 = vmatprep.subr.mxu0 0.0
        %4797 = vmatpush1.msra.mxu0 0.0
        %4798 = vmatprep.subr.mxu0 0.0
        %4799 = vmatpush1.msra.mxu0 0.0
        %4800 = vmatprep.subr.mxu0 0.0
        %4801 = vmatpush1.msra.mxu0 0.0
        %4802 = vmatprep.subr.mxu0 0.0
        %4803 = vmatpush1.msra.mxu0 0.0
        %4804 = vmatprep.subr.mxu0 0.0
        %4805 = vmatpush1.msra.mxu0 0.0
        %4806 = vmatprep.subr.mxu0 0.0
        %4807 = vmatpush1.msra.mxu0 0.0
        %4808 = vmatprep.subr.mxu0 0.0
        %4809 = vmatpush1.msra.mxu0 0.0
        %4810 = vmatprep.subr.mxu0 0.0
        %4811 = vmatpush1.msra.mxu0 0.0
        %4812 = vmatprep.subr.mxu0 0.0
        %4813 = vmatpush1.msra.mxu0 0.0
        %4814 = vmatprep.subr.mxu0 0.0
        %4815 = vmatpush1.msra.mxu0 0.0
        %4816 = vmatprep.subr.mxu0 0.0
        %4817 = vmatpush1.msra.mxu0 0.0
        %4818 = vmatprep.mubr.f32.mxu0 0.0
        %4819 = vmatmul.mubr.f32.gmra.mrb[0].mxu0 %v4752
        %v4820 = vpop.f32.mrb[0].mxu0
        %v4821 = vadd.f32 %v3321, %v4820
        %v4822 = vpop.f32.mrb[0].mxu0
        %4823 = vdwg.mxu0
        %v4825 = vrot.slane %v4821, 5
        %v4826 = vrot.slane %v4821, 6
        %v4827 = vrot.slane %v4821, 7
        %v4828 = vrot.slane %v4821, 1
        %v4829 = vrot.slane %v4821, 2
        %v4830 = vrot.slane %v4821, 3
        %v4831 = vrot.slane %v4821, 4
        %4832 = vrot.lane.b32.xlu0 %v4825, 48
        %v4833 = vpop.permute.xlu0 %4832
        %4834 = vrot.lane.b32.xlu0 %v4826, 48
        %v4835 = vpop.permute.xlu0 %4834
        %4836 = vrot.lane.b32.xlu0 %v4827, 48
        %v4837 = vpop.permute.xlu0 %4836
        %4838 = vrot.lane.b32.xlu0 %v4821, 48
        %v4839 = vpop.permute.xlu0 %4838
        %4840 = vrot.lane.b32.xlu0 %v4828, 48
        %v4841 = vpop.permute.xlu0 %4840
        %4842 = vrot.lane.b32.xlu0 %v4829, 48
        %v4843 = vpop.permute.xlu0 %4842
        %4844 = vrot.lane.b32.xlu0 %v4830, 48
        %v4845 = vpop.permute.xlu0 %4844
        %4846 = vrot.lane.b32.xlu0 %v4831, 48
        %v4847 = vpop.permute.xlu0 %4846
        %v4856 = vadd.f32 %v425, %v4833
        %v4857 = vadd.f32 %v430, %v4835
        %v4858 = vadd.f32 %v435, %v4837
        %v4859 = vadd.f32 %v440, %v4839
        %v4860 = vadd.f32 %v445, %v4841
        %v4861 = vadd.f32 %v450, %v4843
        %v4862 = vadd.f32 %v455, %v4845
        %v4863 = vadd.f32 %v460, %v4847
        %v4864 = vxor.u32 %v4856, 2147483648
        %v4865 = vxor.u32 %v4857, 2147483648
        %v4866 = vxor.u32 %v4858, 2147483648
        %v4867 = vxor.u32 %v4859, 2147483648
        %v4868 = vxor.u32 %v4860, 2147483648
        %v4869 = vxor.u32 %v4861, 2147483648
        %v4870 = vxor.u32 %v4862, 2147483648
        %v4871 = vxor.u32 %v4863, 2147483648
        %v4872 = vmul.f32 %v4864, 1.442695
        %v4873 = vpow.pop %v4872
        %v4874 = vmul.f32 %v4865, 1.442695
        %v4875 = vpow.pop %v4874
        %v4876 = vmul.f32 %v4866, 1.442695
        %v4877 = vpow.pop %v4876
        %v4878 = vmul.f32 %v4867, 1.442695
        %v4879 = vpow.pop %v4878
        %v4880 = vmul.f32 %v4868, 1.442695
        %v4881 = vpow.pop %v4880
        %v4882 = vmul.f32 %v4869, 1.442695
        %v4883 = vpow.pop %v4882
        %v4884 = vmul.f32 %v4870, 1.442695
        %v4885 = vpow.pop %v4884
        %v4886 = vmul.f32 %v4871, 1.442695
        %v4887 = vpow.pop %v4886
        %v4888 = vadd.f32 %v4873, 1.0
        %v4889 = vadd.f32 %v4875, 1.0
        %v4890 = vadd.f32 %v4877, 1.0
        %v4891 = vadd.f32 %v4879, 1.0
        %v4892 = vadd.f32 %v4881, 1.0
        %v4893 = vadd.f32 %v4883, 1.0
        %v4894 = vadd.f32 %v4885, 1.0
        %v4895 = vadd.f32 %v4887, 1.0
        %v4896 = vrcp.pop %v4888
        %v4897 = vmul.f32 1.0, %v4896
        %v4898 = vrcp.pop %v4889
        %v4899 = vmul.f32 1.0, %v4898
        %v4900 = vrcp.pop %v4890
        %v4901 = vmul.f32 1.0, %v4900
        %v4902 = vrcp.pop %v4891
        %v4903 = vmul.f32 1.0, %v4902
        %v4904 = vrcp.pop %v4892
        %v4905 = vmul.f32 1.0, %v4904
        %v4906 = vrcp.pop %v4893
        %v4907 = vmul.f32 1.0, %v4906
        %v4908 = vrcp.pop %v4894
        %v4909 = vmul.f32 1.0, %v4908
        %v4910 = vrcp.pop %v4895
        %v4911 = vmul.f32 1.0, %v4910
        %4912 = vrot.lane.b32.xlu0 %v4825, 16
        %v4913 = vpop.permute.xlu0 %4912
        %4914 = vrot.lane.b32.xlu0 %v4826, 16
        %v4915 = vpop.permute.xlu0 %4914
        %4916 = vrot.lane.b32.xlu0 %v4827, 16
        %v4917 = vpop.permute.xlu0 %4916
        %4918 = vrot.lane.b32.xlu0 %v4821, 16
        %v4919 = vpop.permute.xlu0 %4918
        %4920 = vrot.lane.b32.xlu0 %v4828, 16
        %v4921 = vpop.permute.xlu0 %4920
        %4922 = vrot.lane.b32.xlu0 %v4829, 16
        %v4923 = vpop.permute.xlu0 %4922
        %4924 = vrot.lane.b32.xlu0 %v4830, 16
        %v4925 = vpop.permute.xlu0 %4924
        %4926 = vrot.lane.b32.xlu0 %v4831, 16
        %v4927 = vpop.permute.xlu0 %4926
        %v4936 = vmul.f32 %v4897, %v4913
        %v4937 = vmul.f32 %v4899, %v4915
        %v4938 = vmul.f32 %v4901, %v4917
        %v4939 = vmul.f32 %v4903, %v4919
        %v4940 = vmul.f32 %v4905, %v4921
        %v4941 = vmul.f32 %v4907, %v4923
        %v4942 = vmul.f32 %v4909, %v4925
        %v4943 = vmul.f32 %v4911, %v4927
        %4952 = vrot.lane.b32.xlu0 %v4936, 32
        %v4953 = vpop.permute.xlu0 %4952
        %4954 = vrot.lane.b32.xlu0 %v4937, 32
        %v4955 = vpop.permute.xlu0 %4954
        %4956 = vrot.lane.b32.xlu0 %v4938, 32
        %v4957 = vpop.permute.xlu0 %4956
        %4958 = vrot.lane.b32.xlu0 %v4939, 32
        %v4959 = vpop.permute.xlu0 %4958
        %4960 = vrot.lane.b32.xlu0 %v4940, 32
        %v4961 = vpop.permute.xlu0 %4960
        %4962 = vrot.lane.b32.xlu0 %v4941, 32
        %v4963 = vpop.permute.xlu0 %4962
        %4964 = vrot.lane.b32.xlu0 %v4942, 32
        %v4965 = vpop.permute.xlu0 %4964
        %4966 = vrot.lane.b32.xlu0 %v4943, 32
        %v4967 = vpop.permute.xlu0 %4966
        %v4976 = vadd.f32 %v425, %v4953
        %v4977 = vadd.f32 %v430, %v4955
        %v4978 = vadd.f32 %v435, %v4957
        %v4979 = vadd.f32 %v440, %v4959
        %v4980 = vadd.f32 %v445, %v4961
        %v4981 = vadd.f32 %v450, %v4963
        %v4982 = vadd.f32 %v455, %v4965
        %v4983 = vadd.f32 %v460, %v4967
        %v4984 = vtanh.pop %v4976
        %v4985 = vtanh.pop %v4977
        %v4986 = vtanh.pop %v4978
        %v4987 = vtanh.pop %v4979
        %v4988 = vtanh.pop %v4980
        %v4989 = vtanh.pop %v4981
        %v4990 = vtanh.pop %v4982
        %v4991 = vtanh.pop %v4983
        %v4992 = vsub.f32 1.0, %v4897
        %v4993 = vsub.f32 1.0, %v4899
        %v4994 = vsub.f32 1.0, %v4901
        %v4995 = vsub.f32 1.0, %v4903
        %v4996 = vsub.f32 1.0, %v4905
        %v4997 = vsub.f32 1.0, %v4907
        %v4998 = vsub.f32 1.0, %v4909
        %v4999 = vsub.f32 1.0, %v4911
        %5008 = vrot.lane.b32.xlu0 %v4984, 112
        %v5009 = vpop.permute.xlu0 %5008
        %5010 = vrot.lane.b32.xlu0 %v4985, 112
        %v5011 = vpop.permute.xlu0 %5010
        %5012 = vrot.lane.b32.xlu0 %v4986, 112
        %v5013 = vpop.permute.xlu0 %5012
        %5014 = vrot.lane.b32.xlu0 %v4987, 112
        %v5015 = vpop.permute.xlu0 %5014
        %5016 = vrot.lane.b32.xlu0 %v4988, 112
        %v5017 = vpop.permute.xlu0 %5016
        %5018 = vrot.lane.b32.xlu0 %v4989, 112
        %v5019 = vpop.permute.xlu0 %5018
        %5020 = vrot.lane.b32.xlu0 %v4990, 112
        %v5021 = vpop.permute.xlu0 %5020
        %5022 = vrot.lane.b32.xlu0 %v4991, 112
        %v5023 = vpop.permute.xlu0 %5022
        %v5032 = vmul.f32 %v4992, %v5009
        %v5033 = vmul.f32 %v4993, %v5011
        %v5034 = vmul.f32 %v4994, %v5013
        %v5035 = vmul.f32 %v4995, %v5015
        %v5036 = vmul.f32 %v4996, %v5017
        %v5037 = vmul.f32 %v4997, %v5019
        %v5038 = vmul.f32 %v4998, %v5021
        %v5039 = vmul.f32 %v4999, %v5023
        %v5040 = vrot.slane %v4750, 5
        %v5041 = vrot.slane %v4750, 6
        %v5042 = vrot.slane %v4750, 7
        %v5043 = vrot.slane %v4750, 1
        %v5044 = vrot.slane %v4750, 2
        %v5045 = vrot.slane %v4750, 3
        %v5046 = vrot.slane %v4750, 4
        %5047 = vrot.lane.b32.xlu0 %v5040, 64
        %v5048 = vpop.permute.xlu0 %5047
        %5049 = vrot.lane.b32.xlu0 %v5041, 64
        %v5050 = vpop.permute.xlu0 %5049
        %5051 = vrot.lane.b32.xlu0 %v5042, 64
        %v5052 = vpop.permute.xlu0 %5051
        %5053 = vrot.lane.b32.xlu0 %v4750, 64
        %v5054 = vpop.permute.xlu0 %5053
        %5055 = vrot.lane.b32.xlu0 %v5043, 64
        %v5056 = vpop.permute.xlu0 %5055
        %5057 = vrot.lane.b32.xlu0 %v5044, 64
        %v5058 = vpop.permute.xlu0 %5057
        %5059 = vrot.lane.b32.xlu0 %v5045, 64
        %v5060 = vpop.permute.xlu0 %5059
        %5061 = vrot.lane.b32.xlu0 %v5046, 64
        %v5062 = vpop.permute.xlu0 %5061
        %v5071 = vmul.f32 %v4897, %v5048
        %v5072 = vmul.f32 %v4899, %v5050
        %v5073 = vmul.f32 %v4901, %v5052
        %v5074 = vmul.f32 %v4903, %v5054
        %v5075 = vmul.f32 %v4905, %v5056
        %v5076 = vmul.f32 %v4907, %v5058
        %v5077 = vmul.f32 %v4909, %v5060
        %v5078 = vmul.f32 %v4911, %v5062
        %v5079 = vadd.f32 %v5032, %v5071
        %v5080 = vadd.f32 %v5033, %v5072
        %v5081 = vadd.f32 %v5034, %v5073
        %v5082 = vadd.f32 %v5035, %v5074
        %v5083 = vadd.f32 %v5036, %v5075
        %v5084 = vadd.f32 %v5037, %v5076
        %v5085 = vadd.f32 %v5038, %v5077
        %v5086 = vadd.f32 %v5039, %v5078
        %v5095 = vrot.slane %v5079, 3
        %v5096 = vrot.slane %v5080, 2
        %v5097 = vsel %vm775, %v5096, %v5095
        %v5098 = vrot.slane %v5081, 1
        %v5099 = vsel %vm778, %v5098, %v5097
        %v5100 = vsel %vm781, %v5082, %v5099
        %v5101 = vrot.slane %v5083, 7
        %v5102 = vsel %vm784, %v5101, %v5100
        %v5103 = vrot.slane %v5084, 6
        %v5104 = vsel %vm787, %v5103, %v5102
        %v5105 = vrot.slane %v5085, 5
        %v5106 = vsel %vm790, %v5105, %v5104
        %v5107 = vrot.slane %v5086, 4
        %v5108 = vsel %vm793, %v5107, %v5106
        %5109 = vrot.lane.b32.xlu0 %v5108, 64
        %v5110 = vpop.permute.xlu0 %5109
        %v5112 = vmul.f32 %v1848, %v5110
        %v5113 = vmul.f32 %v1880, %v4750
        %v5114 = vadd.f32 %v5112, %v5113
        %v5116 = vsel %vm333, %v5114, 0
        %5118 = vmatprep.subr.mxu0 0.0
        %5119 = vmatpush1.msra.mxu0 %v3313
        %5120 = vmatprep.subr.mxu0 0.0
        %5121 = vmatpush1.msra.mxu0 %v3314
        %5122 = vmatprep.subr.mxu0 0.0
        %5123 = vmatpush1.msra.mxu0 0.0
        %5124 = vmatprep.subr.mxu0 0.0
        %5125 = vmatpush1.msra.mxu0 0.0
        %5126 = vmatprep.subr.mxu0 0.0
        %5127 = vmatpush1.msra.mxu0 0.0
        %5128 = vmatprep.subr.mxu0 0.0
        %5129 = vmatpush1.msra.mxu0 0.0
        %5130 = vmatprep.subr.mxu0 0.0
        %5131 = vmatpush1.msra.mxu0 0.0
        %5132 = vmatprep.subr.mxu0 0.0
        %5133 = vmatpush1.msra.mxu0 0.0
        %5134 = vmatprep.subr.mxu0 0.0
        %5135 = vmatpush1.msra.mxu0 0.0
        %5136 = vmatprep.subr.mxu0 0.0
        %5137 = vmatpush1.msra.mxu0 0.0
        %5138 = vmatprep.subr.mxu0 0.0
        %5139 = vmatpush1.msra.mxu0 0.0
        %5140 = vmatprep.subr.mxu0 0.0
        %5141 = vmatpush1.msra.mxu0 0.0
        %5142 = vmatprep.subr.mxu0 0.0
        %5143 = vmatpush1.msra.mxu0 0.0
        %5144 = vmatprep.subr.mxu0 0.0
        %5145 = vmatpush1.msra.mxu0 0.0
        %5146 = vmatprep.subr.mxu0 0.0
        %5147 = vmatpush1.msra.mxu0 0.0
        %5148 = vmatprep.subr.mxu0 0.0
        %5149 = vmatpush1.msra.mxu0 0.0
        %5150 = vmatprep.subr.mxu0 0.0
        %5151 = vmatpush1.msra.mxu0 0.0
        %5152 = vmatprep.subr.mxu0 0.0
        %5153 = vmatpush1.msra.mxu0 0.0
        %5154 = vmatprep.subr.mxu0 0.0
        %5155 = vmatpush1.msra.mxu0 0.0
        %5156 = vmatprep.subr.mxu0 0.0
        %5157 = vmatpush1.msra.mxu0 0.0
        %5158 = vmatprep.subr.mxu0 0.0
        %5159 = vmatpush1.msra.mxu0 0.0
        %5160 = vmatprep.subr.mxu0 0.0
        %5161 = vmatpush1.msra.mxu0 0.0
        %5162 = vmatprep.subr.mxu0 0.0
        %5163 = vmatpush1.msra.mxu0 0.0
        %5164 = vmatprep.subr.mxu0 0.0
        %5165 = vmatpush1.msra.mxu0 0.0
        %5166 = vmatprep.subr.mxu0 0.0
        %5167 = vmatpush1.msra.mxu0 0.0
        %5168 = vmatprep.subr.mxu0 0.0
        %5169 = vmatpush1.msra.mxu0 0.0
        %5170 = vmatprep.subr.mxu0 0.0
        %5171 = vmatpush1.msra.mxu0 0.0
        %5172 = vmatprep.subr.mxu0 0.0
        %5173 = vmatpush1.msra.mxu0 0.0
        %5174 = vmatprep.subr.mxu0 0.0
        %5175 = vmatpush1.msra.mxu0 0.0
        %5176 = vmatprep.subr.mxu0 0.0
        %5177 = vmatpush1.msra.mxu0 0.0
        %5178 = vmatprep.subr.mxu0 0.0
        %5179 = vmatpush1.msra.mxu0 0.0
        %5180 = vmatprep.subr.mxu0 0.0
        %5181 = vmatpush1.msra.mxu0 0.0
        %5182 = vmatprep.mubr.f32.mxu0 0.0
        %5183 = vmatmul.mubr.f32.gmra.mrb[0].mxu0 %v5116
        %v5184 = vpop.f32.mrb[0].mxu0
        %v5185 = vadd.f32 %v3321, %v5184
        %v5186 = vpop.f32.mrb[0].mxu0
        %5187 = vdwg.mxu0
        %v5189 = vrot.slane %v5185, 6
        %v5190 = vrot.slane %v5185, 7
        %v5191 = vrot.slane %v5185, 1
        %v5192 = vrot.slane %v5185, 2
        %v5193 = vrot.slane %v5185, 3
        %v5194 = vrot.slane %v5185, 4
        %v5195 = vrot.slane %v5185, 5
        %5196 = vrot.lane.b32.xlu0 %v5189, 48
        %v5197 = vpop.permute.xlu0 %5196
        %5198 = vrot.lane.b32.xlu0 %v5190, 48
        %v5199 = vpop.permute.xlu0 %5198
        %5200 = vrot.lane.b32.xlu0 %v5185, 48
        %v5201 = vpop.permute.xlu0 %5200
        %5202 = vrot.lane.b32.xlu0 %v5191, 48
        %v5203 = vpop.permute.xlu0 %5202
        %5204 = vrot.lane.b32.xlu0 %v5192, 48
        %v5205 = vpop.permute.xlu0 %5204
        %5206 = vrot.lane.b32.xlu0 %v5193, 48
        %v5207 = vpop.permute.xlu0 %5206
        %5208 = vrot.lane.b32.xlu0 %v5194, 48
        %v5209 = vpop.permute.xlu0 %5208
        %5210 = vrot.lane.b32.xlu0 %v5195, 48
        %v5211 = vpop.permute.xlu0 %5210
        %v5220 = vadd.f32 %v425, %v5197
        %v5221 = vadd.f32 %v430, %v5199
        %v5222 = vadd.f32 %v435, %v5201
        %v5223 = vadd.f32 %v440, %v5203
        %v5224 = vadd.f32 %v445, %v5205
        %v5225 = vadd.f32 %v450, %v5207
        %v5226 = vadd.f32 %v455, %v5209
        %v5227 = vadd.f32 %v460, %v5211
        %v5228 = vxor.u32 %v5220, 2147483648
        %v5229 = vxor.u32 %v5221, 2147483648
        %v5230 = vxor.u32 %v5222, 2147483648
        %v5231 = vxor.u32 %v5223, 2147483648
        %v5232 = vxor.u32 %v5224, 2147483648
        %v5233 = vxor.u32 %v5225, 2147483648
        %v5234 = vxor.u32 %v5226, 2147483648
        %v5235 = vxor.u32 %v5227, 2147483648
        %v5236 = vmul.f32 %v5228, 1.442695
        %v5237 = vpow.pop %v5236
        %v5238 = vmul.f32 %v5229, 1.442695
        %v5239 = vpow.pop %v5238
        %v5240 = vmul.f32 %v5230, 1.442695
        %v5241 = vpow.pop %v5240
        %v5242 = vmul.f32 %v5231, 1.442695
        %v5243 = vpow.pop %v5242
        %v5244 = vmul.f32 %v5232, 1.442695
        %v5245 = vpow.pop %v5244
        %v5246 = vmul.f32 %v5233, 1.442695
        %v5247 = vpow.pop %v5246
        %v5248 = vmul.f32 %v5234, 1.442695
        %v5249 = vpow.pop %v5248
        %v5250 = vmul.f32 %v5235, 1.442695
        %v5251 = vpow.pop %v5250
        %v5252 = vadd.f32 %v5237, 1.0
        %v5253 = vadd.f32 %v5239, 1.0
        %v5254 = vadd.f32 %v5241, 1.0
        %v5255 = vadd.f32 %v5243, 1.0
        %v5256 = vadd.f32 %v5245, 1.0
        %v5257 = vadd.f32 %v5247, 1.0
        %v5258 = vadd.f32 %v5249, 1.0
        %v5259 = vadd.f32 %v5251, 1.0
        %v5260 = vrcp.pop %v5252
        %v5261 = vmul.f32 1.0, %v5260
        %v5262 = vrcp.pop %v5253
        %v5263 = vmul.f32 1.0, %v5262
        %v5264 = vrcp.pop %v5254
        %v5265 = vmul.f32 1.0, %v5264
        %v5266 = vrcp.pop %v5255
        %v5267 = vmul.f32 1.0, %v5266
        %v5268 = vrcp.pop %v5256
        %v5269 = vmul.f32 1.0, %v5268
        %v5270 = vrcp.pop %v5257
        %v5271 = vmul.f32 1.0, %v5270
        %v5272 = vrcp.pop %v5258
        %v5273 = vmul.f32 1.0, %v5272
        %v5274 = vrcp.pop %v5259
        %v5275 = vmul.f32 1.0, %v5274
        %5276 = vrot.lane.b32.xlu0 %v5189, 16
        %v5277 = vpop.permute.xlu0 %5276
        %5278 = vrot.lane.b32.xlu0 %v5190, 16
        %v5279 = vpop.permute.xlu0 %5278
        %5280 = vrot.lane.b32.xlu0 %v5185, 16
        %v5281 = vpop.permute.xlu0 %5280
        %5282 = vrot.lane.b32.xlu0 %v5191, 16
        %v5283 = vpop.permute.xlu0 %5282
        %5284 = vrot.lane.b32.xlu0 %v5192, 16
        %v5285 = vpop.permute.xlu0 %5284
        %5286 = vrot.lane.b32.xlu0 %v5193, 16
        %v5287 = vpop.permute.xlu0 %5286
        %5288 = vrot.lane.b32.xlu0 %v5194, 16
        %v5289 = vpop.permute.xlu0 %5288
        %5290 = vrot.lane.b32.xlu0 %v5195, 16
        %v5291 = vpop.permute.xlu0 %5290
        %v5300 = vmul.f32 %v5261, %v5277
        %v5301 = vmul.f32 %v5263, %v5279
        %v5302 = vmul.f32 %v5265, %v5281
        %v5303 = vmul.f32 %v5267, %v5283
        %v5304 = vmul.f32 %v5269, %v5285
        %v5305 = vmul.f32 %v5271, %v5287
        %v5306 = vmul.f32 %v5273, %v5289
        %v5307 = vmul.f32 %v5275, %v5291
        %5316 = vrot.lane.b32.xlu0 %v5300, 32
        %v5317 = vpop.permute.xlu0 %5316
        %5318 = vrot.lane.b32.xlu0 %v5301, 32
        %v5319 = vpop.permute.xlu0 %5318
        %5320 = vrot.lane.b32.xlu0 %v5302, 32
        %v5321 = vpop.permute.xlu0 %5320
        %5322 = vrot.lane.b32.xlu0 %v5303, 32
        %v5323 = vpop.permute.xlu0 %5322
        %5324 = vrot.lane.b32.xlu0 %v5304, 32
        %v5325 = vpop.permute.xlu0 %5324
        %5326 = vrot.lane.b32.xlu0 %v5305, 32
        %v5327 = vpop.permute.xlu0 %5326
        %5328 = vrot.lane.b32.xlu0 %v5306, 32
        %v5329 = vpop.permute.xlu0 %5328
        %5330 = vrot.lane.b32.xlu0 %v5307, 32
        %v5331 = vpop.permute.xlu0 %5330
        %v5340 = vadd.f32 %v425, %v5317
        %v5341 = vadd.f32 %v430, %v5319
        %v5342 = vadd.f32 %v435, %v5321
        %v5343 = vadd.f32 %v440, %v5323
        %v5344 = vadd.f32 %v445, %v5325
        %v5345 = vadd.f32 %v450, %v5327
        %v5346 = vadd.f32 %v455, %v5329
        %v5347 = vadd.f32 %v460, %v5331
        %v5348 = vtanh.pop %v5340
        %v5349 = vtanh.pop %v5341
        %v5350 = vtanh.pop %v5342
        %v5351 = vtanh.pop %v5343
        %v5352 = vtanh.pop %v5344
        %v5353 = vtanh.pop %v5345
        %v5354 = vtanh.pop %v5346
        %v5355 = vtanh.pop %v5347
        %v5356 = vsub.f32 1.0, %v5261
        %v5357 = vsub.f32 1.0, %v5263
        %v5358 = vsub.f32 1.0, %v5265
        %v5359 = vsub.f32 1.0, %v5267
        %v5360 = vsub.f32 1.0, %v5269
        %v5361 = vsub.f32 1.0, %v5271
        %v5362 = vsub.f32 1.0, %v5273
        %v5363 = vsub.f32 1.0, %v5275
        %5372 = vrot.lane.b32.xlu0 %v5348, 112
        %v5373 = vpop.permute.xlu0 %5372
        %5374 = vrot.lane.b32.xlu0 %v5349, 112
        %v5375 = vpop.permute.xlu0 %5374
        %5376 = vrot.lane.b32.xlu0 %v5350, 112
        %v5377 = vpop.permute.xlu0 %5376
        %5378 = vrot.lane.b32.xlu0 %v5351, 112
        %v5379 = vpop.permute.xlu0 %5378
        %5380 = vrot.lane.b32.xlu0 %v5352, 112
        %v5381 = vpop.permute.xlu0 %5380
        %5382 = vrot.lane.b32.xlu0 %v5353, 112
        %v5383 = vpop.permute.xlu0 %5382
        %5384 = vrot.lane.b32.xlu0 %v5354, 112
        %v5385 = vpop.permute.xlu0 %5384
        %5386 = vrot.lane.b32.xlu0 %v5355, 112
        %v5387 = vpop.permute.xlu0 %5386
        %v5396 = vmul.f32 %v5356, %v5373
        %v5397 = vmul.f32 %v5357, %v5375
        %v5398 = vmul.f32 %v5358, %v5377
        %v5399 = vmul.f32 %v5359, %v5379
        %v5400 = vmul.f32 %v5360, %v5381
        %v5401 = vmul.f32 %v5361, %v5383
        %v5402 = vmul.f32 %v5362, %v5385
        %v5403 = vmul.f32 %v5363, %v5387
        %v5404 = vrot.slane %v5114, 6
        %v5405 = vrot.slane %v5114, 7
        %v5406 = vrot.slane %v5114, 1
        %v5407 = vrot.slane %v5114, 2
        %v5408 = vrot.slane %v5114, 3
        %v5409 = vrot.slane %v5114, 4
        %v5410 = vrot.slane %v5114, 5
        %5411 = vrot.lane.b32.xlu0 %v5404, 64
        %v5412 = vpop.permute.xlu0 %5411
        %5413 = vrot.lane.b32.xlu0 %v5405, 64
        %v5414 = vpop.permute.xlu0 %5413
        %5415 = vrot.lane.b32.xlu0 %v5114, 64
        %v5416 = vpop.permute.xlu0 %5415
        %5417 = vrot.lane.b32.xlu0 %v5406, 64
        %v5418 = vpop.permute.xlu0 %5417
        %5419 = vrot.lane.b32.xlu0 %v5407, 64
        %v5420 = vpop.permute.xlu0 %5419
        %5421 = vrot.lane.b32.xlu0 %v5408, 64
        %v5422 = vpop.permute.xlu0 %5421
        %5423 = vrot.lane.b32.xlu0 %v5409, 64
        %v5424 = vpop.permute.xlu0 %5423
        %5425 = vrot.lane.b32.xlu0 %v5410, 64
        %v5426 = vpop.permute.xlu0 %5425
        %v5435 = vmul.f32 %v5261, %v5412
        %v5436 = vmul.f32 %v5263, %v5414
        %v5437 = vmul.f32 %v5265, %v5416
        %v5438 = vmul.f32 %v5267, %v5418
        %v5439 = vmul.f32 %v5269, %v5420
        %v5440 = vmul.f32 %v5271, %v5422
        %v5441 = vmul.f32 %v5273, %v5424
        %v5442 = vmul.f32 %v5275, %v5426
        %v5443 = vadd.f32 %v5396, %v5435
        %v5444 = vadd.f32 %v5397, %v5436
        %v5445 = vadd.f32 %v5398, %v5437
        %v5446 = vadd.f32 %v5399, %v5438
        %v5447 = vadd.f32 %v5400, %v5439
        %v5448 = vadd.f32 %v5401, %v5440
        %v5449 = vadd.f32 %v5402, %v5441
        %v5450 = vadd.f32 %v5403, %v5442
        %v5459 = vrot.slane %v5443, 2
        %v5460 = vrot.slane %v5444, 1
        %v5461 = vsel %vm775, %v5460, %v5459
        %v5462 = vsel %vm778, %v5445, %v5461
        %v5463 = vrot.slane %v5446, 7
        %v5464 = vsel %vm781, %v5463, %v5462
        %v5465 = vrot.slane %v5447, 6
        %v5466 = vsel %vm784, %v5465, %v5464
        %v5467 = vrot.slane %v5448, 5
        %v5468 = vsel %vm787, %v5467, %v5466
        %v5469 = vrot.slane %v5449, 4
        %v5470 = vsel %vm790, %v5469, %v5468
        %v5471 = vrot.slane %v5450, 3
        %v5472 = vsel %vm793, %v5471, %v5470
        %5473 = vrot.lane.b32.xlu0 %v5472, 64
        %v5474 = vpop.permute.xlu0 %5473
        %v5476 = vmul.f32 %v1489, %v5474
        %v5477 = vmul.f32 %v1521, %v5114
        %v5478 = vadd.f32 %v5476, %v5477
        %v5480 = vsel %vm333, %v5478, 0
        %5482 = vmatprep.subr.mxu0 0.0
        %5483 = vmatpush1.msra.mxu0 %v3313
        %5484 = vmatprep.subr.mxu0 0.0
        %5485 = vmatpush1.msra.mxu0 %v3314
        %5486 = vmatprep.subr.mxu0 0.0
        %5487 = vmatpush1.msra.mxu0 0.0
        %5488 = vmatprep.subr.mxu0 0.0
        %5489 = vmatpush1.msra.mxu0 0.0
        %5490 = vmatprep.subr.mxu0 0.0
        %5491 = vmatpush1.msra.mxu0 0.0
        %5492 = vmatprep.subr.mxu0 0.0
        %5493 = vmatpush1.msra.mxu0 0.0
        %5494 = vmatprep.subr.mxu0 0.0
        %5495 = vmatpush1.msra.mxu0 0.0
        %5496 = vmatprep.subr.mxu0 0.0
        %5497 = vmatpush1.msra.mxu0 0.0
        %5498 = vmatprep.subr.mxu0 0.0
        %5499 = vmatpush1.msra.mxu0 0.0
        %5500 = vmatprep.subr.mxu0 0.0
        %5501 = vmatpush1.msra.mxu0 0.0
        %5502 = vmatprep.subr.mxu0 0.0
        %5503 = vmatpush1.msra.mxu0 0.0
        %5504 = vmatprep.subr.mxu0 0.0
        %5505 = vmatpush1.msra.mxu0 0.0
        %5506 = vmatprep.subr.mxu0 0.0
        %5507 = vmatpush1.msra.mxu0 0.0
        %5508 = vmatprep.subr.mxu0 0.0
        %5509 = vmatpush1.msra.mxu0 0.0
        %5510 = vmatprep.subr.mxu0 0.0
        %5511 = vmatpush1.msra.mxu0 0.0
        %5512 = vmatprep.subr.mxu0 0.0
        %5513 = vmatpush1.msra.mxu0 0.0
        %5514 = vmatprep.subr.mxu0 0.0
        %5515 = vmatpush1.msra.mxu0 0.0
        %5516 = vmatprep.subr.mxu0 0.0
        %5517 = vmatpush1.msra.mxu0 0.0
        %5518 = vmatprep.subr.mxu0 0.0
        %5519 = vmatpush1.msra.mxu0 0.0
        %5520 = vmatprep.subr.mxu0 0.0
        %5521 = vmatpush1.msra.mxu0 0.0
        %5522 = vmatprep.subr.mxu0 0.0
        %5523 = vmatpush1.msra.mxu0 0.0
        %5524 = vmatprep.subr.mxu0 0.0
        %5525 = vmatpush1.msra.mxu0 0.0
        %5526 = vmatprep.subr.mxu0 0.0
        %5527 = vmatpush1.msra.mxu0 0.0
        %5528 = vmatprep.subr.mxu0 0.0
        %5529 = vmatpush1.msra.mxu0 0.0
        %5530 = vmatprep.subr.mxu0 0.0
        %5531 = vmatpush1.msra.mxu0 0.0
        %5532 = vmatprep.subr.mxu0 0.0
        %5533 = vmatpush1.msra.mxu0 0.0
        %5534 = vmatprep.subr.mxu0 0.0
        %5535 = vmatpush1.msra.mxu0 0.0
        %5536 = vmatprep.subr.mxu0 0.0
        %5537 = vmatpush1.msra.mxu0 0.0
        %5538 = vmatprep.subr.mxu0 0.0
        %5539 = vmatpush1.msra.mxu0 0.0
        %5540 = vmatprep.subr.mxu0 0.0
        %5541 = vmatpush1.msra.mxu0 0.0
        %5542 = vmatprep.subr.mxu0 0.0
        %5543 = vmatpush1.msra.mxu0 0.0
        %5544 = vmatprep.subr.mxu0 0.0
        %5545 = vmatpush1.msra.mxu0 0.0
        %5546 = vmatprep.mubr.f32.mxu0 0.0
        %5547 = vmatmul.mubr.f32.gmra.mrb[0].mxu0 %v5480
        %v5548 = vpop.f32.mrb[0].mxu0
        %v5549 = vadd.f32 %v3321, %v5548
        %v5550 = vpop.f32.mrb[0].mxu0
        %5551 = vdwg.mxu0
        %v5553 = vrot.slane %v5549, 7
        %v5554 = vrot.slane %v5549, 1
        %v5555 = vrot.slane %v5549, 2
        %v5556 = vrot.slane %v5549, 3
        %v5557 = vrot.slane %v5549, 4
        %v5558 = vrot.slane %v5549, 5
        %v5559 = vrot.slane %v5549, 6
        %5560 = vrot.lane.b32.xlu0 %v5553, 48
        %v5561 = vpop.permute.xlu0 %5560
        %5562 = vrot.lane.b32.xlu0 %v5549, 48
        %v5563 = vpop.permute.xlu0 %5562
        %5564 = vrot.lane.b32.xlu0 %v5554, 48
        %v5565 = vpop.permute.xlu0 %5564
        %5566 = vrot.lane.b32.xlu0 %v5555, 48
        %v5567 = vpop.permute.xlu0 %5566
        %5568 = vrot.lane.b32.xlu0 %v5556, 48
        %v5569 = vpop.permute.xlu0 %5568
        %5570 = vrot.lane.b32.xlu0 %v5557, 48
        %v5571 = vpop.permute.xlu0 %5570
        %5572 = vrot.lane.b32.xlu0 %v5558, 48
        %v5573 = vpop.permute.xlu0 %5572
        %5574 = vrot.lane.b32.xlu0 %v5559, 48
        %v5575 = vpop.permute.xlu0 %5574
        %v5584 = vadd.f32 %v425, %v5561
        %v5585 = vadd.f32 %v430, %v5563
        %v5586 = vadd.f32 %v435, %v5565
        %v5587 = vadd.f32 %v440, %v5567
        %v5588 = vadd.f32 %v445, %v5569
        %v5589 = vadd.f32 %v450, %v5571
        %v5590 = vadd.f32 %v455, %v5573
        %v5591 = vadd.f32 %v460, %v5575
        %v5592 = vxor.u32 %v5584, 2147483648
        %v5593 = vxor.u32 %v5585, 2147483648
        %v5594 = vxor.u32 %v5586, 2147483648
        %v5595 = vxor.u32 %v5587, 2147483648
        %v5596 = vxor.u32 %v5588, 2147483648
        %v5597 = vxor.u32 %v5589, 2147483648
        %v5598 = vxor.u32 %v5590, 2147483648
        %v5599 = vxor.u32 %v5591, 2147483648
        %v5600 = vmul.f32 %v5592, 1.442695
        %v5601 = vpow.pop %v5600
        %v5602 = vmul.f32 %v5593, 1.442695
        %v5603 = vpow.pop %v5602
        %v5604 = vmul.f32 %v5594, 1.442695
        %v5605 = vpow.pop %v5604
        %v5606 = vmul.f32 %v5595, 1.442695
        %v5607 = vpow.pop %v5606
        %v5608 = vmul.f32 %v5596, 1.442695
        %v5609 = vpow.pop %v5608
        %v5610 = vmul.f32 %v5597, 1.442695
        %v5611 = vpow.pop %v5610
        %v5612 = vmul.f32 %v5598, 1.442695
        %v5613 = vpow.pop %v5612
        %v5614 = vmul.f32 %v5599, 1.442695
        %v5615 = vpow.pop %v5614
        %v5616 = vadd.f32 %v5601, 1.0
        %v5617 = vadd.f32 %v5603, 1.0
        %v5618 = vadd.f32 %v5605, 1.0
        %v5619 = vadd.f32 %v5607, 1.0
        %v5620 = vadd.f32 %v5609, 1.0
        %v5621 = vadd.f32 %v5611, 1.0
        %v5622 = vadd.f32 %v5613, 1.0
        %v5623 = vadd.f32 %v5615, 1.0
        %v5624 = vrcp.pop %v5616
        %v5625 = vmul.f32 1.0, %v5624
        %v5626 = vrcp.pop %v5617
        %v5627 = vmul.f32 1.0, %v5626
        %v5628 = vrcp.pop %v5618
        %v5629 = vmul.f32 1.0, %v5628
        %v5630 = vrcp.pop %v5619
        %v5631 = vmul.f32 1.0, %v5630
        %v5632 = vrcp.pop %v5620
        %v5633 = vmul.f32 1.0, %v5632
        %v5634 = vrcp.pop %v5621
        %v5635 = vmul.f32 1.0, %v5634
        %v5636 = vrcp.pop %v5622
        %v5637 = vmul.f32 1.0, %v5636
        %v5638 = vrcp.pop %v5623
        %v5639 = vmul.f32 1.0, %v5638
        %5640 = vrot.lane.b32.xlu0 %v5553, 16
        %v5641 = vpop.permute.xlu0 %5640
        %5642 = vrot.lane.b32.xlu0 %v5549, 16
        %v5643 = vpop.permute.xlu0 %5642
        %5644 = vrot.lane.b32.xlu0 %v5554, 16
        %v5645 = vpop.permute.xlu0 %5644
        %5646 = vrot.lane.b32.xlu0 %v5555, 16
        %v5647 = vpop.permute.xlu0 %5646
        %5648 = vrot.lane.b32.xlu0 %v5556, 16
        %v5649 = vpop.permute.xlu0 %5648
        %5650 = vrot.lane.b32.xlu0 %v5557, 16
        %v5651 = vpop.permute.xlu0 %5650
        %5652 = vrot.lane.b32.xlu0 %v5558, 16
        %v5653 = vpop.permute.xlu0 %5652
        %5654 = vrot.lane.b32.xlu0 %v5559, 16
        %v5655 = vpop.permute.xlu0 %5654
        %v5664 = vmul.f32 %v5625, %v5641
        %v5665 = vmul.f32 %v5627, %v5643
        %v5666 = vmul.f32 %v5629, %v5645
        %v5667 = vmul.f32 %v5631, %v5647
        %v5668 = vmul.f32 %v5633, %v5649
        %v5669 = vmul.f32 %v5635, %v5651
        %v5670 = vmul.f32 %v5637, %v5653
        %v5671 = vmul.f32 %v5639, %v5655
        %5680 = vrot.lane.b32.xlu0 %v5664, 32
        %v5681 = vpop.permute.xlu0 %5680
        %5682 = vrot.lane.b32.xlu0 %v5665, 32
        %v5683 = vpop.permute.xlu0 %5682
        %5684 = vrot.lane.b32.xlu0 %v5666, 32
        %v5685 = vpop.permute.xlu0 %5684
        %5686 = vrot.lane.b32.xlu0 %v5667, 32
        %v5687 = vpop.permute.xlu0 %5686
        %5688 = vrot.lane.b32.xlu0 %v5668, 32
        %v5689 = vpop.permute.xlu0 %5688
        %5690 = vrot.lane.b32.xlu0 %v5669, 32
        %v5691 = vpop.permute.xlu0 %5690
        %5692 = vrot.lane.b32.xlu0 %v5670, 32
        %v5693 = vpop.permute.xlu0 %5692
        %5694 = vrot.lane.b32.xlu0 %v5671, 32
        %v5695 = vpop.permute.xlu0 %5694
        %v5704 = vadd.f32 %v425, %v5681
        %v5705 = vadd.f32 %v430, %v5683
        %v5706 = vadd.f32 %v435, %v5685
        %v5707 = vadd.f32 %v440, %v5687
        %v5708 = vadd.f32 %v445, %v5689
        %v5709 = vadd.f32 %v450, %v5691
        %v5710 = vadd.f32 %v455, %v5693
        %v5711 = vadd.f32 %v460, %v5695
        %v5712 = vtanh.pop %v5704
        %v5713 = vtanh.pop %v5705
        %v5714 = vtanh.pop %v5706
        %v5715 = vtanh.pop %v5707
        %v5716 = vtanh.pop %v5708
        %v5717 = vtanh.pop %v5709
        %v5718 = vtanh.pop %v5710
        %v5719 = vtanh.pop %v5711
        %v5720 = vsub.f32 1.0, %v5625
        %v5721 = vsub.f32 1.0, %v5627
        %v5722 = vsub.f32 1.0, %v5629
        %v5723 = vsub.f32 1.0, %v5631
        %v5724 = vsub.f32 1.0, %v5633
        %v5725 = vsub.f32 1.0, %v5635
        %v5726 = vsub.f32 1.0, %v5637
        %v5727 = vsub.f32 1.0, %v5639
        %5736 = vrot.lane.b32.xlu0 %v5712, 112
        %v5737 = vpop.permute.xlu0 %5736
        %5738 = vrot.lane.b32.xlu0 %v5713, 112
        %v5739 = vpop.permute.xlu0 %5738
        %5740 = vrot.lane.b32.xlu0 %v5714, 112
        %v5741 = vpop.permute.xlu0 %5740
        %5742 = vrot.lane.b32.xlu0 %v5715, 112
        %v5743 = vpop.permute.xlu0 %5742
        %5744 = vrot.lane.b32.xlu0 %v5716, 112
        %v5745 = vpop.permute.xlu0 %5744
        %5746 = vrot.lane.b32.xlu0 %v5717, 112
        %v5747 = vpop.permute.xlu0 %5746
        %5748 = vrot.lane.b32.xlu0 %v5718, 112
        %v5749 = vpop.permute.xlu0 %5748
        %5750 = vrot.lane.b32.xlu0 %v5719, 112
        %v5751 = vpop.permute.xlu0 %5750
        %v5760 = vmul.f32 %v5720, %v5737
        %v5761 = vmul.f32 %v5721, %v5739
        %v5762 = vmul.f32 %v5722, %v5741
        %v5763 = vmul.f32 %v5723, %v5743
        %v5764 = vmul.f32 %v5724, %v5745
        %v5765 = vmul.f32 %v5725, %v5747
        %v5766 = vmul.f32 %v5726, %v5749
        %v5767 = vmul.f32 %v5727, %v5751
        %v5768 = vrot.slane %v5478, 7
        %v5769 = vrot.slane %v5478, 1
        %v5770 = vrot.slane %v5478, 2
        %v5771 = vrot.slane %v5478, 3
        %v5772 = vrot.slane %v5478, 4
        %v5773 = vrot.slane %v5478, 5
        %v5774 = vrot.slane %v5478, 6
        %5775 = vrot.lane.b32.xlu0 %v5768, 64
        %v5776 = vpop.permute.xlu0 %5775
        %5777 = vrot.lane.b32.xlu0 %v5478, 64
        %v5778 = vpop.permute.xlu0 %5777
        %5779 = vrot.lane.b32.xlu0 %v5769, 64
        %v5780 = vpop.permute.xlu0 %5779
        %5781 = vrot.lane.b32.xlu0 %v5770, 64
        %v5782 = vpop.permute.xlu0 %5781
        %5783 = vrot.lane.b32.xlu0 %v5771, 64
        %v5784 = vpop.permute.xlu0 %5783
        %5785 = vrot.lane.b32.xlu0 %v5772, 64
        %v5786 = vpop.permute.xlu0 %5785
        %5787 = vrot.lane.b32.xlu0 %v5773, 64
        %v5788 = vpop.permute.xlu0 %5787
        %5789 = vrot.lane.b32.xlu0 %v5774, 64
        %v5790 = vpop.permute.xlu0 %5789
        %v5799 = vmul.f32 %v5625, %v5776
        %v5800 = vmul.f32 %v5627, %v5778
        %v5801 = vmul.f32 %v5629, %v5780
        %v5802 = vmul.f32 %v5631, %v5782
        %v5803 = vmul.f32 %v5633, %v5784
        %v5804 = vmul.f32 %v5635, %v5786
        %v5805 = vmul.f32 %v5637, %v5788
        %v5806 = vmul.f32 %v5639, %v5790
        %v5807 = vadd.f32 %v5760, %v5799
        %v5808 = vadd.f32 %v5761, %v5800
        %v5809 = vadd.f32 %v5762, %v5801
        %v5810 = vadd.f32 %v5763, %v5802
        %v5811 = vadd.f32 %v5764, %v5803
        %v5812 = vadd.f32 %v5765, %v5804
        %v5813 = vadd.f32 %v5766, %v5805
        %v5814 = vadd.f32 %v5767, %v5806
        %v5823 = vrot.slane %v5807, 1
        %v5824 = vsel %vm775, %v5808, %v5823
        %v5825 = vrot.slane %v5809, 7
        %v5826 = vsel %vm778, %v5825, %v5824
        %v5827 = vrot.slane %v5810, 6
        %v5828 = vsel %vm781, %v5827, %v5826
        %v5829 = vrot.slane %v5811, 5
        %v5830 = vsel %vm784, %v5829, %v5828
        %v5831 = vrot.slane %v5812, 4
        %v5832 = vsel %vm787, %v5831, %v5830
        %v5833 = vrot.slane %v5813, 3
        %v5834 = vsel %vm790, %v5833, %v5832
        %v5835 = vrot.slane %v5814, 2
        %v5836 = vsel %vm793, %v5835, %v5834
        %5837 = vrot.lane.b32.xlu0 %v5836, 64
        %v5838 = vpop.permute.xlu0 %5837
        %v5840 = vmul.f32 %v1130, %v5838
        %v5841 = vmul.f32 %v1162, %v5478
        %v5842 = vadd.f32 %v5840, %v5841
        %v5844 = vsel %vm333, %v5842, 0
        %5846 = vmatprep.subr.mxu0 0.0
        %5847 = vmatpush1.msra.mxu0 %v3313
        %5848 = vmatprep.subr.mxu0 0.0
        %5849 = vmatpush1.msra.mxu0 %v3314
        %5850 = vmatprep.subr.mxu0 0.0
        %5851 = vmatpush1.msra.mxu0 0.0
        %5852 = vmatprep.subr.mxu0 0.0
        %5853 = vmatpush1.msra.mxu0 0.0
        %5854 = vmatprep.subr.mxu0 0.0
        %5855 = vmatpush1.msra.mxu0 0.0
        %5856 = vmatprep.subr.mxu0 0.0
        %5857 = vmatpush1.msra.mxu0 0.0
        %5858 = vmatprep.subr.mxu0 0.0
        %5859 = vmatpush1.msra.mxu0 0.0
        %5860 = vmatprep.subr.mxu0 0.0
        %5861 = vmatpush1.msra.mxu0 0.0
        %5862 = vmatprep.subr.mxu0 0.0
        %5863 = vmatpush1.msra.mxu0 0.0
        %5864 = vmatprep.subr.mxu0 0.0
        %5865 = vmatpush1.msra.mxu0 0.0
        %5866 = vmatprep.subr.mxu0 0.0
        %5867 = vmatpush1.msra.mxu0 0.0
        %5868 = vmatprep.subr.mxu0 0.0
        %5869 = vmatpush1.msra.mxu0 0.0
        %5870 = vmatprep.subr.mxu0 0.0
        %5871 = vmatpush1.msra.mxu0 0.0
        %5872 = vmatprep.subr.mxu0 0.0
        %5873 = vmatpush1.msra.mxu0 0.0
        %5874 = vmatprep.subr.mxu0 0.0
        %5875 = vmatpush1.msra.mxu0 0.0
        %5876 = vmatprep.subr.mxu0 0.0
        %5877 = vmatpush1.msra.mxu0 0.0
        %5878 = vmatprep.subr.mxu0 0.0
        %5879 = vmatpush1.msra.mxu0 0.0
        %5880 = vmatprep.subr.mxu0 0.0
        %5881 = vmatpush1.msra.mxu0 0.0
        %5882 = vmatprep.subr.mxu0 0.0
        %5883 = vmatpush1.msra.mxu0 0.0
        %5884 = vmatprep.subr.mxu0 0.0
        %5885 = vmatpush1.msra.mxu0 0.0
        %5886 = vmatprep.subr.mxu0 0.0
        %5887 = vmatpush1.msra.mxu0 0.0
        %5888 = vmatprep.subr.mxu0 0.0
        %5889 = vmatpush1.msra.mxu0 0.0
        %5890 = vmatprep.subr.mxu0 0.0
        %5891 = vmatpush1.msra.mxu0 0.0
        %5892 = vmatprep.subr.mxu0 0.0
        %5893 = vmatpush1.msra.mxu0 0.0
        %5894 = vmatprep.subr.mxu0 0.0
        %5895 = vmatpush1.msra.mxu0 0.0
        %5896 = vmatprep.subr.mxu0 0.0
        %5897 = vmatpush1.msra.mxu0 0.0
        %5898 = vmatprep.subr.mxu0 0.0
        %5899 = vmatpush1.msra.mxu0 0.0
        %5900 = vmatprep.subr.mxu0 0.0
        %5901 = vmatpush1.msra.mxu0 0.0
        %5902 = vmatprep.subr.mxu0 0.0
        %5903 = vmatpush1.msra.mxu0 0.0
        %5904 = vmatprep.subr.mxu0 0.0
        %5905 = vmatpush1.msra.mxu0 0.0
        %5906 = vmatprep.subr.mxu0 0.0
        %5907 = vmatpush1.msra.mxu0 0.0
        %5908 = vmatprep.subr.mxu0 0.0
        %5909 = vmatpush1.msra.mxu0 0.0
        %5910 = vmatprep.mubr.f32.mxu0 0.0
        %5911 = vmatmul.mubr.f32.gmra.mrb[0].mxu0 %v5844
        %v5912 = vpop.f32.mrb[0].mxu0
        %v5913 = vadd.f32 %v3321, %v5912
        %v5914 = vpop.f32.mrb[0].mxu0
        %5915 = vdwg.mxu0
        %v5917 = vrot.slane %v5913, 1
        %v5918 = vrot.slane %v5913, 2
        %v5919 = vrot.slane %v5913, 3
        %v5920 = vrot.slane %v5913, 4
        %v5921 = vrot.slane %v5913, 5
        %v5922 = vrot.slane %v5913, 6
        %v5923 = vrot.slane %v5913, 7
        %5924 = vrot.lane.b32.xlu0 %v5913, 48
        %v5925 = vpop.permute.xlu0 %5924
        %5926 = vrot.lane.b32.xlu0 %v5917, 48
        %v5927 = vpop.permute.xlu0 %5926
        %5928 = vrot.lane.b32.xlu0 %v5918, 48
        %v5929 = vpop.permute.xlu0 %5928
        %5930 = vrot.lane.b32.xlu0 %v5919, 48
        %v5931 = vpop.permute.xlu0 %5930
        %5932 = vrot.lane.b32.xlu0 %v5920, 48
        %v5933 = vpop.permute.xlu0 %5932
        %5934 = vrot.lane.b32.xlu0 %v5921, 48
        %v5935 = vpop.permute.xlu0 %5934
        %5936 = vrot.lane.b32.xlu0 %v5922, 48
        %v5937 = vpop.permute.xlu0 %5936
        %5938 = vrot.lane.b32.xlu0 %v5923, 48
        %v5939 = vpop.permute.xlu0 %5938
        %v5948 = vadd.f32 %v425, %v5925
        %v5949 = vadd.f32 %v430, %v5927
        %v5950 = vadd.f32 %v435, %v5929
        %v5951 = vadd.f32 %v440, %v5931
        %v5952 = vadd.f32 %v445, %v5933
        %v5953 = vadd.f32 %v450, %v5935
        %v5954 = vadd.f32 %v455, %v5937
        %v5955 = vadd.f32 %v460, %v5939
        %v5956 = vxor.u32 %v5948, 2147483648
        %v5957 = vxor.u32 %v5949, 2147483648
        %v5958 = vxor.u32 %v5950, 2147483648
        %v5959 = vxor.u32 %v5951, 2147483648
        %v5960 = vxor.u32 %v5952, 2147483648
        %v5961 = vxor.u32 %v5953, 2147483648
        %v5962 = vxor.u32 %v5954, 2147483648
        %v5963 = vxor.u32 %v5955, 2147483648
        %v5964 = vmul.f32 %v5956, 1.442695
        %v5965 = vpow.pop %v5964
        %v5966 = vmul.f32 %v5957, 1.442695
        %v5967 = vpow.pop %v5966
        %v5968 = vmul.f32 %v5958, 1.442695
        %v5969 = vpow.pop %v5968
        %v5970 = vmul.f32 %v5959, 1.442695
        %v5971 = vpow.pop %v5970
        %v5972 = vmul.f32 %v5960, 1.442695
        %v5973 = vpow.pop %v5972
        %v5974 = vmul.f32 %v5961, 1.442695
        %v5975 = vpow.pop %v5974
        %v5976 = vmul.f32 %v5962, 1.442695
        %v5977 = vpow.pop %v5976
        %v5978 = vmul.f32 %v5963, 1.442695
        %v5979 = vpow.pop %v5978
        %v5980 = vadd.f32 %v5965, 1.0
        %v5981 = vadd.f32 %v5967, 1.0
        %v5982 = vadd.f32 %v5969, 1.0
        %v5983 = vadd.f32 %v5971, 1.0
        %v5984 = vadd.f32 %v5973, 1.0
        %v5985 = vadd.f32 %v5975, 1.0
        %v5986 = vadd.f32 %v5977, 1.0
        %v5987 = vadd.f32 %v5979, 1.0
        %v5988 = vrcp.pop %v5980
        %v5989 = vmul.f32 1.0, %v5988
        %v5990 = vrcp.pop %v5981
        %v5991 = vmul.f32 1.0, %v5990
        %v5992 = vrcp.pop %v5982
        %v5993 = vmul.f32 1.0, %v5992
        %v5994 = vrcp.pop %v5983
        %v5995 = vmul.f32 1.0, %v5994
        %v5996 = vrcp.pop %v5984
        %v5997 = vmul.f32 1.0, %v5996
        %v5998 = vrcp.pop %v5985
        %v5999 = vmul.f32 1.0, %v5998
        %v6000 = vrcp.pop %v5986
        %v6001 = vmul.f32 1.0, %v6000
        %v6002 = vrcp.pop %v5987
        %v6003 = vmul.f32 1.0, %v6002
        %6004 = vrot.lane.b32.xlu0 %v5913, 16
        %v6005 = vpop.permute.xlu0 %6004
        %6006 = vrot.lane.b32.xlu0 %v5917, 16
        %v6007 = vpop.permute.xlu0 %6006
        %6008 = vrot.lane.b32.xlu0 %v5918, 16
        %v6009 = vpop.permute.xlu0 %6008
        %6010 = vrot.lane.b32.xlu0 %v5919, 16
        %v6011 = vpop.permute.xlu0 %6010
        %6012 = vrot.lane.b32.xlu0 %v5920, 16
        %v6013 = vpop.permute.xlu0 %6012
        %6014 = vrot.lane.b32.xlu0 %v5921, 16
        %v6015 = vpop.permute.xlu0 %6014
        %6016 = vrot.lane.b32.xlu0 %v5922, 16
        %v6017 = vpop.permute.xlu0 %6016
        %6018 = vrot.lane.b32.xlu0 %v5923, 16
        %v6019 = vpop.permute.xlu0 %6018
        %v6028 = vmul.f32 %v5989, %v6005
        %v6029 = vmul.f32 %v5991, %v6007
        %v6030 = vmul.f32 %v5993, %v6009
        %v6031 = vmul.f32 %v5995, %v6011
        %v6032 = vmul.f32 %v5997, %v6013
        %v6033 = vmul.f32 %v5999, %v6015
        %v6034 = vmul.f32 %v6001, %v6017
        %v6035 = vmul.f32 %v6003, %v6019
        %6044 = vrot.lane.b32.xlu0 %v6028, 32
        %v6045 = vpop.permute.xlu0 %6044
        %6046 = vrot.lane.b32.xlu0 %v6029, 32
        %v6047 = vpop.permute.xlu0 %6046
        %6048 = vrot.lane.b32.xlu0 %v6030, 32
        %v6049 = vpop.permute.xlu0 %6048
        %6050 = vrot.lane.b32.xlu0 %v6031, 32
        %v6051 = vpop.permute.xlu0 %6050
        %6052 = vrot.lane.b32.xlu0 %v6032, 32
        %v6053 = vpop.permute.xlu0 %6052
        %6054 = vrot.lane.b32.xlu0 %v6033, 32
        %v6055 = vpop.permute.xlu0 %6054
        %6056 = vrot.lane.b32.xlu0 %v6034, 32
        %v6057 = vpop.permute.xlu0 %6056
        %6058 = vrot.lane.b32.xlu0 %v6035, 32
        %v6059 = vpop.permute.xlu0 %6058
        %v6068 = vadd.f32 %v425, %v6045
        %v6069 = vadd.f32 %v430, %v6047
        %v6070 = vadd.f32 %v435, %v6049
        %v6071 = vadd.f32 %v440, %v6051
        %v6072 = vadd.f32 %v445, %v6053
        %v6073 = vadd.f32 %v450, %v6055
        %v6074 = vadd.f32 %v455, %v6057
        %v6075 = vadd.f32 %v460, %v6059
        %v6076 = vtanh.pop %v6068
        %v6077 = vtanh.pop %v6069
        %v6078 = vtanh.pop %v6070
        %v6079 = vtanh.pop %v6071
        %v6080 = vtanh.pop %v6072
        %v6081 = vtanh.pop %v6073
        %v6082 = vtanh.pop %v6074
        %v6083 = vtanh.pop %v6075
        %v6084 = vsub.f32 1.0, %v5989
        %v6085 = vsub.f32 1.0, %v5991
        %v6086 = vsub.f32 1.0, %v5993
        %v6087 = vsub.f32 1.0, %v5995
        %v6088 = vsub.f32 1.0, %v5997
        %v6089 = vsub.f32 1.0, %v5999
        %v6090 = vsub.f32 1.0, %v6001
        %v6091 = vsub.f32 1.0, %v6003
        %6100 = vrot.lane.b32.xlu0 %v6076, 112
        %v6101 = vpop.permute.xlu0 %6100
        %6102 = vrot.lane.b32.xlu0 %v6077, 112
        %v6103 = vpop.permute.xlu0 %6102
        %6104 = vrot.lane.b32.xlu0 %v6078, 112
        %v6105 = vpop.permute.xlu0 %6104
        %6106 = vrot.lane.b32.xlu0 %v6079, 112
        %v6107 = vpop.permute.xlu0 %6106
        %6108 = vrot.lane.b32.xlu0 %v6080, 112
        %v6109 = vpop.permute.xlu0 %6108
        %6110 = vrot.lane.b32.xlu0 %v6081, 112
        %v6111 = vpop.permute.xlu0 %6110
        %6112 = vrot.lane.b32.xlu0 %v6082, 112
        %v6113 = vpop.permute.xlu0 %6112
        %6114 = vrot.lane.b32.xlu0 %v6083, 112
        %v6115 = vpop.permute.xlu0 %6114
        %v6124 = vmul.f32 %v6084, %v6101
        %v6125 = vmul.f32 %v6085, %v6103
        %v6126 = vmul.f32 %v6086, %v6105
        %v6127 = vmul.f32 %v6087, %v6107
        %v6128 = vmul.f32 %v6088, %v6109
        %v6129 = vmul.f32 %v6089, %v6111
        %v6130 = vmul.f32 %v6090, %v6113
        %v6131 = vmul.f32 %v6091, %v6115
        %v6132 = vrot.slane %v5842, 1
        %v6133 = vrot.slane %v5842, 2
        %v6134 = vrot.slane %v5842, 3
        %v6135 = vrot.slane %v5842, 4
        %v6136 = vrot.slane %v5842, 5
        %v6137 = vrot.slane %v5842, 6
        %v6138 = vrot.slane %v5842, 7
        %6139 = vrot.lane.b32.xlu0 %v5842, 64
        %v6140 = vpop.permute.xlu0 %6139
        %6141 = vrot.lane.b32.xlu0 %v6132, 64
        %v6142 = vpop.permute.xlu0 %6141
        %6143 = vrot.lane.b32.xlu0 %v6133, 64
        %v6144 = vpop.permute.xlu0 %6143
        %6145 = vrot.lane.b32.xlu0 %v6134, 64
        %v6146 = vpop.permute.xlu0 %6145
        %6147 = vrot.lane.b32.xlu0 %v6135, 64
        %v6148 = vpop.permute.xlu0 %6147
        %6149 = vrot.lane.b32.xlu0 %v6136, 64
        %v6150 = vpop.permute.xlu0 %6149
        %6151 = vrot.lane.b32.xlu0 %v6137, 64
        %v6152 = vpop.permute.xlu0 %6151
        %6153 = vrot.lane.b32.xlu0 %v6138, 64
        %v6154 = vpop.permute.xlu0 %6153
        %v6163 = vmul.f32 %v5989, %v6140
        %v6164 = vmul.f32 %v5991, %v6142
        %v6165 = vmul.f32 %v5993, %v6144
        %v6166 = vmul.f32 %v5995, %v6146
        %v6167 = vmul.f32 %v5997, %v6148
        %v6168 = vmul.f32 %v5999, %v6150
        %v6169 = vmul.f32 %v6001, %v6152
        %v6170 = vmul.f32 %v6003, %v6154
        %v6171 = vadd.f32 %v6124, %v6163
        %v6172 = vadd.f32 %v6125, %v6164
        %v6173 = vadd.f32 %v6126, %v6165
        %v6174 = vadd.f32 %v6127, %v6166
        %v6175 = vadd.f32 %v6128, %v6167
        %v6176 = vadd.f32 %v6129, %v6168
        %v6177 = vadd.f32 %v6130, %v6169
        %v6178 = vadd.f32 %v6131, %v6170
        %v6187 = vrot.slane %v6172, 7
        %v6188 = vsel %vm775, %v6187, %v6171
        %v6189 = vrot.slane %v6173, 6
        %v6190 = vsel %vm778, %v6189, %v6188
        %v6191 = vrot.slane %v6174, 5
        %v6192 = vsel %vm781, %v6191, %v6190
        %v6193 = vrot.slane %v6175, 4
        %v6194 = vsel %vm784, %v6193, %v6192
        %v6195 = vrot.slane %v6176, 3
        %v6196 = vsel %vm787, %v6195, %v6194
        %v6197 = vrot.slane %v6177, 2
        %v6198 = vsel %vm790, %v6197, %v6196
        %v6199 = vrot.slane %v6178, 1
        %v6200 = vsel %vm793, %v6199, %v6198
        %6201 = vrot.lane.b32.xlu0 %v6200, 64
        %v6202 = vpop.permute.xlu0 %6201
        %v6204 = vmul.f32 %v764, %v6202
        %6206 = vrot.lane.b32.xlu0 %v6204, 16
        %v6207 = vpop.permute.xlu0 %6206
        %v6209 = vsel %vm333, %v798, %v6207
        %v6211 = vcombine.high %v6209, %v6209
        %v6213 = vunpack.c.l.s4 1966171168
        %v6214 = vunpack.c.0.s8 %v6213
        %v6215 = vlaneseq
        %v6216 = vshrl.u32 %v6215, 7
        %v6217 = vsub.s32 %v6214, %v6216
        %v6218 = vrot.slane %v6209, %v6217
        %v6220 = vunpack.c.l.s4 1966171168
        %v6221 = vunpack.c.0.s8 %v6220
        %v6222 = vlaneseq
        %v6223 = vshrl.u32 %v6222, 7
        %v6224 = vsub.s32 %v6221, %v6223
        %v6225 = vrot.slane %v6211, %v6224
        %v6226 = vcombine.high %v6218, %v6218
        %v6227 = vcombine.high %v6225, %v6225
        %v6229 = vunpack.c.l.s4 1966171168
        %v6230 = vunpack.c.0.s8 %v6229
        %v6231 = vlaneseq
        %v6232 = vshrl.u32 %v6231, 7
        %v6233 = vsub.s32 %v6230, %v6232
        %v6234 = vrot.slane %v6218, %v6233
        %v6236 = vunpack.c.l.s4 1966171168
        %v6237 = vunpack.c.0.s8 %v6236
        %v6238 = vlaneseq
        %v6239 = vshrl.u32 %v6238, 7
        %v6240 = vsub.s32 %v6237, %v6239
        %v6241 = vrot.slane %v6225, %v6240
        %v6243 = vunpack.c.l.s4 1966171168
        %v6244 = vunpack.c.0.s8 %v6243
        %v6245 = vlaneseq
        %v6246 = vshrl.u32 %v6245, 7
        %v6247 = vsub.s32 %v6244, %v6246
        %v6248 = vrot.slane %v6226, %v6247
        %v6250 = vunpack.c.l.s4 1966171168
        %v6251 = vunpack.c.0.s8 %v6250
        %v6252 = vlaneseq
        %v6253 = vshrl.u32 %v6252, 7
        %v6254 = vsub.s32 %v6251, %v6253
        %v6255 = vrot.slane %v6227, %v6254
        %v6256 = vcombine.high %v6234, %v6234
        %v6257 = vcombine.high %v6241, %v6241
        %v6258 = vcombine.high %v6248, %v6248
        %v6259 = vcombine.high %v6255, %v6255
        %vm6268 = vcmask 253952
        %6269 = vst.msk [vmem:[%s289] sm:$0x1] %vm6268, %v6234
        %6270 = vst.msk [vmem:[%s289 + $0x8] sm:$0x1] %vm6268, %v6248
        %6271 = vst.msk [vmem:[%s289 + $0x10] sm:$0x1] %vm6268, %v6256
        %6272 = vst.msk [vmem:[%s289 + $0x18] sm:$0x1] %vm6268, %v6258
        %6273 = vst.msk [vmem:[%s289 + $0x20] sm:$0x1] %vm6268, %v6241
        %6274 = vst.msk [vmem:[%s289 + $0x28] sm:$0x1] %vm6268, %v6255
        %6275 = vst.msk [vmem:[%s289 + $0x30] sm:$0x1] %vm6268, %v6257
        %6276 = vst.msk [vmem:[%s289 + $0x38] sm:$0x1] %vm6268, %v6259
        %6278 = vrot.lane.b32.xlu0 %v5840, 16
        %v6279 = vpop.permute.xlu0 %6278
        %v6281 = vsel %vm333, %v1157, %v6279
        %v6283 = vcombine.high %v6281, %v6281
        %v6285 = vunpack.c.l.s4 1966171168
        %v6286 = vunpack.c.0.s8 %v6285
        %v6287 = vlaneseq
        %v6288 = vshrl.u32 %v6287, 7
        %v6289 = vsub.s32 %v6286, %v6288
        %v6290 = vrot.slane %v6281, %v6289
        %v6292 = vunpack.c.l.s4 1966171168
        %v6293 = vunpack.c.0.s8 %v6292
        %v6294 = vlaneseq
        %v6295 = vshrl.u32 %v6294, 7
        %v6296 = vsub.s32 %v6293, %v6295
        %v6297 = vrot.slane %v6283, %v6296
        %v6298 = vcombine.high %v6290, %v6290
        %v6299 = vcombine.high %v6297, %v6297
        %v6301 = vunpack.c.l.s4 1966171168
        %v6302 = vunpack.c.0.s8 %v6301
        %v6303 = vlaneseq
        %v6304 = vshrl.u32 %v6303, 7
        %v6305 = vsub.s32 %v6302, %v6304
        %v6306 = vrot.slane %v6290, %v6305
        %v6308 = vunpack.c.l.s4 1966171168
        %v6309 = vunpack.c.0.s8 %v6308
        %v6310 = vlaneseq
        %v6311 = vshrl.u32 %v6310, 7
        %v6312 = vsub.s32 %v6309, %v6311
        %v6313 = vrot.slane %v6297, %v6312
        %v6315 = vunpack.c.l.s4 1966171168
        %v6316 = vunpack.c.0.s8 %v6315
        %v6317 = vlaneseq
        %v6318 = vshrl.u32 %v6317, 7
        %v6319 = vsub.s32 %v6316, %v6318
        %v6320 = vrot.slane %v6298, %v6319
        %v6322 = vunpack.c.l.s4 1966171168
        %v6323 = vunpack.c.0.s8 %v6322
        %v6324 = vlaneseq
        %v6325 = vshrl.u32 %v6324, 7
        %v6326 = vsub.s32 %v6323, %v6325
        %v6327 = vrot.slane %v6299, %v6326
        %v6328 = vcombine.high %v6306, %v6306
        %v6329 = vcombine.high %v6313, %v6313
        %v6330 = vcombine.high %v6320, %v6320
        %v6331 = vcombine.high %v6327, %v6327
        %6340 = vst.msk [vmem:[%s289 + $0x1] sm:$0x1] %vm6268, %v6306
        %6341 = vst.msk [vmem:[%s289 + $0x9] sm:$0x1] %vm6268, %v6320
        %6342 = vst.msk [vmem:[%s289 + $0x11] sm:$0x1] %vm6268, %v6328
        %6343 = vst.msk [vmem:[%s289 + $0x19] sm:$0x1] %vm6268, %v6330
        %6344 = vst.msk [vmem:[%s289 + $0x21] sm:$0x1] %vm6268, %v6313
        %6345 = vst.msk [vmem:[%s289 + $0x29] sm:$0x1] %vm6268, %v6327
        %6346 = vst.msk [vmem:[%s289 + $0x31] sm:$0x1] %vm6268, %v6329
        %6347 = vst.msk [vmem:[%s289 + $0x39] sm:$0x1] %vm6268, %v6331
        %6349 = vrot.lane.b32.xlu0 %v5476, 16
        %v6350 = vpop.permute.xlu0 %6349
        %v6352 = vsel %vm333, %v1516, %v6350
        %v6354 = vcombine.high %v6352, %v6352
        %v6356 = vunpack.c.l.s4 1966171168
        %v6357 = vunpack.c.0.s8 %v6356
        %v6358 = vlaneseq
        %v6359 = vshrl.u32 %v6358, 7
        %v6360 = vsub.s32 %v6357, %v6359
        %v6361 = vrot.slane %v6352, %v6360
        %v6363 = vunpack.c.l.s4 1966171168
        %v6364 = vunpack.c.0.s8 %v6363
        %v6365 = vlaneseq
        %v6366 = vshrl.u32 %v6365, 7
        %v6367 = vsub.s32 %v6364, %v6366
        %v6368 = vrot.slane %v6354, %v6367
        %v6369 = vcombine.high %v6361, %v6361
        %v6370 = vcombine.high %v6368, %v6368
        %v6372 = vunpack.c.l.s4 1966171168
        %v6373 = vunpack.c.0.s8 %v6372
        %v6374 = vlaneseq
        %v6375 = vshrl.u32 %v6374, 7
        %v6376 = vsub.s32 %v6373, %v6375
        %v6377 = vrot.slane %v6361, %v6376
        %v6379 = vunpack.c.l.s4 1966171168
        %v6380 = vunpack.c.0.s8 %v6379
        %v6381 = vlaneseq
        %v6382 = vshrl.u32 %v6381, 7
        %v6383 = vsub.s32 %v6380, %v6382
        %v6384 = vrot.slane %v6368, %v6383
        %v6386 = vunpack.c.l.s4 1966171168
        %v6387 = vunpack.c.0.s8 %v6386
        %v6388 = vlaneseq
        %v6389 = vshrl.u32 %v6388, 7
        %v6390 = vsub.s32 %v6387, %v6389
        %v6391 = vrot.slane %v6369, %v6390
        %v6393 = vunpack.c.l.s4 1966171168
        %v6394 = vunpack.c.0.s8 %v6393
        %v6395 = vlaneseq
        %v6396 = vshrl.u32 %v6395, 7
        %v6397 = vsub.s32 %v6394, %v6396
        %v6398 = vrot.slane %v6370, %v6397
        %v6399 = vcombine.high %v6377, %v6377
        %v6400 = vcombine.high %v6384, %v6384
        %v6401 = vcombine.high %v6391, %v6391
        %v6402 = vcombine.high %v6398, %v6398
        %6411 = vst.msk [vmem:[%s289 + $0x2] sm:$0x1] %vm6268, %v6377
        %6412 = vst.msk [vmem:[%s289 + $0xa] sm:$0x1] %vm6268, %v6391
        %6413 = vst.msk [vmem:[%s289 + $0x12] sm:$0x1] %vm6268, %v6399
        %6414 = vst.msk [vmem:[%s289 + $0x1a] sm:$0x1] %vm6268, %v6401
        %6415 = vst.msk [vmem:[%s289 + $0x22] sm:$0x1] %vm6268, %v6384
        %6416 = vst.msk [vmem:[%s289 + $0x2a] sm:$0x1] %vm6268, %v6398
        %6417 = vst.msk [vmem:[%s289 + $0x32] sm:$0x1] %vm6268, %v6400
        %6418 = vst.msk [vmem:[%s289 + $0x3a] sm:$0x1] %vm6268, %v6402
        %6420 = vrot.lane.b32.xlu0 %v5112, 16
        %v6421 = vpop.permute.xlu0 %6420
        %v6423 = vsel %vm333, %v1875, %v6421
        %v6425 = vcombine.high %v6423, %v6423
        %v6427 = vunpack.c.l.s4 1966171168
        %v6428 = vunpack.c.0.s8 %v6427
        %v6429 = vlaneseq
        %v6430 = vshrl.u32 %v6429, 7
        %v6431 = vsub.s32 %v6428, %v6430
        %v6432 = vrot.slane %v6423, %v6431
        %v6434 = vunpack.c.l.s4 1966171168
        %v6435 = vunpack.c.0.s8 %v6434
        %v6436 = vlaneseq
        %v6437 = vshrl.u32 %v6436, 7
        %v6438 = vsub.s32 %v6435, %v6437
        %v6439 = vrot.slane %v6425, %v6438
        %v6440 = vcombine.high %v6432, %v6432
        %v6441 = vcombine.high %v6439, %v6439
        %v6443 = vunpack.c.l.s4 1966171168
        %v6444 = vunpack.c.0.s8 %v6443
        %v6445 = vlaneseq
        %v6446 = vshrl.u32 %v6445, 7
        %v6447 = vsub.s32 %v6444, %v6446
        %v6448 = vrot.slane %v6432, %v6447
        %v6450 = vunpack.c.l.s4 1966171168
        %v6451 = vunpack.c.0.s8 %v6450
        %v6452 = vlaneseq
        %v6453 = vshrl.u32 %v6452, 7
        %v6454 = vsub.s32 %v6451, %v6453
        %v6455 = vrot.slane %v6439, %v6454
        %v6457 = vunpack.c.l.s4 1966171168
        %v6458 = vunpack.c.0.s8 %v6457
        %v6459 = vlaneseq
        %v6460 = vshrl.u32 %v6459, 7
        %v6461 = vsub.s32 %v6458, %v6460
        %v6462 = vrot.slane %v6440, %v6461
        %v6464 = vunpack.c.l.s4 1966171168
        %v6465 = vunpack.c.0.s8 %v6464
        %v6466 = vlaneseq
        %v6467 = vshrl.u32 %v6466, 7
        %v6468 = vsub.s32 %v6465, %v6467
        %v6469 = vrot.slane %v6441, %v6468
        %v6470 = vcombine.high %v6448, %v6448
        %v6471 = vcombine.high %v6455, %v6455
        %v6472 = vcombine.high %v6462, %v6462
        %v6473 = vcombine.high %v6469, %v6469
        %6482 = vst.msk [vmem:[%s289 + $0x3] sm:$0x1] %vm6268, %v6448
        %6483 = vst.msk [vmem:[%s289 + $0xb] sm:$0x1] %vm6268, %v6462
        %6484 = vst.msk [vmem:[%s289 + $0x13] sm:$0x1] %vm6268, %v6470
        %6485 = vst.msk [vmem:[%s289 + $0x1b] sm:$0x1] %vm6268, %v6472
        %6486 = vst.msk [vmem:[%s289 + $0x23] sm:$0x1] %vm6268, %v6455
        %6487 = vst.msk [vmem:[%s289 + $0x2b] sm:$0x1] %vm6268, %v6469
        %6488 = vst.msk [vmem:[%s289 + $0x33] sm:$0x1] %vm6268, %v6471
        %6489 = vst.msk [vmem:[%s289 + $0x3b] sm:$0x1] %vm6268, %v6473
        %6491 = vrot.lane.b32.xlu0 %v4748, 16
        %v6492 = vpop.permute.xlu0 %6491
        %v6494 = vsel %vm333, %v2234, %v6492
        %v6496 = vcombine.high %v6494, %v6494
        %v6498 = vunpack.c.l.s4 1966171168
        %v6499 = vunpack.c.0.s8 %v6498
        %v6500 = vlaneseq
        %v6501 = vshrl.u32 %v6500, 7
        %v6502 = vsub.s32 %v6499, %v6501
        %v6503 = vrot.slane %v6494, %v6502
        %v6505 = vunpack.c.l.s4 1966171168
        %v6506 = vunpack.c.0.s8 %v6505
        %v6507 = vlaneseq
        %v6508 = vshrl.u32 %v6507, 7
        %v6509 = vsub.s32 %v6506, %v6508
        %v6510 = vrot.slane %v6496, %v6509
        %v6511 = vcombine.high %v6503, %v6503
        %v6512 = vcombine.high %v6510, %v6510
        %v6514 = vunpack.c.l.s4 1966171168
        %v6515 = vunpack.c.0.s8 %v6514
        %v6516 = vlaneseq
        %v6517 = vshrl.u32 %v6516, 7
        %v6518 = vsub.s32 %v6515, %v6517
        %v6519 = vrot.slane %v6503, %v6518
        %v6521 = vunpack.c.l.s4 1966171168
        %v6522 = vunpack.c.0.s8 %v6521
        %v6523 = vlaneseq
        %v6524 = vshrl.u32 %v6523, 7
        %v6525 = vsub.s32 %v6522, %v6524
        %v6526 = vrot.slane %v6510, %v6525
        %v6528 = vunpack.c.l.s4 1966171168
        %v6529 = vunpack.c.0.s8 %v6528
        %v6530 = vlaneseq
        %v6531 = vshrl.u32 %v6530, 7
        %v6532 = vsub.s32 %v6529, %v6531
        %v6533 = vrot.slane %v6511, %v6532
        %v6535 = vunpack.c.l.s4 1966171168
        %v6536 = vunpack.c.0.s8 %v6535
        %v6537 = vlaneseq
        %v6538 = vshrl.u32 %v6537, 7
        %v6539 = vsub.s32 %v6536, %v6538
        %v6540 = vrot.slane %v6512, %v6539
        %v6541 = vcombine.high %v6519, %v6519
        %v6542 = vcombine.high %v6526, %v6526
        %v6543 = vcombine.high %v6533, %v6533
        %v6544 = vcombine.high %v6540, %v6540
        %6553 = vst.msk [vmem:[%s289 + $0x4] sm:$0x1] %vm6268, %v6519
        %6554 = vst.msk [vmem:[%s289 + $0xc] sm:$0x1] %vm6268, %v6533
        %6555 = vst.msk [vmem:[%s289 + $0x14] sm:$0x1] %vm6268, %v6541
        %6556 = vst.msk [vmem:[%s289 + $0x1c] sm:$0x1] %vm6268, %v6543
        %6557 = vst.msk [vmem:[%s289 + $0x24] sm:$0x1] %vm6268, %v6526
        %6558 = vst.msk [vmem:[%s289 + $0x2c] sm:$0x1] %vm6268, %v6540
        %6559 = vst.msk [vmem:[%s289 + $0x34] sm:$0x1] %vm6268, %v6542
        %6560 = vst.msk [vmem:[%s289 + $0x3c] sm:$0x1] %vm6268, %v6544
        %6562 = vrot.lane.b32.xlu0 %v4384, 16
        %v6563 = vpop.permute.xlu0 %6562
        %v6565 = vsel %vm333, %v2593, %v6563
        %v6567 = vcombine.high %v6565, %v6565
        %v6569 = vunpack.c.l.s4 1966171168
        %v6570 = vunpack.c.0.s8 %v6569
        %v6571 = vlaneseq
        %v6572 = vshrl.u32 %v6571, 7
        %v6573 = vsub.s32 %v6570, %v6572
        %v6574 = vrot.slane %v6565, %v6573
        %v6576 = vunpack.c.l.s4 1966171168
        %v6577 = vunpack.c.0.s8 %v6576
        %v6578 = vlaneseq
        %v6579 = vshrl.u32 %v6578, 7
        %v6580 = vsub.s32 %v6577, %v6579
        %v6581 = vrot.slane %v6567, %v6580
        %v6582 = vcombine.high %v6574, %v6574
        %v6583 = vcombine.high %v6581, %v6581
        %v6585 = vunpack.c.l.s4 1966171168
        %v6586 = vunpack.c.0.s8 %v6585
        %v6587 = vlaneseq
        %v6588 = vshrl.u32 %v6587, 7
        %v6589 = vsub.s32 %v6586, %v6588
        %v6590 = vrot.slane %v6574, %v6589
        %v6592 = vunpack.c.l.s4 1966171168
        %v6593 = vunpack.c.0.s8 %v6592
        %v6594 = vlaneseq
        %v6595 = vshrl.u32 %v6594, 7
        %v6596 = vsub.s32 %v6593, %v6595
        %v6597 = vrot.slane %v6581, %v6596
        %v6599 = vunpack.c.l.s4 1966171168
        %v6600 = vunpack.c.0.s8 %v6599
        %v6601 = vlaneseq
        %v6602 = vshrl.u32 %v6601, 7
        %v6603 = vsub.s32 %v6600, %v6602
        %v6604 = vrot.slane %v6582, %v6603
        %v6606 = vunpack.c.l.s4 1966171168
        %v6607 = vunpack.c.0.s8 %v6606
        %v6608 = vlaneseq
        %v6609 = vshrl.u32 %v6608, 7
        %v6610 = vsub.s32 %v6607, %v6609
        %v6611 = vrot.slane %v6583, %v6610
        %v6612 = vcombine.high %v6590, %v6590
        %v6613 = vcombine.high %v6597, %v6597
        %v6614 = vcombine.high %v6604, %v6604
        %v6615 = vcombine.high %v6611, %v6611
        %6624 = vst.msk [vmem:[%s289 + $0x5] sm:$0x1] %vm6268, %v6590
        %6625 = vst.msk [vmem:[%s289 + $0xd] sm:$0x1] %vm6268, %v6604
        %6626 = vst.msk [vmem:[%s289 + $0x15] sm:$0x1] %vm6268, %v6612
        %6627 = vst.msk [vmem:[%s289 + $0x1d] sm:$0x1] %vm6268, %v6614
        %6628 = vst.msk [vmem:[%s289 + $0x25] sm:$0x1] %vm6268, %v6597
        %6629 = vst.msk [vmem:[%s289 + $0x2d] sm:$0x1] %vm6268, %v6611
        %6630 = vst.msk [vmem:[%s289 + $0x35] sm:$0x1] %vm6268, %v6613
        %6631 = vst.msk [vmem:[%s289 + $0x3d] sm:$0x1] %vm6268, %v6615
        %6633 = vrot.lane.b32.xlu0 %v4020, 16
        %v6634 = vpop.permute.xlu0 %6633
        %v6636 = vsel %vm333, %v2952, %v6634
        %v6638 = vcombine.high %v6636, %v6636
        %v6640 = vunpack.c.l.s4 1966171168
        %v6641 = vunpack.c.0.s8 %v6640
        %v6642 = vlaneseq
        %v6643 = vshrl.u32 %v6642, 7
        %v6644 = vsub.s32 %v6641, %v6643
        %v6645 = vrot.slane %v6636, %v6644
        %v6647 = vunpack.c.l.s4 1966171168
        %v6648 = vunpack.c.0.s8 %v6647
        %v6649 = vlaneseq
        %v6650 = vshrl.u32 %v6649, 7
        %v6651 = vsub.s32 %v6648, %v6650
        %v6652 = vrot.slane %v6638, %v6651
        %v6653 = vcombine.high %v6645, %v6645
        %v6654 = vcombine.high %v6652, %v6652
        %v6656 = vunpack.c.l.s4 1966171168
        %v6657 = vunpack.c.0.s8 %v6656
        %v6658 = vlaneseq
        %v6659 = vshrl.u32 %v6658, 7
        %v6660 = vsub.s32 %v6657, %v6659
        %v6661 = vrot.slane %v6645, %v6660
        %v6663 = vunpack.c.l.s4 1966171168
        %v6664 = vunpack.c.0.s8 %v6663
        %v6665 = vlaneseq
        %v6666 = vshrl.u32 %v6665, 7
        %v6667 = vsub.s32 %v6664, %v6666
        %v6668 = vrot.slane %v6652, %v6667
        %v6670 = vunpack.c.l.s4 1966171168
        %v6671 = vunpack.c.0.s8 %v6670
        %v6672 = vlaneseq
        %v6673 = vshrl.u32 %v6672, 7
        %v6674 = vsub.s32 %v6671, %v6673
        %v6675 = vrot.slane %v6653, %v6674
        %v6677 = vunpack.c.l.s4 1966171168
        %v6678 = vunpack.c.0.s8 %v6677
        %v6679 = vlaneseq
        %v6680 = vshrl.u32 %v6679, 7
        %v6681 = vsub.s32 %v6678, %v6680
        %v6682 = vrot.slane %v6654, %v6681
        %v6683 = vcombine.high %v6661, %v6661
        %v6684 = vcombine.high %v6668, %v6668
        %v6685 = vcombine.high %v6675, %v6675
        %v6686 = vcombine.high %v6682, %v6682
        %6695 = vst.msk [vmem:[%s289 + $0x6] sm:$0x1] %vm6268, %v6661
        %6696 = vst.msk [vmem:[%s289 + $0xe] sm:$0x1] %vm6268, %v6675
        %6697 = vst.msk [vmem:[%s289 + $0x16] sm:$0x1] %vm6268, %v6683
        %6698 = vst.msk [vmem:[%s289 + $0x1e] sm:$0x1] %vm6268, %v6685
        %6699 = vst.msk [vmem:[%s289 + $0x26] sm:$0x1] %vm6268, %v6668
        %6700 = vst.msk [vmem:[%s289 + $0x2e] sm:$0x1] %vm6268, %v6682
        %6701 = vst.msk [vmem:[%s289 + $0x36] sm:$0x1] %vm6268, %v6684
        %6702 = vst.msk [vmem:[%s289 + $0x3e] sm:$0x1] %vm6268, %v6686
        %6704 = vrot.lane.b32.xlu0 %v3650, 16
        %v6705 = vpop.permute.xlu0 %6704
        %v6707 = vsel %vm333, %v3311, %v6705
        %v6709 = vcombine.high %v6707, %v6707
        %v6711 = vunpack.c.l.s4 1966171168
        %v6712 = vunpack.c.0.s8 %v6711
        %v6713 = vlaneseq
        %v6714 = vshrl.u32 %v6713, 7
        %v6715 = vsub.s32 %v6712, %v6714
        %v6716 = vrot.slane %v6707, %v6715
        %v6718 = vunpack.c.l.s4 1966171168
        %v6719 = vunpack.c.0.s8 %v6718
        %v6720 = vlaneseq
        %v6721 = vshrl.u32 %v6720, 7
        %v6722 = vsub.s32 %v6719, %v6721
        %v6723 = vrot.slane %v6709, %v6722
        %v6724 = vcombine.high %v6716, %v6716
        %v6725 = vcombine.high %v6723, %v6723
        %v6727 = vunpack.c.l.s4 1966171168
        %v6728 = vunpack.c.0.s8 %v6727
        %v6729 = vlaneseq
        %v6730 = vshrl.u32 %v6729, 7
        %v6731 = vsub.s32 %v6728, %v6730
        %v6732 = vrot.slane %v6716, %v6731
        %v6734 = vunpack.c.l.s4 1966171168
        %v6735 = vunpack.c.0.s8 %v6734
        %v6736 = vlaneseq
        %v6737 = vshrl.u32 %v6736, 7
        %v6738 = vsub.s32 %v6735, %v6737
        %v6739 = vrot.slane %v6723, %v6738
        %v6741 = vunpack.c.l.s4 1966171168
        %v6742 = vunpack.c.0.s8 %v6741
        %v6743 = vlaneseq
        %v6744 = vshrl.u32 %v6743, 7
        %v6745 = vsub.s32 %v6742, %v6744
        %v6746 = vrot.slane %v6724, %v6745
        %v6748 = vunpack.c.l.s4 1966171168
        %v6749 = vunpack.c.0.s8 %v6748
        %v6750 = vlaneseq
        %v6751 = vshrl.u32 %v6750, 7
        %v6752 = vsub.s32 %v6749, %v6751
        %v6753 = vrot.slane %v6725, %v6752
        %v6754 = vcombine.high %v6732, %v6732
        %v6755 = vcombine.high %v6739, %v6739
        %v6756 = vcombine.high %v6746, %v6746
        %v6757 = vcombine.high %v6753, %v6753
        %6766 = vst.msk [vmem:[%s289 + $0x7] sm:$0x1] %vm6268, %v6732
        %6767 = vst.msk [vmem:[%s289 + $0xf] sm:$0x1] %vm6268, %v6746
        %6768 = vst.msk [vmem:[%s289 + $0x17] sm:$0x1] %vm6268, %v6754
        %6769 = vst.msk [vmem:[%s289 + $0x1f] sm:$0x1] %vm6268, %v6756
        %6770 = vst.msk [vmem:[%s289 + $0x27] sm:$0x1] %vm6268, %v6739
        %6771 = vst.msk [vmem:[%s289 + $0x2f] sm:$0x1] %vm6268, %v6753
        %6772 = vst.msk [vmem:[%s289 + $0x37] sm:$0x1] %vm6268, %v6755
        %6773 = vst.msk [vmem:[%s289 + $0x3f] sm:$0x1] %vm6268, %v6757
        %s6774 = smul.u32 8, %s20
        %p6775 = scmp.lt.s32.totalorder %s6774, 15
        %s6776 = scalar_select %p6775, %s6774, 15
        %s6777 = smul.addr %s6776, 8
        %s6778 = scalar_lea.vmem %s6, %s6777
        // Predicated region
        $region49: #{hierarchical_attention_encoder_forward.4} parent=43 // pred_check
          %p6779 = pneg %p174
        $region50: #{hierarchical_attention_encoder_forward.4} parent=43 // pred_check_branch
          %6781 = sbr.rel (%p6779) target = $region52
        $region51: #{hierarchical_attention_encoder_forward.4} parent=43 // pred_region
          %s6782 = smul.u32 8, %s20
        $region52: #{hierarchical_attention_encoder_forward.4} parent=43 // pred_fallthru
          _
      $region44: #{hierarchical_attention_encoder_forward.4} parent=5 // pred_fallthru
        _
      %p6783 = scmp.le.s32.totalorder 2, %s15
      // Predicated region
      $region53: #{hierarchical_attention_encoder_forward.4} parent=5 // pred_check
        %p6784 = pneg %p6783
      $region54: #{hierarchical_attention_encoder_forward.4} parent=5 // pred_check_branch
        %6786 = sbr.rel (%p6784) target = $region56
      $region55: #{hierarchical_attention_encoder_forward.4} parent=5 // pred_region
        %s6787 = ssub.s32 %s15, 2
        // Predicated region
        $region57: #{hierarchical_attention_encoder_forward.4} parent=55 // pred_check
          %p6788 = pneg %p180
        $region58: #{hierarchical_attention_encoder_forward.4} parent=55 // pred_check_branch
          %6790 = sbr.rel (%p6788) target = $region60
        $region59: #{hierarchical_attention_encoder_forward.4} parent=55 // pred_region
          %s6791 = smul.u32 8, %s21
          %p6792 = scmp.lt.s32.totalorder %s6791, 15
          %s6793 = scalar_select %p6792, %s6791, 15
          %s6794 = smul.addr %s6793, 8
          %s6795 = scalar_lea.vmem %s6, %s6794
        $region60: #{hierarchical_attention_encoder_forward.4} parent=55 // pred_fallthru
          _
      $region56: #{hierarchical_attention_encoder_forward.4} parent=5 // pred_fallthru
        _
    $region6: #{hierarchical_attention_encoder_forward.4} parent=1 // loop_footer
      %s19 = sadd.s32 1, %s15
    $region7: #{hierarchical_attention_encoder_forward.4} parent=1 // loop_footer_branch
      %14 = sbr.rel target = $region3
    $region8: #{hierarchical_attention_encoder_forward.4} parent=1 // loop_exit
      _
    %6796 = vsyncpa [#allocation3], 1
    %s6797 = scalar_lea.sflag [#allocation3], 1
    %6798 = vsyncpa %s6797, 1

</llo_original>
